<compile_context>
chip_gen: v5e
topology: v5e:2x2
jax: 0.10.0
libtpu: 0.0.40
codegen_flags: <defaults>
</compile_context>

<pallas_src>
import functools
import math

import jax
import jax.numpy as jnp
from jax.experimental import pallas as pl
from jax.experimental.pallas import tpu as pltpu


def get_num_groups(num_channels):
    return min(32, num_channels // 4)


# ----------------------------------------------------------------------------
# Fused residual-block kernel (one grid step == one batch element)
# ----------------------------------------------------------------------------
def _fused_block_kernel(
    x_ref, sc_ref, sh_ref,
    mask_ref, gm_in_ref, gm_out_ref,
    gn0_g_ref, gn0_b_ref, c0_w_ref, c0_b_ref,
    gn1_g_ref, gn1_b_ref, c1_w_ref, c1_b_ref,
    sk_w_ref, sk_b_ref,
    gn2_g_ref, gn2_b_ref, qkv_w_ref, qkv_b_ref, pr_w_ref, pr_b_ref,
    o_ref,
    *, H, W, C_in, C, n_heads, eps, skip_scale, compute_dtype, approx_recip,
):
    f32 = jnp.float32
    cdt = compute_dtype
    L = H * W

    x = x_ref[0].astype(f32)                                       # (C_in, L)

    def silu(v):
        return v * jax.nn.sigmoid(v)

    def group_norm(v, gamma_ref, beta_ref, gm_ref):
        # lane reduce -> per-channel sums (C,1), then tiny within-group matvec
        # (gm is the same-group indicator pre-scaled by 1/(group_size * L)).
        s1 = jnp.sum(v, axis=1, keepdims=True)
        mean = jnp.dot(gm_ref[...], s1, preferred_element_type=f32)
        d = v - mean
        s2 = jnp.sum(d * d, axis=1, keepdims=True)
        var = jnp.dot(gm_ref[...], s2, preferred_element_type=f32)
        return d * jax.lax.rsqrt(var + eps) * gamma_ref[...] + beta_ref[...]

    def conv3x3(v, w_ref, b_ref):
        # v: (nci, L) f32; w_ref: (9, C, nci). 9 rolled + boundary-masked taps are
        # accumulated via small (C,nci)@(nci,L) MXU matmuls (no (L,L) shift matrices,
        # no im2col scratch). Tap t corresponds to (dy, dx) = (t//3 - 1, t%3 - 1).
        acc = None
        for t in range(9):
            dy, dx = t // 3 - 1, t % 3 - 1
            off = dy * W + dx
            if off == 0:
                tap = v
            else:
                tap = pltpu.roll(v, shift=(L - off) % L, axis=1) * mask_ref[pl.ds(t, 1), :]
            contrib = jnp.dot(w_ref[t], tap.astype(cdt), preferred_element_type=f32)
            acc = contrib if acc is None else acc + contrib
        return acc + b_ref[...]

    # ---- main residual branch ----------------------------------------------
    h = silu(group_norm(x, gn0_g_ref, gn0_b_ref, gm_in_ref))
    h = conv3x3(h, c0_w_ref, c0_b_ref)                             # (C, L)

    # adaptive GroupNorm: silu(shift + norm1(h) * (scale + 1))
    hn = group_norm(h, gn1_g_ref, gn1_b_ref, gm_out_ref)
    h = silu(sh_ref[0] + hn * (sc_ref[0] + 1.0))
    # dropout(p=0) is the identity  # TODO(synk): dropout p>0 (training mode) not implemented
    h = conv3x3(h, c1_w_ref, c1_b_ref)                             # (C, L)

    # skip 1x1 on the original input + residual + skip_scale (fused epilogue)
    skip = jnp.dot(sk_w_ref[...], x.astype(cdt), preferred_element_type=f32) + sk_b_ref[...]
    xres = (h + skip) * skip_scale                                  # (C, L)

    # ---- self-attention ------------------------------------------------------
    xn2 = group_norm(xres, gn2_g_ref, gn2_b_ref, gm_out_ref)
    # qkv weights permuted wrapper-side to [head: q(cg) | k(cg) | v(cg)] with 1/sqrt(cg)
    # already folded into the q rows; kept in registers (no VMEM scratch).
    qkv = jnp.dot(qkv_w_ref[...], xn2.astype(cdt), preferred_element_type=f32) + qkv_b_ref[...]

    cg = C // n_heads
    heads = []
    for hd in range(n_heads):
        base = hd * 3 * cg
        q = qkv[base:base + cg, :]                                  # (cg, L), 8-aligned
        k = qkv[base + cg:base + 2 * cg, :]
        v = qkv[base + 2 * cg:base + 3 * cg, :]
        s = jax.lax.dot_general(q.astype(cdt), k.astype(cdt),
                                (((0,), (0,)), ((), ())),
                                preferred_element_type=f32)         # (Lq, Lk)
        s = s - jnp.max(s, axis=-1, keepdims=True)
        p = jnp.exp(s)
        inv = pl.reciprocal(jnp.sum(p, axis=-1, keepdims=True), approx=approx_recip)
        w_att = p * inv
        heads.append(jax.lax.dot_general(v.astype(cdt), w_att.astype(cdt),
                                         (((1,), (1,)), ((), ())),
                                         preferred_element_type=f32))   # (cg, Lq)
    a_all = jnp.concatenate(heads, axis=0)                          # (C, L)

    proj = jnp.dot(pr_w_ref[...], a_all.astype(cdt), preferred_element_type=f32) + pr_b_ref[...]
    o_ref[0] = ((xres + proj) * skip_scale).astype(o_ref.dtype)


# ----------------------------------------------------------------------------
# Wrapper: constant hoisting, weight repacking, single fused pallas_call
# ----------------------------------------------------------------------------
def _const_index_map(ndim):
    idx = (0,) * ndim
    return lambda b: idx


@functools.partial(
    jax.jit,
    static_argnames=("out_channels", "num_heads", "skip_scale", "eps", "compute_dtype"))
def ncsnpp_unet_forward(x, emb, p, *, out_channels, num_heads, skip_scale,
                        eps=1e-5, compute_dtype=jnp.bfloat16):
    B, C_in, H, W = x.shape
    C = out_channels
    L = H * W
    cg = C // num_heads
    wdt = compute_dtype

    def col(v):
        return v.astype(jnp.float32).reshape(-1, 1)

    def conv_w_taps(w):    # (Cout, Cin, 3, 3) -> (9, Cout, Cin); tap t = (dy+1)*3 + (dx+1)
        return jnp.transpose(w, (2, 3, 0, 1)).reshape(9, w.shape[0], w.shape[1]).astype(wdt)

    def group_mat(nc):     # same-group indicator scaled by 1/(group_size * L)
        g = nc // get_num_groups(nc)
        r = jnp.arange(nc)[:, None] // g
        c = jnp.arange(nc)[None, :] // g
        return jnp.where(r == c, 1.0 / (g * L), 0.0).astype(jnp.float32)

    # Hoisted conv boundary masks for the 9 rolled taps (post-roll output validity).
    yy = jnp.arange(L) // W
    xx = jnp.arange(L) % W
    mask_rows = []
    for dy in (-1, 0, 1):
        for dx in (-1, 0, 1):
            ok = (xx + dx >= 0) & (xx + dx < W) & (yy + dy >= 0) & (yy + dy < H)
            mask_rows.append(ok)
    masks = jnp.stack(mask_rows, axis=0).astype(jnp.float32)        # (9, L)

    # Time-embedding affine in plain JAX (tiny; pure launch overhead as a kernel).
    ab = emb.astype(jnp.float32) @ p["affine_w"].T + p["affine_b"]   # (B, 2C)
    scale = ab[:, :C].reshape(B, C, 1)
    shift = ab[:, C:].reshape(B, C, 1)

    # qkv: permute rows to [head: q(cg) | k(cg) | v(cg)], fold 1/sqrt(cg) into q rows.
    perm = jnp.array([hd * 3 * cg + c * 3 + t
                      for hd in range(num_heads) for t in range(3) for c in range(cg)],
                     dtype=jnp.int32)
    qscale = jnp.where((jnp.arange(3 * C) % (3 * cg)) < cg,
                       1.0 / math.sqrt(cg), 1.0).astype(jnp.float32)
    qkv_w = (p["qkv_w"].reshape(3 * C, C)[perm] * qscale[:, None]).astype(wdt)
    qkv_b = p["qkv_b"][perm] * qscale

    x_cl = x.reshape(B, C_in, L).astype(jnp.float32)

    weight_args = (
        masks, group_mat(C_in), group_mat(C),
        col(p["norm0_w"]), col(p["norm0_b"]),
        conv_w_taps(p["conv0_w"]), col(p["conv0_b"]),
        col(p["norm1_w"]), col(p["norm1_b"]),
        conv_w_taps(p["conv1_w"]), col(p["conv1_b"]),
        p["skip_w"].reshape(C, C_in).astype(wdt), col(p["skip_b"]),
        col(p["norm2_w"]), col(p["norm2_b"]),
        qkv_w, col(qkv_b),
        p["proj_w"].reshape(C, C).astype(wdt), col(p["proj_b"]),
    )

    kern = functools.partial(
        _fused_block_kernel,
        H=H, W=W, C_in=C_in, C=C, n_heads=num_heads, eps=eps,
        skip_scale=skip_scale, compute_dtype=compute_dtype,
        approx_recip=(compute_dtype != jnp.float32))

    in_specs = [
        pl.BlockSpec((1, C_in, L), lambda b: (b, 0, 0)),
        pl.BlockSpec((1, C, 1), lambda b: (b, 0, 0)),
        pl.BlockSpec((1, C, 1), lambda b: (b, 0, 0)),
    ] + [pl.BlockSpec(w.shape, _const_index_map(w.ndim)) for w in weight_args]

    # Cost / VMEM hints (explicit per review).
    weight_bytes = sum(int(w.size) * w.dtype.itemsize for w in weight_args)
    act_bytes = 4 * B * L * (C_in + C) + 8 * B * C
    mm_flops = 2 * B * L * (9 * C * C_in + 9 * C * C + C * C_in + 3 * C * C + C * C) \
        + 4 * B * C * L * L
    cost = pl.CostEstimate(
        flops=int(mm_flops + 40 * B * C * L),
        transcendentals=int(B * L * (C_in + 2 * C) + B * num_heads * L * L),
        bytes_accessed=int(act_bytes + weight_bytes))
    vmem_limit = int(min(64 * 2**20,
                         max(8 * 2**20,
                             2 * weight_bytes + 8 * (act_bytes // B) + 24 * L * L * 4)))

    out = pl.pallas_call(
        kern,
        out_shape=jax.ShapeDtypeStruct((B, C, L), jnp.float32),
        grid_spec=pltpu.PrefetchScalarGridSpec(
            num_scalar_prefetch=0,
            grid=(B,),
            in_specs=in_specs,
            out_specs=pl.BlockSpec((1, C, L), lambda b: (b, 0, 0)),
        ),
        compiler_params=pltpu.CompilerParams(
            dimension_semantics=("parallel",),
            vmem_limit_bytes=vmem_limit),
        cost_estimate=cost,
    )(x_cl, scale, shift, *weight_args)

    return out.reshape(B, C, H, W)


# ----------------------------------------------------------------------------
# Plain-JAX reference (mirrors the PyTorch forward) for runtime validation
# ----------------------------------------------------------------------------
def _reference_forward(x, emb, p, *, out_channels, num_heads, skip_scale, eps=1e-5):
    B, C_in, H, W = x.shape
    C = out_channels
    HIGH = jax.lax.Precision.HIGHEST

    def gn(v, w, b):
        nc = v.shape[1]
        G = get_num_groups(nc)
        vg = v.reshape(B, G, nc // G, H * W)
        m = jnp.mean(vg, axis=(2, 3), keepdims=True)
        var = jnp.mean((vg - m) ** 2, axis=(2, 3), keepdims=True)
        vn = ((vg - m) / jnp.sqrt(var + eps)).reshape(B, nc, H, W)
        return vn * w.reshape(1, nc, 1, 1) + b.reshape(1, nc, 1, 1)

    def conv3(v, w, b):
        o = jax.lax.conv_general_dilated(
            v, w, (1, 1), ((1, 1), (1, 1)),
            dimension_numbers=("NCHW", "OIHW", "NCHW"), precision=HIGH)
        return o + b.reshape(1, -1, 1, 1)

    def conv1(v, w, b):
        o = jnp.einsum("oc,bchw->bohw", w.reshape(w.shape[0], w.shape[1]), v, precision=HIGH)
        return o + b.reshape(1, -1, 1, 1)

    silu = lambda t: t * jax.nn.sigmoid(t)

    orig = x
    h = conv3(silu(gn(x, p["norm0_w"], p["norm0_b"])), p["conv0_w"], p["conv0_b"])
    ab = emb @ p["affine_w"].T + p["affine_b"]
    scale = ab[:, :C].reshape(B, C, 1, 1)
    shift = ab[:, C:].reshape(B, C, 1, 1)
    h = silu(shift + gn(h, p["norm1_w"], p["norm1_b"]) * (scale + 1.0))
    h = conv3(h, p["conv1_w"], p["conv1_b"])
    skip = conv1(orig, p["skip_w"], p["skip_b"])
    xres = (h + skip) * skip_scale

    xn = gn(xres, p["norm2_w"], p["norm2_b"])
    qkv = conv1(xn, p["qkv_w"], p["qkv_b"])                         # (B, 3C, H, W)
    cg = C // num_heads
    qkv_r = qkv.reshape(B * num_heads, cg, 3, H * W)
    q, k, v = qkv_r[:, :, 0, :], qkv_r[:, :, 1, :], qkv_r[:, :, 2, :]
    s = jnp.einsum("ncq,nck->nqk", q, k / math.sqrt(cg), precision=HIGH)
    w_att = jax.nn.softmax(s, axis=2)
    a = jnp.einsum("nqk,nck->ncq", w_att, v, precision=HIGH).reshape(B, C, H, W)
    proj = conv1(a, p["proj_w"], p["proj_b"])
    return (xres + proj) * skip_scale


# ----------------------------------------------------------------------------
# Parameter construction (deterministic, synthetic)
# ----------------------------------------------------------------------------
def _kaiming_normal(key, shape, fan_in):
    return math.sqrt(1.0 / fan_in) * jax.random.normal(key, shape, jnp.float32)


def init_params(key, in_channels, out_channels, emb_channels):
    ks = jax.random.split(key, 12)
    C_in, C, E = in_channels, out_channels, emb_channels
    return {
        "norm0_w": jnp.ones((C_in,), jnp.float32),
        "norm0_b": jnp.zeros((C_in,), jnp.float32),
        "conv0_w": _kaiming_normal(ks[0], (C, C_in, 3, 3), C_in * 9),
        "conv0_b": _kaiming_normal(ks[1], (C,), C_in * 9) * 0.1,
        "affine_w": _kaiming_normal(ks[2], (2 * C, E), E),
        "affine_b": _kaiming_normal(ks[3], (2 * C,), E) * 0.1,
        "norm1_w": jnp.ones((C,), jnp.float32),
        "norm1_b": jnp.zeros((C,), jnp.float32),
        # conv1 / proj are init_zero in the original module; synthetic nonzero init here
        "conv1_w": _kaiming_normal(ks[4], (C, C, 3, 3), C * 9),
        "conv1_b": _kaiming_normal(ks[5], (C,), C * 9) * 0.1,
        "skip_w": _kaiming_normal(ks[6], (C, C_in, 1, 1), C_in),
        "skip_b": _kaiming_normal(ks[7], (C,), C_in) * 0.1,
        "norm2_w": jnp.ones((C,), jnp.float32),
        "norm2_b": jnp.zeros((C,), jnp.float32),
        "qkv_w": _kaiming_normal(ks[8], (3 * C, C, 1, 1), C),
        "qkv_b": _kaiming_normal(ks[9], (3 * C,), C) * 0.1,
        "proj_w": _kaiming_normal(ks[10], (C, C, 1, 1), C),
        "proj_b": _kaiming_normal(ks[11], (C,), C) * 0.1,
    }


# ----------------------------------------------------------------------------
if __name__ == "__main__":
    B = 2
    in_channels = 8
    out_channels = 32
    emb_channels = 32
    H = W = 16                          # L = 256 -> lane-dense blocks (multiple of 128)
    num_heads = 4                       # channels_per_head = 8 -> 8-aligned head slices
    skip_scale = 1.0 / math.sqrt(2.0)

    key = jax.random.PRNGKey(0)
    kx, ke, kp = jax.random.split(key, 3)
    x = jax.random.normal(kx, (B, in_channels, H, W), jnp.float32)
    emb = jax.random.normal(ke, (B, emb_channels), jnp.float32)
    params = init_params(kp, in_channels, out_channels, emb_channels)

    common = dict(out_channels=out_channels, num_heads=num_heads,
                  skip_scale=skip_scale, eps=1e-5)

    # Production path: bf16 matmul operands, f32 accumulation, approx softmax reciprocal.
    out_bf16 = jax.block_until_ready(
        ncsnpp_unet_forward(x, emb, params, compute_dtype=jnp.bfloat16, **common))
    assert out_bf16.shape == (B, out_channels, H, W), out_bf16.shape
    assert bool(jnp.all(jnp.isfinite(out_bf16)))

    ref = _reference_forward(x, emb, params, **common)

    # Strict check: all-f32 operands, exact reciprocal — tight tolerance per review.
    out_f32 = jax.block_until_ready(
        ncsnpp_unet_forward(x, emb, params, compute_dtype=jnp.float32, **common))
    rel_f32 = float(jnp.linalg.norm(out_f32 - ref) / (jnp.linalg.norm(ref) + 1e-12))
    assert rel_f32 < 1e-4, f"f32 kernel/reference mismatch: rel err {rel_f32}"

    # bf16 production path against the f32 reference (bf16 operand noise floor).
    rel_bf16 = float(jnp.linalg.norm(out_bf16 - ref) / (jnp.linalg.norm(ref) + 1e-12))
    assert rel_bf16 < 2e-2, f"bf16 kernel/reference mismatch: rel err {rel_bf16}"

    print("KERNEL_OK")
</pallas_src>

<mosaic_0001>
module attributes {stable_mosaic.version = 11 : i64} {
  func.func @_fused_block_kernel(%arg0: i32, %arg1: memref<1x8x256xf32, #tpu.memory_space<vmem>>, %arg2: memref<1x32x1xf32, #tpu.memory_space<vmem>>, %arg3: memref<1x32x1xf32, #tpu.memory_space<vmem>>, %arg4: memref<9x256xf32, #tpu.memory_space<vmem>>, %arg5: memref<8x8xf32, #tpu.memory_space<vmem>>, %arg6: memref<32x32xf32, #tpu.memory_space<vmem>>, %arg7: memref<8x1xf32, #tpu.memory_space<vmem>>, %arg8: memref<8x1xf32, #tpu.memory_space<vmem>>, %arg9: memref<9x32x8xbf16, #tpu.memory_space<vmem>>, %arg10: memref<32x1xf32, #tpu.memory_space<vmem>>, %arg11: memref<32x1xf32, #tpu.memory_space<vmem>>, %arg12: memref<32x1xf32, #tpu.memory_space<vmem>>, %arg13: memref<9x32x32xbf16, #tpu.memory_space<vmem>>, %arg14: memref<32x1xf32, #tpu.memory_space<vmem>>, %arg15: memref<32x8xbf16, #tpu.memory_space<vmem>>, %arg16: memref<32x1xf32, #tpu.memory_space<vmem>>, %arg17: memref<32x1xf32, #tpu.memory_space<vmem>>, %arg18: memref<32x1xf32, #tpu.memory_space<vmem>>, %arg19: memref<96x32xbf16, #tpu.memory_space<vmem>>, %arg20: memref<96x1xf32, #tpu.memory_space<vmem>>, %arg21: memref<32x32xbf16, #tpu.memory_space<vmem>>, %arg22: memref<32x1xf32, #tpu.memory_space<vmem>>, %arg23: memref<1x32x256xf32, #tpu.memory_space<vmem>>) attributes {dimension_semantics = [#tpu.dimension_semantics<parallel>], iteration_bounds = array<i64: 2>, scalar_prefetch = 0 : i64, scratch_operands = 0 : i64, tpu.core_type = #tpu.core_type<tc>, window_params = [{transform_indices = @transform_0, window_bounds = array<i64: 1, 8, 256>}, {transform_indices = @transform_1, window_bounds = array<i64: 1, 32, 1>}, {transform_indices = @transform_2, window_bounds = array<i64: 1, 32, 1>}, {pipeline_mode = #tpu.pipeline_mode<synchronous>, transform_indices = @transform_3, window_bounds = array<i64: 9, 256>}, {pipeline_mode = #tpu.pipeline_mode<synchronous>, transform_indices = @transform_4, window_bounds = array<i64: 8, 8>}, {pipeline_mode = #tpu.pipeline_mode<synchronous>, transform_indices = @transform_5, window_bounds = array<i64: 32, 32>}, {pipeline_mode = #tpu.pipeline_mode<synchronous>, transform_indices = @transform_6, window_bounds = array<i64: 8, 1>}, {pipeline_mode = #tpu.pipeline_mode<synchronous>, transform_indices = @transform_7, window_bounds = array<i64: 8, 1>}, {pipeline_mode = #tpu.pipeline_mode<synchronous>, transform_indices = @transform_8, window_bounds = array<i64: 9, 32, 8>}, {pipeline_mode = #tpu.pipeline_mode<synchronous>, transform_indices = @transform_9, window_bounds = array<i64: 32, 1>}, {pipeline_mode = #tpu.pipeline_mode<synchronous>, transform_indices = @transform_10, window_bounds = array<i64: 32, 1>}, {pipeline_mode = #tpu.pipeline_mode<synchronous>, transform_indices = @transform_11, window_bounds = array<i64: 32, 1>}, {pipeline_mode = #tpu.pipeline_mode<synchronous>, transform_indices = @transform_12, window_bounds = array<i64: 9, 32, 32>}, {pipeline_mode = #tpu.pipeline_mode<synchronous>, transform_indices = @transform_13, window_bounds = array<i64: 32, 1>}, {pipeline_mode = #tpu.pipeline_mode<synchronous>, transform_indices = @transform_14, window_bounds = array<i64: 32, 8>}, {pipeline_mode = #tpu.pipeline_mode<synchronous>, transform_indices = @transform_15, window_bounds = array<i64: 32, 1>}, {pipeline_mode = #tpu.pipeline_mode<synchronous>, transform_indices = @transform_16, window_bounds = array<i64: 32, 1>}, {pipeline_mode = #tpu.pipeline_mode<synchronous>, transform_indices = @transform_17, window_bounds = array<i64: 32, 1>}, {pipeline_mode = #tpu.pipeline_mode<synchronous>, transform_indices = @transform_18, window_bounds = array<i64: 96, 32>}, {pipeline_mode = #tpu.pipeline_mode<synchronous>, transform_indices = @transform_19, window_bounds = array<i64: 96, 1>}, {pipeline_mode = #tpu.pipeline_mode<synchronous>, transform_indices = @transform_20, window_bounds = array<i64: 32, 32>}, {pipeline_mode = #tpu.pipeline_mode<synchronous>, transform_indices = @transform_21, window_bounds = array<i64: 32, 1>}, {transform_indices = @transform_22, window_bounds = array<i64: 1, 32, 256>}]} {
    %c0 = arith.constant 0 : index
    %c0_0 = arith.constant 0 : index
    %c0_1 = arith.constant 0 : index
    %0 = vector.load %arg1[%c0, %c0_0, %c0_1] : memref<1x8x256xf32, #tpu.memory_space<vmem>>, vector<1x8x256xf32>
    %1 = vector.shape_cast %0 : vector<1x8x256xf32> to vector<8x256xf32>
    %cst = arith.constant dense<0.000000e+00> : vector<8xf32>
    %2 = vector.multi_reduction <add>, %1, %cst [1] : vector<8x256xf32> to vector<8xf32>
    %3 = vector.shape_cast %2 : vector<8xf32> to vector<8x1xf32>
    %c0_2 = arith.constant 0 : index
    %c0_3 = arith.constant 0 : index
    %4 = vector.load %arg5[%c0_2, %c0_3] : memref<8x8xf32, #tpu.memory_space<vmem>>, vector<8x8xf32>
    %cst_4 = arith.constant dense<0.000000e+00> : vector<8x1xf32>
    %5 = tpu.matmul %4, %3, %cst_4 {dimension_numbers = #tpu.dot_dimension_numbers<[1], [0], [0], [1], [0, 0, 1, 1], [], []>} : vector<8x8xf32>, vector<8x1xf32>, vector<8x1xf32> -> vector<8x1xf32>
    %6 = vector.broadcast %5 : vector<8x1xf32> to vector<8x256xf32>
    %7 = arith.subf %1, %6 : vector<8x256xf32>
    %8 = arith.mulf %7, %7 : vector<8x256xf32>
    %cst_5 = arith.constant dense<0.000000e+00> : vector<8xf32>
    %9 = vector.multi_reduction <add>, %8, %cst_5 [1] : vector<8x256xf32> to vector<8xf32>
    %10 = vector.shape_cast %9 : vector<8xf32> to vector<8x1xf32>
    %c0_6 = arith.constant 0 : index
    %c0_7 = arith.constant 0 : index
    %11 = vector.load %arg5[%c0_6, %c0_7] : memref<8x8xf32, #tpu.memory_space<vmem>>, vector<8x8xf32>
    %cst_8 = arith.constant dense<0.000000e+00> : vector<8x1xf32>
    %12 = tpu.matmul %11, %10, %cst_8 {dimension_numbers = #tpu.dot_dimension_numbers<[1], [0], [0], [1], [0, 0, 1, 1], [], []>} : vector<8x8xf32>, vector<8x1xf32>, vector<8x1xf32> -> vector<8x1xf32>
    %cst_9 = arith.constant 9.99999974E-6 : f32
    %13 = vector.broadcast %cst_9 : f32 to vector<8x1xf32>
    %14 = arith.addf %12, %13 : vector<8x1xf32>
    %15 = math.rsqrt %14 : vector<8x1xf32>
    %16 = vector.broadcast %15 : vector<8x1xf32> to vector<8x256xf32>
    %17 = arith.mulf %7, %16 : vector<8x256xf32>
    %c0_10 = arith.constant 0 : index
    %c0_11 = arith.constant 0 : index
    %18 = vector.load %arg7[%c0_10, %c0_11] : memref<8x1xf32, #tpu.memory_space<vmem>>, vector<8x1xf32>
    %19 = vector.broadcast %18 : vector<8x1xf32> to vector<8x256xf32>
    %20 = arith.mulf %17, %19 : vector<8x256xf32>
    %c0_12 = arith.constant 0 : index
    %c0_13 = arith.constant 0 : index
    %21 = vector.load %arg8[%c0_12, %c0_13] : memref<8x1xf32, #tpu.memory_space<vmem>>, vector<8x1xf32>
    %22 = vector.broadcast %21 : vector<8x1xf32> to vector<8x256xf32>
    %23 = arith.addf %20, %22 : vector<8x256xf32>
    %24 = arith.negf %23 : vector<8x256xf32>
    %25 = math.exp %24 : vector<8x256xf32>
    %cst_14 = arith.constant 1.000000e+00 : f32
    %26 = vector.broadcast %cst_14 : f32 to vector<8x256xf32>
    %27 = arith.addf %26, %25 : vector<8x256xf32>
    %28 = arith.divf %26, %27 : vector<8x256xf32>
    %29 = arith.mulf %23, %28 : vector<8x256xf32>
    %c17_i32 = arith.constant 17 : i32
    %30 = tpu.dynamic_rotate %29 by %c17_i32 dim 1 : vector<8x256xf32>, i32 -> vector<8x256xf32>
    %c0_15 = arith.constant 0 : index
    %c0_16 = arith.constant 0 : index
    %31 = vector.load %arg4[%c0_15, %c0_16] : memref<9x256xf32, #tpu.memory_space<vmem>>, vector<1x256xf32>
    %32 = vector.broadcast %31 : vector<1x256xf32> to vector<8x256xf32>
    %33 = arith.mulf %30, %32 : vector<8x256xf32>
    %c0_17 = arith.constant 0 : index
    %c0_18 = arith.constant 0 : index
    %c0_19 = arith.constant 0 : index
    %34 = vector.load %arg9[%c0_17, %c0_18, %c0_19] : memref<9x32x8xbf16, #tpu.memory_space<vmem>>, vector<1x32x8xbf16>
    %35 = vector.shape_cast %34 : vector<1x32x8xbf16> to vector<32x8xbf16>
    %36 = arith.truncf %33 : vector<8x256xf32> to vector<8x256xbf16>
    %cst_20 = arith.constant dense<0.000000e+00> : vector<32x256xf32>
    %37 = tpu.matmul %35, %36, %cst_20 {dimension_numbers = #tpu.dot_dimension_numbers<[1], [0], [0], [1], [0, 0, 1, 1], [], []>} : vector<32x8xbf16>, vector<8x256xbf16>, vector<32x256xf32> -> vector<32x256xf32>
    %c16_i32 = arith.constant 16 : i32
    %38 = tpu.dynamic_rotate %29 by %c16_i32 dim 1 : vector<8x256xf32>, i32 -> vector<8x256xf32>
    %c1 = arith.constant 1 : index
    %c0_21 = arith.constant 0 : index
    %39 = vector.load %arg4[%c1, %c0_21] : memref<9x256xf32, #tpu.memory_space<vmem>>, vector<1x256xf32>
    %40 = vector.broadcast %39 : vector<1x256xf32> to vector<8x256xf32>
    %41 = arith.mulf %38, %40 : vector<8x256xf32>
    %c1_22 = arith.constant 1 : index
    %c0_23 = arith.constant 0 : index
    %c0_24 = arith.constant 0 : index
    %42 = vector.load %arg9[%c1_22, %c0_23, %c0_24] : memref<9x32x8xbf16, #tpu.memory_space<vmem>>, vector<1x32x8xbf16>
    %43 = vector.shape_cast %42 : vector<1x32x8xbf16> to vector<32x8xbf16>
    %44 = arith.truncf %41 : vector<8x256xf32> to vector<8x256xbf16>
    %cst_25 = arith.constant dense<0.000000e+00> : vector<32x256xf32>
    %45 = tpu.matmul %43, %44, %cst_25 {dimension_numbers = #tpu.dot_dimension_numbers<[1], [0], [0], [1], [0, 0, 1, 1], [], []>} : vector<32x8xbf16>, vector<8x256xbf16>, vector<32x256xf32> -> vector<32x256xf32>
    %46 = arith.addf %37, %45 : vector<32x256xf32>
    %c15_i32 = arith.constant 15 : i32
    %47 = tpu.dynamic_rotate %29 by %c15_i32 dim 1 : vector<8x256xf32>, i32 -> vector<8x256xf32>
    %c2 = arith.constant 2 : index
    %c0_26 = arith.constant 0 : index
    %48 = vector.load %arg4[%c2, %c0_26] : memref<9x256xf32, #tpu.memory_space<vmem>>, vector<1x256xf32>
    %49 = vector.broadcast %48 : vector<1x256xf32> to vector<8x256xf32>
    %50 = arith.mulf %47, %49 : vector<8x256xf32>
    %c2_27 = arith.constant 2 : index
    %c0_28 = arith.constant 0 : index
    %c0_29 = arith.constant 0 : index
    %51 = vector.load %arg9[%c2_27, %c0_28, %c0_29] : memref<9x32x8xbf16, #tpu.memory_space<vmem>>, vector<1x32x8xbf16>
    %52 = vector.shape_cast %51 : vector<1x32x8xbf16> to vector<32x8xbf16>
    %53 = arith.truncf %50 : vector<8x256xf32> to vector<8x256xbf16>
    %cst_30 = arith.constant dense<0.000000e+00> : vector<32x256xf32>
    %54 = tpu.matmul %52, %53, %cst_30 {dimension_numbers = #tpu.dot_dimension_numbers<[1], [0], [0], [1], [0, 0, 1, 1], [], []>} : vector<32x8xbf16>, vector<8x256xbf16>, vector<32x256xf32> -> vector<32x256xf32>
    %55 = arith.addf %46, %54 : vector<32x256xf32>
    %c1_i32 = arith.constant 1 : i32
    %56 = tpu.dynamic_rotate %29 by %c1_i32 dim 1 : vector<8x256xf32>, i32 -> vector<8x256xf32>
    %c3 = arith.constant 3 : index
    %c0_31 = arith.constant 0 : index
    %57 = vector.load %arg4[%c3, %c0_31] : memref<9x256xf32, #tpu.memory_space<vmem>>, vector<1x256xf32>
    %58 = vector.broadcast %57 : vector<1x256xf32> to vector<8x256xf32>
    %59 = arith.mulf %56, %58 : vector<8x256xf32>
    %c3_32 = arith.constant 3 : index
    %c0_33 = arith.constant 0 : index
    %c0_34 = arith.constant 0 : index
    %60 = vector.load %arg9[%c3_32, %c0_33, %c0_34] : memref<9x32x8xbf16, #tpu.memory_space<vmem>>, vector<1x32x8xbf16>
    %61 = vector.shape_cast %60 : vector<1x32x8xbf16> to vector<32x8xbf16>
    %62 = arith.truncf %59 : vector<8x256xf32> to vector<8x256xbf16>
    %cst_35 = arith.constant dense<0.000000e+00> : vector<32x256xf32>
    %63 = tpu.matmul %61, %62, %cst_35 {dimension_numbers = #tpu.dot_dimension_numbers<[1], [0], [0], [1], [0, 0, 1, 1], [], []>} : vector<32x8xbf16>, vector<8x256xbf16>, vector<32x256xf32> -> vector<32x256xf32>
    %64 = arith.addf %55, %63 : vector<32x256xf32>
    %c4 = arith.constant 4 : index
    %c0_36 = arith.constant 0 : index
    %c0_37 = arith.constant 0 : index
    %65 = vector.load %arg9[%c4, %c0_36, %c0_37] : memref<9x32x8xbf16, #tpu.memory_space<vmem>>, vector<1x32x8xbf16>
    %66 = vector.shape_cast %65 : vector<1x32x8xbf16> to vector<32x8xbf16>
    %67 = arith.truncf %29 : vector<8x256xf32> to vector<8x256xbf16>
    %cst_38 = arith.constant dense<0.000000e+00> : vector<32x256xf32>
    %68 = tpu.matmul %66, %67, %cst_38 {dimension_numbers = #tpu.dot_dimension_numbers<[1], [0], [0], [1], [0, 0, 1, 1], [], []>} : vector<32x8xbf16>, vector<8x256xbf16>, vector<32x256xf32> -> vector<32x256xf32>
    %69 = arith.addf %64, %68 : vector<32x256xf32>
    %c255_i32 = arith.constant 255 : i32
    %70 = tpu.dynamic_rotate %29 by %c255_i32 dim 1 : vector<8x256xf32>, i32 -> vector<8x256xf32>
    %c5 = arith.constant 5 : index
    %c0_39 = arith.constant 0 : index
    %71 = vector.load %arg4[%c5, %c0_39] : memref<9x256xf32, #tpu.memory_space<vmem>>, vector<1x256xf32>
    %72 = vector.broadcast %71 : vector<1x256xf32> to vector<8x256xf32>
    %73 = arith.mulf %70, %72 : vector<8x256xf32>
    %c5_40 = arith.constant 5 : index
    %c0_41 = arith.constant 0 : index
    %c0_42 = arith.constant 0 : index
    %74 = vector.load %arg9[%c5_40, %c0_41, %c0_42] : memref<9x32x8xbf16, #tpu.memory_space<vmem>>, vector<1x32x8xbf16>
    %75 = vector.shape_cast %74 : vector<1x32x8xbf16> to vector<32x8xbf16>
    %76 = arith.truncf %73 : vector<8x256xf32> to vector<8x256xbf16>
    %cst_43 = arith.constant dense<0.000000e+00> : vector<32x256xf32>
    %77 = tpu.matmul %75, %76, %cst_43 {dimension_numbers = #tpu.dot_dimension_numbers<[1], [0], [0], [1], [0, 0, 1, 1], [], []>} : vector<32x8xbf16>, vector<8x256xbf16>, vector<32x256xf32> -> vector<32x256xf32>
    %78 = arith.addf %69, %77 : vector<32x256xf32>
    %c241_i32 = arith.constant 241 : i32
    %79 = tpu.dynamic_rotate %29 by %c241_i32 dim 1 : vector<8x256xf32>, i32 -> vector<8x256xf32>
    %c6 = arith.constant 6 : index
    %c0_44 = arith.constant 0 : index
    %80 = vector.load %arg4[%c6, %c0_44] : memref<9x256xf32, #tpu.memory_space<vmem>>, vector<1x256xf32>
    %81 = vector.broadcast %80 : vector<1x256xf32> to vector<8x256xf32>
    %82 = arith.mulf %79, %81 : vector<8x256xf32>
    %c6_45 = arith.constant 6 : index
    %c0_46 = arith.constant 0 : index
    %c0_47 = arith.constant 0 : index
    %83 = vector.load %arg9[%c6_45, %c0_46, %c0_47] : memref<9x32x8xbf16, #tpu.memory_space<vmem>>, vector<1x32x8xbf16>
    %84 = vector.shape_cast %83 : vector<1x32x8xbf16> to vector<32x8xbf16>
    %85 = arith.truncf %82 : vector<8x256xf32> to vector<8x256xbf16>
    %cst_48 = arith.constant dense<0.000000e+00> : vector<32x256xf32>
    %86 = tpu.matmul %84, %85, %cst_48 {dimension_numbers = #tpu.dot_dimension_numbers<[1], [0], [0], [1], [0, 0, 1, 1], [], []>} : vector<32x8xbf16>, vector<8x256xbf16>, vector<32x256xf32> -> vector<32x256xf32>
    %87 = arith.addf %78, %86 : vector<32x256xf32>
    %c240_i32 = arith.constant 240 : i32
    %88 = tpu.dynamic_rotate %29 by %c240_i32 dim 1 : vector<8x256xf32>, i32 -> vector<8x256xf32>
    %c7 = arith.constant 7 : index
    %c0_49 = arith.constant 0 : index
    %89 = vector.load %arg4[%c7, %c0_49] : memref<9x256xf32, #tpu.memory_space<vmem>>, vector<1x256xf32>
    %90 = vector.broadcast %89 : vector<1x256xf32> to vector<8x256xf32>
    %91 = arith.mulf %88, %90 : vector<8x256xf32>
    %c7_50 = arith.constant 7 : index
    %c0_51 = arith.constant 0 : index
    %c0_52 = arith.constant 0 : index
    %92 = vector.load %arg9[%c7_50, %c0_51, %c0_52] : memref<9x32x8xbf16, #tpu.memory_space<vmem>>, vector<1x32x8xbf16>
    %93 = vector.shape_cast %92 : vector<1x32x8xbf16> to vector<32x8xbf16>
    %94 = arith.truncf %91 : vector<8x256xf32> to vector<8x256xbf16>
    %cst_53 = arith.constant dense<0.000000e+00> : vector<32x256xf32>
    %95 = tpu.matmul %93, %94, %cst_53 {dimension_numbers = #tpu.dot_dimension_numbers<[1], [0], [0], [1], [0, 0, 1, 1], [], []>} : vector<32x8xbf16>, vector<8x256xbf16>, vector<32x256xf32> -> vector<32x256xf32>
    %96 = arith.addf %87, %95 : vector<32x256xf32>
    %c239_i32 = arith.constant 239 : i32
    %97 = tpu.dynamic_rotate %29 by %c239_i32 dim 1 : vector<8x256xf32>, i32 -> vector<8x256xf32>
    %c8 = arith.constant 8 : index
    %c0_54 = arith.constant 0 : index
    %98 = vector.load %arg4[%c8, %c0_54] : memref<9x256xf32, #tpu.memory_space<vmem>>, vector<1x256xf32>
    %99 = vector.broadcast %98 : vector<1x256xf32> to vector<8x256xf32>
    %100 = arith.mulf %97, %99 : vector<8x256xf32>
    %c8_55 = arith.constant 8 : index
    %c0_56 = arith.constant 0 : index
    %c0_57 = arith.constant 0 : index
    %101 = vector.load %arg9[%c8_55, %c0_56, %c0_57] : memref<9x32x8xbf16, #tpu.memory_space<vmem>>, vector<1x32x8xbf16>
    %102 = vector.shape_cast %101 : vector<1x32x8xbf16> to vector<32x8xbf16>
    %103 = arith.truncf %100 : vector<8x256xf32> to vector<8x256xbf16>
    %cst_58 = arith.constant dense<0.000000e+00> : vector<32x256xf32>
    %104 = tpu.matmul %102, %103, %cst_58 {dimension_numbers = #tpu.dot_dimension_numbers<[1], [0], [0], [1], [0, 0, 1, 1], [], []>} : vector<32x8xbf16>, vector<8x256xbf16>, vector<32x256xf32> -> vector<32x256xf32>
    %105 = arith.addf %96, %104 : vector<32x256xf32>
    %c0_59 = arith.constant 0 : index
    %c0_60 = arith.constant 0 : index
    %106 = vector.load %arg10[%c0_59, %c0_60] : memref<32x1xf32, #tpu.memory_space<vmem>>, vector<32x1xf32>
    %107 = vector.broadcast %106 : vector<32x1xf32> to vector<32x256xf32>
    %108 = arith.addf %105, %107 : vector<32x256xf32>
    %cst_61 = arith.constant dense<0.000000e+00> : vector<32xf32>
    %109 = vector.multi_reduction <add>, %108, %cst_61 [1] : vector<32x256xf32> to vector<32xf32>
    %110 = vector.shape_cast %109 : vector<32xf32> to vector<32x1xf32>
    %c0_62 = arith.constant 0 : index
    %c0_63 = arith.constant 0 : index
    %111 = vector.load %arg6[%c0_62, %c0_63] : memref<32x32xf32, #tpu.memory_space<vmem>>, vector<32x32xf32>
    %cst_64 = arith.constant dense<0.000000e+00> : vector<32x1xf32>
    %112 = tpu.matmul %111, %110, %cst_64 {dimension_numbers = #tpu.dot_dimension_numbers<[1], [0], [0], [1], [0, 0, 1, 1], [], []>} : vector<32x32xf32>, vector<32x1xf32>, vector<32x1xf32> -> vector<32x1xf32>
    %113 = vector.broadcast %112 : vector<32x1xf32> to vector<32x256xf32>
    %114 = arith.subf %108, %113 : vector<32x256xf32>
    %115 = arith.mulf %114, %114 : vector<32x256xf32>
    %cst_65 = arith.constant dense<0.000000e+00> : vector<32xf32>
    %116 = vector.multi_reduction <add>, %115, %cst_65 [1] : vector<32x256xf32> to vector<32xf32>
    %117 = vector.shape_cast %116 : vector<32xf32> to vector<32x1xf32>
    %c0_66 = arith.constant 0 : index
    %c0_67 = arith.constant 0 : index
    %118 = vector.load %arg6[%c0_66, %c0_67] : memref<32x32xf32, #tpu.memory_space<vmem>>, vector<32x32xf32>
    %cst_68 = arith.constant dense<0.000000e+00> : vector<32x1xf32>
    %119 = tpu.matmul %118, %117, %cst_68 {dimension_numbers = #tpu.dot_dimension_numbers<[1], [0], [0], [1], [0, 0, 1, 1], [], []>} : vector<32x32xf32>, vector<32x1xf32>, vector<32x1xf32> -> vector<32x1xf32>
    %cst_69 = arith.constant 9.99999974E-6 : f32
    %120 = vector.broadcast %cst_69 : f32 to vector<32x1xf32>
    %121 = arith.addf %119, %120 : vector<32x1xf32>
    %122 = math.rsqrt %121 : vector<32x1xf32>
    %123 = vector.broadcast %122 : vector<32x1xf32> to vector<32x256xf32>
    %124 = arith.mulf %114, %123 : vector<32x256xf32>
    %c0_70 = arith.constant 0 : index
    %c0_71 = arith.constant 0 : index
    %125 = vector.load %arg11[%c0_70, %c0_71] : memref<32x1xf32, #tpu.memory_space<vmem>>, vector<32x1xf32>
    %126 = vector.broadcast %125 : vector<32x1xf32> to vector<32x256xf32>
    %127 = arith.mulf %124, %126 : vector<32x256xf32>
    %c0_72 = arith.constant 0 : index
    %c0_73 = arith.constant 0 : index
    %128 = vector.load %arg12[%c0_72, %c0_73] : memref<32x1xf32, #tpu.memory_space<vmem>>, vector<32x1xf32>
    %129 = vector.broadcast %128 : vector<32x1xf32> to vector<32x256xf32>
    %130 = arith.addf %127, %129 : vector<32x256xf32>
    %c0_74 = arith.constant 0 : index
    %c0_75 = arith.constant 0 : index
    %c0_76 = arith.constant 0 : index
    %131 = vector.load %arg3[%c0_74, %c0_75, %c0_76] : memref<1x32x1xf32, #tpu.memory_space<vmem>>, vector<1x32x1xf32>
    %132 = vector.shape_cast %131 : vector<1x32x1xf32> to vector<32x1xf32>
    %c0_77 = arith.constant 0 : index
    %c0_78 = arith.constant 0 : index
    %c0_79 = arith.constant 0 : index
    %133 = vector.load %arg2[%c0_77, %c0_78, %c0_79] : memref<1x32x1xf32, #tpu.memory_space<vmem>>, vector<1x32x1xf32>
    %134 = vector.shape_cast %133 : vector<1x32x1xf32> to vector<32x1xf32>
    %cst_80 = arith.constant 1.000000e+00 : f32
    %135 = vector.broadcast %cst_80 : f32 to vector<32x1xf32>
    %136 = arith.addf %134, %135 : vector<32x1xf32>
    %137 = vector.broadcast %136 : vector<32x1xf32> to vector<32x256xf32>
    %138 = arith.mulf %130, %137 : vector<32x256xf32>
    %139 = vector.broadcast %132 : vector<32x1xf32> to vector<32x256xf32>
    %140 = arith.addf %139, %138 : vector<32x256xf32>
    %141 = arith.negf %140 : vector<32x256xf32>
    %142 = math.exp %141 : vector<32x256xf32>
    %cst_81 = arith.constant 1.000000e+00 : f32
    %143 = vector.broadcast %cst_81 : f32 to vector<32x256xf32>
    %144 = arith.addf %143, %142 : vector<32x256xf32>
    %145 = arith.divf %143, %144 : vector<32x256xf32>
    %146 = arith.mulf %140, %145 : vector<32x256xf32>
    %c17_i32_82 = arith.constant 17 : i32
    %147 = tpu.dynamic_rotate %146 by %c17_i32_82 dim 1 : vector<32x256xf32>, i32 -> vector<32x256xf32>
    %c0_83 = arith.constant 0 : index
    %c0_84 = arith.constant 0 : index
    %148 = vector.load %arg4[%c0_83, %c0_84] : memref<9x256xf32, #tpu.memory_space<vmem>>, vector<1x256xf32>
    %149 = vector.broadcast %148 : vector<1x256xf32> to vector<32x256xf32>
    %150 = arith.mulf %147, %149 : vector<32x256xf32>
    %c0_85 = arith.constant 0 : index
    %c0_86 = arith.constant 0 : index
    %c0_87 = arith.constant 0 : index
    %151 = vector.load %arg13[%c0_85, %c0_86, %c0_87] : memref<9x32x32xbf16, #tpu.memory_space<vmem>>, vector<1x32x32xbf16>
    %152 = vector.shape_cast %151 : vector<1x32x32xbf16> to vector<32x32xbf16>
    %153 = arith.truncf %150 : vector<32x256xf32> to vector<32x256xbf16>
    %cst_88 = arith.constant dense<0.000000e+00> : vector<32x256xf32>
    %154 = tpu.matmul %152, %153, %cst_88 {dimension_numbers = #tpu.dot_dimension_numbers<[1], [0], [0], [1], [0, 0, 1, 1], [], []>} : vector<32x32xbf16>, vector<32x256xbf16>, vector<32x256xf32> -> vector<32x256xf32>
    %c16_i32_89 = arith.constant 16 : i32
    %155 = tpu.dynamic_rotate %146 by %c16_i32_89 dim 1 : vector<32x256xf32>, i32 -> vector<32x256xf32>
    %c1_90 = arith.constant 1 : index
    %c0_91 = arith.constant 0 : index
    %156 = vector.load %arg4[%c1_90, %c0_91] : memref<9x256xf32, #tpu.memory_space<vmem>>, vector<1x256xf32>
    %157 = vector.broadcast %156 : vector<1x256xf32> to vector<32x256xf32>
    %158 = arith.mulf %155, %157 : vector<32x256xf32>
    %c1_92 = arith.constant 1 : index
    %c0_93 = arith.constant 0 : index
    %c0_94 = arith.constant 0 : index
    %159 = vector.load %arg13[%c1_92, %c0_93, %c0_94] : memref<9x32x32xbf16, #tpu.memory_space<vmem>>, vector<1x32x32xbf16>
    %160 = vector.shape_cast %159 : vector<1x32x32xbf16> to vector<32x32xbf16>
    %161 = arith.truncf %158 : vector<32x256xf32> to vector<32x256xbf16>
    %cst_95 = arith.constant dense<0.000000e+00> : vector<32x256xf32>
    %162 = tpu.matmul %160, %161, %cst_95 {dimension_numbers = #tpu.dot_dimension_numbers<[1], [0], [0], [1], [0, 0, 1, 1], [], []>} : vector<32x32xbf16>, vector<32x256xbf16>, vector<32x256xf32> -> vector<32x256xf32>
    %163 = arith.addf %154, %162 : vector<32x256xf32>
    %c15_i32_96 = arith.constant 15 : i32
    %164 = tpu.dynamic_rotate %146 by %c15_i32_96 dim 1 : vector<32x256xf32>, i32 -> vector<32x256xf32>
    %c2_97 = arith.constant 2 : index
    %c0_98 = arith.constant 0 : index
    %165 = vector.load %arg4[%c2_97, %c0_98] : memref<9x256xf32, #tpu.memory_space<vmem>>, vector<1x256xf32>
    %166 = vector.broadcast %165 : vector<1x256xf32> to vector<32x256xf32>
    %167 = arith.mulf %164, %166 : vector<32x256xf32>
    %c2_99 = arith.constant 2 : index
    %c0_100 = arith.constant 0 : index
    %c0_101 = arith.constant 0 : index
    %168 = vector.load %arg13[%c2_99, %c0_100, %c0_101] : memref<9x32x32xbf16, #tpu.memory_space<vmem>>, vector<1x32x32xbf16>
    %169 = vector.shape_cast %168 : vector<1x32x32xbf16> to vector<32x32xbf16>
    %170 = arith.truncf %167 : vector<32x256xf32> to vector<32x256xbf16>
    %cst_102 = arith.constant dense<0.000000e+00> : vector<32x256xf32>
    %171 = tpu.matmul %169, %170, %cst_102 {dimension_numbers = #tpu.dot_dimension_numbers<[1], [0], [0], [1], [0, 0, 1, 1], [], []>} : vector<32x32xbf16>, vector<32x256xbf16>, vector<32x256xf32> -> vector<32x256xf32>
    %172 = arith.addf %163, %171 : vector<32x256xf32>
    %c1_i32_103 = arith.constant 1 : i32
    %173 = tpu.dynamic_rotate %146 by %c1_i32_103 dim 1 : vector<32x256xf32>, i32 -> vector<32x256xf32>
    %c3_104 = arith.constant 3 : index
    %c0_105 = arith.constant 0 : index
    %174 = vector.load %arg4[%c3_104, %c0_105] : memref<9x256xf32, #tpu.memory_space<vmem>>, vector<1x256xf32>
    %175 = vector.broadcast %174 : vector<1x256xf32> to vector<32x256xf32>
    %176 = arith.mulf %173, %175 : vector<32x256xf32>
    %c3_106 = arith.constant 3 : index
    %c0_107 = arith.constant 0 : index
    %c0_108 = arith.constant 0 : index
    %177 = vector.load %arg13[%c3_106, %c0_107, %c0_108] : memref<9x32x32xbf16, #tpu.memory_space<vmem>>, vector<1x32x32xbf16>
    %178 = vector.shape_cast %177 : vector<1x32x32xbf16> to vector<32x32xbf16>
    %179 = arith.truncf %176 : vector<32x256xf32> to vector<32x256xbf16>
    %cst_109 = arith.constant dense<0.000000e+00> : vector<32x256xf32>
    %180 = tpu.matmul %178, %179, %cst_109 {dimension_numbers = #tpu.dot_dimension_numbers<[1], [0], [0], [1], [0, 0, 1, 1], [], []>} : vector<32x32xbf16>, vector<32x256xbf16>, vector<32x256xf32> -> vector<32x256xf32>
    %181 = arith.addf %172, %180 : vector<32x256xf32>
    %c4_110 = arith.constant 4 : index
    %c0_111 = arith.constant 0 : index
    %c0_112 = arith.constant 0 : index
    %182 = vector.load %arg13[%c4_110, %c0_111, %c0_112] : memref<9x32x32xbf16, #tpu.memory_space<vmem>>, vector<1x32x32xbf16>
    %183 = vector.shape_cast %182 : vector<1x32x32xbf16> to vector<32x32xbf16>
    %184 = arith.truncf %146 : vector<32x256xf32> to vector<32x256xbf16>
    %cst_113 = arith.constant dense<0.000000e+00> : vector<32x256xf32>
    %185 = tpu.matmul %183, %184, %cst_113 {dimension_numbers = #tpu.dot_dimension_numbers<[1], [0], [0], [1], [0, 0, 1, 1], [], []>} : vector<32x32xbf16>, vector<32x256xbf16>, vector<32x256xf32> -> vector<32x256xf32>
    %186 = arith.addf %181, %185 : vector<32x256xf32>
    %c255_i32_114 = arith.constant 255 : i32
    %187 = tpu.dynamic_rotate %146 by %c255_i32_114 dim 1 : vector<32x256xf32>, i32 -> vector<32x256xf32>
    %c5_115 = arith.constant 5 : index
    %c0_116 = arith.constant 0 : index
    %188 = vector.load %arg4[%c5_115, %c0_116] : memref<9x256xf32, #tpu.memory_space<vmem>>, vector<1x256xf32>
    %189 = vector.broadcast %188 : vector<1x256xf32> to vector<32x256xf32>
    %190 = arith.mulf %187, %189 : vector<32x256xf32>
    %c5_117 = arith.constant 5 : index
    %c0_118 = arith.constant 0 : index
    %c0_119 = arith.constant 0 : index
    %191 = vector.load %arg13[%c5_117, %c0_118, %c0_119] : memref<9x32x32xbf16, #tpu.memory_space<vmem>>, vector<1x32x32xbf16>
    %192 = vector.shape_cast %191 : vector<1x32x32xbf16> to vector<32x32xbf16>
    %193 = arith.truncf %190 : vector<32x256xf32> to vector<32x256xbf16>
    %cst_120 = arith.constant dense<0.000000e+00> : vector<32x256xf32>
    %194 = tpu.matmul %192, %193, %cst_120 {dimension_numbers = #tpu.dot_dimension_numbers<[1], [0], [0], [1], [0, 0, 1, 1], [], []>} : vector<32x32xbf16>, vector<32x256xbf16>, vector<32x256xf32> -> vector<32x256xf32>
    %195 = arith.addf %186, %194 : vector<32x256xf32>
    %c241_i32_121 = arith.constant 241 : i32
    %196 = tpu.dynamic_rotate %146 by %c241_i32_121 dim 1 : vector<32x256xf32>, i32 -> vector<32x256xf32>
    %c6_122 = arith.constant 6 : index
    %c0_123 = arith.constant 0 : index
    %197 = vector.load %arg4[%c6_122, %c0_123] : memref<9x256xf32, #tpu.memory_space<vmem>>, vector<1x256xf32>
    %198 = vector.broadcast %197 : vector<1x256xf32> to vector<32x256xf32>
    %199 = arith.mulf %196, %198 : vector<32x256xf32>
    %c6_124 = arith.constant 6 : index
    %c0_125 = arith.constant 0 : index
    %c0_126 = arith.constant 0 : index
    %200 = vector.load %arg13[%c6_124, %c0_125, %c0_126] : memref<9x32x32xbf16, #tpu.memory_space<vmem>>, vector<1x32x32xbf16>
    %201 = vector.shape_cast %200 : vector<1x32x32xbf16> to vector<32x32xbf16>
    %202 = arith.truncf %199 : vector<32x256xf32> to vector<32x256xbf16>
    %cst_127 = arith.constant dense<0.000000e+00> : vector<32x256xf32>
    %203 = tpu.matmul %201, %202, %cst_127 {dimension_numbers = #tpu.dot_dimension_numbers<[1], [0], [0], [1], [0, 0, 1, 1], [], []>} : vector<32x32xbf16>, vector<32x256xbf16>, vector<32x256xf32> -> vector<32x256xf32>
    %204 = arith.addf %195, %203 : vector<32x256xf32>
    %c240_i32_128 = arith.constant 240 : i32
    %205 = tpu.dynamic_rotate %146 by %c240_i32_128 dim 1 : vector<32x256xf32>, i32 -> vector<32x256xf32>
    %c7_129 = arith.constant 7 : index
    %c0_130 = arith.constant 0 : index
    %206 = vector.load %arg4[%c7_129, %c0_130] : memref<9x256xf32, #tpu.memory_space<vmem>>, vector<1x256xf32>
    %207 = vector.broadcast %206 : vector<1x256xf32> to vector<32x256xf32>
    %208 = arith.mulf %205, %207 : vector<32x256xf32>
    %c7_131 = arith.constant 7 : index
    %c0_132 = arith.constant 0 : index
    %c0_133 = arith.constant 0 : index
    %209 = vector.load %arg13[%c7_131, %c0_132, %c0_133] : memref<9x32x32xbf16, #tpu.memory_space<vmem>>, vector<1x32x32xbf16>
    %210 = vector.shape_cast %209 : vector<1x32x32xbf16> to vector<32x32xbf16>
    %211 = arith.truncf %208 : vector<32x256xf32> to vector<32x256xbf16>
    %cst_134 = arith.constant dense<0.000000e+00> : vector<32x256xf32>
    %212 = tpu.matmul %210, %211, %cst_134 {dimension_numbers = #tpu.dot_dimension_numbers<[1], [0], [0], [1], [0, 0, 1, 1], [], []>} : vector<32x32xbf16>, vector<32x256xbf16>, vector<32x256xf32> -> vector<32x256xf32>
    %213 = arith.addf %204, %212 : vector<32x256xf32>
    %c239_i32_135 = arith.constant 239 : i32
    %214 = tpu.dynamic_rotate %146 by %c239_i32_135 dim 1 : vector<32x256xf32>, i32 -> vector<32x256xf32>
    %c8_136 = arith.constant 8 : index
    %c0_137 = arith.constant 0 : index
    %215 = vector.load %arg4[%c8_136, %c0_137] : memref<9x256xf32, #tpu.memory_space<vmem>>, vector<1x256xf32>
    %216 = vector.broadcast %215 : vector<1x256xf32> to vector<32x256xf32>
    %217 = arith.mulf %214, %216 : vector<32x256xf32>
    %c8_138 = arith.constant 8 : index
    %c0_139 = arith.constant 0 : index
    %c0_140 = arith.constant 0 : index
    %218 = vector.load %arg13[%c8_138, %c0_139, %c0_140] : memref<9x32x32xbf16, #tpu.memory_space<vmem>>, vector<1x32x32xbf16>
    %219 = vector.shape_cast %218 : vector<1x32x32xbf16> to vector<32x32xbf16>
    %220 = arith.truncf %217 : vector<32x256xf32> to vector<32x256xbf16>
    %cst_141 = arith.constant dense<0.000000e+00> : vector<32x256xf32>
    %221 = tpu.matmul %219, %220, %cst_141 {dimension_numbers = #tpu.dot_dimension_numbers<[1], [0], [0], [1], [0, 0, 1, 1], [], []>} : vector<32x32xbf16>, vector<32x256xbf16>, vector<32x256xf32> -> vector<32x256xf32>
    %222 = arith.addf %213, %221 : vector<32x256xf32>
    %c0_142 = arith.constant 0 : index
    %c0_143 = arith.constant 0 : index
    %223 = vector.load %arg14[%c0_142, %c0_143] : memref<32x1xf32, #tpu.memory_space<vmem>>, vector<32x1xf32>
    %224 = vector.broadcast %223 : vector<32x1xf32> to vector<32x256xf32>
    %225 = arith.addf %222, %224 : vector<32x256xf32>
    %c0_144 = arith.constant 0 : index
    %c0_145 = arith.constant 0 : index
    %226 = vector.load %arg15[%c0_144, %c0_145] : memref<32x8xbf16, #tpu.memory_space<vmem>>, vector<32x8xbf16>
    %227 = arith.truncf %1 : vector<8x256xf32> to vector<8x256xbf16>
    %cst_146 = arith.constant dense<0.000000e+00> : vector<32x256xf32>
    %228 = tpu.matmul %226, %227, %cst_146 {dimension_numbers = #tpu.dot_dimension_numbers<[1], [0], [0], [1], [0, 0, 1, 1], [], []>} : vector<32x8xbf16>, vector<8x256xbf16>, vector<32x256xf32> -> vector<32x256xf32>
    %c0_147 = arith.constant 0 : index
    %c0_148 = arith.constant 0 : index
    %229 = vector.load %arg16[%c0_147, %c0_148] : memref<32x1xf32, #tpu.memory_space<vmem>>, vector<32x1xf32>
    %230 = vector.broadcast %229 : vector<32x1xf32> to vector<32x256xf32>
    %231 = arith.addf %228, %230 : vector<32x256xf32>
    %232 = arith.addf %225, %231 : vector<32x256xf32>
    %cst_149 = arith.constant 0.707106769 : f32
    %233 = vector.broadcast %cst_149 : f32 to vector<32x256xf32>
    %234 = arith.mulf %232, %233 : vector<32x256xf32>
    %cst_150 = arith.constant dense<0.000000e+00> : vector<32xf32>
    %235 = vector.multi_reduction <add>, %234, %cst_150 [1] : vector<32x256xf32> to vector<32xf32>
    %236 = vector.shape_cast %235 : vector<32xf32> to vector<32x1xf32>
    %c0_151 = arith.constant 0 : index
    %c0_152 = arith.constant 0 : index
    %237 = vector.load %arg6[%c0_151, %c0_152] : memref<32x32xf32, #tpu.memory_space<vmem>>, vector<32x32xf32>
    %cst_153 = arith.constant dense<0.000000e+00> : vector<32x1xf32>
    %238 = tpu.matmul %237, %236, %cst_153 {dimension_numbers = #tpu.dot_dimension_numbers<[1], [0], [0], [1], [0, 0, 1, 1], [], []>} : vector<32x32xf32>, vector<32x1xf32>, vector<32x1xf32> -> vector<32x1xf32>
    %239 = vector.broadcast %238 : vector<32x1xf32> to vector<32x256xf32>
    %240 = arith.subf %234, %239 : vector<32x256xf32>
    %241 = arith.mulf %240, %240 : vector<32x256xf32>
    %cst_154 = arith.constant dense<0.000000e+00> : vector<32xf32>
    %242 = vector.multi_reduction <add>, %241, %cst_154 [1] : vector<32x256xf32> to vector<32xf32>
    %243 = vector.shape_cast %242 : vector<32xf32> to vector<32x1xf32>
    %c0_155 = arith.constant 0 : index
    %c0_156 = arith.constant 0 : index
    %244 = vector.load %arg6[%c0_155, %c0_156] : memref<32x32xf32, #tpu.memory_space<vmem>>, vector<32x32xf32>
    %cst_157 = arith.constant dense<0.000000e+00> : vector<32x1xf32>
    %245 = tpu.matmul %244, %243, %cst_157 {dimension_numbers = #tpu.dot_dimension_numbers<[1], [0], [0], [1], [0, 0, 1, 1], [], []>} : vector<32x32xf32>, vector<32x1xf32>, vector<32x1xf32> -> vector<32x1xf32>
    %cst_158 = arith.constant 9.99999974E-6 : f32
    %246 = vector.broadcast %cst_158 : f32 to vector<32x1xf32>
    %247 = arith.addf %245, %246 : vector<32x1xf32>
    %248 = math.rsqrt %247 : vector<32x1xf32>
    %249 = vector.broadcast %248 : vector<32x1xf32> to vector<32x256xf32>
    %250 = arith.mulf %240, %249 : vector<32x256xf32>
    %c0_159 = arith.constant 0 : index
    %c0_160 = arith.constant 0 : index
    %251 = vector.load %arg17[%c0_159, %c0_160] : memref<32x1xf32, #tpu.memory_space<vmem>>, vector<32x1xf32>
    %252 = vector.broadcast %251 : vector<32x1xf32> to vector<32x256xf32>
    %253 = arith.mulf %250, %252 : vector<32x256xf32>
    %c0_161 = arith.constant 0 : index
    %c0_162 = arith.constant 0 : index
    %254 = vector.load %arg18[%c0_161, %c0_162] : memref<32x1xf32, #tpu.memory_space<vmem>>, vector<32x1xf32>
    %255 = vector.broadcast %254 : vector<32x1xf32> to vector<32x256xf32>
    %256 = arith.addf %253, %255 : vector<32x256xf32>
    %c0_163 = arith.constant 0 : index
    %c0_164 = arith.constant 0 : index
    %257 = vector.load %arg19[%c0_163, %c0_164] : memref<96x32xbf16, #tpu.memory_space<vmem>>, vector<96x32xbf16>
    %258 = arith.truncf %256 : vector<32x256xf32> to vector<32x256xbf16>
    %cst_165 = arith.constant dense<0.000000e+00> : vector<96x256xf32>
    %259 = tpu.matmul %257, %258, %cst_165 {dimension_numbers = #tpu.dot_dimension_numbers<[1], [0], [0], [1], [0, 0, 1, 1], [], []>} : vector<96x32xbf16>, vector<32x256xbf16>, vector<96x256xf32> -> vector<96x256xf32>
    %c0_166 = arith.constant 0 : index
    %c0_167 = arith.constant 0 : index
    %260 = vector.load %arg20[%c0_166, %c0_167] : memref<96x1xf32, #tpu.memory_space<vmem>>, vector<96x1xf32>
    %261 = vector.broadcast %260 : vector<96x1xf32> to vector<96x256xf32>
    %262 = arith.addf %259, %261 : vector<96x256xf32>
    %263 = vector.extract_strided_slice %262 {offsets = [0, 0], sizes = [8, 256], strides = [1, 1]} : vector<96x256xf32> to vector<8x256xf32>
    %264 = vector.extract_strided_slice %262 {offsets = [8, 0], sizes = [8, 256], strides = [1, 1]} : vector<96x256xf32> to vector<8x256xf32>
    %265 = vector.extract_strided_slice %262 {offsets = [16, 0], sizes = [8, 256], strides = [1, 1]} : vector<96x256xf32> to vector<8x256xf32>
    %266 = arith.truncf %263 : vector<8x256xf32> to vector<8x256xbf16>
    %267 = arith.truncf %264 : vector<8x256xf32> to vector<8x256xbf16>
    %cst_168 = arith.constant dense<0.000000e+00> : vector<256x256xf32>
    %268 = tpu.matmul %266, %267, %cst_168 {dimension_numbers = #tpu.dot_dimension_numbers<[0], [0], [1], [1], [0, 1, 1, 1], [], []>} : vector<8x256xbf16>, vector<8x256xbf16>, vector<256x256xf32> -> vector<256x256xf32>
    %cst_169 = arith.constant dense<0xFF800000> : vector<256xf32>
    %269 = vector.multi_reduction <maximumf>, %268, %cst_169 [1] : vector<256x256xf32> to vector<256xf32>
    %270 = vector.shape_cast %269 : vector<256xf32> to vector<256x1xf32>
    %271 = vector.broadcast %270 : vector<256x1xf32> to vector<256x256xf32>
    %272 = arith.subf %268, %271 : vector<256x256xf32>
    %273 = math.exp %272 : vector<256x256xf32>
    %cst_170 = arith.constant dense<0.000000e+00> : vector<256xf32>
    %274 = vector.multi_reduction <add>, %273, %cst_170 [1] : vector<256x256xf32> to vector<256xf32>
    %275 = vector.shape_cast %274 : vector<256xf32> to vector<256x1xf32>
    %276 = tpu.reciprocal %275 {approx = true} : vector<256x1xf32> -> vector<256x1xf32>
    %277 = vector.broadcast %276 : vector<256x1xf32> to vector<256x256xf32>
    %278 = arith.mulf %273, %277 : vector<256x256xf32>
    %279 = arith.truncf %265 : vector<8x256xf32> to vector<8x256xbf16>
    %280 = arith.truncf %278 : vector<256x256xf32> to vector<256x256xbf16>
    %cst_171 = arith.constant dense<0.000000e+00> : vector<8x256xf32>
    %281 = tpu.matmul %279, %280, %cst_171 {dimension_numbers = #tpu.dot_dimension_numbers<[1], [1], [0], [0], [0, 0, 1, 0], [], []>} : vector<8x256xbf16>, vector<256x256xbf16>, vector<8x256xf32> -> vector<8x256xf32>
    %282 = vector.extract_strided_slice %262 {offsets = [24, 0], sizes = [8, 256], strides = [1, 1]} : vector<96x256xf32> to vector<8x256xf32>
    %283 = vector.extract_strided_slice %262 {offsets = [32, 0], sizes = [8, 256], strides = [1, 1]} : vector<96x256xf32> to vector<8x256xf32>
    %284 = vector.extract_strided_slice %262 {offsets = [40, 0], sizes = [8, 256], strides = [1, 1]} : vector<96x256xf32> to vector<8x256xf32>
    %285 = arith.truncf %282 : vector<8x256xf32> to vector<8x256xbf16>
    %286 = arith.truncf %283 : vector<8x256xf32> to vector<8x256xbf16>
    %cst_172 = arith.constant dense<0.000000e+00> : vector<256x256xf32>
    %287 = tpu.matmul %285, %286, %cst_172 {dimension_numbers = #tpu.dot_dimension_numbers<[0], [0], [1], [1], [0, 1, 1, 1], [], []>} : vector<8x256xbf16>, vector<8x256xbf16>, vector<256x256xf32> -> vector<256x256xf32>
    %cst_173 = arith.constant dense<0xFF800000> : vector<256xf32>
    %288 = vector.multi_reduction <maximumf>, %287, %cst_173 [1] : vector<256x256xf32> to vector<256xf32>
    %289 = vector.shape_cast %288 : vector<256xf32> to vector<256x1xf32>
    %290 = vector.broadcast %289 : vector<256x1xf32> to vector<256x256xf32>
    %291 = arith.subf %287, %290 : vector<256x256xf32>
    %292 = math.exp %291 : vector<256x256xf32>
    %cst_174 = arith.constant dense<0.000000e+00> : vector<256xf32>
    %293 = vector.multi_reduction <add>, %292, %cst_174 [1] : vector<256x256xf32> to vector<256xf32>
    %294 = vector.shape_cast %293 : vector<256xf32> to vector<256x1xf32>
    %295 = tpu.reciprocal %294 {approx = true} : vector<256x1xf32> -> vector<256x1xf32>
    %296 = vector.broadcast %295 : vector<256x1xf32> to vector<256x256xf32>
    %297 = arith.mulf %292, %296 : vector<256x256xf32>
    %298 = arith.truncf %284 : vector<8x256xf32> to vector<8x256xbf16>
    %299 = arith.truncf %297 : vector<256x256xf32> to vector<256x256xbf16>
    %cst_175 = arith.constant dense<0.000000e+00> : vector<8x256xf32>
    %300 = tpu.matmul %298, %299, %cst_175 {dimension_numbers = #tpu.dot_dimension_numbers<[1], [1], [0], [0], [0, 0, 1, 0], [], []>} : vector<8x256xbf16>, vector<256x256xbf16>, vector<8x256xf32> -> vector<8x256xf32>
    %301 = vector.extract_strided_slice %262 {offsets = [48, 0], sizes = [8, 256], strides = [1, 1]} : vector<96x256xf32> to vector<8x256xf32>
    %302 = vector.extract_strided_slice %262 {offsets = [56, 0], sizes = [8, 256], strides = [1, 1]} : vector<96x256xf32> to vector<8x256xf32>
    %303 = vector.extract_strided_slice %262 {offsets = [64, 0], sizes = [8, 256], strides = [1, 1]} : vector<96x256xf32> to vector<8x256xf32>
    %304 = arith.truncf %301 : vector<8x256xf32> to vector<8x256xbf16>
    %305 = arith.truncf %302 : vector<8x256xf32> to vector<8x256xbf16>
    %cst_176 = arith.constant dense<0.000000e+00> : vector<256x256xf32>
    %306 = tpu.matmul %304, %305, %cst_176 {dimension_numbers = #tpu.dot_dimension_numbers<[0], [0], [1], [1], [0, 1, 1, 1], [], []>} : vector<8x256xbf16>, vector<8x256xbf16>, vector<256x256xf32> -> vector<256x256xf32>
    %cst_177 = arith.constant dense<0xFF800000> : vector<256xf32>
    %307 = vector.multi_reduction <maximumf>, %306, %cst_177 [1] : vector<256x256xf32> to vector<256xf32>
    %308 = vector.shape_cast %307 : vector<256xf32> to vector<256x1xf32>
    %309 = vector.broadcast %308 : vector<256x1xf32> to vector<256x256xf32>
    %310 = arith.subf %306, %309 : vector<256x256xf32>
    %311 = math.exp %310 : vector<256x256xf32>
    %cst_178 = arith.constant dense<0.000000e+00> : vector<256xf32>
    %312 = vector.multi_reduction <add>, %311, %cst_178 [1] : vector<256x256xf32> to vector<256xf32>
    %313 = vector.shape_cast %312 : vector<256xf32> to vector<256x1xf32>
    %314 = tpu.reciprocal %313 {approx = true} : vector<256x1xf32> -> vector<256x1xf32>
    %315 = vector.broadcast %314 : vector<256x1xf32> to vector<256x256xf32>
    %316 = arith.mulf %311, %315 : vector<256x256xf32>
    %317 = arith.truncf %303 : vector<8x256xf32> to vector<8x256xbf16>
    %318 = arith.truncf %316 : vector<256x256xf32> to vector<256x256xbf16>
    %cst_179 = arith.constant dense<0.000000e+00> : vector<8x256xf32>
    %319 = tpu.matmul %317, %318, %cst_179 {dimension_numbers = #tpu.dot_dimension_numbers<[1], [1], [0], [0], [0, 0, 1, 0], [], []>} : vector<8x256xbf16>, vector<256x256xbf16>, vector<8x256xf32> -> vector<8x256xf32>
    %320 = vector.extract_strided_slice %262 {offsets = [72, 0], sizes = [8, 256], strides = [1, 1]} : vector<96x256xf32> to vector<8x256xf32>
    %321 = vector.extract_strided_slice %262 {offsets = [80, 0], sizes = [8, 256], strides = [1, 1]} : vector<96x256xf32> to vector<8x256xf32>
    %322 = vector.extract_strided_slice %262 {offsets = [88, 0], sizes = [8, 256], strides = [1, 1]} : vector<96x256xf32> to vector<8x256xf32>
    %323 = arith.truncf %320 : vector<8x256xf32> to vector<8x256xbf16>
    %324 = arith.truncf %321 : vector<8x256xf32> to vector<8x256xbf16>
    %cst_180 = arith.constant dense<0.000000e+00> : vector<256x256xf32>
    %325 = tpu.matmul %323, %324, %cst_180 {dimension_numbers = #tpu.dot_dimension_numbers<[0], [0], [1], [1], [0, 1, 1, 1], [], []>} : vector<8x256xbf16>, vector<8x256xbf16>, vector<256x256xf32> -> vector<256x256xf32>
    %cst_181 = arith.constant dense<0xFF800000> : vector<256xf32>
    %326 = vector.multi_reduction <maximumf>, %325, %cst_181 [1] : vector<256x256xf32> to vector<256xf32>
    %327 = vector.shape_cast %326 : vector<256xf32> to vector<256x1xf32>
    %328 = vector.broadcast %327 : vector<256x1xf32> to vector<256x256xf32>
    %329 = arith.subf %325, %328 : vector<256x256xf32>
    %330 = math.exp %329 : vector<256x256xf32>
    %cst_182 = arith.constant dense<0.000000e+00> : vector<256xf32>
    %331 = vector.multi_reduction <add>, %330, %cst_182 [1] : vector<256x256xf32> to vector<256xf32>
    %332 = vector.shape_cast %331 : vector<256xf32> to vector<256x1xf32>
    %333 = tpu.reciprocal %332 {approx = true} : vector<256x1xf32> -> vector<256x1xf32>
    %334 = vector.broadcast %333 : vector<256x1xf32> to vector<256x256xf32>
    %335 = arith.mulf %330, %334 : vector<256x256xf32>
    %336 = arith.truncf %322 : vector<8x256xf32> to vector<8x256xbf16>
    %337 = arith.truncf %335 : vector<256x256xf32> to vector<256x256xbf16>
    %cst_183 = arith.constant dense<0.000000e+00> : vector<8x256xf32>
    %338 = tpu.matmul %336, %337, %cst_183 {dimension_numbers = #tpu.dot_dimension_numbers<[1], [1], [0], [0], [0, 0, 1, 0], [], []>} : vector<8x256xbf16>, vector<256x256xbf16>, vector<8x256xf32> -> vector<8x256xf32>
    %339 = tpu.concatenate %281, %300, %319, %338 in 0 : vector<8x256xf32>, vector<8x256xf32>, vector<8x256xf32>, vector<8x256xf32> -> vector<32x256xf32>
    %c0_184 = arith.constant 0 : index
    %c0_185 = arith.constant 0 : index
    %340 = vector.load %arg21[%c0_184, %c0_185] : memref<32x32xbf16, #tpu.memory_space<vmem>>, vector<32x32xbf16>
    %341 = arith.truncf %339 : vector<32x256xf32> to vector<32x256xbf16>
    %cst_186 = arith.constant dense<0.000000e+00> : vector<32x256xf32>
    %342 = tpu.matmul %340, %341, %cst_186 {dimension_numbers = #tpu.dot_dimension_numbers<[1], [0], [0], [1], [0, 0, 1, 1], [], []>} : vector<32x32xbf16>, vector<32x256xbf16>, vector<32x256xf32> -> vector<32x256xf32>
    %c0_187 = arith.constant 0 : index
    %c0_188 = arith.constant 0 : index
    %343 = vector.load %arg22[%c0_187, %c0_188] : memref<32x1xf32, #tpu.memory_space<vmem>>, vector<32x1xf32>
    %344 = vector.broadcast %343 : vector<32x1xf32> to vector<32x256xf32>
    %345 = arith.addf %342, %344 : vector<32x256xf32>
    %346 = arith.addf %234, %345 : vector<32x256xf32>
    %cst_189 = arith.constant 0.707106769 : f32
    %347 = vector.broadcast %cst_189 : f32 to vector<32x256xf32>
    %348 = arith.mulf %346, %347 : vector<32x256xf32>
    %c0_190 = arith.constant 0 : index
    %c0_191 = arith.constant 0 : index
    %c0_192 = arith.constant 0 : index
    %349 = vector.load %arg23[%c0_190, %c0_191, %c0_192] : memref<1x32x256xf32, #tpu.memory_space<vmem>>, vector<1x32x256xf32>
    %350 = vector.shape_cast %349 : vector<1x32x256xf32> to vector<32x256xf32>
    %351 = vector.shape_cast %348 : vector<32x256xf32> to vector<1x32x256xf32>
    tpu.vector_store %arg23[%c0_190, %c0_191, %c0_192], %351 {strides = array<i32>} : memref<1x32x256xf32, #tpu.memory_space<vmem>>, vector<1x32x256xf32>,
    return
  }
  func.func @transform_0(%arg0: i32) -> (i32, i32, i32) {
    %c0_i32 = arith.constant 0 : i32
    %c0_i32_0 = arith.constant 0 : i32
    %c0_i32_1 = arith.constant 0 : i32
    return %arg0, %c0_i32, %c0_i32_0 : i32, i32, i32
  }
  func.func @transform_1(%arg0: i32) -> (i32, i32, i32) {
    %c0_i32 = arith.constant 0 : i32
    %c0_i32_0 = arith.constant 0 : i32
    %c0_i32_1 = arith.constant 0 : i32
    return %arg0, %c0_i32, %c0_i32_0 : i32, i32, i32
  }
  func.func @transform_2(%arg0: i32) -> (i32, i32, i32) {
    %c0_i32 = arith.constant 0 : i32
    %c0_i32_0 = arith.constant 0 : i32
    %c0_i32_1 = arith.constant 0 : i32
    return %arg0, %c0_i32, %c0_i32_0 : i32, i32, i32
  }
  func.func @transform_3(%arg0: i32) -> (i32, i32) {
    %c0_i32 = arith.constant 0 : i32
    %c0_i32_0 = arith.constant 0 : i32
    %c0_i32_1 = arith.constant 0 : i32
    return %c0_i32, %c0_i32_0 : i32, i32
  }
  func.func @transform_4(%arg0: i32) -> (i32, i32) {
    %c0_i32 = arith.constant 0 : i32
    %c0_i32_0 = arith.constant 0 : i32
    %c0_i32_1 = arith.constant 0 : i32
    return %c0_i32, %c0_i32_0 : i32, i32
  }
  func.func @transform_5(%arg0: i32) -> (i32, i32) {
    %c0_i32 = arith.constant 0 : i32
    %c0_i32_0 = arith.constant 0 : i32
    %c0_i32_1 = arith.constant 0 : i32
    return %c0_i32, %c0_i32_0 : i32, i32
  }
  func.func @transform_6(%arg0: i32) -> (i32, i32) {
    %c0_i32 = arith.constant 0 : i32
    %c0_i32_0 = arith.constant 0 : i32
    %c0_i32_1 = arith.constant 0 : i32
    return %c0_i32, %c0_i32_0 : i32, i32
  }
  func.func @transform_7(%arg0: i32) -> (i32, i32) {
    %c0_i32 = arith.constant 0 : i32
    %c0_i32_0 = arith.constant 0 : i32
    %c0_i32_1 = arith.constant 0 : i32
    return %c0_i32, %c0_i32_0 : i32, i32
  }
  func.func @transform_8(%arg0: i32) -> (i32, i32, i32) {
    %c0_i32 = arith.constant 0 : i32
    %c0_i32_0 = arith.constant 0 : i32
    %c0_i32_1 = arith.constant 0 : i32
    %c0_i32_2 = arith.constant 0 : i32
    return %c0_i32, %c0_i32_0, %c0_i32_1 : i32, i32, i32
  }
  func.func @transform_9(%arg0: i32) -> (i32, i32) {
    %c0_i32 = arith.constant 0 : i32
    %c0_i32_0 = arith.constant 0 : i32
    %c0_i32_1 = arith.constant 0 : i32
    return %c0_i32, %c0_i32_0 : i32, i32
  }
  func.func @transform_10(%arg0: i32) -> (i32, i32) {
    %c0_i32 = arith.constant 0 : i32
    %c0_i32_0 = arith.constant 0 : i32
    %c0_i32_1 = arith.constant 0 : i32
    return %c0_i32, %c0_i32_0 : i32, i32
  }
  func.func @transform_11(%arg0: i32) -> (i32, i32) {
    %c0_i32 = arith.constant 0 : i32
    %c0_i32_0 = arith.constant 0 : i32
    %c0_i32_1 = arith.constant 0 : i32
    return %c0_i32, %c0_i32_0 : i32, i32
  }
  func.func @transform_12(%arg0: i32) -> (i32, i32, i32) {
    %c0_i32 = arith.constant 0 : i32
    %c0_i32_0 = arith.constant 0 : i32
    %c0_i32_1 = arith.constant 0 : i32
    %c0_i32_2 = arith.constant 0 : i32
    return %c0_i32, %c0_i32_0, %c0_i32_1 : i32, i32, i32
  }
  func.func @transform_13(%arg0: i32) -> (i32, i32) {
    %c0_i32 = arith.constant 0 : i32
    %c0_i32_0 = arith.constant 0 : i32
    %c0_i32_1 = arith.constant 0 : i32
    return %c0_i32, %c0_i32_0 : i32, i32
  }
  func.func @transform_14(%arg0: i32) -> (i32, i32) {
    %c0_i32 = arith.constant 0 : i32
    %c0_i32_0 = arith.constant 0 : i32
    %c0_i32_1 = arith.constant 0 : i32
    return %c0_i32, %c0_i32_0 : i32, i32
  }
  func.func @transform_15(%arg0: i32) -> (i32, i32) {
    %c0_i32 = arith.constant 0 : i32
    %c0_i32_0 = arith.constant 0 : i32
    %c0_i32_1 = arith.constant 0 : i32
    return %c0_i32, %c0_i32_0 : i32, i32
  }
  func.func @transform_16(%arg0: i32) -> (i32, i32) {
    %c0_i32 = arith.constant 0 : i32
    %c0_i32_0 = arith.constant 0 : i32
    %c0_i32_1 = arith.constant 0 : i32
    return %c0_i32, %c0_i32_0 : i32, i32
  }
  func.func @transform_17(%arg0: i32) -> (i32, i32) {
    %c0_i32 = arith.constant 0 : i32
    %c0_i32_0 = arith.constant 0 : i32
    %c0_i32_1 = arith.constant 0 : i32
    return %c0_i32, %c0_i32_0 : i32, i32
  }
  func.func @transform_18(%arg0: i32) -> (i32, i32) {
    %c0_i32 = arith.constant 0 : i32
    %c0_i32_0 = arith.constant 0 : i32
    %c0_i32_1 = arith.constant 0 : i32
    return %c0_i32, %c0_i32_0 : i32, i32
  }
  func.func @transform_19(%arg0: i32) -> (i32, i32) {
    %c0_i32 = arith.constant 0 : i32
    %c0_i32_0 = arith.constant 0 : i32
    %c0_i32_1 = arith.constant 0 : i32
    return %c0_i32, %c0_i32_0 : i32, i32
  }
  func.func @transform_20(%arg0: i32) -> (i32, i32) {
    %c0_i32 = arith.constant 0 : i32
    %c0_i32_0 = arith.constant 0 : i32
    %c0_i32_1 = arith.constant 0 : i32
    return %c0_i32, %c0_i32_0 : i32, i32
  }
  func.func @transform_21(%arg0: i32) -> (i32, i32) {
    %c0_i32 = arith.constant 0 : i32
    %c0_i32_0 = arith.constant 0 : i32
    %c0_i32_1 = arith.constant 0 : i32
    return %c0_i32, %c0_i32_0 : i32, i32
  }
  func.func @transform_22(%arg0: i32) -> (i32, i32, i32) {
    %c0_i32 = arith.constant 0 : i32
    %c0_i32_0 = arith.constant 0 : i32
    %c0_i32_1 = arith.constant 0 : i32
    return %arg0, %c0_i32, %c0_i32_0 : i32, i32, i32
  }
}

</mosaic_0001>

<llo_original>
// kernel: ncsnpp_unet_forward.1
$region0: #{ncsnpp_unet_forward.1}
  #allocation0 [shape = 'u32[]', space=smem, size = 0x4, offset = 0x4, fixed_abs, tag = 'smem constant byte address 0x4 - core index']
  #allocation1 [shape = 'u32[72,128]{1,0:T(1,128)}', space=vmem, size = 0x9000, scoped, tag = 'internal scratch']
  %s0 = inlined_call_operand.vmem [shape: f32[2,8,256], index: 0, kind: input, shape index: {}]
  %s1 = inlined_call_operand.vmem [shape: f32[2,32,1], index: 1, kind: input, shape index: {}]
  %s2 = inlined_call_operand.vmem [shape: f32[2,32,1], index: 2, kind: input, shape index: {}]
  %s3 = inlined_call_operand.vmem [shape: f32[9,256], index: 3, kind: input, shape index: {}]
  %s4 = inlined_call_operand.vmem [shape: f32[8,8], index: 4, kind: input, shape index: {}]
  %s5 = inlined_call_operand.vmem [shape: f32[32,32], index: 5, kind: input, shape index: {}]
  %s6 = inlined_call_operand.vmem [shape: f32[8,1], index: 6, kind: input, shape index: {}]
  %s7 = inlined_call_operand.vmem [shape: f32[8,1], index: 7, kind: input, shape index: {}]
  %s8 = inlined_call_operand.vmem [shape: bf16[9,32,8], index: 8, kind: input, shape index: {}]
  %s9 = inlined_call_operand.vmem [shape: f32[32,1], index: 9, kind: input, shape index: {}]
  %s10 = inlined_call_operand.vmem [shape: f32[32,1], index: 10, kind: input, shape index: {}]
  %s11 = inlined_call_operand.vmem [shape: f32[32,1], index: 11, kind: input, shape index: {}]
  %s12 = inlined_call_operand.vmem [shape: bf16[9,32,32], index: 12, kind: input, shape index: {}]
  %s13 = inlined_call_operand.vmem [shape: f32[32,1], index: 13, kind: input, shape index: {}]
  %s14 = inlined_call_operand.vmem [shape: bf16[32,8], index: 14, kind: input, shape index: {}]
  %s15 = inlined_call_operand.vmem [shape: f32[32,1], index: 15, kind: input, shape index: {}]
  %s16 = inlined_call_operand.vmem [shape: f32[32,1], index: 16, kind: input, shape index: {}]
  %s17 = inlined_call_operand.vmem [shape: f32[32,1], index: 17, kind: input, shape index: {}]
  %s18 = inlined_call_operand.vmem [shape: bf16[96,32], index: 18, kind: input, shape index: {}]
  %s19 = inlined_call_operand.vmem [shape: f32[96,1], index: 19, kind: input, shape index: {}]
  %s20 = inlined_call_operand.vmem [shape: bf16[32,32], index: 20, kind: input, shape index: {}]
  %s21 = inlined_call_operand.vmem [shape: f32[32,1], index: 21, kind: input, shape index: {}]
  %s22 = inlined_call_operand.vmem [shape: f32[2,32,256], index: 22, kind: output, shape index: {}]
  %s23 = sld [smem:[#allocation0]]
  $region121: #{ncsnpp_unet_forward.1} parent=0
    _
  %s25 = ssub.s32 1, %s23
  %s26 = scalar_select 0, %s25, %s23
  loop: start=0, step=1, limit=4
  $region2: #{ncsnpp_unet_forward.1} parent=0 // loop_pre_header
    _
  $region3: #{ncsnpp_unet_forward.1} parent=0 // loop_header
    %s28 = sphi 0, %s32
    %p29 = scmp.ge.s32.totalorder %s28, 4
    %s38 = sphi 0, %s40
    %s41 = sphi 0, %s38
    %s42 = sphi 0, %s41
    %s58 = sphi 0, %s42
    %s64 = sphi 0, %s66
    %s67 = sphi 0, %s64
    %s68 = sphi 0, %s67
    %s84 = sphi 0, %s68
    %s90 = sphi 0, %s92
    %s93 = sphi 0, %s90
    %s94 = sphi 0, %s93
    %s110 = sphi 0, %s94
    %s114 = sphi 0, %s114
    %s116 = sphi 0, %s114
    %s117 = sphi 0, %s116
    %s131 = sphi 0, %s117
    %s135 = sphi 0, %s135
    %s137 = sphi 0, %s135
    %s138 = sphi 0, %s137
    %s152 = sphi 0, %s138
    %s156 = sphi 0, %s156
    %s158 = sphi 0, %s156
    %s159 = sphi 0, %s158
    %s173 = sphi 0, %s159
    %s177 = sphi 0, %s177
    %s179 = sphi 0, %s177
    %s180 = sphi 0, %s179
    %s194 = sphi 0, %s180
    %s198 = sphi 0, %s198
    %s200 = sphi 0, %s198
    %s201 = sphi 0, %s200
    %s215 = sphi 0, %s201
    %s219 = sphi 0, %s219
    %s221 = sphi 0, %s219
    %s222 = sphi 0, %s221
    %s236 = sphi 0, %s222
    %s240 = sphi 0, %s240
    %s242 = sphi 0, %s240
    %s243 = sphi 0, %s242
    %s257 = sphi 0, %s243
    %s261 = sphi 0, %s261
    %s263 = sphi 0, %s261
    %s264 = sphi 0, %s263
    %s278 = sphi 0, %s264
    %s282 = sphi 0, %s282
    %s284 = sphi 0, %s282
    %s285 = sphi 0, %s284
    %s299 = sphi 0, %s285
    %s303 = sphi 0, %s303
    %s305 = sphi 0, %s303
    %s306 = sphi 0, %s305
    %s320 = sphi 0, %s306
    %s324 = sphi 0, %s324
    %s326 = sphi 0, %s324
    %s327 = sphi 0, %s326
    %s341 = sphi 0, %s327
    %s345 = sphi 0, %s345
    %s347 = sphi 0, %s345
    %s348 = sphi 0, %s347
    %s362 = sphi 0, %s348
    %s366 = sphi 0, %s366
    %s368 = sphi 0, %s366
    %s369 = sphi 0, %s368
    %s383 = sphi 0, %s369
    %s387 = sphi 0, %s387
    %s389 = sphi 0, %s387
    %s390 = sphi 0, %s389
    %s404 = sphi 0, %s390
    %s408 = sphi 0, %s408
    %s410 = sphi 0, %s408
    %s411 = sphi 0, %s410
    %s425 = sphi 0, %s411
    %s429 = sphi 0, %s429
    %s431 = sphi 0, %s429
    %s432 = sphi 0, %s431
    %s446 = sphi 0, %s432
    %s450 = sphi 0, %s450
    %s452 = sphi 0, %s450
    %s453 = sphi 0, %s452
    %s467 = sphi 0, %s453
    %s471 = sphi 0, %s471
    %s473 = sphi 0, %s471
    %s474 = sphi 0, %s473
    %s488 = sphi 0, %s474
    %s492 = sphi 0, %s492
    %s494 = sphi 0, %s492
    %s495 = sphi 0, %s494
    %s509 = sphi 0, %s495
    %s515 = sphi 0, %s517
    %s518 = sphi 0, %s515
    %s519 = sphi 0, %s518
    %s535 = sphi 0, %s519
  $region4: #{ncsnpp_unet_forward.1} parent=0 // loop_header_branch
    %31 = sbr.rel (%p29) target = $region8
  $region5: #{ncsnpp_unet_forward.1} parent=0 // loop_body
    %s33 = ssub.s32 %s28, 1
    %s34 = ssub.s32 %s28, 2
    %s35 = sadd.s32 %s28, 1
    %s36 = ssub.s32 %s28, %s35
    %p37 = scmp.eq.s32.totalorder %s36, 0
    %s39 = sadd.s32 %s38, 1
    %s40 = scalar_select %p37, %s38, %s39
    %p43 = pneg %p37
    %p44 = scmp.eq.s32.totalorder %s28, 1
    %p45 = por %p43, %p44
    %p46 = scmp.ne.s32.totalorder %s38, %s41
    %p47 = scmp.eq.s32.totalorder %s28, 0
    %p48 = por %p46, %p47
    %p49 = scmp.ne.s32.totalorder %s38, %s41
    %p50 = scmp.eq.s32.totalorder %s33, 1
    %p51 = por %p49, %p50
    %p52 = scmp.ne.s32.totalorder %s41, %s42
    %p53 = scmp.eq.s32.totalorder %s33, 0
    %p54 = por %p52, %p53
    %p55 = scmp.ne.s32.totalorder %s41, %s42
    %p56 = scmp.eq.s32.totalorder %s34, 1
    %p57 = por %p55, %p56
    %p59 = scmp.ne.s32.totalorder %s42, %s58
    %p60 = scmp.eq.s32.totalorder %s34, 0
    %p61 = por %p59, %p60
    %s62 = ssub.s32 %s28, %s35
    %p63 = scmp.eq.s32.totalorder %s62, 0
    %s65 = sadd.s32 %s64, 1
    %s66 = scalar_select %p63, %s64, %s65
    %p69 = pneg %p63
    %p70 = scmp.eq.s32.totalorder %s28, 1
    %p71 = por %p69, %p70
    %p72 = scmp.ne.s32.totalorder %s64, %s67
    %p73 = scmp.eq.s32.totalorder %s28, 0
    %p74 = por %p72, %p73
    %p75 = scmp.ne.s32.totalorder %s64, %s67
    %p76 = scmp.eq.s32.totalorder %s33, 1
    %p77 = por %p75, %p76
    %p78 = scmp.ne.s32.totalorder %s67, %s68
    %p79 = scmp.eq.s32.totalorder %s33, 0
    %p80 = por %p78, %p79
    %p81 = scmp.ne.s32.totalorder %s67, %s68
    %p82 = scmp.eq.s32.totalorder %s34, 1
    %p83 = por %p81, %p82
    %p85 = scmp.ne.s32.totalorder %s68, %s84
    %p86 = scmp.eq.s32.totalorder %s34, 0
    %p87 = por %p85, %p86
    %s88 = ssub.s32 %s28, %s35
    %p89 = scmp.eq.s32.totalorder %s88, 0
    %s91 = sadd.s32 %s90, 1
    %s92 = scalar_select %p89, %s90, %s91
    %p95 = pneg %p89
    %p96 = scmp.eq.s32.totalorder %s28, 1
    %p97 = por %p95, %p96
    %p98 = scmp.ne.s32.totalorder %s90, %s93
    %p99 = scmp.eq.s32.totalorder %s28, 0
    %p100 = por %p98, %p99
    %p101 = scmp.ne.s32.totalorder %s90, %s93
    %p102 = scmp.eq.s32.totalorder %s33, 1
    %p103 = por %p101, %p102
    %p104 = scmp.ne.s32.totalorder %s93, %s94
    %p105 = scmp.eq.s32.totalorder %s33, 0
    %p106 = por %p104, %p105
    %p107 = scmp.ne.s32.totalorder %s93, %s94
    %p108 = scmp.eq.s32.totalorder %s34, 1
    %p109 = por %p107, %p108
    %p111 = scmp.ne.s32.totalorder %s94, %s110
    %p112 = scmp.eq.s32.totalorder %s34, 0
    %p113 = por %p111, %p112
    %s115 = sadd.s32 %s114, 1
    %p118 = scmp.eq.s32.totalorder %s28, 1
    %p119 = scmp.ne.s32.totalorder %s114, %s116
    %p120 = scmp.eq.s32.totalorder %s28, 0
    %p121 = por %p119, %p120
    %p122 = scmp.ne.s32.totalorder %s114, %s116
    %p123 = scmp.eq.s32.totalorder %s33, 1
    %p124 = por %p122, %p123
    %p125 = scmp.ne.s32.totalorder %s116, %s117
    %p126 = scmp.eq.s32.totalorder %s33, 0
    %p127 = por %p125, %p126
    %p128 = scmp.ne.s32.totalorder %s116, %s117
    %p129 = scmp.eq.s32.totalorder %s34, 1
    %p130 = por %p128, %p129
    %p132 = scmp.ne.s32.totalorder %s117, %s131
    %p133 = scmp.eq.s32.totalorder %s34, 0
    %p134 = por %p132, %p133
    %s136 = sadd.s32 %s135, 1
    %p139 = scmp.eq.s32.totalorder %s28, 1
    %p140 = scmp.ne.s32.totalorder %s135, %s137
    %p141 = scmp.eq.s32.totalorder %s28, 0
    %p142 = por %p140, %p141
    %p143 = scmp.ne.s32.totalorder %s135, %s137
    %p144 = scmp.eq.s32.totalorder %s33, 1
    %p145 = por %p143, %p144
    %p146 = scmp.ne.s32.totalorder %s137, %s138
    %p147 = scmp.eq.s32.totalorder %s33, 0
    %p148 = por %p146, %p147
    %p149 = scmp.ne.s32.totalorder %s137, %s138
    %p150 = scmp.eq.s32.totalorder %s34, 1
    %p151 = por %p149, %p150
    %p153 = scmp.ne.s32.totalorder %s138, %s152
    %p154 = scmp.eq.s32.totalorder %s34, 0
    %p155 = por %p153, %p154
    %s157 = sadd.s32 %s156, 1
    %p160 = scmp.eq.s32.totalorder %s28, 1
    %p161 = scmp.ne.s32.totalorder %s156, %s158
    %p162 = scmp.eq.s32.totalorder %s28, 0
    %p163 = por %p161, %p162
    %p164 = scmp.ne.s32.totalorder %s156, %s158
    %p165 = scmp.eq.s32.totalorder %s33, 1
    %p166 = por %p164, %p165
    %p167 = scmp.ne.s32.totalorder %s158, %s159
    %p168 = scmp.eq.s32.totalorder %s33, 0
    %p169 = por %p167, %p168
    %p170 = scmp.ne.s32.totalorder %s158, %s159
    %p171 = scmp.eq.s32.totalorder %s34, 1
    %p172 = por %p170, %p171
    %p174 = scmp.ne.s32.totalorder %s159, %s173
    %p175 = scmp.eq.s32.totalorder %s34, 0
    %p176 = por %p174, %p175
    %s178 = sadd.s32 %s177, 1
    %p181 = scmp.eq.s32.totalorder %s28, 1
    %p182 = scmp.ne.s32.totalorder %s177, %s179
    %p183 = scmp.eq.s32.totalorder %s28, 0
    %p184 = por %p182, %p183
    %p185 = scmp.ne.s32.totalorder %s177, %s179
    %p186 = scmp.eq.s32.totalorder %s33, 1
    %p187 = por %p185, %p186
    %p188 = scmp.ne.s32.totalorder %s179, %s180
    %p189 = scmp.eq.s32.totalorder %s33, 0
    %p190 = por %p188, %p189
    %p191 = scmp.ne.s32.totalorder %s179, %s180
    %p192 = scmp.eq.s32.totalorder %s34, 1
    %p193 = por %p191, %p192
    %p195 = scmp.ne.s32.totalorder %s180, %s194
    %p196 = scmp.eq.s32.totalorder %s34, 0
    %p197 = por %p195, %p196
    %s199 = sadd.s32 %s198, 1
    %p202 = scmp.eq.s32.totalorder %s28, 1
    %p203 = scmp.ne.s32.totalorder %s198, %s200
    %p204 = scmp.eq.s32.totalorder %s28, 0
    %p205 = por %p203, %p204
    %p206 = scmp.ne.s32.totalorder %s198, %s200
    %p207 = scmp.eq.s32.totalorder %s33, 1
    %p208 = por %p206, %p207
    %p209 = scmp.ne.s32.totalorder %s200, %s201
    %p210 = scmp.eq.s32.totalorder %s33, 0
    %p211 = por %p209, %p210
    %p212 = scmp.ne.s32.totalorder %s200, %s201
    %p213 = scmp.eq.s32.totalorder %s34, 1
    %p214 = por %p212, %p213
    %p216 = scmp.ne.s32.totalorder %s201, %s215
    %p217 = scmp.eq.s32.totalorder %s34, 0
    %p218 = por %p216, %p217
    %s220 = sadd.s32 %s219, 1
    %p223 = scmp.eq.s32.totalorder %s28, 1
    %p224 = scmp.ne.s32.totalorder %s219, %s221
    %p225 = scmp.eq.s32.totalorder %s28, 0
    %p226 = por %p224, %p225
    %p227 = scmp.ne.s32.totalorder %s219, %s221
    %p228 = scmp.eq.s32.totalorder %s33, 1
    %p229 = por %p227, %p228
    %p230 = scmp.ne.s32.totalorder %s221, %s222
    %p231 = scmp.eq.s32.totalorder %s33, 0
    %p232 = por %p230, %p231
    %p233 = scmp.ne.s32.totalorder %s221, %s222
    %p234 = scmp.eq.s32.totalorder %s34, 1
    %p235 = por %p233, %p234
    %p237 = scmp.ne.s32.totalorder %s222, %s236
    %p238 = scmp.eq.s32.totalorder %s34, 0
    %p239 = por %p237, %p238
    %s241 = sadd.s32 %s240, 1
    %p244 = scmp.eq.s32.totalorder %s28, 1
    %p245 = scmp.ne.s32.totalorder %s240, %s242
    %p246 = scmp.eq.s32.totalorder %s28, 0
    %p247 = por %p245, %p246
    %p248 = scmp.ne.s32.totalorder %s240, %s242
    %p249 = scmp.eq.s32.totalorder %s33, 1
    %p250 = por %p248, %p249
    %p251 = scmp.ne.s32.totalorder %s242, %s243
    %p252 = scmp.eq.s32.totalorder %s33, 0
    %p253 = por %p251, %p252
    %p254 = scmp.ne.s32.totalorder %s242, %s243
    %p255 = scmp.eq.s32.totalorder %s34, 1
    %p256 = por %p254, %p255
    %p258 = scmp.ne.s32.totalorder %s243, %s257
    %p259 = scmp.eq.s32.totalorder %s34, 0
    %p260 = por %p258, %p259
    %s262 = sadd.s32 %s261, 1
    %p265 = scmp.eq.s32.totalorder %s28, 1
    %p266 = scmp.ne.s32.totalorder %s261, %s263
    %p267 = scmp.eq.s32.totalorder %s28, 0
    %p268 = por %p266, %p267
    %p269 = scmp.ne.s32.totalorder %s261, %s263
    %p270 = scmp.eq.s32.totalorder %s33, 1
    %p271 = por %p269, %p270
    %p272 = scmp.ne.s32.totalorder %s263, %s264
    %p273 = scmp.eq.s32.totalorder %s33, 0
    %p274 = por %p272, %p273
    %p275 = scmp.ne.s32.totalorder %s263, %s264
    %p276 = scmp.eq.s32.totalorder %s34, 1
    %p277 = por %p275, %p276
    %p279 = scmp.ne.s32.totalorder %s264, %s278
    %p280 = scmp.eq.s32.totalorder %s34, 0
    %p281 = por %p279, %p280
    %s283 = sadd.s32 %s282, 1
    %p286 = scmp.eq.s32.totalorder %s28, 1
    %p287 = scmp.ne.s32.totalorder %s282, %s284
    %p288 = scmp.eq.s32.totalorder %s28, 0
    %p289 = por %p287, %p288
    %p290 = scmp.ne.s32.totalorder %s282, %s284
    %p291 = scmp.eq.s32.totalorder %s33, 1
    %p292 = por %p290, %p291
    %p293 = scmp.ne.s32.totalorder %s284, %s285
    %p294 = scmp.eq.s32.totalorder %s33, 0
    %p295 = por %p293, %p294
    %p296 = scmp.ne.s32.totalorder %s284, %s285
    %p297 = scmp.eq.s32.totalorder %s34, 1
    %p298 = por %p296, %p297
    %p300 = scmp.ne.s32.totalorder %s285, %s299
    %p301 = scmp.eq.s32.totalorder %s34, 0
    %p302 = por %p300, %p301
    %s304 = sadd.s32 %s303, 1
    %p307 = scmp.eq.s32.totalorder %s28, 1
    %p308 = scmp.ne.s32.totalorder %s303, %s305
    %p309 = scmp.eq.s32.totalorder %s28, 0
    %p310 = por %p308, %p309
    %p311 = scmp.ne.s32.totalorder %s303, %s305
    %p312 = scmp.eq.s32.totalorder %s33, 1
    %p313 = por %p311, %p312
    %p314 = scmp.ne.s32.totalorder %s305, %s306
    %p315 = scmp.eq.s32.totalorder %s33, 0
    %p316 = por %p314, %p315
    %p317 = scmp.ne.s32.totalorder %s305, %s306
    %p318 = scmp.eq.s32.totalorder %s34, 1
    %p319 = por %p317, %p318
    %p321 = scmp.ne.s32.totalorder %s306, %s320
    %p322 = scmp.eq.s32.totalorder %s34, 0
    %p323 = por %p321, %p322
    %s325 = sadd.s32 %s324, 1
    %p328 = scmp.eq.s32.totalorder %s28, 1
    %p329 = scmp.ne.s32.totalorder %s324, %s326
    %p330 = scmp.eq.s32.totalorder %s28, 0
    %p331 = por %p329, %p330
    %p332 = scmp.ne.s32.totalorder %s324, %s326
    %p333 = scmp.eq.s32.totalorder %s33, 1
    %p334 = por %p332, %p333
    %p335 = scmp.ne.s32.totalorder %s326, %s327
    %p336 = scmp.eq.s32.totalorder %s33, 0
    %p337 = por %p335, %p336
    %p338 = scmp.ne.s32.totalorder %s326, %s327
    %p339 = scmp.eq.s32.totalorder %s34, 1
    %p340 = por %p338, %p339
    %p342 = scmp.ne.s32.totalorder %s327, %s341
    %p343 = scmp.eq.s32.totalorder %s34, 0
    %p344 = por %p342, %p343
    %s346 = sadd.s32 %s345, 1
    %p349 = scmp.eq.s32.totalorder %s28, 1
    %p350 = scmp.ne.s32.totalorder %s345, %s347
    %p351 = scmp.eq.s32.totalorder %s28, 0
    %p352 = por %p350, %p351
    %p353 = scmp.ne.s32.totalorder %s345, %s347
    %p354 = scmp.eq.s32.totalorder %s33, 1
    %p355 = por %p353, %p354
    %p356 = scmp.ne.s32.totalorder %s347, %s348
    %p357 = scmp.eq.s32.totalorder %s33, 0
    %p358 = por %p356, %p357
    %p359 = scmp.ne.s32.totalorder %s347, %s348
    %p360 = scmp.eq.s32.totalorder %s34, 1
    %p361 = por %p359, %p360
    %p363 = scmp.ne.s32.totalorder %s348, %s362
    %p364 = scmp.eq.s32.totalorder %s34, 0
    %p365 = por %p363, %p364
    %s367 = sadd.s32 %s366, 1
    %p370 = scmp.eq.s32.totalorder %s28, 1
    %p371 = scmp.ne.s32.totalorder %s366, %s368
    %p372 = scmp.eq.s32.totalorder %s28, 0
    %p373 = por %p371, %p372
    %p374 = scmp.ne.s32.totalorder %s366, %s368
    %p375 = scmp.eq.s32.totalorder %s33, 1
    %p376 = por %p374, %p375
    %p377 = scmp.ne.s32.totalorder %s368, %s369
    %p378 = scmp.eq.s32.totalorder %s33, 0
    %p379 = por %p377, %p378
    %p380 = scmp.ne.s32.totalorder %s368, %s369
    %p381 = scmp.eq.s32.totalorder %s34, 1
    %p382 = por %p380, %p381
    %p384 = scmp.ne.s32.totalorder %s369, %s383
    %p385 = scmp.eq.s32.totalorder %s34, 0
    %p386 = por %p384, %p385
    %s388 = sadd.s32 %s387, 1
    %p391 = scmp.eq.s32.totalorder %s28, 1
    %p392 = scmp.ne.s32.totalorder %s387, %s389
    %p393 = scmp.eq.s32.totalorder %s28, 0
    %p394 = por %p392, %p393
    %p395 = scmp.ne.s32.totalorder %s387, %s389
    %p396 = scmp.eq.s32.totalorder %s33, 1
    %p397 = por %p395, %p396
    %p398 = scmp.ne.s32.totalorder %s389, %s390
    %p399 = scmp.eq.s32.totalorder %s33, 0
    %p400 = por %p398, %p399
    %p401 = scmp.ne.s32.totalorder %s389, %s390
    %p402 = scmp.eq.s32.totalorder %s34, 1
    %p403 = por %p401, %p402
    %p405 = scmp.ne.s32.totalorder %s390, %s404
    %p406 = scmp.eq.s32.totalorder %s34, 0
    %p407 = por %p405, %p406
    %s409 = sadd.s32 %s408, 1
    %p412 = scmp.eq.s32.totalorder %s28, 1
    %p413 = scmp.ne.s32.totalorder %s408, %s410
    %p414 = scmp.eq.s32.totalorder %s28, 0
    %p415 = por %p413, %p414
    %p416 = scmp.ne.s32.totalorder %s408, %s410
    %p417 = scmp.eq.s32.totalorder %s33, 1
    %p418 = por %p416, %p417
    %p419 = scmp.ne.s32.totalorder %s410, %s411
    %p420 = scmp.eq.s32.totalorder %s33, 0
    %p421 = por %p419, %p420
    %p422 = scmp.ne.s32.totalorder %s410, %s411
    %p423 = scmp.eq.s32.totalorder %s34, 1
    %p424 = por %p422, %p423
    %p426 = scmp.ne.s32.totalorder %s411, %s425
    %p427 = scmp.eq.s32.totalorder %s34, 0
    %p428 = por %p426, %p427
    %s430 = sadd.s32 %s429, 1
    %p433 = scmp.eq.s32.totalorder %s28, 1
    %p434 = scmp.ne.s32.totalorder %s429, %s431
    %p435 = scmp.eq.s32.totalorder %s28, 0
    %p436 = por %p434, %p435
    %p437 = scmp.ne.s32.totalorder %s429, %s431
    %p438 = scmp.eq.s32.totalorder %s33, 1
    %p439 = por %p437, %p438
    %p440 = scmp.ne.s32.totalorder %s431, %s432
    %p441 = scmp.eq.s32.totalorder %s33, 0
    %p442 = por %p440, %p441
    %p443 = scmp.ne.s32.totalorder %s431, %s432
    %p444 = scmp.eq.s32.totalorder %s34, 1
    %p445 = por %p443, %p444
    %p447 = scmp.ne.s32.totalorder %s432, %s446
    %p448 = scmp.eq.s32.totalorder %s34, 0
    %p449 = por %p447, %p448
    %s451 = sadd.s32 %s450, 1
    %p454 = scmp.eq.s32.totalorder %s28, 1
    %p455 = scmp.ne.s32.totalorder %s450, %s452
    %p456 = scmp.eq.s32.totalorder %s28, 0
    %p457 = por %p455, %p456
    %p458 = scmp.ne.s32.totalorder %s450, %s452
    %p459 = scmp.eq.s32.totalorder %s33, 1
    %p460 = por %p458, %p459
    %p461 = scmp.ne.s32.totalorder %s452, %s453
    %p462 = scmp.eq.s32.totalorder %s33, 0
    %p463 = por %p461, %p462
    %p464 = scmp.ne.s32.totalorder %s452, %s453
    %p465 = scmp.eq.s32.totalorder %s34, 1
    %p466 = por %p464, %p465
    %p468 = scmp.ne.s32.totalorder %s453, %s467
    %p469 = scmp.eq.s32.totalorder %s34, 0
    %p470 = por %p468, %p469
    %s472 = sadd.s32 %s471, 1
    %p475 = scmp.eq.s32.totalorder %s28, 1
    %p476 = scmp.ne.s32.totalorder %s471, %s473
    %p477 = scmp.eq.s32.totalorder %s28, 0
    %p478 = por %p476, %p477
    %p479 = scmp.ne.s32.totalorder %s471, %s473
    %p480 = scmp.eq.s32.totalorder %s33, 1
    %p481 = por %p479, %p480
    %p482 = scmp.ne.s32.totalorder %s473, %s474
    %p483 = scmp.eq.s32.totalorder %s33, 0
    %p484 = por %p482, %p483
    %p485 = scmp.ne.s32.totalorder %s473, %s474
    %p486 = scmp.eq.s32.totalorder %s34, 1
    %p487 = por %p485, %p486
    %p489 = scmp.ne.s32.totalorder %s474, %s488
    %p490 = scmp.eq.s32.totalorder %s34, 0
    %p491 = por %p489, %p490
    %s493 = sadd.s32 %s492, 1
    %p496 = scmp.eq.s32.totalorder %s28, 1
    %p497 = scmp.ne.s32.totalorder %s492, %s494
    %p498 = scmp.eq.s32.totalorder %s28, 0
    %p499 = por %p497, %p498
    %p500 = scmp.ne.s32.totalorder %s492, %s494
    %p501 = scmp.eq.s32.totalorder %s33, 1
    %p502 = por %p500, %p501
    %p503 = scmp.ne.s32.totalorder %s494, %s495
    %p504 = scmp.eq.s32.totalorder %s33, 0
    %p505 = por %p503, %p504
    %p506 = scmp.ne.s32.totalorder %s494, %s495
    %p507 = scmp.eq.s32.totalorder %s34, 1
    %p508 = por %p506, %p507
    %p510 = scmp.ne.s32.totalorder %s495, %s509
    %p511 = scmp.eq.s32.totalorder %s34, 0
    %p512 = por %p510, %p511
    %s513 = ssub.s32 %s28, %s35
    %p514 = scmp.eq.s32.totalorder %s513, 0
    %s516 = sadd.s32 %s515, 1
    %s517 = scalar_select %p514, %s515, %s516
    %p520 = pneg %p514
    %p521 = scmp.eq.s32.totalorder %s28, 1
    %p522 = por %p520, %p521
    %p523 = scmp.ne.s32.totalorder %s515, %s518
    %p524 = scmp.eq.s32.totalorder %s28, 0
    %p525 = por %p523, %p524
    %p526 = scmp.ne.s32.totalorder %s515, %s518
    %p527 = scmp.eq.s32.totalorder %s33, 1
    %p528 = por %p526, %p527
    %p529 = scmp.ne.s32.totalorder %s518, %s519
    %p530 = scmp.eq.s32.totalorder %s33, 0
    %p531 = por %p529, %p530
    %p532 = scmp.ne.s32.totalorder %s518, %s519
    %p533 = scmp.eq.s32.totalorder %s34, 1
    %p534 = por %p532, %p533
    %p536 = scmp.ne.s32.totalorder %s519, %s535
    %p537 = scmp.eq.s32.totalorder %s34, 0
    %p538 = por %p536, %p537
    %p539 = scmp.le.s32.totalorder 1, %s28
    %p540 = scmp.lt.s32.totalorder %s28, 3
    %p541 = pnand %p539, %p540
    %p542 = pneg %p541
    // Predicated region
    $region9: #{ncsnpp_unet_forward.1} parent=5 // pred_check
      _
    $region10: #{ncsnpp_unet_forward.1} parent=5 // pred_check_branch
      %544 = sbr.rel (%p541) target = $region12
    $region11: #{ncsnpp_unet_forward.1} parent=5 // pred_region
      %s545 = ssub.s32 %s28, 1
      // Predicated region
      $region13: #{ncsnpp_unet_forward.1} parent=11 // pred_check
        %p546 = pneg %p127
      $region14: #{ncsnpp_unet_forward.1} parent=11 // pred_check_branch
        %548 = sbr.rel (%p546) target = $region16
      $region15: #{ncsnpp_unet_forward.1} parent=11 // pred_region
        _
      $region16: #{ncsnpp_unet_forward.1} parent=11 // pred_fallthru
        _
      // Predicated region
      $region17: #{ncsnpp_unet_forward.1} parent=11 // pred_check
        %p549 = pneg %p148
      $region18: #{ncsnpp_unet_forward.1} parent=11 // pred_check_branch
        %551 = sbr.rel (%p549) target = $region20
      $region19: #{ncsnpp_unet_forward.1} parent=11 // pred_region
        _
      $region20: #{ncsnpp_unet_forward.1} parent=11 // pred_fallthru
        _
      // Predicated region
      $region21: #{ncsnpp_unet_forward.1} parent=11 // pred_check
        %p552 = pneg %p169
      $region22: #{ncsnpp_unet_forward.1} parent=11 // pred_check_branch
        %554 = sbr.rel (%p552) target = $region24
      $region23: #{ncsnpp_unet_forward.1} parent=11 // pred_region
        _
      $region24: #{ncsnpp_unet_forward.1} parent=11 // pred_fallthru
        _
      // Predicated region
      $region25: #{ncsnpp_unet_forward.1} parent=11 // pred_check
        %p555 = pneg %p190
      $region26: #{ncsnpp_unet_forward.1} parent=11 // pred_check_branch
        %557 = sbr.rel (%p555) target = $region28
      $region27: #{ncsnpp_unet_forward.1} parent=11 // pred_region
        _
      $region28: #{ncsnpp_unet_forward.1} parent=11 // pred_fallthru
        _
      // Predicated region
      $region29: #{ncsnpp_unet_forward.1} parent=11 // pred_check
        %p558 = pneg %p211
      $region30: #{ncsnpp_unet_forward.1} parent=11 // pred_check_branch
        %560 = sbr.rel (%p558) target = $region32
      $region31: #{ncsnpp_unet_forward.1} parent=11 // pred_region
        _
      $region32: #{ncsnpp_unet_forward.1} parent=11 // pred_fallthru
        _
      // Predicated region
      $region33: #{ncsnpp_unet_forward.1} parent=11 // pred_check
        %p561 = pneg %p232
      $region34: #{ncsnpp_unet_forward.1} parent=11 // pred_check_branch
        %563 = sbr.rel (%p561) target = $region36
      $region35: #{ncsnpp_unet_forward.1} parent=11 // pred_region
        _
      $region36: #{ncsnpp_unet_forward.1} parent=11 // pred_fallthru
        _
      // Predicated region
      $region37: #{ncsnpp_unet_forward.1} parent=11 // pred_check
        %p564 = pneg %p253
      $region38: #{ncsnpp_unet_forward.1} parent=11 // pred_check_branch
        %566 = sbr.rel (%p564) target = $region40
      $region39: #{ncsnpp_unet_forward.1} parent=11 // pred_region
        _
      $region40: #{ncsnpp_unet_forward.1} parent=11 // pred_fallthru
        _
      // Predicated region
      $region41: #{ncsnpp_unet_forward.1} parent=11 // pred_check
        %p567 = pneg %p274
      $region42: #{ncsnpp_unet_forward.1} parent=11 // pred_check_branch
        %569 = sbr.rel (%p567) target = $region44
      $region43: #{ncsnpp_unet_forward.1} parent=11 // pred_region
        _
      $region44: #{ncsnpp_unet_forward.1} parent=11 // pred_fallthru
        _
      // Predicated region
      $region45: #{ncsnpp_unet_forward.1} parent=11 // pred_check
        %p570 = pneg %p295
      $region46: #{ncsnpp_unet_forward.1} parent=11 // pred_check_branch
        %572 = sbr.rel (%p570) target = $region48
      $region47: #{ncsnpp_unet_forward.1} parent=11 // pred_region
        _
      $region48: #{ncsnpp_unet_forward.1} parent=11 // pred_fallthru
        _
      // Predicated region
      $region49: #{ncsnpp_unet_forward.1} parent=11 // pred_check
        %p573 = pneg %p316
      $region50: #{ncsnpp_unet_forward.1} parent=11 // pred_check_branch
        %575 = sbr.rel (%p573) target = $region52
      $region51: #{ncsnpp_unet_forward.1} parent=11 // pred_region
        _
      $region52: #{ncsnpp_unet_forward.1} parent=11 // pred_fallthru
        _
      // Predicated region
      $region53: #{ncsnpp_unet_forward.1} parent=11 // pred_check
        %p576 = pneg %p337
      $region54: #{ncsnpp_unet_forward.1} parent=11 // pred_check_branch
        %578 = sbr.rel (%p576) target = $region56
      $region55: #{ncsnpp_unet_forward.1} parent=11 // pred_region
        _
      $region56: #{ncsnpp_unet_forward.1} parent=11 // pred_fallthru
        _
      // Predicated region
      $region57: #{ncsnpp_unet_forward.1} parent=11 // pred_check
        %p579 = pneg %p358
      $region58: #{ncsnpp_unet_forward.1} parent=11 // pred_check_branch
        %581 = sbr.rel (%p579) target = $region60
      $region59: #{ncsnpp_unet_forward.1} parent=11 // pred_region
        _
      $region60: #{ncsnpp_unet_forward.1} parent=11 // pred_fallthru
        _
      // Predicated region
      $region61: #{ncsnpp_unet_forward.1} parent=11 // pred_check
        %p582 = pneg %p379
      $region62: #{ncsnpp_unet_forward.1} parent=11 // pred_check_branch
        %584 = sbr.rel (%p582) target = $region64
      $region63: #{ncsnpp_unet_forward.1} parent=11 // pred_region
        _
      $region64: #{ncsnpp_unet_forward.1} parent=11 // pred_fallthru
        _
      // Predicated region
      $region65: #{ncsnpp_unet_forward.1} parent=11 // pred_check
        %p585 = pneg %p400
      $region66: #{ncsnpp_unet_forward.1} parent=11 // pred_check_branch
        %587 = sbr.rel (%p585) target = $region68
      $region67: #{ncsnpp_unet_forward.1} parent=11 // pred_region
        _
      $region68: #{ncsnpp_unet_forward.1} parent=11 // pred_fallthru
        _
      // Predicated region
      $region69: #{ncsnpp_unet_forward.1} parent=11 // pred_check
        %p588 = pneg %p421
      $region70: #{ncsnpp_unet_forward.1} parent=11 // pred_check_branch
        %590 = sbr.rel (%p588) target = $region72
      $region71: #{ncsnpp_unet_forward.1} parent=11 // pred_region
        _
      $region72: #{ncsnpp_unet_forward.1} parent=11 // pred_fallthru
        _
      // Predicated region
      $region73: #{ncsnpp_unet_forward.1} parent=11 // pred_check
        %p591 = pneg %p442
      $region74: #{ncsnpp_unet_forward.1} parent=11 // pred_check_branch
        %593 = sbr.rel (%p591) target = $region76
      $region75: #{ncsnpp_unet_forward.1} parent=11 // pred_region
        _
      $region76: #{ncsnpp_unet_forward.1} parent=11 // pred_fallthru
        _
      // Predicated region
      $region77: #{ncsnpp_unet_forward.1} parent=11 // pred_check
        %p594 = pneg %p463
      $region78: #{ncsnpp_unet_forward.1} parent=11 // pred_check_branch
        %596 = sbr.rel (%p594) target = $region80
      $region79: #{ncsnpp_unet_forward.1} parent=11 // pred_region
        _
      $region80: #{ncsnpp_unet_forward.1} parent=11 // pred_fallthru
        _
      // Predicated region
      $region81: #{ncsnpp_unet_forward.1} parent=11 // pred_check
        %p597 = pneg %p484
      $region82: #{ncsnpp_unet_forward.1} parent=11 // pred_check_branch
        %599 = sbr.rel (%p597) target = $region84
      $region83: #{ncsnpp_unet_forward.1} parent=11 // pred_region
        _
      $region84: #{ncsnpp_unet_forward.1} parent=11 // pred_fallthru
        _
      // Predicated region
      $region85: #{ncsnpp_unet_forward.1} parent=11 // pred_check
        %p600 = pneg %p505
      $region86: #{ncsnpp_unet_forward.1} parent=11 // pred_check_branch
        %602 = sbr.rel (%p600) target = $region88
      $region87: #{ncsnpp_unet_forward.1} parent=11 // pred_region
        _
      $region88: #{ncsnpp_unet_forward.1} parent=11 // pred_fallthru
        _
    $region12: #{ncsnpp_unet_forward.1} parent=5 // pred_fallthru
      _
    %p603 = scmp.lt.s32.totalorder %s28, 2
    // Predicated region
    $region89: #{ncsnpp_unet_forward.1} parent=5 // pred_check
      %p604 = pneg %p603
    $region90: #{ncsnpp_unet_forward.1} parent=5 // pred_check_branch
      %606 = sbr.rel (%p604) target = $region92
    $region91: #{ncsnpp_unet_forward.1} parent=5 // pred_region
      // Predicated region
      $region93: #{ncsnpp_unet_forward.1} parent=91 // pred_check
        %p607 = pneg %p48
      $region94: #{ncsnpp_unet_forward.1} parent=91 // pred_check_branch
        %609 = sbr.rel (%p607) target = $region96
      $region95: #{ncsnpp_unet_forward.1} parent=91 // pred_region
        %p610 = scmp.lt.s32.totalorder %s28, 1
        %s611 = scalar_select %p610, %s28, 1
        %s612 = smul.addr %s611, 2
        %s613 = smul.addr %s612, 8
        %s614 = scalar_lea.vmem %s0, %s613
      $region96: #{ncsnpp_unet_forward.1} parent=91 // pred_fallthru
        _
      // Predicated region
      $region97: #{ncsnpp_unet_forward.1} parent=91 // pred_check
        %p615 = pneg %p74
      $region98: #{ncsnpp_unet_forward.1} parent=91 // pred_check_branch
        %617 = sbr.rel (%p615) target = $region100
      $region99: #{ncsnpp_unet_forward.1} parent=91 // pred_region
        %p618 = scmp.lt.s32.totalorder %s28, 1
        %s619 = scalar_select %p618, %s28, 1
        %s620 = smul.addr %s619, 4
        %s621 = smul.addr %s620, 8
        %s622 = scalar_lea.vmem %s1, %s621
      $region100: #{ncsnpp_unet_forward.1} parent=91 // pred_fallthru
        _
      // Predicated region
      $region101: #{ncsnpp_unet_forward.1} parent=91 // pred_check
        %p623 = pneg %p100
      $region102: #{ncsnpp_unet_forward.1} parent=91 // pred_check_branch
        %625 = sbr.rel (%p623) target = $region104
      $region103: #{ncsnpp_unet_forward.1} parent=91 // pred_region
        %p626 = scmp.lt.s32.totalorder %s28, 1
        %s627 = scalar_select %p626, %s28, 1
        %s628 = smul.addr %s627, 4
        %s629 = smul.addr %s628, 8
        %s630 = scalar_lea.vmem %s2, %s629
      $region104: #{ncsnpp_unet_forward.1} parent=91 // pred_fallthru
        _
    $region92: #{ncsnpp_unet_forward.1} parent=5 // pred_fallthru
      _
    %p631 = scmp.le.s32.totalorder 1, %s28
    %p632 = scmp.lt.s32.totalorder %s28, 3
    %p633 = pnand %p631, %p632
    %p634 = pneg %p633
    // Predicated region
    $region105: #{ncsnpp_unet_forward.1} parent=5 // pred_check
      _
    $region106: #{ncsnpp_unet_forward.1} parent=5 // pred_check_branch
      %636 = sbr.rel (%p633) target = $region108
    $region107: #{ncsnpp_unet_forward.1} parent=5 // pred_region
      %s637 = ssub.s32 %s28, 1
      %p638 = scmp.lt.s32.totalorder %s33, 1
      %s639 = scalar_select %p638, %s33, 1
      %s640 = smul.addr %s639, 2
      %s641 = smul.addr %s640, 8
      %s642 = scalar_lea.vmem %s0, %s641
      %p643 = pneg %p54
      %p644 = pneg %p51
      %p645 = scmp.lt.s32.totalorder %s33, 1
      %s646 = scalar_select %p645, %s33, 1
      %s647 = smul.addr %s646, 4
      %s648 = smul.addr %s647, 8
      %s649 = scalar_lea.vmem %s1, %s648
      %p650 = pneg %p80
      %p651 = pneg %p77
      %p652 = scmp.lt.s32.totalorder %s33, 1
      %s653 = scalar_select %p652, %s33, 1
      %s654 = smul.addr %s653, 4
      %s655 = smul.addr %s654, 8
      %s656 = scalar_lea.vmem %s2, %s655
      %p657 = pneg %p106
      %p658 = pneg %p103
      %p659 = pneg %p127
      %p660 = pneg %p124
      %p661 = pneg %p148
      %p662 = pneg %p145
      %p663 = pneg %p169
      %p664 = pneg %p166
      %p665 = pneg %p190
      %p666 = pneg %p187
      %p667 = pneg %p211
      %p668 = pneg %p208
      %p669 = pneg %p232
      %p670 = pneg %p229
      %p671 = pneg %p253
      %p672 = pneg %p250
      %p673 = pneg %p274
      %p674 = pneg %p271
      %p675 = pneg %p295
      %p676 = pneg %p292
      %p677 = pneg %p316
      %p678 = pneg %p313
      %p679 = pneg %p337
      %p680 = pneg %p334
      %p681 = pneg %p358
      %p682 = pneg %p355
      %p683 = pneg %p379
      %p684 = pneg %p376
      %p685 = pneg %p400
      %p686 = pneg %p397
      %p687 = pneg %p421
      %p688 = pneg %p418
      %p689 = pneg %p442
      %p690 = pneg %p439
      %p691 = pneg %p463
      %p692 = pneg %p460
      %p693 = pneg %p484
      %p694 = pneg %p481
      %p695 = pneg %p505
      %p696 = pneg %p502
      %p697 = pneg %p531
      %p698 = pneg %p528
      %p699 = scmp.lt.s32.totalorder %s33, 1
      %s700 = scalar_select %p699, %s33, 1
      %s701 = smul.addr %s700, 8
      %s702 = smul.addr %s701, 8
      %s703 = scalar_lea.vmem %s22, %s702
      %p704 = scmp.lt.s32.totalorder %s33, 1
      %s705 = scalar_select %p704, %s33, 1
      %s706 = smul.addr %s705, 2
      %s707 = smul.addr %s706, 8
      %s708 = scalar_lea.vmem %s0, %s707
      %p709 = scmp.lt.s32.totalorder %s33, 1
      %s710 = scalar_select %p709, %s33, 1
      %s711 = smul.addr %s710, 4
      %s712 = smul.addr %s711, 8
      %s713 = scalar_lea.vmem %s1, %s712
      %p714 = scmp.lt.s32.totalorder %s33, 1
      %s715 = scalar_select %p714, %s33, 1
      %s716 = smul.addr %s715, 4
      %s717 = smul.addr %s716, 8
      %s718 = scalar_lea.vmem %s2, %s717
      %p719 = scmp.lt.s32.totalorder %s33, 1
      %s720 = scalar_select %p719, %s33, 1
      %s721 = smul.addr %s720, 8
      %s722 = smul.addr %s721, 8
      %s723 = scalar_lea.vmem %s22, %s722
      %v725 = vld [vmem:[%s708] sm:$0xff]
      %v726 = vld [vmem:[%s708 + $0x8] sm:$0xff]
      %v727 = vadd.f32 %v725, %v726
      %728 = vadd.xlane.f32.xlu0 %v727
      %v729 = vpop.xlane.xlu0 %728
      %v730 = vld [vmem:[%s4] sm:$0xff]
      %vm731 = vcmask 64512
      %v733 = vsel %vm731, %v730, 0
      %735 = vmatpush.msra.mxu0 0.0
      %736 = vmatpush.msra.mxu0 0.0
      %737 = vmatpush.msra.mxu0 0.0
      %738 = vmatpush.msra.mxu0 0.0
      %739 = vmatpush.msra.mxu0 0.0
      %740 = vmatpush.msra.mxu0 0.0
      %741 = vmatpush.msra.mxu0 0.0
      %742 = vmatpush.msra.mxu0 0.0
      %743 = vmatpush.msra.mxu0 0.0
      %744 = vmatpush.msra.mxu0 0.0
      %745 = vmatpush.msra.mxu0 0.0
      %746 = vmatpush.msra.mxu0 0.0
      %747 = vmatpush.msra.mxu0 0.0
      %748 = vmatpush.msra.mxu0 0.0
      %749 = vmatpush.msra.mxu0 0.0
      %750 = vmatpush.msra.mxu0 %v729
      %751 = vmatmul.f32.gmra.mxu0 %v733
      %v752 = vpop.f32.mrf.mxu0
      %v753 = vadd.f32 0.0, %v752
      %754 = vdwg.mxu0
      %756 = vset.pattern.permute.xlu0 0
      %757 = vperm.xlu0 %756, %v753
      %v758 = vpop.permute.xlu0 %757
      %v760 = vsub.f32 %v725, %v758
      %v761 = vsub.f32 %v726, %v758
      %v762 = vmul.f32 %v760, %v760
      %v763 = vmul.f32 %v761, %v761
      %v764 = vadd.f32 %v762, %v763
      %765 = vadd.xlane.f32.xlu0 %v764
      %v766 = vpop.xlane.xlu0 %765
      %767 = vmatpush.msra.mxu0 0.0
      %768 = vmatpush.msra.mxu0 0.0
      %769 = vmatpush.msra.mxu0 0.0
      %770 = vmatpush.msra.mxu0 0.0
      %771 = vmatpush.msra.mxu0 0.0
      %772 = vmatpush.msra.mxu0 0.0
      %773 = vmatpush.msra.mxu0 0.0
      %774 = vmatpush.msra.mxu0 0.0
      %775 = vmatpush.msra.mxu0 0.0
      %776 = vmatpush.msra.mxu0 0.0
      %777 = vmatpush.msra.mxu0 0.0
      %778 = vmatpush.msra.mxu0 0.0
      %779 = vmatpush.msra.mxu0 0.0
      %780 = vmatpush.msra.mxu0 0.0
      %781 = vmatpush.msra.mxu0 0.0
      %782 = vmatpush.msra.mxu0 %v766
      %783 = vmatmul.f32.gmra.mxu0 %v733
      %v784 = vpop.f32.mrf.mxu0
      %v785 = vadd.f32 1e-05, %v784
      %786 = vdwg.mxu0
      %v787 = vrsqrt.pop %v785
      %v788 = vmul.f32 %v787, %v785
      %v789 = vmul.f32 %v788, %v787
      %v790 = vmul.f32 0.5, %v789
      %v791 = vsub.f32 1.5, %v790
      %v792 = vmul.f32 %v787, %v791
      %vm793 = vweird.f32 %v785
      %vm794 = vweird.f32 %v787
      %vm795 = vmor %vm793, %vm794
      %v796 = vsel %vm795, %v787, %v792
      %798 = vset.pattern.permute.xlu0 0
      %799 = vperm.xlu0 %798, %v796
      %v800 = vpop.permute.xlu0 %799
      %v802 = vmul.f32 %v760, %v800
      %v803 = vmul.f32 %v761, %v800
      %v804 = vld [vmem:[%s6] sm:$0xff]
      %806 = vset.pattern.permute.xlu0 0
      %807 = vperm.xlu0 %806, %v804
      %v808 = vpop.permute.xlu0 %807
      %v810 = vmul.f32 %v802, %v808
      %v811 = vmul.f32 %v803, %v808
      %v812 = vld [vmem:[%s7] sm:$0xff]
      %814 = vset.pattern.permute.xlu0 0
      %815 = vperm.xlu0 %814, %v812
      %v816 = vpop.permute.xlu0 %815
      %v818 = vadd.f32 %v810, %v816
      %v819 = vadd.f32 %v811, %v816
      %v820 = vxor.u32 %v818, 2147483648
      %v821 = vxor.u32 %v819, 2147483648
      %v822 = vmul.f32 %v820, 1.442695
      %v823 = vpow.pop %v822
      %v824 = vmul.f32 %v821, 1.442695
      %v825 = vpow.pop %v824
      %v826 = vadd.f32 %v823, 1.0
      %v827 = vadd.f32 %v825, 1.0
      %v828 = vrcp.pop %v826
      %v829 = vmul.f32 %v826, %v828
      %v830 = vsub.f32 1.0, %v829
      %v831 = vmul.f32 %v828, %v830
      %v832 = vadd.f32 %v828, %v831
      %vm833 = vweird.f32 %v826
      %vm834 = vweird.f32 %v828
      %vm835 = vmor %vm833, %vm834
      %v836 = vsel %vm835, %v828, %v832
      %v837 = vand.u32 2147483647, %v826
      %vm838 = vcmp.eq.f32.partialorder %v837, 8.507059e+37
      %v839 = vand.u32 %v826, 2147483648
      %v840 = vor.u32 1.1754944e-38, %v839
      %v841 = vsel %vm838, %v840, %v836
      %v842 = vmul.f32 1.0, %v841
      %v843 = vrcp.pop %v827
      %v844 = vmul.f32 %v827, %v843
      %v845 = vsub.f32 1.0, %v844
      %v846 = vmul.f32 %v843, %v845
      %v847 = vadd.f32 %v843, %v846
      %vm848 = vweird.f32 %v827
      %vm849 = vweird.f32 %v843
      %vm850 = vmor %vm848, %vm849
      %v851 = vsel %vm850, %v843, %v847
      %v852 = vand.u32 2147483647, %v827
      %vm853 = vcmp.eq.f32.partialorder %v852, 8.507059e+37
      %v854 = vand.u32 %v827, 2147483648
      %v855 = vor.u32 1.1754944e-38, %v854
      %v856 = vsel %vm853, %v855, %v851
      %v857 = vmul.f32 1.0, %v856
      %v858 = vmul.f32 %v818, %v842
      %v859 = vmul.f32 %v819, %v857
      %860 = vrot.lane.b32.xlu0 %v858, 17
      %v861 = vpop.permute.xlu0 %860
      %862 = vrot.lane.b32.xlu0 %v859, 17
      %v863 = vpop.permute.xlu0 %862
      %v864 = vlaneseq
      %v865 = vand.u32 %v864, 127
      %vm866 = vcmp.lt.s32.totalorder %v865, 17
      %v867 = vsel %vm866, %v861, %v863
      %v868 = vsel %vm866, %v863, %v861
      %v869 = vld [vmem:[%s3] ss:$8 sm:$0x3]
      %v871 = vperm.slane %v869, 0
      %v872 = vperm.slane %v869, 1
      %v875 = vmul.f32 %v868, %v871
      %v876 = vmul.f32 %v867, %v872
      %v877 = vld [vmem:[%s8] sm:$0xf]
      %v878 = vld [vmem:[%s8 + $0x4] sm:$0xf]
      %v879 = vld [vmem:[%s8 + $0x8] sm:$0xf]
      %v880 = vld [vmem:[%s8 + $0xc] sm:$0xf]
      %v881 = vpack.c.bf16 %v875, %v875
      %v882 = vpack.c.bf16 %v876, %v876
      %883 = vrot.lane.b32.xlu0 %v858, 16
      %v884 = vpop.permute.xlu0 %883
      %885 = vrot.lane.b32.xlu0 %v859, 16
      %v886 = vpop.permute.xlu0 %885
      %vm887 = vcmp.lt.s32.totalorder %v865, 16
      %v888 = vsel %vm887, %v884, %v886
      %v889 = vsel %vm887, %v886, %v884
      %s890 = scalar_lea.vmem %s3, 1
      %v891 = vld [vmem:[%s890] ss:$8 sm:$0x3]
      %v893 = vperm.slane %v891, 0
      %v894 = vperm.slane %v891, 1
      %v897 = vmul.f32 %v889, %v893
      %v898 = vmul.f32 %v888, %v894
      %s899 = scalar_lea.vmem %s8, 16
      %v900 = vld [vmem:[%s899] sm:$0xf]
      %v901 = vld [vmem:[%s899 + $0x4] sm:$0xf]
      %v902 = vld [vmem:[%s899 + $0x8] sm:$0xf]
      %v903 = vld [vmem:[%s899 + $0xc] sm:$0xf]
      %v904 = vpack.c.bf16 %v897, %v897
      %v905 = vpack.c.bf16 %v898, %v898
      %v910 = vunpack.c.l.b16 %v900
      %v911 = vunpack.c.l.b16 %v901
      %v912 = vunpack.c.l.b16 %v902
      %v913 = vunpack.c.l.b16 %v903
      %v914 = vpack.c.b16 %v911, %v910
      %v915 = vpack.c.b16 %v913, %v912
      %v917 = vsel %vm731, %v914, 0
      %v920 = vsel %vm731, %v915, 0
      %vm922 = vcmask 1043456
      %v924 = vsel %vm922, %v904, 0
      %v927 = vsel %vm922, %v905, 0
      %929 = vmatpush.bf16.msra.mxu0 0
      %930 = vmatpush.bf16.msra.mxu0 0
      %931 = vmatpush.bf16.msra.mxu0 0
      %932 = vmatpush.bf16.msra.mxu0 0
      %933 = vmatpush.bf16.msra.mxu0 0
      %934 = vmatpush.bf16.msra.mxu0 0
      %935 = vmatpush.bf16.msra.mxu0 0
      %936 = vmatpush.bf16.msra.mxu0 %v924
      %937 = vmatmul.bf16.gmra.mxu0 %v917
      %v938 = vpop.f32.mrf.mxu0
      %v939 = vadd.f32 0.0, %v938
      %v940 = vpop.f32.mrf.mxu0
      %v941 = vadd.f32 0.0, %v940
      %942 = vmatmul.bf16.gmra.mxu0 %v920
      %v943 = vpop.f32.mrf.mxu0
      %v944 = vadd.f32 0.0, %v943
      %v945 = vpop.f32.mrf.mxu0
      %v946 = vadd.f32 0.0, %v945
      %947 = vdwg.mxu0
      %948 = vmatpush.bf16.msra.mxu0 0
      %949 = vmatpush.bf16.msra.mxu0 0
      %950 = vmatpush.bf16.msra.mxu0 0
      %951 = vmatpush.bf16.msra.mxu0 0
      %952 = vmatpush.bf16.msra.mxu0 0
      %953 = vmatpush.bf16.msra.mxu0 0
      %954 = vmatpush.bf16.msra.mxu0 0
      %955 = vmatpush.bf16.msra.mxu0 %v927
      %956 = vmatmul.bf16.gmra.mxu0 %v917
      %v957 = vpop.f32.mrf.mxu0
      %v958 = vadd.f32 0.0, %v957
      %v959 = vpop.f32.mrf.mxu0
      %v960 = vadd.f32 0.0, %v959
      %961 = vmatmul.bf16.gmra.mxu0 %v920
      %v962 = vpop.f32.mrf.mxu0
      %v963 = vadd.f32 0.0, %v962
      %v964 = vpop.f32.mrf.mxu0
      %v965 = vadd.f32 0.0, %v964
      %966 = vdwg.mxu0
      %v971 = vunpack.c.l.b16 %v877
      %v972 = vunpack.c.l.b16 %v878
      %v973 = vunpack.c.l.b16 %v879
      %v974 = vunpack.c.l.b16 %v880
      %v975 = vpack.c.b16 %v972, %v971
      %v976 = vpack.c.b16 %v974, %v973
      %v978 = vsel %vm731, %v975, 0
      %v981 = vsel %vm731, %v976, 0
      %v984 = vsel %vm922, %v881, 0
      %v987 = vsel %vm922, %v882, 0
      %989 = vmatpush.bf16.msra.mxu0 0
      %990 = vmatpush.bf16.msra.mxu0 0
      %991 = vmatpush.bf16.msra.mxu0 0
      %992 = vmatpush.bf16.msra.mxu0 0
      %993 = vmatpush.bf16.msra.mxu0 0
      %994 = vmatpush.bf16.msra.mxu0 0
      %995 = vmatpush.bf16.msra.mxu0 0
      %996 = vmatpush.bf16.msra.mxu0 %v984
      %997 = vmatmul.bf16.gmra.mxu0 %v978
      %v998 = vpop.f32.mrf.mxu0
      %v999 = vadd.f32 %v939, %v998
      %v1000 = vpop.f32.mrf.mxu0
      %v1001 = vadd.f32 %v941, %v1000
      %1002 = vmatmul.bf16.gmra.mxu0 %v981
      %v1003 = vpop.f32.mrf.mxu0
      %v1004 = vadd.f32 %v944, %v1003
      %v1005 = vpop.f32.mrf.mxu0
      %v1006 = vadd.f32 %v946, %v1005
      %1007 = vdwg.mxu0
      %1008 = vmatpush.bf16.msra.mxu0 0
      %1009 = vmatpush.bf16.msra.mxu0 0
      %1010 = vmatpush.bf16.msra.mxu0 0
      %1011 = vmatpush.bf16.msra.mxu0 0
      %1012 = vmatpush.bf16.msra.mxu0 0
      %1013 = vmatpush.bf16.msra.mxu0 0
      %1014 = vmatpush.bf16.msra.mxu0 0
      %1015 = vmatpush.bf16.msra.mxu0 %v987
      %1016 = vmatmul.bf16.gmra.mxu0 %v978
      %v1017 = vpop.f32.mrf.mxu0
      %v1018 = vadd.f32 %v958, %v1017
      %v1019 = vpop.f32.mrf.mxu0
      %v1020 = vadd.f32 %v960, %v1019
      %1021 = vmatmul.bf16.gmra.mxu0 %v981
      %v1022 = vpop.f32.mrf.mxu0
      %v1023 = vadd.f32 %v963, %v1022
      %v1024 = vpop.f32.mrf.mxu0
      %v1025 = vadd.f32 %v965, %v1024
      %1026 = vdwg.mxu0
      %1027 = vrot.lane.b32.xlu0 %v858, 15
      %v1028 = vpop.permute.xlu0 %1027
      %1029 = vrot.lane.b32.xlu0 %v859, 15
      %v1030 = vpop.permute.xlu0 %1029
      %vm1031 = vcmp.lt.s32.totalorder %v865, 15
      %v1032 = vsel %vm1031, %v1028, %v1030
      %v1033 = vsel %vm1031, %v1030, %v1028
      %s1034 = scalar_lea.vmem %s3, 2
      %v1035 = vld [vmem:[%s1034] ss:$8 sm:$0x3]
      %v1037 = vperm.slane %v1035, 0
      %v1038 = vperm.slane %v1035, 1
      %v1041 = vmul.f32 %v1033, %v1037
      %v1042 = vmul.f32 %v1032, %v1038
      %s1043 = scalar_lea.vmem %s8, 32
      %v1044 = vld [vmem:[%s1043] sm:$0xf]
      %v1045 = vld [vmem:[%s1043 + $0x4] sm:$0xf]
      %v1046 = vld [vmem:[%s1043 + $0x8] sm:$0xf]
      %v1047 = vld [vmem:[%s1043 + $0xc] sm:$0xf]
      %v1048 = vpack.c.bf16 %v1041, %v1041
      %v1049 = vpack.c.bf16 %v1042, %v1042
      %v1054 = vunpack.c.l.b16 %v1044
      %v1055 = vunpack.c.l.b16 %v1045
      %v1056 = vunpack.c.l.b16 %v1046
      %v1057 = vunpack.c.l.b16 %v1047
      %v1058 = vpack.c.b16 %v1055, %v1054
      %v1059 = vpack.c.b16 %v1057, %v1056
      %v1061 = vsel %vm731, %v1058, 0
      %v1064 = vsel %vm731, %v1059, 0
      %v1067 = vsel %vm922, %v1048, 0
      %v1070 = vsel %vm922, %v1049, 0
      %1072 = vmatpush.bf16.msra.mxu0 0
      %1073 = vmatpush.bf16.msra.mxu0 0
      %1074 = vmatpush.bf16.msra.mxu0 0
      %1075 = vmatpush.bf16.msra.mxu0 0
      %1076 = vmatpush.bf16.msra.mxu0 0
      %1077 = vmatpush.bf16.msra.mxu0 0
      %1078 = vmatpush.bf16.msra.mxu0 0
      %1079 = vmatpush.bf16.msra.mxu0 %v1067
      %1080 = vmatmul.bf16.gmra.mxu0 %v1061
      %v1081 = vpop.f32.mrf.mxu0
      %v1082 = vadd.f32 0.0, %v1081
      %v1083 = vpop.f32.mrf.mxu0
      %v1084 = vadd.f32 0.0, %v1083
      %1085 = vmatmul.bf16.gmra.mxu0 %v1064
      %v1086 = vpop.f32.mrf.mxu0
      %v1087 = vadd.f32 0.0, %v1086
      %v1088 = vpop.f32.mrf.mxu0
      %v1089 = vadd.f32 0.0, %v1088
      %1090 = vdwg.mxu0
      %1091 = vmatpush.bf16.msra.mxu0 0
      %1092 = vmatpush.bf16.msra.mxu0 0
      %1093 = vmatpush.bf16.msra.mxu0 0
      %1094 = vmatpush.bf16.msra.mxu0 0
      %1095 = vmatpush.bf16.msra.mxu0 0
      %1096 = vmatpush.bf16.msra.mxu0 0
      %1097 = vmatpush.bf16.msra.mxu0 0
      %1098 = vmatpush.bf16.msra.mxu0 %v1070
      %1099 = vmatmul.bf16.gmra.mxu0 %v1061
      %v1100 = vpop.f32.mrf.mxu0
      %v1101 = vadd.f32 0.0, %v1100
      %v1102 = vpop.f32.mrf.mxu0
      %v1103 = vadd.f32 0.0, %v1102
      %1104 = vmatmul.bf16.gmra.mxu0 %v1064
      %v1105 = vpop.f32.mrf.mxu0
      %v1106 = vadd.f32 0.0, %v1105
      %v1107 = vpop.f32.mrf.mxu0
      %v1108 = vadd.f32 0.0, %v1107
      %1109 = vdwg.mxu0
      %v1110 = vadd.f32 %v999, %v1082
      %v1111 = vadd.f32 %v1018, %v1101
      %v1112 = vadd.f32 %v1001, %v1084
      %v1113 = vadd.f32 %v1020, %v1103
      %v1114 = vadd.f32 %v1004, %v1087
      %v1115 = vadd.f32 %v1023, %v1106
      %v1116 = vadd.f32 %v1006, %v1089
      %v1117 = vadd.f32 %v1025, %v1108
      %1118 = vrot.lane.b32.xlu0 %v858, 1
      %v1119 = vpop.permute.xlu0 %1118
      %1120 = vrot.lane.b32.xlu0 %v859, 1
      %v1121 = vpop.permute.xlu0 %1120
      %vm1122 = vcmp.lt.s32.totalorder %v865, 1
      %v1123 = vsel %vm1122, %v1119, %v1121
      %v1124 = vsel %vm1122, %v1121, %v1119
      %s1125 = scalar_lea.vmem %s3, 3
      %v1126 = vld [vmem:[%s1125] ss:$8 sm:$0x3]
      %v1128 = vperm.slane %v1126, 0
      %v1129 = vperm.slane %v1126, 1
      %v1132 = vmul.f32 %v1124, %v1128
      %v1133 = vmul.f32 %v1123, %v1129
      %s1134 = scalar_lea.vmem %s8, 48
      %v1135 = vld [vmem:[%s1134] sm:$0xf]
      %v1136 = vld [vmem:[%s1134 + $0x4] sm:$0xf]
      %v1137 = vld [vmem:[%s1134 + $0x8] sm:$0xf]
      %v1138 = vld [vmem:[%s1134 + $0xc] sm:$0xf]
      %v1139 = vpack.c.bf16 %v1132, %v1132
      %v1140 = vpack.c.bf16 %v1133, %v1133
      %v1145 = vunpack.c.l.b16 %v1135
      %v1146 = vunpack.c.l.b16 %v1136
      %v1147 = vunpack.c.l.b16 %v1137
      %v1148 = vunpack.c.l.b16 %v1138
      %v1149 = vpack.c.b16 %v1146, %v1145
      %v1150 = vpack.c.b16 %v1148, %v1147
      %v1152 = vsel %vm731, %v1149, 0
      %v1155 = vsel %vm731, %v1150, 0
      %v1158 = vsel %vm922, %v1139, 0
      %v1161 = vsel %vm922, %v1140, 0
      %1163 = vmatpush.bf16.msra.mxu0 0
      %1164 = vmatpush.bf16.msra.mxu0 0
      %1165 = vmatpush.bf16.msra.mxu0 0
      %1166 = vmatpush.bf16.msra.mxu0 0
      %1167 = vmatpush.bf16.msra.mxu0 0
      %1168 = vmatpush.bf16.msra.mxu0 0
      %1169 = vmatpush.bf16.msra.mxu0 0
      %1170 = vmatpush.bf16.msra.mxu0 %v1158
      %1171 = vmatmul.bf16.gmra.mxu0 %v1152
      %v1172 = vpop.f32.mrf.mxu0
      %v1173 = vadd.f32 0.0, %v1172
      %v1174 = vpop.f32.mrf.mxu0
      %v1175 = vadd.f32 0.0, %v1174
      %1176 = vmatmul.bf16.gmra.mxu0 %v1155
      %v1177 = vpop.f32.mrf.mxu0
      %v1178 = vadd.f32 0.0, %v1177
      %v1179 = vpop.f32.mrf.mxu0
      %v1180 = vadd.f32 0.0, %v1179
      %1181 = vdwg.mxu0
      %1182 = vmatpush.bf16.msra.mxu0 0
      %1183 = vmatpush.bf16.msra.mxu0 0
      %1184 = vmatpush.bf16.msra.mxu0 0
      %1185 = vmatpush.bf16.msra.mxu0 0
      %1186 = vmatpush.bf16.msra.mxu0 0
      %1187 = vmatpush.bf16.msra.mxu0 0
      %1188 = vmatpush.bf16.msra.mxu0 0
      %1189 = vmatpush.bf16.msra.mxu0 %v1161
      %1190 = vmatmul.bf16.gmra.mxu0 %v1152
      %v1191 = vpop.f32.mrf.mxu0
      %v1192 = vadd.f32 0.0, %v1191
      %v1193 = vpop.f32.mrf.mxu0
      %v1194 = vadd.f32 0.0, %v1193
      %1195 = vmatmul.bf16.gmra.mxu0 %v1155
      %v1196 = vpop.f32.mrf.mxu0
      %v1197 = vadd.f32 0.0, %v1196
      %v1198 = vpop.f32.mrf.mxu0
      %v1199 = vadd.f32 0.0, %v1198
      %1200 = vdwg.mxu0
      %v1201 = vadd.f32 %v1110, %v1173
      %v1202 = vadd.f32 %v1111, %v1192
      %v1203 = vadd.f32 %v1112, %v1175
      %v1204 = vadd.f32 %v1113, %v1194
      %v1205 = vadd.f32 %v1114, %v1178
      %v1206 = vadd.f32 %v1115, %v1197
      %v1207 = vadd.f32 %v1116, %v1180
      %v1208 = vadd.f32 %v1117, %v1199
      %s1209 = scalar_lea.vmem %s8, 64
      %v1210 = vld [vmem:[%s1209] sm:$0xf]
      %v1211 = vld [vmem:[%s1209 + $0x4] sm:$0xf]
      %v1212 = vld [vmem:[%s1209 + $0x8] sm:$0xf]
      %v1213 = vld [vmem:[%s1209 + $0xc] sm:$0xf]
      %v1214 = vpack.c.bf16 %v858, %v858
      %v1215 = vpack.c.bf16 %v859, %v859
      %v1220 = vunpack.c.l.b16 %v1210
      %v1221 = vunpack.c.l.b16 %v1211
      %v1222 = vunpack.c.l.b16 %v1212
      %v1223 = vunpack.c.l.b16 %v1213
      %v1224 = vpack.c.b16 %v1221, %v1220
      %v1225 = vpack.c.b16 %v1223, %v1222
      %v1227 = vsel %vm731, %v1224, 0
      %v1230 = vsel %vm731, %v1225, 0
      %v1233 = vsel %vm922, %v1214, 0
      %v1236 = vsel %vm922, %v1215, 0
      %1238 = vmatpush.bf16.msra.mxu0 0
      %1239 = vmatpush.bf16.msra.mxu0 0
      %1240 = vmatpush.bf16.msra.mxu0 0
      %1241 = vmatpush.bf16.msra.mxu0 0
      %1242 = vmatpush.bf16.msra.mxu0 0
      %1243 = vmatpush.bf16.msra.mxu0 0
      %1244 = vmatpush.bf16.msra.mxu0 0
      %1245 = vmatpush.bf16.msra.mxu0 %v1233
      %1246 = vmatmul.bf16.gmra.mxu0 %v1227
      %v1247 = vpop.f32.mrf.mxu0
      %v1248 = vadd.f32 0.0, %v1247
      %v1249 = vpop.f32.mrf.mxu0
      %v1250 = vadd.f32 0.0, %v1249
      %1251 = vmatmul.bf16.gmra.mxu0 %v1230
      %v1252 = vpop.f32.mrf.mxu0
      %v1253 = vadd.f32 0.0, %v1252
      %v1254 = vpop.f32.mrf.mxu0
      %v1255 = vadd.f32 0.0, %v1254
      %1256 = vdwg.mxu0
      %1257 = vmatpush.bf16.msra.mxu0 0
      %1258 = vmatpush.bf16.msra.mxu0 0
      %1259 = vmatpush.bf16.msra.mxu0 0
      %1260 = vmatpush.bf16.msra.mxu0 0
      %1261 = vmatpush.bf16.msra.mxu0 0
      %1262 = vmatpush.bf16.msra.mxu0 0
      %1263 = vmatpush.bf16.msra.mxu0 0
      %1264 = vmatpush.bf16.msra.mxu0 %v1236
      %1265 = vmatmul.bf16.gmra.mxu0 %v1227
      %v1266 = vpop.f32.mrf.mxu0
      %v1267 = vadd.f32 0.0, %v1266
      %v1268 = vpop.f32.mrf.mxu0
      %v1269 = vadd.f32 0.0, %v1268
      %1270 = vmatmul.bf16.gmra.mxu0 %v1230
      %v1271 = vpop.f32.mrf.mxu0
      %v1272 = vadd.f32 0.0, %v1271
      %v1273 = vpop.f32.mrf.mxu0
      %v1274 = vadd.f32 0.0, %v1273
      %1275 = vdwg.mxu0
      %v1276 = vadd.f32 %v1201, %v1248
      %v1277 = vadd.f32 %v1202, %v1267
      %v1278 = vadd.f32 %v1203, %v1250
      %v1279 = vadd.f32 %v1204, %v1269
      %v1280 = vadd.f32 %v1205, %v1253
      %v1281 = vadd.f32 %v1206, %v1272
      %v1282 = vadd.f32 %v1207, %v1255
      %v1283 = vadd.f32 %v1208, %v1274
      %1284 = vrot.lane.b32.xlu0 %v858, 127
      %v1285 = vpop.permute.xlu0 %1284
      %1286 = vrot.lane.b32.xlu0 %v859, 127
      %v1287 = vpop.permute.xlu0 %1286
      %vm1288 = vcmp.lt.s32.totalorder %v865, 127
      %v1289 = vsel %vm1288, %v1285, %v1287
      %v1290 = vsel %vm1288, %v1287, %v1285
      %s1291 = scalar_lea.vmem %s3, 5
      %v1292 = vld [vmem:[%s1291] ss:$8 sm:$0x3]
      %v1294 = vperm.slane %v1292, 0
      %v1295 = vperm.slane %v1292, 1
      %v1298 = vmul.f32 %v1289, %v1294
      %v1299 = vmul.f32 %v1290, %v1295
      %s1300 = scalar_lea.vmem %s8, 80
      %v1301 = vld [vmem:[%s1300] sm:$0xf]
      %v1302 = vld [vmem:[%s1300 + $0x4] sm:$0xf]
      %v1303 = vld [vmem:[%s1300 + $0x8] sm:$0xf]
      %v1304 = vld [vmem:[%s1300 + $0xc] sm:$0xf]
      %v1305 = vpack.c.bf16 %v1298, %v1298
      %v1306 = vpack.c.bf16 %v1299, %v1299
      %v1311 = vunpack.c.l.b16 %v1301
      %v1312 = vunpack.c.l.b16 %v1302
      %v1313 = vunpack.c.l.b16 %v1303
      %v1314 = vunpack.c.l.b16 %v1304
      %v1315 = vpack.c.b16 %v1312, %v1311
      %v1316 = vpack.c.b16 %v1314, %v1313
      %v1318 = vsel %vm731, %v1315, 0
      %v1321 = vsel %vm731, %v1316, 0
      %v1324 = vsel %vm922, %v1305, 0
      %v1327 = vsel %vm922, %v1306, 0
      %1329 = vmatpush.bf16.msra.mxu0 0
      %1330 = vmatpush.bf16.msra.mxu0 0
      %1331 = vmatpush.bf16.msra.mxu0 0
      %1332 = vmatpush.bf16.msra.mxu0 0
      %1333 = vmatpush.bf16.msra.mxu0 0
      %1334 = vmatpush.bf16.msra.mxu0 0
      %1335 = vmatpush.bf16.msra.mxu0 0
      %1336 = vmatpush.bf16.msra.mxu0 %v1324
      %1337 = vmatmul.bf16.gmra.mxu0 %v1318
      %v1338 = vpop.f32.mrf.mxu0
      %v1339 = vadd.f32 0.0, %v1338
      %v1340 = vpop.f32.mrf.mxu0
      %v1341 = vadd.f32 0.0, %v1340
      %1342 = vmatmul.bf16.gmra.mxu0 %v1321
      %v1343 = vpop.f32.mrf.mxu0
      %v1344 = vadd.f32 0.0, %v1343
      %v1345 = vpop.f32.mrf.mxu0
      %v1346 = vadd.f32 0.0, %v1345
      %1347 = vdwg.mxu0
      %1348 = vmatpush.bf16.msra.mxu0 0
      %1349 = vmatpush.bf16.msra.mxu0 0
      %1350 = vmatpush.bf16.msra.mxu0 0
      %1351 = vmatpush.bf16.msra.mxu0 0
      %1352 = vmatpush.bf16.msra.mxu0 0
      %1353 = vmatpush.bf16.msra.mxu0 0
      %1354 = vmatpush.bf16.msra.mxu0 0
      %1355 = vmatpush.bf16.msra.mxu0 %v1327
      %1356 = vmatmul.bf16.gmra.mxu0 %v1318
      %v1357 = vpop.f32.mrf.mxu0
      %v1358 = vadd.f32 0.0, %v1357
      %v1359 = vpop.f32.mrf.mxu0
      %v1360 = vadd.f32 0.0, %v1359
      %1361 = vmatmul.bf16.gmra.mxu0 %v1321
      %v1362 = vpop.f32.mrf.mxu0
      %v1363 = vadd.f32 0.0, %v1362
      %v1364 = vpop.f32.mrf.mxu0
      %v1365 = vadd.f32 0.0, %v1364
      %1366 = vdwg.mxu0
      %v1367 = vadd.f32 %v1276, %v1339
      %v1368 = vadd.f32 %v1277, %v1358
      %v1369 = vadd.f32 %v1278, %v1341
      %v1370 = vadd.f32 %v1279, %v1360
      %v1371 = vadd.f32 %v1280, %v1344
      %v1372 = vadd.f32 %v1281, %v1363
      %v1373 = vadd.f32 %v1282, %v1346
      %v1374 = vadd.f32 %v1283, %v1365
      %1375 = vrot.lane.b32.xlu0 %v858, 113
      %v1376 = vpop.permute.xlu0 %1375
      %1377 = vrot.lane.b32.xlu0 %v859, 113
      %v1378 = vpop.permute.xlu0 %1377
      %vm1379 = vcmp.lt.s32.totalorder %v865, 113
      %v1380 = vsel %vm1379, %v1376, %v1378
      %v1381 = vsel %vm1379, %v1378, %v1376
      %s1382 = scalar_lea.vmem %s3, 6
      %v1383 = vld [vmem:[%s1382] ss:$8 sm:$0x3]
      %v1385 = vperm.slane %v1383, 0
      %v1386 = vperm.slane %v1383, 1
      %v1389 = vmul.f32 %v1380, %v1385
      %v1390 = vmul.f32 %v1381, %v1386
      %s1391 = scalar_lea.vmem %s8, 96
      %v1392 = vld [vmem:[%s1391] sm:$0xf]
      %v1393 = vld [vmem:[%s1391 + $0x4] sm:$0xf]
      %v1394 = vld [vmem:[%s1391 + $0x8] sm:$0xf]
      %v1395 = vld [vmem:[%s1391 + $0xc] sm:$0xf]
      %v1396 = vpack.c.bf16 %v1389, %v1389
      %v1397 = vpack.c.bf16 %v1390, %v1390
      %v1402 = vunpack.c.l.b16 %v1392
      %v1403 = vunpack.c.l.b16 %v1393
      %v1404 = vunpack.c.l.b16 %v1394
      %v1405 = vunpack.c.l.b16 %v1395
      %v1406 = vpack.c.b16 %v1403, %v1402
      %v1407 = vpack.c.b16 %v1405, %v1404
      %v1409 = vsel %vm731, %v1406, 0
      %v1412 = vsel %vm731, %v1407, 0
      %v1415 = vsel %vm922, %v1396, 0
      %v1418 = vsel %vm922, %v1397, 0
      %1420 = vmatpush.bf16.msra.mxu0 0
      %1421 = vmatpush.bf16.msra.mxu0 0
      %1422 = vmatpush.bf16.msra.mxu0 0
      %1423 = vmatpush.bf16.msra.mxu0 0
      %1424 = vmatpush.bf16.msra.mxu0 0
      %1425 = vmatpush.bf16.msra.mxu0 0
      %1426 = vmatpush.bf16.msra.mxu0 0
      %1427 = vmatpush.bf16.msra.mxu0 %v1415
      %1428 = vmatmul.bf16.gmra.mxu0 %v1409
      %v1429 = vpop.f32.mrf.mxu0
      %v1430 = vadd.f32 0.0, %v1429
      %v1431 = vpop.f32.mrf.mxu0
      %v1432 = vadd.f32 0.0, %v1431
      %1433 = vmatmul.bf16.gmra.mxu0 %v1412
      %v1434 = vpop.f32.mrf.mxu0
      %v1435 = vadd.f32 0.0, %v1434
      %v1436 = vpop.f32.mrf.mxu0
      %v1437 = vadd.f32 0.0, %v1436
      %1438 = vdwg.mxu0
      %1439 = vmatpush.bf16.msra.mxu0 0
      %1440 = vmatpush.bf16.msra.mxu0 0
      %1441 = vmatpush.bf16.msra.mxu0 0
      %1442 = vmatpush.bf16.msra.mxu0 0
      %1443 = vmatpush.bf16.msra.mxu0 0
      %1444 = vmatpush.bf16.msra.mxu0 0
      %1445 = vmatpush.bf16.msra.mxu0 0
      %1446 = vmatpush.bf16.msra.mxu0 %v1418
      %1447 = vmatmul.bf16.gmra.mxu0 %v1409
      %v1448 = vpop.f32.mrf.mxu0
      %v1449 = vadd.f32 0.0, %v1448
      %v1450 = vpop.f32.mrf.mxu0
      %v1451 = vadd.f32 0.0, %v1450
      %1452 = vmatmul.bf16.gmra.mxu0 %v1412
      %v1453 = vpop.f32.mrf.mxu0
      %v1454 = vadd.f32 0.0, %v1453
      %v1455 = vpop.f32.mrf.mxu0
      %v1456 = vadd.f32 0.0, %v1455
      %1457 = vdwg.mxu0
      %v1458 = vadd.f32 %v1367, %v1430
      %v1459 = vadd.f32 %v1368, %v1449
      %v1460 = vadd.f32 %v1369, %v1432
      %v1461 = vadd.f32 %v1370, %v1451
      %v1462 = vadd.f32 %v1371, %v1435
      %v1463 = vadd.f32 %v1372, %v1454
      %v1464 = vadd.f32 %v1373, %v1437
      %v1465 = vadd.f32 %v1374, %v1456
      %1466 = vrot.lane.b32.xlu0 %v858, 112
      %v1467 = vpop.permute.xlu0 %1466
      %1468 = vrot.lane.b32.xlu0 %v859, 112
      %v1469 = vpop.permute.xlu0 %1468
      %vm1470 = vcmp.lt.s32.totalorder %v865, 112
      %v1471 = vsel %vm1470, %v1467, %v1469
      %v1472 = vsel %vm1470, %v1469, %v1467
      %s1473 = scalar_lea.vmem %s3, 7
      %v1474 = vld [vmem:[%s1473] ss:$8 sm:$0x3]
      %v1476 = vperm.slane %v1474, 0
      %v1477 = vperm.slane %v1474, 1
      %v1480 = vmul.f32 %v1471, %v1476
      %v1481 = vmul.f32 %v1472, %v1477
      %s1482 = scalar_lea.vmem %s8, 112
      %v1483 = vld [vmem:[%s1482] sm:$0xf]
      %v1484 = vld [vmem:[%s1482 + $0x4] sm:$0xf]
      %v1485 = vld [vmem:[%s1482 + $0x8] sm:$0xf]
      %v1486 = vld [vmem:[%s1482 + $0xc] sm:$0xf]
      %v1487 = vpack.c.bf16 %v1480, %v1480
      %v1488 = vpack.c.bf16 %v1481, %v1481
      %v1493 = vunpack.c.l.b16 %v1483
      %v1494 = vunpack.c.l.b16 %v1484
      %v1495 = vunpack.c.l.b16 %v1485
      %v1496 = vunpack.c.l.b16 %v1486
      %v1497 = vpack.c.b16 %v1494, %v1493
      %v1498 = vpack.c.b16 %v1496, %v1495
      %v1500 = vsel %vm731, %v1497, 0
      %v1503 = vsel %vm731, %v1498, 0
      %v1506 = vsel %vm922, %v1487, 0
      %v1509 = vsel %vm922, %v1488, 0
      %1511 = vmatpush.bf16.msra.mxu0 0
      %1512 = vmatpush.bf16.msra.mxu0 0
      %1513 = vmatpush.bf16.msra.mxu0 0
      %1514 = vmatpush.bf16.msra.mxu0 0
      %1515 = vmatpush.bf16.msra.mxu0 0
      %1516 = vmatpush.bf16.msra.mxu0 0
      %1517 = vmatpush.bf16.msra.mxu0 0
      %1518 = vmatpush.bf16.msra.mxu0 %v1506
      %1519 = vmatmul.bf16.gmra.mxu0 %v1500
      %v1520 = vpop.f32.mrf.mxu0
      %v1521 = vadd.f32 0.0, %v1520
      %v1522 = vpop.f32.mrf.mxu0
      %v1523 = vadd.f32 0.0, %v1522
      %1524 = vmatmul.bf16.gmra.mxu0 %v1503
      %v1525 = vpop.f32.mrf.mxu0
      %v1526 = vadd.f32 0.0, %v1525
      %v1527 = vpop.f32.mrf.mxu0
      %v1528 = vadd.f32 0.0, %v1527
      %1529 = vdwg.mxu0
      %1530 = vmatpush.bf16.msra.mxu0 0
      %1531 = vmatpush.bf16.msra.mxu0 0
      %1532 = vmatpush.bf16.msra.mxu0 0
      %1533 = vmatpush.bf16.msra.mxu0 0
      %1534 = vmatpush.bf16.msra.mxu0 0
      %1535 = vmatpush.bf16.msra.mxu0 0
      %1536 = vmatpush.bf16.msra.mxu0 0
      %1537 = vmatpush.bf16.msra.mxu0 %v1509
      %1538 = vmatmul.bf16.gmra.mxu0 %v1500
      %v1539 = vpop.f32.mrf.mxu0
      %v1540 = vadd.f32 0.0, %v1539
      %v1541 = vpop.f32.mrf.mxu0
      %v1542 = vadd.f32 0.0, %v1541
      %1543 = vmatmul.bf16.gmra.mxu0 %v1503
      %v1544 = vpop.f32.mrf.mxu0
      %v1545 = vadd.f32 0.0, %v1544
      %v1546 = vpop.f32.mrf.mxu0
      %v1547 = vadd.f32 0.0, %v1546
      %1548 = vdwg.mxu0
      %v1549 = vadd.f32 %v1458, %v1521
      %v1550 = vadd.f32 %v1459, %v1540
      %v1551 = vadd.f32 %v1460, %v1523
      %v1552 = vadd.f32 %v1461, %v1542
      %v1553 = vadd.f32 %v1462, %v1526
      %v1554 = vadd.f32 %v1463, %v1545
      %v1555 = vadd.f32 %v1464, %v1528
      %v1556 = vadd.f32 %v1465, %v1547
      %1557 = vrot.lane.b32.xlu0 %v858, 111
      %v1558 = vpop.permute.xlu0 %1557
      %1559 = vrot.lane.b32.xlu0 %v859, 111
      %v1560 = vpop.permute.xlu0 %1559
      %vm1561 = vcmp.lt.s32.totalorder %v865, 111
      %v1562 = vsel %vm1561, %v1558, %v1560
      %v1563 = vsel %vm1561, %v1560, %v1558
      %s1564 = scalar_lea.vmem %s3, 16
      %v1565 = vld [vmem:[%s1564] ss:$8 sm:$0x3]
      %v1567 = vperm.slane %v1565, 0
      %v1568 = vperm.slane %v1565, 1
      %v1571 = vmul.f32 %v1562, %v1567
      %v1572 = vmul.f32 %v1563, %v1568
      %s1573 = scalar_lea.vmem %s8, 128
      %v1574 = vld [vmem:[%s1573] sm:$0xf]
      %v1575 = vld [vmem:[%s1573 + $0x4] sm:$0xf]
      %v1576 = vld [vmem:[%s1573 + $0x8] sm:$0xf]
      %v1577 = vld [vmem:[%s1573 + $0xc] sm:$0xf]
      %v1578 = vpack.c.bf16 %v1571, %v1571
      %v1579 = vpack.c.bf16 %v1572, %v1572
      %v1584 = vunpack.c.l.b16 %v1574
      %v1585 = vunpack.c.l.b16 %v1575
      %v1586 = vunpack.c.l.b16 %v1576
      %v1587 = vunpack.c.l.b16 %v1577
      %v1588 = vpack.c.b16 %v1585, %v1584
      %v1589 = vpack.c.b16 %v1587, %v1586
      %v1591 = vsel %vm731, %v1588, 0
      %v1594 = vsel %vm731, %v1589, 0
      %v1597 = vsel %vm922, %v1578, 0
      %v1600 = vsel %vm922, %v1579, 0
      %1602 = vmatpush.bf16.msra.mxu0 0
      %1603 = vmatpush.bf16.msra.mxu0 0
      %1604 = vmatpush.bf16.msra.mxu0 0
      %1605 = vmatpush.bf16.msra.mxu0 0
      %1606 = vmatpush.bf16.msra.mxu0 0
      %1607 = vmatpush.bf16.msra.mxu0 0
      %1608 = vmatpush.bf16.msra.mxu0 0
      %1609 = vmatpush.bf16.msra.mxu0 %v1597
      %1610 = vmatmul.bf16.gmra.mxu0 %v1591
      %v1611 = vpop.f32.mrf.mxu0
      %v1612 = vadd.f32 0.0, %v1611
      %v1613 = vpop.f32.mrf.mxu0
      %v1614 = vadd.f32 0.0, %v1613
      %1615 = vmatmul.bf16.gmra.mxu0 %v1594
      %v1616 = vpop.f32.mrf.mxu0
      %v1617 = vadd.f32 0.0, %v1616
      %v1618 = vpop.f32.mrf.mxu0
      %v1619 = vadd.f32 0.0, %v1618
      %1620 = vdwg.mxu0
      %1621 = vmatpush.bf16.msra.mxu0 0
      %1622 = vmatpush.bf16.msra.mxu0 0
      %1623 = vmatpush.bf16.msra.mxu0 0
      %1624 = vmatpush.bf16.msra.mxu0 0
      %1625 = vmatpush.bf16.msra.mxu0 0
      %1626 = vmatpush.bf16.msra.mxu0 0
      %1627 = vmatpush.bf16.msra.mxu0 0
      %1628 = vmatpush.bf16.msra.mxu0 %v1600
      %1629 = vmatmul.bf16.gmra.mxu0 %v1591
      %v1630 = vpop.f32.mrf.mxu0
      %v1631 = vadd.f32 0.0, %v1630
      %v1632 = vpop.f32.mrf.mxu0
      %v1633 = vadd.f32 0.0, %v1632
      %1634 = vmatmul.bf16.gmra.mxu0 %v1594
      %v1635 = vpop.f32.mrf.mxu0
      %v1636 = vadd.f32 0.0, %v1635
      %v1637 = vpop.f32.mrf.mxu0
      %v1638 = vadd.f32 0.0, %v1637
      %1639 = vdwg.mxu0
      %v1640 = vadd.f32 %v1549, %v1612
      %v1641 = vadd.f32 %v1550, %v1631
      %v1642 = vadd.f32 %v1551, %v1614
      %v1643 = vadd.f32 %v1552, %v1633
      %v1644 = vadd.f32 %v1553, %v1617
      %v1645 = vadd.f32 %v1554, %v1636
      %v1646 = vadd.f32 %v1555, %v1619
      %v1647 = vadd.f32 %v1556, %v1638
      %v1648 = vld [vmem:[%s9] sm:$0xff]
      %v1649 = vld [vmem:[%s9 + $0x8] sm:$0xff]
      %v1650 = vld [vmem:[%s9 + $0x10] sm:$0xff]
      %v1651 = vld [vmem:[%s9 + $0x18] sm:$0xff]
      %1653 = vset.pattern.permute.xlu0 0
      %1654 = vperm.xlu0 %1653, %v1648
      %v1655 = vpop.permute.xlu0 %1654
      %1658 = vset.pattern.permute.xlu0 0
      %1659 = vperm.xlu0 %1658, %v1649
      %v1660 = vpop.permute.xlu0 %1659
      %1663 = vset.pattern.permute.xlu0 0
      %1664 = vperm.xlu0 %1663, %v1650
      %v1665 = vpop.permute.xlu0 %1664
      %1668 = vset.pattern.permute.xlu0 0
      %1669 = vperm.xlu0 %1668, %v1651
      %v1670 = vpop.permute.xlu0 %1669
      %v1672 = vadd.f32 %v1640, %v1655
      %v1673 = vadd.f32 %v1641, %v1655
      %v1674 = vadd.f32 %v1642, %v1660
      %v1675 = vadd.f32 %v1643, %v1660
      %v1676 = vadd.f32 %v1644, %v1665
      %v1677 = vadd.f32 %v1645, %v1665
      %v1678 = vadd.f32 %v1646, %v1670
      %v1679 = vadd.f32 %v1647, %v1670
      %v1680 = vadd.f32 %v1672, %v1673
      %1681 = vadd.xlane.f32.xlu0 %v1680
      %v1682 = vpop.xlane.xlu0 %1681
      %v1683 = vadd.f32 %v1674, %v1675
      %1684 = vadd.xlane.f32.xlu0 %v1683
      %v1685 = vpop.xlane.xlu0 %1684
      %v1686 = vadd.f32 %v1676, %v1677
      %1687 = vadd.xlane.f32.xlu0 %v1686
      %v1688 = vpop.xlane.xlu0 %1687
      %v1689 = vadd.f32 %v1678, %v1679
      %1690 = vadd.xlane.f32.xlu0 %v1689
      %v1691 = vpop.xlane.xlu0 %1690
      %v1692 = vld [vmem:[%s5] sm:$0xff]
      %v1693 = vld [vmem:[%s5 + $0x8] sm:$0xff]
      %v1694 = vld [vmem:[%s5 + $0x10] sm:$0xff]
      %v1695 = vld [vmem:[%s5 + $0x18] sm:$0xff]
      %vm1696 = vcmask 261120
      %v1698 = vsel %vm1696, %v1692, 0
      %v1701 = vsel %vm1696, %v1693, 0
      %v1704 = vsel %vm1696, %v1694, 0
      %v1707 = vsel %vm1696, %v1695, 0
      %1709 = vmatpush.msra.mxu0 0.0
      %1710 = vmatpush.msra.mxu0 0.0
      %1711 = vmatpush.msra.mxu0 0.0
      %1712 = vmatpush.msra.mxu0 0.0
      %1713 = vmatpush.msra.mxu0 0.0
      %1714 = vmatpush.msra.mxu0 0.0
      %1715 = vmatpush.msra.mxu0 0.0
      %1716 = vmatpush.msra.mxu0 0.0
      %1717 = vmatpush.msra.mxu0 0.0
      %1718 = vmatpush.msra.mxu0 0.0
      %1719 = vmatpush.msra.mxu0 0.0
      %1720 = vmatpush.msra.mxu0 0.0
      %1721 = vmatpush.msra.mxu0 %v1691
      %1722 = vmatpush.msra.mxu0 %v1688
      %1723 = vmatpush.msra.mxu0 %v1685
      %1724 = vmatpush.msra.mxu0 %v1682
      %1725 = vmatmul.f32.gmra.mxu0 %v1698
      %v1726 = vpop.f32.mrf.mxu0
      %v1727 = vadd.f32 0.0, %v1726
      %1728 = vmatmul.f32.gmra.mxu0 %v1701
      %v1729 = vpop.f32.mrf.mxu0
      %v1730 = vadd.f32 0.0, %v1729
      %1731 = vmatmul.f32.gmra.mxu0 %v1704
      %v1732 = vpop.f32.mrf.mxu0
      %v1733 = vadd.f32 0.0, %v1732
      %1734 = vmatmul.f32.gmra.mxu0 %v1707
      %v1735 = vpop.f32.mrf.mxu0
      %v1736 = vadd.f32 0.0, %v1735
      %1737 = vdwg.mxu0
      %1739 = vset.pattern.permute.xlu0 0
      %1740 = vperm.xlu0 %1739, %v1727
      %v1741 = vpop.permute.xlu0 %1740
      %1744 = vset.pattern.permute.xlu0 0
      %1745 = vperm.xlu0 %1744, %v1730
      %v1746 = vpop.permute.xlu0 %1745
      %1749 = vset.pattern.permute.xlu0 0
      %1750 = vperm.xlu0 %1749, %v1733
      %v1751 = vpop.permute.xlu0 %1750
      %1754 = vset.pattern.permute.xlu0 0
      %1755 = vperm.xlu0 %1754, %v1736
      %v1756 = vpop.permute.xlu0 %1755
      %v1758 = vsub.f32 %v1672, %v1741
      %v1759 = vsub.f32 %v1673, %v1741
      %v1760 = vsub.f32 %v1674, %v1746
      %v1761 = vsub.f32 %v1675, %v1746
      %v1762 = vsub.f32 %v1676, %v1751
      %v1763 = vsub.f32 %v1677, %v1751
      %v1764 = vsub.f32 %v1678, %v1756
      %v1765 = vsub.f32 %v1679, %v1756
      %v1766 = vmul.f32 %v1758, %v1758
      %v1767 = vmul.f32 %v1759, %v1759
      %v1768 = vmul.f32 %v1760, %v1760
      %v1769 = vmul.f32 %v1761, %v1761
      %v1770 = vmul.f32 %v1762, %v1762
      %v1771 = vmul.f32 %v1763, %v1763
      %v1772 = vmul.f32 %v1764, %v1764
      %v1773 = vmul.f32 %v1765, %v1765
      %v1774 = vadd.f32 %v1766, %v1767
      %1775 = vadd.xlane.f32.xlu0 %v1774
      %v1776 = vpop.xlane.xlu0 %1775
      %v1777 = vadd.f32 %v1768, %v1769
      %1778 = vadd.xlane.f32.xlu0 %v1777
      %v1779 = vpop.xlane.xlu0 %1778
      %v1780 = vadd.f32 %v1770, %v1771
      %1781 = vadd.xlane.f32.xlu0 %v1780
      %v1782 = vpop.xlane.xlu0 %1781
      %v1783 = vadd.f32 %v1772, %v1773
      %1784 = vadd.xlane.f32.xlu0 %v1783
      %v1785 = vpop.xlane.xlu0 %1784
      %1786 = vmatpush.msra.mxu0 0.0
      %1787 = vmatpush.msra.mxu0 0.0
      %1788 = vmatpush.msra.mxu0 0.0
      %1789 = vmatpush.msra.mxu0 0.0
      %1790 = vmatpush.msra.mxu0 0.0
      %1791 = vmatpush.msra.mxu0 0.0
      %1792 = vmatpush.msra.mxu0 0.0
      %1793 = vmatpush.msra.mxu0 0.0
      %1794 = vmatpush.msra.mxu0 0.0
      %1795 = vmatpush.msra.mxu0 0.0
      %1796 = vmatpush.msra.mxu0 0.0
      %1797 = vmatpush.msra.mxu0 0.0
      %1798 = vmatpush.msra.mxu0 %v1785
      %1799 = vmatpush.msra.mxu0 %v1782
      %1800 = vmatpush.msra.mxu0 %v1779
      %1801 = vmatpush.msra.mxu0 %v1776
      %1802 = vmatmul.f32.gmra.mxu0 %v1698
      %v1803 = vpop.f32.mrf.mxu0
      %v1804 = vadd.f32 1e-05, %v1803
      %1805 = vmatmul.f32.gmra.mxu0 %v1701
      %v1806 = vpop.f32.mrf.mxu0
      %v1807 = vadd.f32 1e-05, %v1806
      %1808 = vmatmul.f32.gmra.mxu0 %v1704
      %v1809 = vpop.f32.mrf.mxu0
      %v1810 = vadd.f32 1e-05, %v1809
      %1811 = vmatmul.f32.gmra.mxu0 %v1707
      %v1812 = vpop.f32.mrf.mxu0
      %v1813 = vadd.f32 1e-05, %v1812
      %1814 = vdwg.mxu0
      %v1815 = vrsqrt.pop %v1804
      %v1816 = vmul.f32 %v1815, %v1804
      %v1817 = vmul.f32 %v1816, %v1815
      %v1818 = vmul.f32 0.5, %v1817
      %v1819 = vsub.f32 1.5, %v1818
      %v1820 = vmul.f32 %v1815, %v1819
      %vm1821 = vweird.f32 %v1804
      %vm1822 = vweird.f32 %v1815
      %vm1823 = vmor %vm1821, %vm1822
      %v1824 = vsel %vm1823, %v1815, %v1820
      %v1825 = vrsqrt.pop %v1807
      %v1826 = vmul.f32 %v1825, %v1807
      %v1827 = vmul.f32 %v1826, %v1825
      %v1828 = vmul.f32 0.5, %v1827
      %v1829 = vsub.f32 1.5, %v1828
      %v1830 = vmul.f32 %v1825, %v1829
      %vm1831 = vweird.f32 %v1807
      %vm1832 = vweird.f32 %v1825
      %vm1833 = vmor %vm1831, %vm1832
      %v1834 = vsel %vm1833, %v1825, %v1830
      %v1835 = vrsqrt.pop %v1810
      %v1836 = vmul.f32 %v1835, %v1810
      %v1837 = vmul.f32 %v1836, %v1835
      %v1838 = vmul.f32 0.5, %v1837
      %v1839 = vsub.f32 1.5, %v1838
      %v1840 = vmul.f32 %v1835, %v1839
      %vm1841 = vweird.f32 %v1810
      %vm1842 = vweird.f32 %v1835
      %vm1843 = vmor %vm1841, %vm1842
      %v1844 = vsel %vm1843, %v1835, %v1840
      %v1845 = vrsqrt.pop %v1813
      %v1846 = vmul.f32 %v1845, %v1813
      %v1847 = vmul.f32 %v1846, %v1845
      %v1848 = vmul.f32 0.5, %v1847
      %v1849 = vsub.f32 1.5, %v1848
      %v1850 = vmul.f32 %v1845, %v1849
      %vm1851 = vweird.f32 %v1813
      %vm1852 = vweird.f32 %v1845
      %vm1853 = vmor %vm1851, %vm1852
      %v1854 = vsel %vm1853, %v1845, %v1850
      %1856 = vset.pattern.permute.xlu0 0
      %1857 = vperm.xlu0 %1856, %v1824
      %v1858 = vpop.permute.xlu0 %1857
      %1861 = vset.pattern.permute.xlu0 0
      %1862 = vperm.xlu0 %1861, %v1834
      %v1863 = vpop.permute.xlu0 %1862
      %1866 = vset.pattern.permute.xlu0 0
      %1867 = vperm.xlu0 %1866, %v1844
      %v1868 = vpop.permute.xlu0 %1867
      %1871 = vset.pattern.permute.xlu0 0
      %1872 = vperm.xlu0 %1871, %v1854
      %v1873 = vpop.permute.xlu0 %1872
      %v1875 = vmul.f32 %v1758, %v1858
      %v1876 = vmul.f32 %v1759, %v1858
      %v1877 = vmul.f32 %v1760, %v1863
      %v1878 = vmul.f32 %v1761, %v1863
      %v1879 = vmul.f32 %v1762, %v1868
      %v1880 = vmul.f32 %v1763, %v1868
      %v1881 = vmul.f32 %v1764, %v1873
      %v1882 = vmul.f32 %v1765, %v1873
      %v1883 = vld [vmem:[%s10] sm:$0xff]
      %v1884 = vld [vmem:[%s10 + $0x8] sm:$0xff]
      %v1885 = vld [vmem:[%s10 + $0x10] sm:$0xff]
      %v1886 = vld [vmem:[%s10 + $0x18] sm:$0xff]
      %1888 = vset.pattern.permute.xlu0 0
      %1889 = vperm.xlu0 %1888, %v1883
      %v1890 = vpop.permute.xlu0 %1889
      %1893 = vset.pattern.permute.xlu0 0
      %1894 = vperm.xlu0 %1893, %v1884
      %v1895 = vpop.permute.xlu0 %1894
      %1898 = vset.pattern.permute.xlu0 0
      %1899 = vperm.xlu0 %1898, %v1885
      %v1900 = vpop.permute.xlu0 %1899
      %1903 = vset.pattern.permute.xlu0 0
      %1904 = vperm.xlu0 %1903, %v1886
      %v1905 = vpop.permute.xlu0 %1904
      %v1907 = vmul.f32 %v1875, %v1890
      %v1908 = vmul.f32 %v1876, %v1890
      %v1909 = vmul.f32 %v1877, %v1895
      %v1910 = vmul.f32 %v1878, %v1895
      %v1911 = vmul.f32 %v1879, %v1900
      %v1912 = vmul.f32 %v1880, %v1900
      %v1913 = vmul.f32 %v1881, %v1905
      %v1914 = vmul.f32 %v1882, %v1905
      %v1915 = vld [vmem:[%s11] sm:$0xff]
      %v1916 = vld [vmem:[%s11 + $0x8] sm:$0xff]
      %v1917 = vld [vmem:[%s11 + $0x10] sm:$0xff]
      %v1918 = vld [vmem:[%s11 + $0x18] sm:$0xff]
      %1920 = vset.pattern.permute.xlu0 0
      %1921 = vperm.xlu0 %1920, %v1915
      %v1922 = vpop.permute.xlu0 %1921
      %1925 = vset.pattern.permute.xlu0 0
      %1926 = vperm.xlu0 %1925, %v1916
      %v1927 = vpop.permute.xlu0 %1926
      %1930 = vset.pattern.permute.xlu0 0
      %1931 = vperm.xlu0 %1930, %v1917
      %v1932 = vpop.permute.xlu0 %1931
      %1935 = vset.pattern.permute.xlu0 0
      %1936 = vperm.xlu0 %1935, %v1918
      %v1937 = vpop.permute.xlu0 %1936
      %v1939 = vadd.f32 %v1907, %v1922
      %v1940 = vadd.f32 %v1908, %v1922
      %v1941 = vadd.f32 %v1909, %v1927
      %v1942 = vadd.f32 %v1910, %v1927
      %v1943 = vadd.f32 %v1911, %v1932
      %v1944 = vadd.f32 %v1912, %v1932
      %v1945 = vadd.f32 %v1913, %v1937
      %v1946 = vadd.f32 %v1914, %v1937
      %v1947 = vld [vmem:[%s718] sm:$0xff]
      %v1948 = vld [vmem:[%s718 + $0x8] sm:$0xff]
      %v1949 = vld [vmem:[%s718 + $0x10] sm:$0xff]
      %v1950 = vld [vmem:[%s718 + $0x18] sm:$0xff]
      %v1951 = vld [vmem:[%s713] sm:$0xff]
      %v1952 = vld [vmem:[%s713 + $0x8] sm:$0xff]
      %v1953 = vld [vmem:[%s713 + $0x10] sm:$0xff]
      %v1954 = vld [vmem:[%s713 + $0x18] sm:$0xff]
      %v1955 = vadd.f32 %v1951, 1.0
      %v1956 = vadd.f32 %v1952, 1.0
      %v1957 = vadd.f32 %v1953, 1.0
      %v1958 = vadd.f32 %v1954, 1.0
      %1960 = vset.pattern.permute.xlu0 0
      %1961 = vperm.xlu0 %1960, %v1955
      %v1962 = vpop.permute.xlu0 %1961
      %1965 = vset.pattern.permute.xlu0 0
      %1966 = vperm.xlu0 %1965, %v1956
      %v1967 = vpop.permute.xlu0 %1966
      %1970 = vset.pattern.permute.xlu0 0
      %1971 = vperm.xlu0 %1970, %v1957
      %v1972 = vpop.permute.xlu0 %1971
      %1975 = vset.pattern.permute.xlu0 0
      %1976 = vperm.xlu0 %1975, %v1958
      %v1977 = vpop.permute.xlu0 %1976
      %v1979 = vmul.f32 %v1939, %v1962
      %v1980 = vmul.f32 %v1940, %v1962
      %v1981 = vmul.f32 %v1941, %v1967
      %v1982 = vmul.f32 %v1942, %v1967
      %v1983 = vmul.f32 %v1943, %v1972
      %v1984 = vmul.f32 %v1944, %v1972
      %v1985 = vmul.f32 %v1945, %v1977
      %v1986 = vmul.f32 %v1946, %v1977
      %1988 = vset.pattern.permute.xlu0 0
      %1989 = vperm.xlu0 %1988, %v1947
      %v1990 = vpop.permute.xlu0 %1989
      %1993 = vset.pattern.permute.xlu0 0
      %1994 = vperm.xlu0 %1993, %v1948
      %v1995 = vpop.permute.xlu0 %1994
      %1998 = vset.pattern.permute.xlu0 0
      %1999 = vperm.xlu0 %1998, %v1949
      %v2000 = vpop.permute.xlu0 %1999
      %2003 = vset.pattern.permute.xlu0 0
      %2004 = vperm.xlu0 %2003, %v1950
      %v2005 = vpop.permute.xlu0 %2004
      %v2007 = vadd.f32 %v1990, %v1979
      %v2008 = vadd.f32 %v1990, %v1980
      %v2009 = vadd.f32 %v1995, %v1981
      %v2010 = vadd.f32 %v1995, %v1982
      %v2011 = vadd.f32 %v2000, %v1983
      %v2012 = vadd.f32 %v2000, %v1984
      %v2013 = vadd.f32 %v2005, %v1985
      %v2014 = vadd.f32 %v2005, %v1986
      %v2015 = vxor.u32 %v2007, 2147483648
      %v2016 = vxor.u32 %v2008, 2147483648
      %v2017 = vxor.u32 %v2009, 2147483648
      %v2018 = vxor.u32 %v2010, 2147483648
      %v2019 = vxor.u32 %v2011, 2147483648
      %v2020 = vxor.u32 %v2012, 2147483648
      %v2021 = vxor.u32 %v2013, 2147483648
      %v2022 = vxor.u32 %v2014, 2147483648
      %v2023 = vmul.f32 %v2015, 1.442695
      %v2024 = vpow.pop %v2023
      %v2025 = vmul.f32 %v2016, 1.442695
      %v2026 = vpow.pop %v2025
      %v2027 = vmul.f32 %v2017, 1.442695
      %v2028 = vpow.pop %v2027
      %v2029 = vmul.f32 %v2018, 1.442695
      %v2030 = vpow.pop %v2029
      %v2031 = vmul.f32 %v2019, 1.442695
      %v2032 = vpow.pop %v2031
      %v2033 = vmul.f32 %v2020, 1.442695
      %v2034 = vpow.pop %v2033
      %v2035 = vmul.f32 %v2021, 1.442695
      %v2036 = vpow.pop %v2035
      %v2037 = vmul.f32 %v2022, 1.442695
      %v2038 = vpow.pop %v2037
      %v2039 = vadd.f32 %v2024, 1.0
      %v2040 = vadd.f32 %v2026, 1.0
      %v2041 = vadd.f32 %v2028, 1.0
      %v2042 = vadd.f32 %v2030, 1.0
      %v2043 = vadd.f32 %v2032, 1.0
      %v2044 = vadd.f32 %v2034, 1.0
      %v2045 = vadd.f32 %v2036, 1.0
      %v2046 = vadd.f32 %v2038, 1.0
      %v2047 = vrcp.pop %v2039
      %v2048 = vmul.f32 %v2039, %v2047
      %v2049 = vsub.f32 1.0, %v2048
      %v2050 = vmul.f32 %v2047, %v2049
      %v2051 = vadd.f32 %v2047, %v2050
      %vm2052 = vweird.f32 %v2039
      %vm2053 = vweird.f32 %v2047
      %vm2054 = vmor %vm2052, %vm2053
      %v2055 = vsel %vm2054, %v2047, %v2051
      %v2056 = vand.u32 2147483647, %v2039
      %vm2057 = vcmp.eq.f32.partialorder %v2056, 8.507059e+37
      %v2058 = vand.u32 %v2039, 2147483648
      %v2059 = vor.u32 1.1754944e-38, %v2058
      %v2060 = vsel %vm2057, %v2059, %v2055
      %v2061 = vmul.f32 1.0, %v2060
      %v2062 = vrcp.pop %v2040
      %v2063 = vmul.f32 %v2040, %v2062
      %v2064 = vsub.f32 1.0, %v2063
      %v2065 = vmul.f32 %v2062, %v2064
      %v2066 = vadd.f32 %v2062, %v2065
      %vm2067 = vweird.f32 %v2040
      %vm2068 = vweird.f32 %v2062
      %vm2069 = vmor %vm2067, %vm2068
      %v2070 = vsel %vm2069, %v2062, %v2066
      %v2071 = vand.u32 2147483647, %v2040
      %vm2072 = vcmp.eq.f32.partialorder %v2071, 8.507059e+37
      %v2073 = vand.u32 %v2040, 2147483648
      %v2074 = vor.u32 1.1754944e-38, %v2073
      %v2075 = vsel %vm2072, %v2074, %v2070
      %v2076 = vmul.f32 1.0, %v2075
      %v2077 = vrcp.pop %v2041
      %v2078 = vmul.f32 %v2041, %v2077
      %v2079 = vsub.f32 1.0, %v2078
      %v2080 = vmul.f32 %v2077, %v2079
      %v2081 = vadd.f32 %v2077, %v2080
      %vm2082 = vweird.f32 %v2041
      %vm2083 = vweird.f32 %v2077
      %vm2084 = vmor %vm2082, %vm2083
      %v2085 = vsel %vm2084, %v2077, %v2081
      %v2086 = vand.u32 2147483647, %v2041
      %vm2087 = vcmp.eq.f32.partialorder %v2086, 8.507059e+37
      %v2088 = vand.u32 %v2041, 2147483648
      %v2089 = vor.u32 1.1754944e-38, %v2088
      %v2090 = vsel %vm2087, %v2089, %v2085
      %v2091 = vmul.f32 1.0, %v2090
      %v2092 = vrcp.pop %v2042
      %v2093 = vmul.f32 %v2042, %v2092
      %v2094 = vsub.f32 1.0, %v2093
      %v2095 = vmul.f32 %v2092, %v2094
      %v2096 = vadd.f32 %v2092, %v2095
      %vm2097 = vweird.f32 %v2042
      %vm2098 = vweird.f32 %v2092
      %vm2099 = vmor %vm2097, %vm2098
      %v2100 = vsel %vm2099, %v2092, %v2096
      %v2101 = vand.u32 2147483647, %v2042
      %vm2102 = vcmp.eq.f32.partialorder %v2101, 8.507059e+37
      %v2103 = vand.u32 %v2042, 2147483648
      %v2104 = vor.u32 1.1754944e-38, %v2103
      %v2105 = vsel %vm2102, %v2104, %v2100
      %v2106 = vmul.f32 1.0, %v2105
      %v2107 = vrcp.pop %v2043
      %v2108 = vmul.f32 %v2043, %v2107
      %v2109 = vsub.f32 1.0, %v2108
      %v2110 = vmul.f32 %v2107, %v2109
      %v2111 = vadd.f32 %v2107, %v2110
      %vm2112 = vweird.f32 %v2043
      %vm2113 = vweird.f32 %v2107
      %vm2114 = vmor %vm2112, %vm2113
      %v2115 = vsel %vm2114, %v2107, %v2111
      %v2116 = vand.u32 2147483647, %v2043
      %vm2117 = vcmp.eq.f32.partialorder %v2116, 8.507059e+37
      %v2118 = vand.u32 %v2043, 2147483648
      %v2119 = vor.u32 1.1754944e-38, %v2118
      %v2120 = vsel %vm2117, %v2119, %v2115
      %v2121 = vmul.f32 1.0, %v2120
      %v2122 = vrcp.pop %v2044
      %v2123 = vmul.f32 %v2044, %v2122
      %v2124 = vsub.f32 1.0, %v2123
      %v2125 = vmul.f32 %v2122, %v2124
      %v2126 = vadd.f32 %v2122, %v2125
      %vm2127 = vweird.f32 %v2044
      %vm2128 = vweird.f32 %v2122
      %vm2129 = vmor %vm2127, %vm2128
      %v2130 = vsel %vm2129, %v2122, %v2126
      %v2131 = vand.u32 2147483647, %v2044
      %vm2132 = vcmp.eq.f32.partialorder %v2131, 8.507059e+37
      %v2133 = vand.u32 %v2044, 2147483648
      %v2134 = vor.u32 1.1754944e-38, %v2133
      %v2135 = vsel %vm2132, %v2134, %v2130
      %v2136 = vmul.f32 1.0, %v2135
      %v2137 = vrcp.pop %v2045
      %v2138 = vmul.f32 %v2045, %v2137
      %v2139 = vsub.f32 1.0, %v2138
      %v2140 = vmul.f32 %v2137, %v2139
      %v2141 = vadd.f32 %v2137, %v2140
      %vm2142 = vweird.f32 %v2045
      %vm2143 = vweird.f32 %v2137
      %vm2144 = vmor %vm2142, %vm2143
      %v2145 = vsel %vm2144, %v2137, %v2141
      %v2146 = vand.u32 2147483647, %v2045
      %vm2147 = vcmp.eq.f32.partialorder %v2146, 8.507059e+37
      %v2148 = vand.u32 %v2045, 2147483648
      %v2149 = vor.u32 1.1754944e-38, %v2148
      %v2150 = vsel %vm2147, %v2149, %v2145
      %v2151 = vmul.f32 1.0, %v2150
      %v2152 = vrcp.pop %v2046
      %v2153 = vmul.f32 %v2046, %v2152
      %v2154 = vsub.f32 1.0, %v2153
      %v2155 = vmul.f32 %v2152, %v2154
      %v2156 = vadd.f32 %v2152, %v2155
      %vm2157 = vweird.f32 %v2046
      %vm2158 = vweird.f32 %v2152
      %vm2159 = vmor %vm2157, %vm2158
      %v2160 = vsel %vm2159, %v2152, %v2156
      %v2161 = vand.u32 2147483647, %v2046
      %vm2162 = vcmp.eq.f32.partialorder %v2161, 8.507059e+37
      %v2163 = vand.u32 %v2046, 2147483648
      %v2164 = vor.u32 1.1754944e-38, %v2163
      %v2165 = vsel %vm2162, %v2164, %v2160
      %v2166 = vmul.f32 1.0, %v2165
      %v2167 = vmul.f32 %v2007, %v2061
      %v2168 = vmul.f32 %v2008, %v2076
      %v2169 = vmul.f32 %v2009, %v2091
      %v2170 = vmul.f32 %v2010, %v2106
      %v2171 = vmul.f32 %v2011, %v2121
      %v2172 = vmul.f32 %v2012, %v2136
      %v2173 = vmul.f32 %v2013, %v2151
      %v2174 = vmul.f32 %v2014, %v2166
      %2175 = vrot.lane.b32.xlu0 %v2167, 17
      %v2176 = vpop.permute.xlu0 %2175
      %2177 = vrot.lane.b32.xlu0 %v2169, 17
      %v2178 = vpop.permute.xlu0 %2177
      %2179 = vrot.lane.b32.xlu0 %v2171, 17
      %v2180 = vpop.permute.xlu0 %2179
      %2181 = vrot.lane.b32.xlu0 %v2173, 17
      %v2182 = vpop.permute.xlu0 %2181
      %2183 = vrot.lane.b32.xlu0 %v2168, 17
      %v2184 = vpop.permute.xlu0 %2183
      %2185 = vrot.lane.b32.xlu0 %v2170, 17
      %v2186 = vpop.permute.xlu0 %2185
      %2187 = vrot.lane.b32.xlu0 %v2172, 17
      %v2188 = vpop.permute.xlu0 %2187
      %2189 = vrot.lane.b32.xlu0 %v2174, 17
      %v2190 = vpop.permute.xlu0 %2189
      %v2191 = vsel %vm866, %v2176, %v2184
      %v2192 = vsel %vm866, %v2178, %v2186
      %v2193 = vsel %vm866, %v2180, %v2188
      %v2194 = vsel %vm866, %v2182, %v2190
      %v2195 = vsel %vm866, %v2184, %v2176
      %v2196 = vsel %vm866, %v2186, %v2178
      %v2197 = vsel %vm866, %v2188, %v2180
      %v2198 = vsel %vm866, %v2190, %v2182
      %v2199 = vmul.f32 %v2195, %v871
      %v2200 = vmul.f32 %v2191, %v872
      %v2201 = vmul.f32 %v2196, %v871
      %v2202 = vmul.f32 %v2192, %v872
      %v2203 = vmul.f32 %v2197, %v871
      %v2204 = vmul.f32 %v2193, %v872
      %v2205 = vmul.f32 %v2198, %v871
      %v2206 = vmul.f32 %v2194, %v872
      %v2207 = vld [vmem:[%s12] sm:$0xf]
      %v2208 = vld [vmem:[%s12 + $0x4] sm:$0xf]
      %v2209 = vld [vmem:[%s12 + $0x8] sm:$0xf]
      %v2210 = vld [vmem:[%s12 + $0xc] sm:$0xf]
      %v2211 = vpack.c.bf16 %v2201, %v2199
      %v2212 = vpack.c.bf16 %v2202, %v2200
      %v2213 = vpack.c.bf16 %v2205, %v2203
      %v2214 = vpack.c.bf16 %v2206, %v2204
      %2215 = vrot.lane.b32.xlu0 %v2167, 16
      %v2216 = vpop.permute.xlu0 %2215
      %2217 = vrot.lane.b32.xlu0 %v2169, 16
      %v2218 = vpop.permute.xlu0 %2217
      %2219 = vrot.lane.b32.xlu0 %v2171, 16
      %v2220 = vpop.permute.xlu0 %2219
      %2221 = vrot.lane.b32.xlu0 %v2173, 16
      %v2222 = vpop.permute.xlu0 %2221
      %2223 = vrot.lane.b32.xlu0 %v2168, 16
      %v2224 = vpop.permute.xlu0 %2223
      %2225 = vrot.lane.b32.xlu0 %v2170, 16
      %v2226 = vpop.permute.xlu0 %2225
      %2227 = vrot.lane.b32.xlu0 %v2172, 16
      %v2228 = vpop.permute.xlu0 %2227
      %2229 = vrot.lane.b32.xlu0 %v2174, 16
      %v2230 = vpop.permute.xlu0 %2229
      %v2231 = vsel %vm887, %v2216, %v2224
      %v2232 = vsel %vm887, %v2218, %v2226
      %v2233 = vsel %vm887, %v2220, %v2228
      %v2234 = vsel %vm887, %v2222, %v2230
      %v2235 = vsel %vm887, %v2224, %v2216
      %v2236 = vsel %vm887, %v2226, %v2218
      %v2237 = vsel %vm887, %v2228, %v2220
      %v2238 = vsel %vm887, %v2230, %v2222
      %v2239 = vmul.f32 %v2235, %v893
      %v2240 = vmul.f32 %v2231, %v894
      %v2241 = vmul.f32 %v2236, %v893
      %v2242 = vmul.f32 %v2232, %v894
      %v2243 = vmul.f32 %v2237, %v893
      %v2244 = vmul.f32 %v2233, %v894
      %v2245 = vmul.f32 %v2238, %v893
      %v2246 = vmul.f32 %v2234, %v894
      %s2247 = scalar_lea.vmem %s12, 16
      %v2248 = vld [vmem:[%s2247] sm:$0xf]
      %v2249 = vld [vmem:[%s2247 + $0x4] sm:$0xf]
      %v2250 = vld [vmem:[%s2247 + $0x8] sm:$0xf]
      %v2251 = vld [vmem:[%s2247 + $0xc] sm:$0xf]
      %v2252 = vpack.c.bf16 %v2241, %v2239
      %v2253 = vpack.c.bf16 %v2242, %v2240
      %v2254 = vpack.c.bf16 %v2245, %v2243
      %v2255 = vpack.c.bf16 %v2246, %v2244
      %v2260 = vunpack.c.l.b16 %v2248
      %v2261 = vunpack.c.l.b16 %v2249
      %v2262 = vunpack.c.l.b16 %v2250
      %v2263 = vunpack.c.l.b16 %v2251
      %v2264 = vpack.c.b16 %v2261, %v2260
      %v2265 = vpack.c.b16 %v2263, %v2262
      %v2267 = vsel %vm1696, %v2264, 0
      %v2270 = vsel %vm1696, %v2265, 0
      %2272 = vmatpush.bf16.msra.mxu0 0
      %2273 = vmatpush.bf16.msra.mxu0 0
      %2274 = vmatpush.bf16.msra.mxu0 0
      %2275 = vmatpush.bf16.msra.mxu0 0
      %2276 = vmatpush.bf16.msra.mxu0 0
      %2277 = vmatpush.bf16.msra.mxu0 0
      %2278 = vmatpush.bf16.msra.mxu0 %v2254
      %2279 = vmatpush.bf16.msra.mxu0 %v2252
      %2280 = vmatmul.bf16.gmra.mxu0 %v2267
      %v2281 = vpop.f32.mrf.mxu0
      %v2282 = vadd.f32 0.0, %v2281
      %v2283 = vpop.f32.mrf.mxu0
      %v2284 = vadd.f32 0.0, %v2283
      %2285 = vmatmul.bf16.gmra.mxu0 %v2270
      %v2286 = vpop.f32.mrf.mxu0
      %v2287 = vadd.f32 0.0, %v2286
      %v2288 = vpop.f32.mrf.mxu0
      %v2289 = vadd.f32 0.0, %v2288
      %2290 = vdwg.mxu0
      %2291 = vmatpush.bf16.msra.mxu0 0
      %2292 = vmatpush.bf16.msra.mxu0 0
      %2293 = vmatpush.bf16.msra.mxu0 0
      %2294 = vmatpush.bf16.msra.mxu0 0
      %2295 = vmatpush.bf16.msra.mxu0 0
      %2296 = vmatpush.bf16.msra.mxu0 0
      %2297 = vmatpush.bf16.msra.mxu0 %v2255
      %2298 = vmatpush.bf16.msra.mxu0 %v2253
      %2299 = vmatmul.bf16.gmra.mxu0 %v2267
      %v2300 = vpop.f32.mrf.mxu0
      %v2301 = vadd.f32 0.0, %v2300
      %v2302 = vpop.f32.mrf.mxu0
      %v2303 = vadd.f32 0.0, %v2302
      %2304 = vmatmul.bf16.gmra.mxu0 %v2270
      %v2305 = vpop.f32.mrf.mxu0
      %v2306 = vadd.f32 0.0, %v2305
      %v2307 = vpop.f32.mrf.mxu0
      %v2308 = vadd.f32 0.0, %v2307
      %2309 = vdwg.mxu0
      %v2314 = vunpack.c.l.b16 %v2207
      %v2315 = vunpack.c.l.b16 %v2208
      %v2316 = vunpack.c.l.b16 %v2209
      %v2317 = vunpack.c.l.b16 %v2210
      %v2318 = vpack.c.b16 %v2315, %v2314
      %v2319 = vpack.c.b16 %v2317, %v2316
      %v2321 = vsel %vm1696, %v2318, 0
      %v2324 = vsel %vm1696, %v2319, 0
      %2326 = vmatpush.bf16.msra.mxu0 0
      %2327 = vmatpush.bf16.msra.mxu0 0
      %2328 = vmatpush.bf16.msra.mxu0 0
      %2329 = vmatpush.bf16.msra.mxu0 0
      %2330 = vmatpush.bf16.msra.mxu0 0
      %2331 = vmatpush.bf16.msra.mxu0 0
      %2332 = vmatpush.bf16.msra.mxu0 %v2213
      %2333 = vmatpush.bf16.msra.mxu0 %v2211
      %2334 = vmatmul.bf16.gmra.mxu0 %v2321
      %v2335 = vpop.f32.mrf.mxu0
      %v2336 = vadd.f32 %v2282, %v2335
      %v2337 = vpop.f32.mrf.mxu0
      %v2338 = vadd.f32 %v2284, %v2337
      %2339 = vmatmul.bf16.gmra.mxu0 %v2324
      %v2340 = vpop.f32.mrf.mxu0
      %v2341 = vadd.f32 %v2287, %v2340
      %v2342 = vpop.f32.mrf.mxu0
      %v2343 = vadd.f32 %v2289, %v2342
      %2344 = vdwg.mxu0
      %2345 = vmatpush.bf16.msra.mxu0 0
      %2346 = vmatpush.bf16.msra.mxu0 0
      %2347 = vmatpush.bf16.msra.mxu0 0
      %2348 = vmatpush.bf16.msra.mxu0 0
      %2349 = vmatpush.bf16.msra.mxu0 0
      %2350 = vmatpush.bf16.msra.mxu0 0
      %2351 = vmatpush.bf16.msra.mxu0 %v2214
      %2352 = vmatpush.bf16.msra.mxu0 %v2212
      %2353 = vmatmul.bf16.gmra.mxu0 %v2321
      %v2354 = vpop.f32.mrf.mxu0
      %v2355 = vadd.f32 %v2301, %v2354
      %v2356 = vpop.f32.mrf.mxu0
      %v2357 = vadd.f32 %v2303, %v2356
      %2358 = vmatmul.bf16.gmra.mxu0 %v2324
      %v2359 = vpop.f32.mrf.mxu0
      %v2360 = vadd.f32 %v2306, %v2359
      %v2361 = vpop.f32.mrf.mxu0
      %v2362 = vadd.f32 %v2308, %v2361
      %2363 = vdwg.mxu0
      %2364 = vrot.lane.b32.xlu0 %v2167, 15
      %v2365 = vpop.permute.xlu0 %2364
      %2366 = vrot.lane.b32.xlu0 %v2169, 15
      %v2367 = vpop.permute.xlu0 %2366
      %2368 = vrot.lane.b32.xlu0 %v2171, 15
      %v2369 = vpop.permute.xlu0 %2368
      %2370 = vrot.lane.b32.xlu0 %v2173, 15
      %v2371 = vpop.permute.xlu0 %2370
      %2372 = vrot.lane.b32.xlu0 %v2168, 15
      %v2373 = vpop.permute.xlu0 %2372
      %2374 = vrot.lane.b32.xlu0 %v2170, 15
      %v2375 = vpop.permute.xlu0 %2374
      %2376 = vrot.lane.b32.xlu0 %v2172, 15
      %v2377 = vpop.permute.xlu0 %2376
      %2378 = vrot.lane.b32.xlu0 %v2174, 15
      %v2379 = vpop.permute.xlu0 %2378
      %v2380 = vsel %vm1031, %v2365, %v2373
      %v2381 = vsel %vm1031, %v2367, %v2375
      %v2382 = vsel %vm1031, %v2369, %v2377
      %v2383 = vsel %vm1031, %v2371, %v2379
      %v2384 = vsel %vm1031, %v2373, %v2365
      %v2385 = vsel %vm1031, %v2375, %v2367
      %v2386 = vsel %vm1031, %v2377, %v2369
      %v2387 = vsel %vm1031, %v2379, %v2371
      %v2388 = vmul.f32 %v2384, %v1037
      %v2389 = vmul.f32 %v2380, %v1038
      %v2390 = vmul.f32 %v2385, %v1037
      %v2391 = vmul.f32 %v2381, %v1038
      %v2392 = vmul.f32 %v2386, %v1037
      %v2393 = vmul.f32 %v2382, %v1038
      %v2394 = vmul.f32 %v2387, %v1037
      %v2395 = vmul.f32 %v2383, %v1038
      %s2396 = scalar_lea.vmem %s12, 32
      %v2397 = vld [vmem:[%s2396] sm:$0xf]
      %v2398 = vld [vmem:[%s2396 + $0x4] sm:$0xf]
      %v2399 = vld [vmem:[%s2396 + $0x8] sm:$0xf]
      %v2400 = vld [vmem:[%s2396 + $0xc] sm:$0xf]
      %v2401 = vpack.c.bf16 %v2390, %v2388
      %v2402 = vpack.c.bf16 %v2391, %v2389
      %v2403 = vpack.c.bf16 %v2394, %v2392
      %v2404 = vpack.c.bf16 %v2395, %v2393
      %v2409 = vunpack.c.l.b16 %v2397
      %v2410 = vunpack.c.l.b16 %v2398
      %v2411 = vunpack.c.l.b16 %v2399
      %v2412 = vunpack.c.l.b16 %v2400
      %v2413 = vpack.c.b16 %v2410, %v2409
      %v2414 = vpack.c.b16 %v2412, %v2411
      %v2416 = vsel %vm1696, %v2413, 0
      %v2419 = vsel %vm1696, %v2414, 0
      %2421 = vmatpush.bf16.msra.mxu0 0
      %2422 = vmatpush.bf16.msra.mxu0 0
      %2423 = vmatpush.bf16.msra.mxu0 0
      %2424 = vmatpush.bf16.msra.mxu0 0
      %2425 = vmatpush.bf16.msra.mxu0 0
      %2426 = vmatpush.bf16.msra.mxu0 0
      %2427 = vmatpush.bf16.msra.mxu0 %v2403
      %2428 = vmatpush.bf16.msra.mxu0 %v2401
      %2429 = vmatmul.bf16.gmra.mxu0 %v2416
      %v2430 = vpop.f32.mrf.mxu0
      %v2431 = vadd.f32 0.0, %v2430
      %v2432 = vpop.f32.mrf.mxu0
      %v2433 = vadd.f32 0.0, %v2432
      %2434 = vmatmul.bf16.gmra.mxu0 %v2419
      %v2435 = vpop.f32.mrf.mxu0
      %v2436 = vadd.f32 0.0, %v2435
      %v2437 = vpop.f32.mrf.mxu0
      %v2438 = vadd.f32 0.0, %v2437
      %2439 = vdwg.mxu0
      %2440 = vmatpush.bf16.msra.mxu0 0
      %2441 = vmatpush.bf16.msra.mxu0 0
      %2442 = vmatpush.bf16.msra.mxu0 0
      %2443 = vmatpush.bf16.msra.mxu0 0
      %2444 = vmatpush.bf16.msra.mxu0 0
      %2445 = vmatpush.bf16.msra.mxu0 0
      %2446 = vmatpush.bf16.msra.mxu0 %v2404
      %2447 = vmatpush.bf16.msra.mxu0 %v2402
      %2448 = vmatmul.bf16.gmra.mxu0 %v2416
      %v2449 = vpop.f32.mrf.mxu0
      %v2450 = vadd.f32 0.0, %v2449
      %v2451 = vpop.f32.mrf.mxu0
      %v2452 = vadd.f32 0.0, %v2451
      %2453 = vmatmul.bf16.gmra.mxu0 %v2419
      %v2454 = vpop.f32.mrf.mxu0
      %v2455 = vadd.f32 0.0, %v2454
      %v2456 = vpop.f32.mrf.mxu0
      %v2457 = vadd.f32 0.0, %v2456
      %2458 = vdwg.mxu0
      %v2459 = vadd.f32 %v2336, %v2431
      %v2460 = vadd.f32 %v2355, %v2450
      %v2461 = vadd.f32 %v2338, %v2433
      %v2462 = vadd.f32 %v2357, %v2452
      %v2463 = vadd.f32 %v2341, %v2436
      %v2464 = vadd.f32 %v2360, %v2455
      %v2465 = vadd.f32 %v2343, %v2438
      %v2466 = vadd.f32 %v2362, %v2457
      %2467 = vrot.lane.b32.xlu0 %v2167, 1
      %v2468 = vpop.permute.xlu0 %2467
      %2469 = vrot.lane.b32.xlu0 %v2169, 1
      %v2470 = vpop.permute.xlu0 %2469
      %2471 = vrot.lane.b32.xlu0 %v2171, 1
      %v2472 = vpop.permute.xlu0 %2471
      %2473 = vrot.lane.b32.xlu0 %v2173, 1
      %v2474 = vpop.permute.xlu0 %2473
      %2475 = vrot.lane.b32.xlu0 %v2168, 1
      %v2476 = vpop.permute.xlu0 %2475
      %2477 = vrot.lane.b32.xlu0 %v2170, 1
      %v2478 = vpop.permute.xlu0 %2477
      %2479 = vrot.lane.b32.xlu0 %v2172, 1
      %v2480 = vpop.permute.xlu0 %2479
      %2481 = vrot.lane.b32.xlu0 %v2174, 1
      %v2482 = vpop.permute.xlu0 %2481
      %v2483 = vsel %vm1122, %v2468, %v2476
      %v2484 = vsel %vm1122, %v2470, %v2478
      %v2485 = vsel %vm1122, %v2472, %v2480
      %v2486 = vsel %vm1122, %v2474, %v2482
      %v2487 = vsel %vm1122, %v2476, %v2468
      %v2488 = vsel %vm1122, %v2478, %v2470
      %v2489 = vsel %vm1122, %v2480, %v2472
      %v2490 = vsel %vm1122, %v2482, %v2474
      %v2491 = vmul.f32 %v2487, %v1128
      %v2492 = vmul.f32 %v2483, %v1129
      %v2493 = vmul.f32 %v2488, %v1128
      %v2494 = vmul.f32 %v2484, %v1129
      %v2495 = vmul.f32 %v2489, %v1128
      %v2496 = vmul.f32 %v2485, %v1129
      %v2497 = vmul.f32 %v2490, %v1128
      %v2498 = vmul.f32 %v2486, %v1129
      %s2499 = scalar_lea.vmem %s12, 48
      %v2500 = vld [vmem:[%s2499] sm:$0xf]
      %v2501 = vld [vmem:[%s2499 + $0x4] sm:$0xf]
      %v2502 = vld [vmem:[%s2499 + $0x8] sm:$0xf]
      %v2503 = vld [vmem:[%s2499 + $0xc] sm:$0xf]
      %v2504 = vpack.c.bf16 %v2493, %v2491
      %v2505 = vpack.c.bf16 %v2494, %v2492
      %v2506 = vpack.c.bf16 %v2497, %v2495
      %v2507 = vpack.c.bf16 %v2498, %v2496
      %v2512 = vunpack.c.l.b16 %v2500
      %v2513 = vunpack.c.l.b16 %v2501
      %v2514 = vunpack.c.l.b16 %v2502
      %v2515 = vunpack.c.l.b16 %v2503
      %v2516 = vpack.c.b16 %v2513, %v2512
      %v2517 = vpack.c.b16 %v2515, %v2514
      %v2519 = vsel %vm1696, %v2516, 0
      %v2522 = vsel %vm1696, %v2517, 0
      %2524 = vmatpush.bf16.msra.mxu0 0
      %2525 = vmatpush.bf16.msra.mxu0 0
      %2526 = vmatpush.bf16.msra.mxu0 0
      %2527 = vmatpush.bf16.msra.mxu0 0
      %2528 = vmatpush.bf16.msra.mxu0 0
      %2529 = vmatpush.bf16.msra.mxu0 0
      %2530 = vmatpush.bf16.msra.mxu0 %v2506
      %2531 = vmatpush.bf16.msra.mxu0 %v2504
      %2532 = vmatmul.bf16.gmra.mxu0 %v2519
      %v2533 = vpop.f32.mrf.mxu0
      %v2534 = vadd.f32 0.0, %v2533
      %v2535 = vpop.f32.mrf.mxu0
      %v2536 = vadd.f32 0.0, %v2535
      %2537 = vmatmul.bf16.gmra.mxu0 %v2522
      %v2538 = vpop.f32.mrf.mxu0
      %v2539 = vadd.f32 0.0, %v2538
      %v2540 = vpop.f32.mrf.mxu0
      %v2541 = vadd.f32 0.0, %v2540
      %2542 = vdwg.mxu0
      %2543 = vmatpush.bf16.msra.mxu0 0
      %2544 = vmatpush.bf16.msra.mxu0 0
      %2545 = vmatpush.bf16.msra.mxu0 0
      %2546 = vmatpush.bf16.msra.mxu0 0
      %2547 = vmatpush.bf16.msra.mxu0 0
      %2548 = vmatpush.bf16.msra.mxu0 0
      %2549 = vmatpush.bf16.msra.mxu0 %v2507
      %2550 = vmatpush.bf16.msra.mxu0 %v2505
      %2551 = vmatmul.bf16.gmra.mxu0 %v2519
      %v2552 = vpop.f32.mrf.mxu0
      %v2553 = vadd.f32 0.0, %v2552
      %v2554 = vpop.f32.mrf.mxu0
      %v2555 = vadd.f32 0.0, %v2554
      %2556 = vmatmul.bf16.gmra.mxu0 %v2522
      %v2557 = vpop.f32.mrf.mxu0
      %v2558 = vadd.f32 0.0, %v2557
      %v2559 = vpop.f32.mrf.mxu0
      %v2560 = vadd.f32 0.0, %v2559
      %2561 = vdwg.mxu0
      %v2562 = vadd.f32 %v2459, %v2534
      %v2563 = vadd.f32 %v2460, %v2553
      %v2564 = vadd.f32 %v2461, %v2536
      %v2565 = vadd.f32 %v2462, %v2555
      %v2566 = vadd.f32 %v2463, %v2539
      %v2567 = vadd.f32 %v2464, %v2558
      %v2568 = vadd.f32 %v2465, %v2541
      %v2569 = vadd.f32 %v2466, %v2560
      %s2570 = scalar_lea.vmem %s12, 64
      %v2571 = vld [vmem:[%s2570] sm:$0xf]
      %v2572 = vld [vmem:[%s2570 + $0x4] sm:$0xf]
      %v2573 = vld [vmem:[%s2570 + $0x8] sm:$0xf]
      %v2574 = vld [vmem:[%s2570 + $0xc] sm:$0xf]
      %v2575 = vpack.c.bf16 %v2169, %v2167
      %v2576 = vpack.c.bf16 %v2170, %v2168
      %v2577 = vpack.c.bf16 %v2173, %v2171
      %v2578 = vpack.c.bf16 %v2174, %v2172
      %v2583 = vunpack.c.l.b16 %v2571
      %v2584 = vunpack.c.l.b16 %v2572
      %v2585 = vunpack.c.l.b16 %v2573
      %v2586 = vunpack.c.l.b16 %v2574
      %v2587 = vpack.c.b16 %v2584, %v2583
      %v2588 = vpack.c.b16 %v2586, %v2585
      %v2590 = vsel %vm1696, %v2587, 0
      %v2593 = vsel %vm1696, %v2588, 0
      %2595 = vmatpush.bf16.msra.mxu0 0
      %2596 = vmatpush.bf16.msra.mxu0 0
      %2597 = vmatpush.bf16.msra.mxu0 0
      %2598 = vmatpush.bf16.msra.mxu0 0
      %2599 = vmatpush.bf16.msra.mxu0 0
      %2600 = vmatpush.bf16.msra.mxu0 0
      %2601 = vmatpush.bf16.msra.mxu0 %v2577
      %2602 = vmatpush.bf16.msra.mxu0 %v2575
      %2603 = vmatmul.bf16.gmra.mxu0 %v2590
      %v2604 = vpop.f32.mrf.mxu0
      %v2605 = vadd.f32 0.0, %v2604
      %v2606 = vpop.f32.mrf.mxu0
      %v2607 = vadd.f32 0.0, %v2606
      %2608 = vmatmul.bf16.gmra.mxu0 %v2593
      %v2609 = vpop.f32.mrf.mxu0
      %v2610 = vadd.f32 0.0, %v2609
      %v2611 = vpop.f32.mrf.mxu0
      %v2612 = vadd.f32 0.0, %v2611
      %2613 = vdwg.mxu0
      %2614 = vmatpush.bf16.msra.mxu0 0
      %2615 = vmatpush.bf16.msra.mxu0 0
      %2616 = vmatpush.bf16.msra.mxu0 0
      %2617 = vmatpush.bf16.msra.mxu0 0
      %2618 = vmatpush.bf16.msra.mxu0 0
      %2619 = vmatpush.bf16.msra.mxu0 0
      %2620 = vmatpush.bf16.msra.mxu0 %v2578
      %2621 = vmatpush.bf16.msra.mxu0 %v2576
      %2622 = vmatmul.bf16.gmra.mxu0 %v2590
      %v2623 = vpop.f32.mrf.mxu0
      %v2624 = vadd.f32 0.0, %v2623
      %v2625 = vpop.f32.mrf.mxu0
      %v2626 = vadd.f32 0.0, %v2625
      %2627 = vmatmul.bf16.gmra.mxu0 %v2593
      %v2628 = vpop.f32.mrf.mxu0
      %v2629 = vadd.f32 0.0, %v2628
      %v2630 = vpop.f32.mrf.mxu0
      %v2631 = vadd.f32 0.0, %v2630
      %2632 = vdwg.mxu0
      %v2633 = vadd.f32 %v2562, %v2605
      %v2634 = vadd.f32 %v2563, %v2624
      %v2635 = vadd.f32 %v2564, %v2607
      %v2636 = vadd.f32 %v2565, %v2626
      %v2637 = vadd.f32 %v2566, %v2610
      %v2638 = vadd.f32 %v2567, %v2629
      %v2639 = vadd.f32 %v2568, %v2612
      %v2640 = vadd.f32 %v2569, %v2631
      %2641 = vrot.lane.b32.xlu0 %v2167, 127
      %v2642 = vpop.permute.xlu0 %2641
      %2643 = vrot.lane.b32.xlu0 %v2169, 127
      %v2644 = vpop.permute.xlu0 %2643
      %2645 = vrot.lane.b32.xlu0 %v2171, 127
      %v2646 = vpop.permute.xlu0 %2645
      %2647 = vrot.lane.b32.xlu0 %v2173, 127
      %v2648 = vpop.permute.xlu0 %2647
      %2649 = vrot.lane.b32.xlu0 %v2168, 127
      %v2650 = vpop.permute.xlu0 %2649
      %2651 = vrot.lane.b32.xlu0 %v2170, 127
      %v2652 = vpop.permute.xlu0 %2651
      %2653 = vrot.lane.b32.xlu0 %v2172, 127
      %v2654 = vpop.permute.xlu0 %2653
      %2655 = vrot.lane.b32.xlu0 %v2174, 127
      %v2656 = vpop.permute.xlu0 %2655
      %v2657 = vsel %vm1288, %v2642, %v2650
      %v2658 = vsel %vm1288, %v2644, %v2652
      %v2659 = vsel %vm1288, %v2646, %v2654
      %v2660 = vsel %vm1288, %v2648, %v2656
      %v2661 = vsel %vm1288, %v2650, %v2642
      %v2662 = vsel %vm1288, %v2652, %v2644
      %v2663 = vsel %vm1288, %v2654, %v2646
      %v2664 = vsel %vm1288, %v2656, %v2648
      %v2665 = vmul.f32 %v2657, %v1294
      %v2666 = vmul.f32 %v2661, %v1295
      %v2667 = vmul.f32 %v2658, %v1294
      %v2668 = vmul.f32 %v2662, %v1295
      %v2669 = vmul.f32 %v2659, %v1294
      %v2670 = vmul.f32 %v2663, %v1295
      %v2671 = vmul.f32 %v2660, %v1294
      %v2672 = vmul.f32 %v2664, %v1295
      %s2673 = scalar_lea.vmem %s12, 80
      %v2674 = vld [vmem:[%s2673] sm:$0xf]
      %v2675 = vld [vmem:[%s2673 + $0x4] sm:$0xf]
      %v2676 = vld [vmem:[%s2673 + $0x8] sm:$0xf]
      %v2677 = vld [vmem:[%s2673 + $0xc] sm:$0xf]
      %v2678 = vpack.c.bf16 %v2667, %v2665
      %v2679 = vpack.c.bf16 %v2668, %v2666
      %v2680 = vpack.c.bf16 %v2671, %v2669
      %v2681 = vpack.c.bf16 %v2672, %v2670
      %v2686 = vunpack.c.l.b16 %v2674
      %v2687 = vunpack.c.l.b16 %v2675
      %v2688 = vunpack.c.l.b16 %v2676
      %v2689 = vunpack.c.l.b16 %v2677
      %v2690 = vpack.c.b16 %v2687, %v2686
      %v2691 = vpack.c.b16 %v2689, %v2688
      %v2693 = vsel %vm1696, %v2690, 0
      %v2696 = vsel %vm1696, %v2691, 0
      %2698 = vmatpush.bf16.msra.mxu0 0
      %2699 = vmatpush.bf16.msra.mxu0 0
      %2700 = vmatpush.bf16.msra.mxu0 0
      %2701 = vmatpush.bf16.msra.mxu0 0
      %2702 = vmatpush.bf16.msra.mxu0 0
      %2703 = vmatpush.bf16.msra.mxu0 0
      %2704 = vmatpush.bf16.msra.mxu0 %v2680
      %2705 = vmatpush.bf16.msra.mxu0 %v2678
      %2706 = vmatmul.bf16.gmra.mxu0 %v2693
      %v2707 = vpop.f32.mrf.mxu0
      %v2708 = vadd.f32 0.0, %v2707
      %v2709 = vpop.f32.mrf.mxu0
      %v2710 = vadd.f32 0.0, %v2709
      %2711 = vmatmul.bf16.gmra.mxu0 %v2696
      %v2712 = vpop.f32.mrf.mxu0
      %v2713 = vadd.f32 0.0, %v2712
      %v2714 = vpop.f32.mrf.mxu0
      %v2715 = vadd.f32 0.0, %v2714
      %2716 = vdwg.mxu0
      %2717 = vmatpush.bf16.msra.mxu0 0
      %2718 = vmatpush.bf16.msra.mxu0 0
      %2719 = vmatpush.bf16.msra.mxu0 0
      %2720 = vmatpush.bf16.msra.mxu0 0
      %2721 = vmatpush.bf16.msra.mxu0 0
      %2722 = vmatpush.bf16.msra.mxu0 0
      %2723 = vmatpush.bf16.msra.mxu0 %v2681
      %2724 = vmatpush.bf16.msra.mxu0 %v2679
      %2725 = vmatmul.bf16.gmra.mxu0 %v2693
      %v2726 = vpop.f32.mrf.mxu0
      %v2727 = vadd.f32 0.0, %v2726
      %v2728 = vpop.f32.mrf.mxu0
      %v2729 = vadd.f32 0.0, %v2728
      %2730 = vmatmul.bf16.gmra.mxu0 %v2696
      %v2731 = vpop.f32.mrf.mxu0
      %v2732 = vadd.f32 0.0, %v2731
      %v2733 = vpop.f32.mrf.mxu0
      %v2734 = vadd.f32 0.0, %v2733
      %2735 = vdwg.mxu0
      %v2736 = vadd.f32 %v2633, %v2708
      %v2737 = vadd.f32 %v2634, %v2727
      %v2738 = vadd.f32 %v2635, %v2710
      %v2739 = vadd.f32 %v2636, %v2729
      %v2740 = vadd.f32 %v2637, %v2713
      %v2741 = vadd.f32 %v2638, %v2732
      %v2742 = vadd.f32 %v2639, %v2715
      %v2743 = vadd.f32 %v2640, %v2734
      %2744 = vrot.lane.b32.xlu0 %v2167, 113
      %v2745 = vpop.permute.xlu0 %2744
      %2746 = vrot.lane.b32.xlu0 %v2169, 113
      %v2747 = vpop.permute.xlu0 %2746
      %2748 = vrot.lane.b32.xlu0 %v2171, 113
      %v2749 = vpop.permute.xlu0 %2748
      %2750 = vrot.lane.b32.xlu0 %v2173, 113
      %v2751 = vpop.permute.xlu0 %2750
      %2752 = vrot.lane.b32.xlu0 %v2168, 113
      %v2753 = vpop.permute.xlu0 %2752
      %2754 = vrot.lane.b32.xlu0 %v2170, 113
      %v2755 = vpop.permute.xlu0 %2754
      %2756 = vrot.lane.b32.xlu0 %v2172, 113
      %v2757 = vpop.permute.xlu0 %2756
      %2758 = vrot.lane.b32.xlu0 %v2174, 113
      %v2759 = vpop.permute.xlu0 %2758
      %v2760 = vsel %vm1379, %v2745, %v2753
      %v2761 = vsel %vm1379, %v2747, %v2755
      %v2762 = vsel %vm1379, %v2749, %v2757
      %v2763 = vsel %vm1379, %v2751, %v2759
      %v2764 = vsel %vm1379, %v2753, %v2745
      %v2765 = vsel %vm1379, %v2755, %v2747
      %v2766 = vsel %vm1379, %v2757, %v2749
      %v2767 = vsel %vm1379, %v2759, %v2751
      %v2768 = vmul.f32 %v2760, %v1385
      %v2769 = vmul.f32 %v2764, %v1386
      %v2770 = vmul.f32 %v2761, %v1385
      %v2771 = vmul.f32 %v2765, %v1386
      %v2772 = vmul.f32 %v2762, %v1385
      %v2773 = vmul.f32 %v2766, %v1386
      %v2774 = vmul.f32 %v2763, %v1385
      %v2775 = vmul.f32 %v2767, %v1386
      %s2776 = scalar_lea.vmem %s12, 96
      %v2777 = vld [vmem:[%s2776] sm:$0xf]
      %v2778 = vld [vmem:[%s2776 + $0x4] sm:$0xf]
      %v2779 = vld [vmem:[%s2776 + $0x8] sm:$0xf]
      %v2780 = vld [vmem:[%s2776 + $0xc] sm:$0xf]
      %v2781 = vpack.c.bf16 %v2770, %v2768
      %v2782 = vpack.c.bf16 %v2771, %v2769
      %v2783 = vpack.c.bf16 %v2774, %v2772
      %v2784 = vpack.c.bf16 %v2775, %v2773
      %v2789 = vunpack.c.l.b16 %v2777
      %v2790 = vunpack.c.l.b16 %v2778
      %v2791 = vunpack.c.l.b16 %v2779
      %v2792 = vunpack.c.l.b16 %v2780
      %v2793 = vpack.c.b16 %v2790, %v2789
      %v2794 = vpack.c.b16 %v2792, %v2791
      %v2796 = vsel %vm1696, %v2793, 0
      %v2799 = vsel %vm1696, %v2794, 0
      %2801 = vmatpush.bf16.msra.mxu0 0
      %2802 = vmatpush.bf16.msra.mxu0 0
      %2803 = vmatpush.bf16.msra.mxu0 0
      %2804 = vmatpush.bf16.msra.mxu0 0
      %2805 = vmatpush.bf16.msra.mxu0 0
      %2806 = vmatpush.bf16.msra.mxu0 0
      %2807 = vmatpush.bf16.msra.mxu0 %v2783
      %2808 = vmatpush.bf16.msra.mxu0 %v2781
      %2809 = vmatmul.bf16.gmra.mxu0 %v2796
      %v2810 = vpop.f32.mrf.mxu0
      %v2811 = vadd.f32 0.0, %v2810
      %v2812 = vpop.f32.mrf.mxu0
      %v2813 = vadd.f32 0.0, %v2812
      %2814 = vmatmul.bf16.gmra.mxu0 %v2799
      %v2815 = vpop.f32.mrf.mxu0
      %v2816 = vadd.f32 0.0, %v2815
      %v2817 = vpop.f32.mrf.mxu0
      %v2818 = vadd.f32 0.0, %v2817
      %2819 = vdwg.mxu0
      %2820 = vmatpush.bf16.msra.mxu0 0
      %2821 = vmatpush.bf16.msra.mxu0 0
      %2822 = vmatpush.bf16.msra.mxu0 0
      %2823 = vmatpush.bf16.msra.mxu0 0
      %2824 = vmatpush.bf16.msra.mxu0 0
      %2825 = vmatpush.bf16.msra.mxu0 0
      %2826 = vmatpush.bf16.msra.mxu0 %v2784
      %2827 = vmatpush.bf16.msra.mxu0 %v2782
      %2828 = vmatmul.bf16.gmra.mxu0 %v2796
      %v2829 = vpop.f32.mrf.mxu0
      %v2830 = vadd.f32 0.0, %v2829
      %v2831 = vpop.f32.mrf.mxu0
      %v2832 = vadd.f32 0.0, %v2831
      %2833 = vmatmul.bf16.gmra.mxu0 %v2799
      %v2834 = vpop.f32.mrf.mxu0
      %v2835 = vadd.f32 0.0, %v2834
      %v2836 = vpop.f32.mrf.mxu0
      %v2837 = vadd.f32 0.0, %v2836
      %2838 = vdwg.mxu0
      %v2839 = vadd.f32 %v2736, %v2811
      %v2840 = vadd.f32 %v2737, %v2830
      %v2841 = vadd.f32 %v2738, %v2813
      %v2842 = vadd.f32 %v2739, %v2832
      %v2843 = vadd.f32 %v2740, %v2816
      %v2844 = vadd.f32 %v2741, %v2835
      %v2845 = vadd.f32 %v2742, %v2818
      %v2846 = vadd.f32 %v2743, %v2837
      %2847 = vrot.lane.b32.xlu0 %v2167, 112
      %v2848 = vpop.permute.xlu0 %2847
      %2849 = vrot.lane.b32.xlu0 %v2169, 112
      %v2850 = vpop.permute.xlu0 %2849
      %2851 = vrot.lane.b32.xlu0 %v2171, 112
      %v2852 = vpop.permute.xlu0 %2851
      %2853 = vrot.lane.b32.xlu0 %v2173, 112
      %v2854 = vpop.permute.xlu0 %2853
      %2855 = vrot.lane.b32.xlu0 %v2168, 112
      %v2856 = vpop.permute.xlu0 %2855
      %2857 = vrot.lane.b32.xlu0 %v2170, 112
      %v2858 = vpop.permute.xlu0 %2857
      %2859 = vrot.lane.b32.xlu0 %v2172, 112
      %v2860 = vpop.permute.xlu0 %2859
      %2861 = vrot.lane.b32.xlu0 %v2174, 112
      %v2862 = vpop.permute.xlu0 %2861
      %v2863 = vsel %vm1470, %v2848, %v2856
      %v2864 = vsel %vm1470, %v2850, %v2858
      %v2865 = vsel %vm1470, %v2852, %v2860
      %v2866 = vsel %vm1470, %v2854, %v2862
      %v2867 = vsel %vm1470, %v2856, %v2848
      %v2868 = vsel %vm1470, %v2858, %v2850
      %v2869 = vsel %vm1470, %v2860, %v2852
      %v2870 = vsel %vm1470, %v2862, %v2854
      %v2871 = vmul.f32 %v2863, %v1476
      %v2872 = vmul.f32 %v2867, %v1477
      %v2873 = vmul.f32 %v2864, %v1476
      %v2874 = vmul.f32 %v2868, %v1477
      %v2875 = vmul.f32 %v2865, %v1476
      %v2876 = vmul.f32 %v2869, %v1477
      %v2877 = vmul.f32 %v2866, %v1476
      %v2878 = vmul.f32 %v2870, %v1477
      %s2879 = scalar_lea.vmem %s12, 112
      %v2880 = vld [vmem:[%s2879] sm:$0xf]
      %v2881 = vld [vmem:[%s2879 + $0x4] sm:$0xf]
      %v2882 = vld [vmem:[%s2879 + $0x8] sm:$0xf]
      %v2883 = vld [vmem:[%s2879 + $0xc] sm:$0xf]
      %v2884 = vpack.c.bf16 %v2873, %v2871
      %v2885 = vpack.c.bf16 %v2874, %v2872
      %v2886 = vpack.c.bf16 %v2877, %v2875
      %v2887 = vpack.c.bf16 %v2878, %v2876
      %v2892 = vunpack.c.l.b16 %v2880
      %v2893 = vunpack.c.l.b16 %v2881
      %v2894 = vunpack.c.l.b16 %v2882
      %v2895 = vunpack.c.l.b16 %v2883
      %v2896 = vpack.c.b16 %v2893, %v2892
      %v2897 = vpack.c.b16 %v2895, %v2894
      %v2899 = vsel %vm1696, %v2896, 0
      %v2902 = vsel %vm1696, %v2897, 0
      %2904 = vmatpush.bf16.msra.mxu0 0
      %2905 = vmatpush.bf16.msra.mxu0 0
      %2906 = vmatpush.bf16.msra.mxu0 0
      %2907 = vmatpush.bf16.msra.mxu0 0
      %2908 = vmatpush.bf16.msra.mxu0 0
      %2909 = vmatpush.bf16.msra.mxu0 0
      %2910 = vmatpush.bf16.msra.mxu0 %v2886
      %2911 = vmatpush.bf16.msra.mxu0 %v2884
      %2912 = vmatmul.bf16.gmra.mxu0 %v2899
      %v2913 = vpop.f32.mrf.mxu0
      %v2914 = vadd.f32 0.0, %v2913
      %v2915 = vpop.f32.mrf.mxu0
      %v2916 = vadd.f32 0.0, %v2915
      %2917 = vmatmul.bf16.gmra.mxu0 %v2902
      %v2918 = vpop.f32.mrf.mxu0
      %v2919 = vadd.f32 0.0, %v2918
      %v2920 = vpop.f32.mrf.mxu0
      %v2921 = vadd.f32 0.0, %v2920
      %2922 = vdwg.mxu0
      %2923 = vmatpush.bf16.msra.mxu0 0
      %2924 = vmatpush.bf16.msra.mxu0 0
      %2925 = vmatpush.bf16.msra.mxu0 0
      %2926 = vmatpush.bf16.msra.mxu0 0
      %2927 = vmatpush.bf16.msra.mxu0 0
      %2928 = vmatpush.bf16.msra.mxu0 0
      %2929 = vmatpush.bf16.msra.mxu0 %v2887
      %2930 = vmatpush.bf16.msra.mxu0 %v2885
      %2931 = vmatmul.bf16.gmra.mxu0 %v2899
      %v2932 = vpop.f32.mrf.mxu0
      %v2933 = vadd.f32 0.0, %v2932
      %v2934 = vpop.f32.mrf.mxu0
      %v2935 = vadd.f32 0.0, %v2934
      %2936 = vmatmul.bf16.gmra.mxu0 %v2902
      %v2937 = vpop.f32.mrf.mxu0
      %v2938 = vadd.f32 0.0, %v2937
      %v2939 = vpop.f32.mrf.mxu0
      %v2940 = vadd.f32 0.0, %v2939
      %2941 = vdwg.mxu0
      %v2942 = vadd.f32 %v2839, %v2914
      %v2943 = vadd.f32 %v2840, %v2933
      %v2944 = vadd.f32 %v2841, %v2916
      %v2945 = vadd.f32 %v2842, %v2935
      %v2946 = vadd.f32 %v2843, %v2919
      %v2947 = vadd.f32 %v2844, %v2938
      %v2948 = vadd.f32 %v2845, %v2921
      %v2949 = vadd.f32 %v2846, %v2940
      %2950 = vrot.lane.b32.xlu0 %v2167, 111
      %v2951 = vpop.permute.xlu0 %2950
      %2952 = vrot.lane.b32.xlu0 %v2169, 111
      %v2953 = vpop.permute.xlu0 %2952
      %2954 = vrot.lane.b32.xlu0 %v2171, 111
      %v2955 = vpop.permute.xlu0 %2954
      %2956 = vrot.lane.b32.xlu0 %v2173, 111
      %v2957 = vpop.permute.xlu0 %2956
      %2958 = vrot.lane.b32.xlu0 %v2168, 111
      %v2959 = vpop.permute.xlu0 %2958
      %2960 = vrot.lane.b32.xlu0 %v2170, 111
      %v2961 = vpop.permute.xlu0 %2960
      %2962 = vrot.lane.b32.xlu0 %v2172, 111
      %v2963 = vpop.permute.xlu0 %2962
      %2964 = vrot.lane.b32.xlu0 %v2174, 111
      %v2965 = vpop.permute.xlu0 %2964
      %v2966 = vsel %vm1561, %v2951, %v2959
      %v2967 = vsel %vm1561, %v2953, %v2961
      %v2968 = vsel %vm1561, %v2955, %v2963
      %v2969 = vsel %vm1561, %v2957, %v2965
      %v2970 = vsel %vm1561, %v2959, %v2951
      %v2971 = vsel %vm1561, %v2961, %v2953
      %v2972 = vsel %vm1561, %v2963, %v2955
      %v2973 = vsel %vm1561, %v2965, %v2957
      %v2974 = vmul.f32 %v2966, %v1567
      %v2975 = vmul.f32 %v2970, %v1568
      %v2976 = vmul.f32 %v2967, %v1567
      %v2977 = vmul.f32 %v2971, %v1568
      %v2978 = vmul.f32 %v2968, %v1567
      %v2979 = vmul.f32 %v2972, %v1568
      %v2980 = vmul.f32 %v2969, %v1567
      %v2981 = vmul.f32 %v2973, %v1568
      %s2982 = scalar_lea.vmem %s12, 128
      %v2983 = vld [vmem:[%s2982] sm:$0xf]
      %v2984 = vld [vmem:[%s2982 + $0x4] sm:$0xf]
      %v2985 = vld [vmem:[%s2982 + $0x8] sm:$0xf]
      %v2986 = vld [vmem:[%s2982 + $0xc] sm:$0xf]
      %v2987 = vpack.c.bf16 %v2976, %v2974
      %v2988 = vpack.c.bf16 %v2977, %v2975
      %v2989 = vpack.c.bf16 %v2980, %v2978
      %v2990 = vpack.c.bf16 %v2981, %v2979
      %v2995 = vunpack.c.l.b16 %v2983
      %v2996 = vunpack.c.l.b16 %v2984
      %v2997 = vunpack.c.l.b16 %v2985
      %v2998 = vunpack.c.l.b16 %v2986
      %v2999 = vpack.c.b16 %v2996, %v2995
      %v3000 = vpack.c.b16 %v2998, %v2997
      %v3002 = vsel %vm1696, %v2999, 0
      %v3005 = vsel %vm1696, %v3000, 0
      %3007 = vmatpush.bf16.msra.mxu0 0
      %3008 = vmatpush.bf16.msra.mxu0 0
      %3009 = vmatpush.bf16.msra.mxu0 0
      %3010 = vmatpush.bf16.msra.mxu0 0
      %3011 = vmatpush.bf16.msra.mxu0 0
      %3012 = vmatpush.bf16.msra.mxu0 0
      %3013 = vmatpush.bf16.msra.mxu0 %v2989
      %3014 = vmatpush.bf16.msra.mxu0 %v2987
      %3015 = vmatmul.bf16.gmra.mxu0 %v3002
      %v3016 = vpop.f32.mrf.mxu0
      %v3017 = vadd.f32 0.0, %v3016
      %v3018 = vpop.f32.mrf.mxu0
      %v3019 = vadd.f32 0.0, %v3018
      %3020 = vmatmul.bf16.gmra.mxu0 %v3005
      %v3021 = vpop.f32.mrf.mxu0
      %v3022 = vadd.f32 0.0, %v3021
      %v3023 = vpop.f32.mrf.mxu0
      %v3024 = vadd.f32 0.0, %v3023
      %3025 = vdwg.mxu0
      %3026 = vmatpush.bf16.msra.mxu0 0
      %3027 = vmatpush.bf16.msra.mxu0 0
      %3028 = vmatpush.bf16.msra.mxu0 0
      %3029 = vmatpush.bf16.msra.mxu0 0
      %3030 = vmatpush.bf16.msra.mxu0 0
      %3031 = vmatpush.bf16.msra.mxu0 0
      %3032 = vmatpush.bf16.msra.mxu0 %v2990
      %3033 = vmatpush.bf16.msra.mxu0 %v2988
      %3034 = vmatmul.bf16.gmra.mxu0 %v3002
      %v3035 = vpop.f32.mrf.mxu0
      %v3036 = vadd.f32 0.0, %v3035
      %v3037 = vpop.f32.mrf.mxu0
      %v3038 = vadd.f32 0.0, %v3037
      %3039 = vmatmul.bf16.gmra.mxu0 %v3005
      %v3040 = vpop.f32.mrf.mxu0
      %v3041 = vadd.f32 0.0, %v3040
      %v3042 = vpop.f32.mrf.mxu0
      %v3043 = vadd.f32 0.0, %v3042
      %3044 = vdwg.mxu0
      %v3045 = vadd.f32 %v2942, %v3017
      %v3046 = vadd.f32 %v2943, %v3036
      %v3047 = vadd.f32 %v2944, %v3019
      %v3048 = vadd.f32 %v2945, %v3038
      %v3049 = vadd.f32 %v2946, %v3022
      %v3050 = vadd.f32 %v2947, %v3041
      %v3051 = vadd.f32 %v2948, %v3024
      %v3052 = vadd.f32 %v2949, %v3043
      %v3053 = vld [vmem:[%s13] sm:$0xff]
      %v3054 = vld [vmem:[%s13 + $0x8] sm:$0xff]
      %v3055 = vld [vmem:[%s13 + $0x10] sm:$0xff]
      %v3056 = vld [vmem:[%s13 + $0x18] sm:$0xff]
      %3058 = vset.pattern.permute.xlu0 0
      %3059 = vperm.xlu0 %3058, %v3053
      %v3060 = vpop.permute.xlu0 %3059
      %3063 = vset.pattern.permute.xlu0 0
      %3064 = vperm.xlu0 %3063, %v3054
      %v3065 = vpop.permute.xlu0 %3064
      %3068 = vset.pattern.permute.xlu0 0
      %3069 = vperm.xlu0 %3068, %v3055
      %v3070 = vpop.permute.xlu0 %3069
      %3073 = vset.pattern.permute.xlu0 0
      %3074 = vperm.xlu0 %3073, %v3056
      %v3075 = vpop.permute.xlu0 %3074
      %v3077 = vadd.f32 %v3045, %v3060
      %v3078 = vadd.f32 %v3046, %v3060
      %v3079 = vadd.f32 %v3047, %v3065
      %v3080 = vadd.f32 %v3048, %v3065
      %v3081 = vadd.f32 %v3049, %v3070
      %v3082 = vadd.f32 %v3050, %v3070
      %v3083 = vadd.f32 %v3051, %v3075
      %v3084 = vadd.f32 %v3052, %v3075
      %v3085 = vld [vmem:[%s14] sm:$0xf]
      %v3086 = vld [vmem:[%s14 + $0x4] sm:$0xf]
      %v3087 = vld [vmem:[%s14 + $0x8] sm:$0xf]
      %v3088 = vld [vmem:[%s14 + $0xc] sm:$0xf]
      %v3089 = vpack.c.bf16 %v725, %v725
      %v3090 = vpack.c.bf16 %v726, %v726
      %v3091 = vld [vmem:[%s15] sm:$0xff]
      %v3092 = vld [vmem:[%s15 + $0x8] sm:$0xff]
      %v3093 = vld [vmem:[%s15 + $0x10] sm:$0xff]
      %v3094 = vld [vmem:[%s15 + $0x18] sm:$0xff]
      %3096 = vset.pattern.permute.xlu0 0
      %3097 = vperm.xlu0 %3096, %v3091
      %v3098 = vpop.permute.xlu0 %3097
      %3101 = vset.pattern.permute.xlu0 0
      %3102 = vperm.xlu0 %3101, %v3092
      %v3103 = vpop.permute.xlu0 %3102
      %3106 = vset.pattern.permute.xlu0 0
      %3107 = vperm.xlu0 %3106, %v3093
      %v3108 = vpop.permute.xlu0 %3107
      %3111 = vset.pattern.permute.xlu0 0
      %3112 = vperm.xlu0 %3111, %v3094
      %v3113 = vpop.permute.xlu0 %3112
      %v3119 = vunpack.c.l.b16 %v3085
      %v3120 = vunpack.c.l.b16 %v3086
      %v3121 = vunpack.c.l.b16 %v3087
      %v3122 = vunpack.c.l.b16 %v3088
      %v3123 = vpack.c.b16 %v3120, %v3119
      %v3124 = vpack.c.b16 %v3122, %v3121
      %v3126 = vsel %vm731, %v3123, 0
      %v3129 = vsel %vm731, %v3124, 0
      %v3132 = vsel %vm922, %v3089, 0
      %v3135 = vsel %vm922, %v3090, 0
      %3137 = vmatpush.bf16.msra.mxu0 0
      %3138 = vmatpush.bf16.msra.mxu0 0
      %3139 = vmatpush.bf16.msra.mxu0 0
      %3140 = vmatpush.bf16.msra.mxu0 0
      %3141 = vmatpush.bf16.msra.mxu0 0
      %3142 = vmatpush.bf16.msra.mxu0 0
      %3143 = vmatpush.bf16.msra.mxu0 0
      %3144 = vmatpush.bf16.msra.mxu0 %v3132
      %3145 = vmatmul.bf16.gmra.mxu0 %v3126
      %v3146 = vpop.f32.mrf.mxu0
      %v3147 = vadd.f32 %v3098, %v3146
      %v3148 = vpop.f32.mrf.mxu0
      %v3149 = vadd.f32 %v3103, %v3148
      %3150 = vmatmul.bf16.gmra.mxu0 %v3129
      %v3151 = vpop.f32.mrf.mxu0
      %v3152 = vadd.f32 %v3108, %v3151
      %v3153 = vpop.f32.mrf.mxu0
      %v3154 = vadd.f32 %v3113, %v3153
      %3155 = vdwg.mxu0
      %3156 = vmatpush.bf16.msra.mxu0 0
      %3157 = vmatpush.bf16.msra.mxu0 0
      %3158 = vmatpush.bf16.msra.mxu0 0
      %3159 = vmatpush.bf16.msra.mxu0 0
      %3160 = vmatpush.bf16.msra.mxu0 0
      %3161 = vmatpush.bf16.msra.mxu0 0
      %3162 = vmatpush.bf16.msra.mxu0 0
      %3163 = vmatpush.bf16.msra.mxu0 %v3135
      %3164 = vmatmul.bf16.gmra.mxu0 %v3126
      %v3165 = vpop.f32.mrf.mxu0
      %v3166 = vadd.f32 %v3098, %v3165
      %v3167 = vpop.f32.mrf.mxu0
      %v3168 = vadd.f32 %v3103, %v3167
      %3169 = vmatmul.bf16.gmra.mxu0 %v3129
      %v3170 = vpop.f32.mrf.mxu0
      %v3171 = vadd.f32 %v3108, %v3170
      %v3172 = vpop.f32.mrf.mxu0
      %v3173 = vadd.f32 %v3113, %v3172
      %3174 = vdwg.mxu0
      %v3175 = vadd.f32 %v3077, %v3147
      %v3176 = vadd.f32 %v3078, %v3166
      %v3177 = vadd.f32 %v3079, %v3149
      %v3178 = vadd.f32 %v3080, %v3168
      %v3179 = vadd.f32 %v3081, %v3152
      %v3180 = vadd.f32 %v3082, %v3171
      %v3181 = vadd.f32 %v3083, %v3154
      %v3182 = vadd.f32 %v3084, %v3173
      %v3183 = vmul.f32 %v3175, 0.70710677
      %v3184 = vmul.f32 %v3176, 0.70710677
      %v3185 = vmul.f32 %v3177, 0.70710677
      %v3186 = vmul.f32 %v3178, 0.70710677
      %v3187 = vmul.f32 %v3179, 0.70710677
      %v3188 = vmul.f32 %v3180, 0.70710677
      %v3189 = vmul.f32 %v3181, 0.70710677
      %v3190 = vmul.f32 %v3182, 0.70710677
      %v3191 = vadd.f32 %v3183, %v3184
      %3192 = vadd.xlane.f32.xlu0 %v3191
      %v3193 = vpop.xlane.xlu0 %3192
      %v3194 = vadd.f32 %v3185, %v3186
      %3195 = vadd.xlane.f32.xlu0 %v3194
      %v3196 = vpop.xlane.xlu0 %3195
      %v3197 = vadd.f32 %v3187, %v3188
      %3198 = vadd.xlane.f32.xlu0 %v3197
      %v3199 = vpop.xlane.xlu0 %3198
      %v3200 = vadd.f32 %v3189, %v3190
      %3201 = vadd.xlane.f32.xlu0 %v3200
      %v3202 = vpop.xlane.xlu0 %3201
      %3203 = vmatpush.msra.mxu0 0.0
      %3204 = vmatpush.msra.mxu0 0.0
      %3205 = vmatpush.msra.mxu0 0.0
      %3206 = vmatpush.msra.mxu0 0.0
      %3207 = vmatpush.msra.mxu0 0.0
      %3208 = vmatpush.msra.mxu0 0.0
      %3209 = vmatpush.msra.mxu0 0.0
      %3210 = vmatpush.msra.mxu0 0.0
      %3211 = vmatpush.msra.mxu0 0.0
      %3212 = vmatpush.msra.mxu0 0.0
      %3213 = vmatpush.msra.mxu0 0.0
      %3214 = vmatpush.msra.mxu0 0.0
      %3215 = vmatpush.msra.mxu0 %v3202
      %3216 = vmatpush.msra.mxu0 %v3199
      %3217 = vmatpush.msra.mxu0 %v3196
      %3218 = vmatpush.msra.mxu0 %v3193
      %3219 = vmatmul.f32.gmra.mxu0 %v1698
      %v3220 = vpop.f32.mrf.mxu0
      %v3221 = vadd.f32 0.0, %v3220
      %3222 = vmatmul.f32.gmra.mxu0 %v1701
      %v3223 = vpop.f32.mrf.mxu0
      %v3224 = vadd.f32 0.0, %v3223
      %3225 = vmatmul.f32.gmra.mxu0 %v1704
      %v3226 = vpop.f32.mrf.mxu0
      %v3227 = vadd.f32 0.0, %v3226
      %3228 = vmatmul.f32.gmra.mxu0 %v1707
      %v3229 = vpop.f32.mrf.mxu0
      %v3230 = vadd.f32 0.0, %v3229
      %3231 = vdwg.mxu0
      %3233 = vset.pattern.permute.xlu0 0
      %3234 = vperm.xlu0 %3233, %v3221
      %v3235 = vpop.permute.xlu0 %3234
      %3238 = vset.pattern.permute.xlu0 0
      %3239 = vperm.xlu0 %3238, %v3224
      %v3240 = vpop.permute.xlu0 %3239
      %3243 = vset.pattern.permute.xlu0 0
      %3244 = vperm.xlu0 %3243, %v3227
      %v3245 = vpop.permute.xlu0 %3244
      %3248 = vset.pattern.permute.xlu0 0
      %3249 = vperm.xlu0 %3248, %v3230
      %v3250 = vpop.permute.xlu0 %3249
      %v3252 = vsub.f32 %v3183, %v3235
      %v3253 = vsub.f32 %v3184, %v3235
      %v3254 = vsub.f32 %v3185, %v3240
      %v3255 = vsub.f32 %v3186, %v3240
      %v3256 = vsub.f32 %v3187, %v3245
      %v3257 = vsub.f32 %v3188, %v3245
      %v3258 = vsub.f32 %v3189, %v3250
      %v3259 = vsub.f32 %v3190, %v3250
      %v3260 = vmul.f32 %v3252, %v3252
      %v3261 = vmul.f32 %v3253, %v3253
      %v3262 = vmul.f32 %v3254, %v3254
      %v3263 = vmul.f32 %v3255, %v3255
      %v3264 = vmul.f32 %v3256, %v3256
      %v3265 = vmul.f32 %v3257, %v3257
      %v3266 = vmul.f32 %v3258, %v3258
      %v3267 = vmul.f32 %v3259, %v3259
      %v3268 = vadd.f32 %v3260, %v3261
      %3269 = vadd.xlane.f32.xlu0 %v3268
      %v3270 = vpop.xlane.xlu0 %3269
      %v3271 = vadd.f32 %v3262, %v3263
      %3272 = vadd.xlane.f32.xlu0 %v3271
      %v3273 = vpop.xlane.xlu0 %3272
      %v3274 = vadd.f32 %v3264, %v3265
      %3275 = vadd.xlane.f32.xlu0 %v3274
      %v3276 = vpop.xlane.xlu0 %3275
      %v3277 = vadd.f32 %v3266, %v3267
      %3278 = vadd.xlane.f32.xlu0 %v3277
      %v3279 = vpop.xlane.xlu0 %3278
      %3280 = vmatpush.msra.mxu0 0.0
      %3281 = vmatpush.msra.mxu0 0.0
      %3282 = vmatpush.msra.mxu0 0.0
      %3283 = vmatpush.msra.mxu0 0.0
      %3284 = vmatpush.msra.mxu0 0.0
      %3285 = vmatpush.msra.mxu0 0.0
      %3286 = vmatpush.msra.mxu0 0.0
      %3287 = vmatpush.msra.mxu0 0.0
      %3288 = vmatpush.msra.mxu0 0.0
      %3289 = vmatpush.msra.mxu0 0.0
      %3290 = vmatpush.msra.mxu0 0.0
      %3291 = vmatpush.msra.mxu0 0.0
      %3292 = vmatpush.msra.mxu0 %v3279
      %3293 = vmatpush.msra.mxu0 %v3276
      %3294 = vmatpush.msra.mxu0 %v3273
      %3295 = vmatpush.msra.mxu0 %v3270
      %3296 = vmatmul.f32.gmra.mxu0 %v1698
      %v3297 = vpop.f32.mrf.mxu0
      %v3298 = vadd.f32 1e-05, %v3297
      %3299 = vmatmul.f32.gmra.mxu0 %v1701
      %v3300 = vpop.f32.mrf.mxu0
      %v3301 = vadd.f32 1e-05, %v3300
      %3302 = vmatmul.f32.gmra.mxu0 %v1704
      %v3303 = vpop.f32.mrf.mxu0
      %v3304 = vadd.f32 1e-05, %v3303
      %3305 = vmatmul.f32.gmra.mxu0 %v1707
      %v3306 = vpop.f32.mrf.mxu0
      %v3307 = vadd.f32 1e-05, %v3306
      %3308 = vdwg.mxu0
      %v3309 = vrsqrt.pop %v3298
      %v3310 = vmul.f32 %v3309, %v3298
      %v3311 = vmul.f32 %v3310, %v3309
      %v3312 = vmul.f32 0.5, %v3311
      %v3313 = vsub.f32 1.5, %v3312
      %v3314 = vmul.f32 %v3309, %v3313
      %vm3315 = vweird.f32 %v3298
      %vm3316 = vweird.f32 %v3309
      %vm3317 = vmor %vm3315, %vm3316
      %v3318 = vsel %vm3317, %v3309, %v3314
      %v3319 = vrsqrt.pop %v3301
      %v3320 = vmul.f32 %v3319, %v3301
      %v3321 = vmul.f32 %v3320, %v3319
      %v3322 = vmul.f32 0.5, %v3321
      %v3323 = vsub.f32 1.5, %v3322
      %v3324 = vmul.f32 %v3319, %v3323
      %vm3325 = vweird.f32 %v3301
      %vm3326 = vweird.f32 %v3319
      %vm3327 = vmor %vm3325, %vm3326
      %v3328 = vsel %vm3327, %v3319, %v3324
      %v3329 = vrsqrt.pop %v3304
      %v3330 = vmul.f32 %v3329, %v3304
      %v3331 = vmul.f32 %v3330, %v3329
      %v3332 = vmul.f32 0.5, %v3331
      %v3333 = vsub.f32 1.5, %v3332
      %v3334 = vmul.f32 %v3329, %v3333
      %vm3335 = vweird.f32 %v3304
      %vm3336 = vweird.f32 %v3329
      %vm3337 = vmor %vm3335, %vm3336
      %v3338 = vsel %vm3337, %v3329, %v3334
      %v3339 = vrsqrt.pop %v3307
      %v3340 = vmul.f32 %v3339, %v3307
      %v3341 = vmul.f32 %v3340, %v3339
      %v3342 = vmul.f32 0.5, %v3341
      %v3343 = vsub.f32 1.5, %v3342
      %v3344 = vmul.f32 %v3339, %v3343
      %vm3345 = vweird.f32 %v3307
      %vm3346 = vweird.f32 %v3339
      %vm3347 = vmor %vm3345, %vm3346
      %v3348 = vsel %vm3347, %v3339, %v3344
      %3350 = vset.pattern.permute.xlu0 0
      %3351 = vperm.xlu0 %3350, %v3318
      %v3352 = vpop.permute.xlu0 %3351
      %3355 = vset.pattern.permute.xlu0 0
      %3356 = vperm.xlu0 %3355, %v3328
      %v3357 = vpop.permute.xlu0 %3356
      %3360 = vset.pattern.permute.xlu0 0
      %3361 = vperm.xlu0 %3360, %v3338
      %v3362 = vpop.permute.xlu0 %3361
      %3365 = vset.pattern.permute.xlu0 0
      %3366 = vperm.xlu0 %3365, %v3348
      %v3367 = vpop.permute.xlu0 %3366
      %v3369 = vmul.f32 %v3252, %v3352
      %v3370 = vmul.f32 %v3253, %v3352
      %v3371 = vmul.f32 %v3254, %v3357
      %v3372 = vmul.f32 %v3255, %v3357
      %v3373 = vmul.f32 %v3256, %v3362
      %v3374 = vmul.f32 %v3257, %v3362
      %v3375 = vmul.f32 %v3258, %v3367
      %v3376 = vmul.f32 %v3259, %v3367
      %v3377 = vld [vmem:[%s16] sm:$0xff]
      %v3378 = vld [vmem:[%s16 + $0x8] sm:$0xff]
      %v3379 = vld [vmem:[%s16 + $0x10] sm:$0xff]
      %v3380 = vld [vmem:[%s16 + $0x18] sm:$0xff]
      %3382 = vset.pattern.permute.xlu0 0
      %3383 = vperm.xlu0 %3382, %v3377
      %v3384 = vpop.permute.xlu0 %3383
      %3387 = vset.pattern.permute.xlu0 0
      %3388 = vperm.xlu0 %3387, %v3378
      %v3389 = vpop.permute.xlu0 %3388
      %3392 = vset.pattern.permute.xlu0 0
      %3393 = vperm.xlu0 %3392, %v3379
      %v3394 = vpop.permute.xlu0 %3393
      %3397 = vset.pattern.permute.xlu0 0
      %3398 = vperm.xlu0 %3397, %v3380
      %v3399 = vpop.permute.xlu0 %3398
      %v3401 = vmul.f32 %v3369, %v3384
      %v3402 = vmul.f32 %v3370, %v3384
      %v3403 = vmul.f32 %v3371, %v3389
      %v3404 = vmul.f32 %v3372, %v3389
      %v3405 = vmul.f32 %v3373, %v3394
      %v3406 = vmul.f32 %v3374, %v3394
      %v3407 = vmul.f32 %v3375, %v3399
      %v3408 = vmul.f32 %v3376, %v3399
      %v3409 = vld [vmem:[%s17] sm:$0xff]
      %v3410 = vld [vmem:[%s17 + $0x8] sm:$0xff]
      %v3411 = vld [vmem:[%s17 + $0x10] sm:$0xff]
      %v3412 = vld [vmem:[%s17 + $0x18] sm:$0xff]
      %3414 = vset.pattern.permute.xlu0 0
      %3415 = vperm.xlu0 %3414, %v3409
      %v3416 = vpop.permute.xlu0 %3415
      %3419 = vset.pattern.permute.xlu0 0
      %3420 = vperm.xlu0 %3419, %v3410
      %v3421 = vpop.permute.xlu0 %3420
      %3424 = vset.pattern.permute.xlu0 0
      %3425 = vperm.xlu0 %3424, %v3411
      %v3426 = vpop.permute.xlu0 %3425
      %3429 = vset.pattern.permute.xlu0 0
      %3430 = vperm.xlu0 %3429, %v3412
      %v3431 = vpop.permute.xlu0 %3430
      %v3433 = vadd.f32 %v3401, %v3416
      %v3434 = vadd.f32 %v3402, %v3416
      %v3435 = vadd.f32 %v3403, %v3421
      %v3436 = vadd.f32 %v3404, %v3421
      %v3437 = vadd.f32 %v3405, %v3426
      %v3438 = vadd.f32 %v3406, %v3426
      %v3439 = vadd.f32 %v3407, %v3431
      %v3440 = vadd.f32 %v3408, %v3431
      %v3441 = vld [vmem:[%s18] sm:$0xf]
      %v3442 = vld [vmem:[%s18 + $0x4] sm:$0xf]
      %v3443 = vld [vmem:[%s18 + $0x8] sm:$0xf]
      %v3444 = vld [vmem:[%s18 + $0xc] sm:$0xf]
      %v3445 = vld [vmem:[%s18 + $0x10] sm:$0xf]
      %v3446 = vld [vmem:[%s18 + $0x14] sm:$0xf]
      %v3447 = vld [vmem:[%s18 + $0x18] sm:$0xf]
      %v3448 = vld [vmem:[%s18 + $0x1c] sm:$0xf]
      %v3449 = vld [vmem:[%s18 + $0x20] sm:$0xf]
      %v3450 = vld [vmem:[%s18 + $0x24] sm:$0xf]
      %v3451 = vld [vmem:[%s18 + $0x28] sm:$0xf]
      %v3452 = vld [vmem:[%s18 + $0x2c] sm:$0xf]
      %v3453 = vpack.c.bf16 %v3435, %v3433
      %v3454 = vpack.c.bf16 %v3436, %v3434
      %v3455 = vpack.c.bf16 %v3439, %v3437
      %v3456 = vpack.c.bf16 %v3440, %v3438
      %v3457 = vld [vmem:[%s19] sm:$0xff]
      %v3458 = vld [vmem:[%s19 + $0x8] sm:$0xff]
      %v3459 = vld [vmem:[%s19 + $0x10] sm:$0xff]
      %v3460 = vld [vmem:[%s19 + $0x18] sm:$0xff]
      %v3461 = vld [vmem:[%s19 + $0x20] sm:$0xff]
      %v3462 = vld [vmem:[%s19 + $0x28] sm:$0xff]
      %v3463 = vld [vmem:[%s19 + $0x30] sm:$0xff]
      %v3464 = vld [vmem:[%s19 + $0x38] sm:$0xff]
      %v3465 = vld [vmem:[%s19 + $0x40] sm:$0xff]
      %v3466 = vld [vmem:[%s19 + $0x48] sm:$0xff]
      %v3467 = vld [vmem:[%s19 + $0x50] sm:$0xff]
      %v3468 = vld [vmem:[%s19 + $0x58] sm:$0xff]
      %3470 = vset.pattern.permute.xlu0 0
      %3471 = vperm.xlu0 %3470, %v3457
      %v3472 = vpop.permute.xlu0 %3471
      %3475 = vset.pattern.permute.xlu0 0
      %3476 = vperm.xlu0 %3475, %v3458
      %v3477 = vpop.permute.xlu0 %3476
      %3480 = vset.pattern.permute.xlu0 0
      %3481 = vperm.xlu0 %3480, %v3459
      %v3482 = vpop.permute.xlu0 %3481
      %3485 = vset.pattern.permute.xlu0 0
      %3486 = vperm.xlu0 %3485, %v3460
      %v3487 = vpop.permute.xlu0 %3486
      %3490 = vset.pattern.permute.xlu0 0
      %3491 = vperm.xlu0 %3490, %v3461
      %v3492 = vpop.permute.xlu0 %3491
      %3495 = vset.pattern.permute.xlu0 0
      %3496 = vperm.xlu0 %3495, %v3462
      %v3497 = vpop.permute.xlu0 %3496
      %3500 = vset.pattern.permute.xlu0 0
      %3501 = vperm.xlu0 %3500, %v3463
      %v3502 = vpop.permute.xlu0 %3501
      %3505 = vset.pattern.permute.xlu0 0
      %3506 = vperm.xlu0 %3505, %v3464
      %v3507 = vpop.permute.xlu0 %3506
      %3510 = vset.pattern.permute.xlu0 0
      %3511 = vperm.xlu0 %3510, %v3465
      %v3512 = vpop.permute.xlu0 %3511
      %3515 = vset.pattern.permute.xlu0 0
      %3516 = vperm.xlu0 %3515, %v3466
      %v3517 = vpop.permute.xlu0 %3516
      %3520 = vset.pattern.permute.xlu0 0
      %3521 = vperm.xlu0 %3520, %v3467
      %v3522 = vpop.permute.xlu0 %3521
      %3525 = vset.pattern.permute.xlu0 0
      %3526 = vperm.xlu0 %3525, %v3468
      %v3527 = vpop.permute.xlu0 %3526
      %v3541 = vunpack.c.l.b16 %v3441
      %v3542 = vunpack.c.l.b16 %v3442
      %v3543 = vunpack.c.l.b16 %v3443
      %v3544 = vunpack.c.l.b16 %v3444
      %v3545 = vunpack.c.l.b16 %v3445
      %v3546 = vunpack.c.l.b16 %v3446
      %v3547 = vunpack.c.l.b16 %v3447
      %v3548 = vunpack.c.l.b16 %v3448
      %v3549 = vunpack.c.l.b16 %v3449
      %v3550 = vunpack.c.l.b16 %v3450
      %v3551 = vunpack.c.l.b16 %v3451
      %v3552 = vunpack.c.l.b16 %v3452
      %v3553 = vpack.c.b16 %v3542, %v3541
      %v3554 = vpack.c.b16 %v3544, %v3543
      %v3555 = vpack.c.b16 %v3546, %v3545
      %v3556 = vpack.c.b16 %v3548, %v3547
      %v3557 = vpack.c.b16 %v3550, %v3549
      %v3558 = vpack.c.b16 %v3552, %v3551
      %v3560 = vsel %vm1696, %v3553, 0
      %v3563 = vsel %vm1696, %v3554, 0
      %v3566 = vsel %vm1696, %v3555, 0
      %v3569 = vsel %vm1696, %v3556, 0
      %v3572 = vsel %vm1696, %v3557, 0
      %v3575 = vsel %vm1696, %v3558, 0
      %3577 = vmatpush.bf16.msra.mxu0 0
      %3578 = vmatpush.bf16.msra.mxu0 0
      %3579 = vmatpush.bf16.msra.mxu0 0
      %3580 = vmatpush.bf16.msra.mxu0 0
      %3581 = vmatpush.bf16.msra.mxu0 0
      %3582 = vmatpush.bf16.msra.mxu0 0
      %3583 = vmatpush.bf16.msra.mxu0 %v3455
      %3584 = vmatpush.bf16.msra.mxu0 %v3453
      %3585 = vmatmul.bf16.gmra.mxu0 %v3560
      %v3586 = vpop.f32.mrf.mxu0
      %v3587 = vadd.f32 %v3472, %v3586
      %v3588 = vpop.f32.mrf.mxu0
      %v3589 = vadd.f32 %v3477, %v3588
      %3590 = vmatmul.bf16.gmra.mxu0 %v3563
      %v3591 = vpop.f32.mrf.mxu0
      %v3592 = vadd.f32 %v3482, %v3591
      %v3593 = vpop.f32.mrf.mxu0
      %v3594 = vadd.f32 %v3487, %v3593
      %3595 = vmatmul.bf16.gmra.mxu0 %v3566
      %v3596 = vpop.f32.mrf.mxu0
      %v3597 = vadd.f32 %v3492, %v3596
      %v3598 = vpop.f32.mrf.mxu0
      %v3599 = vadd.f32 %v3497, %v3598
      %3600 = vmatmul.bf16.gmra.mxu0 %v3569
      %v3601 = vpop.f32.mrf.mxu0
      %v3602 = vadd.f32 %v3502, %v3601
      %v3603 = vpop.f32.mrf.mxu0
      %v3604 = vadd.f32 %v3507, %v3603
      %3605 = vmatmul.bf16.gmra.mxu0 %v3572
      %v3606 = vpop.f32.mrf.mxu0
      %v3607 = vadd.f32 %v3512, %v3606
      %v3608 = vpop.f32.mrf.mxu0
      %v3609 = vadd.f32 %v3517, %v3608
      %3610 = vmatmul.bf16.gmra.mxu0 %v3575
      %v3611 = vpop.f32.mrf.mxu0
      %v3612 = vadd.f32 %v3522, %v3611
      %v3613 = vpop.f32.mrf.mxu0
      %v3614 = vadd.f32 %v3527, %v3613
      %3615 = vdwg.mxu0
      %3616 = vmatpush.bf16.msra.mxu0 0
      %3617 = vmatpush.bf16.msra.mxu0 0
      %3618 = vmatpush.bf16.msra.mxu0 0
      %3619 = vmatpush.bf16.msra.mxu0 0
      %3620 = vmatpush.bf16.msra.mxu0 0
      %3621 = vmatpush.bf16.msra.mxu0 0
      %3622 = vmatpush.bf16.msra.mxu0 %v3456
      %3623 = vmatpush.bf16.msra.mxu0 %v3454
      %3624 = vmatmul.bf16.gmra.mxu0 %v3560
      %v3625 = vpop.f32.mrf.mxu0
      %v3626 = vadd.f32 %v3472, %v3625
      %v3627 = vpop.f32.mrf.mxu0
      %v3628 = vadd.f32 %v3477, %v3627
      %3629 = vmatmul.bf16.gmra.mxu0 %v3563
      %v3630 = vpop.f32.mrf.mxu0
      %v3631 = vadd.f32 %v3482, %v3630
      %v3632 = vpop.f32.mrf.mxu0
      %v3633 = vadd.f32 %v3487, %v3632
      %3634 = vmatmul.bf16.gmra.mxu0 %v3566
      %v3635 = vpop.f32.mrf.mxu0
      %v3636 = vadd.f32 %v3492, %v3635
      %v3637 = vpop.f32.mrf.mxu0
      %v3638 = vadd.f32 %v3497, %v3637
      %3639 = vmatmul.bf16.gmra.mxu0 %v3569
      %v3640 = vpop.f32.mrf.mxu0
      %v3641 = vadd.f32 %v3502, %v3640
      %v3642 = vpop.f32.mrf.mxu0
      %v3643 = vadd.f32 %v3507, %v3642
      %3644 = vmatmul.bf16.gmra.mxu0 %v3572
      %v3645 = vpop.f32.mrf.mxu0
      %v3646 = vadd.f32 %v3512, %v3645
      %v3647 = vpop.f32.mrf.mxu0
      %v3648 = vadd.f32 %v3517, %v3647
      %3649 = vmatmul.bf16.gmra.mxu0 %v3575
      %v3650 = vpop.f32.mrf.mxu0
      %v3651 = vadd.f32 %v3522, %v3650
      %v3652 = vpop.f32.mrf.mxu0
      %v3653 = vadd.f32 %v3527, %v3652
      %3654 = vdwg.mxu0
      %v3655 = vpack.c.bf16 %v3587, %v3587
      %v3656 = vpack.c.bf16 %v3626, %v3626
      %v3657 = vpack.c.bf16 %v3589, %v3589
      %v3658 = vpack.c.bf16 %v3628, %v3628
      %3659 = vxpose.binary.xlu0.c.b16.start [1/16] %v3656, %v3655, 128
      %3660 = vxpose.binary.xlu0.c.b16.cont [2/16] 0, 0, 128
      %3661 = vxpose.binary.xlu0.c.b16.cont [3/16] 0, 0, 128
      %3662 = vxpose.binary.xlu0.c.b16.cont [4/16] 0, 0, 128
      %3663 = vxpose.binary.xlu0.c.b16.cont [5/16] 0, 0, 128
      %3664 = vxpose.binary.xlu0.c.b16.cont [6/16] 0, 0, 128
      %3665 = vxpose.binary.xlu0.c.b16.cont [7/16] 0, 0, 128
      %3666 = vxpose.binary.xlu0.c.b16.end [8/16] 0, 0, 128
      %v3667 = vpop.trf.xlu0
      %v3668 = vpop.trf.xlu0
      %v3669 = vpop.trf.xlu0
      %v3670 = vpop.trf.xlu0
      %v3671 = vpop.trf.xlu0
      %v3672 = vpop.trf.xlu0
      %v3673 = vpop.trf.xlu0
      %v3674 = vpop.trf.xlu0
      %v3675 = vpop.trf.xlu0
      %v3676 = vpop.trf.xlu0
      %v3677 = vpop.trf.xlu0
      %v3678 = vpop.trf.xlu0
      %v3679 = vpop.trf.xlu0
      %v3680 = vpop.trf.xlu0
      %v3681 = vpop.trf.xlu0
      %v3682 = vpop.trf.xlu0
      %v3684 = vsel %vm731, %v3667, 0
      %v3687 = vsel %vm731, %v3669, 0
      %v3690 = vsel %vm731, %v3671, 0
      %v3693 = vsel %vm731, %v3673, 0
      %v3696 = vsel %vm731, %v3675, 0
      %v3699 = vsel %vm731, %v3677, 0
      %v3702 = vsel %vm731, %v3679, 0
      %v3705 = vsel %vm731, %v3681, 0
      %v3708 = vsel %vm731, %v3668, 0
      %v3711 = vsel %vm731, %v3670, 0
      %v3714 = vsel %vm731, %v3672, 0
      %v3717 = vsel %vm731, %v3674, 0
      %v3720 = vsel %vm731, %v3676, 0
      %v3723 = vsel %vm731, %v3678, 0
      %v3726 = vsel %vm731, %v3680, 0
      %v3729 = vsel %vm731, %v3682, 0
      %v3732 = vsel %vm922, %v3657, 0
      %v3735 = vsel %vm922, %v3658, 0
      %3737 = vmatpush.bf16.msra.mxu0 0
      %3738 = vmatpush.bf16.msra.mxu0 0
      %3739 = vmatpush.bf16.msra.mxu0 0
      %3740 = vmatpush.bf16.msra.mxu0 0
      %3741 = vmatpush.bf16.msra.mxu0 0
      %3742 = vmatpush.bf16.msra.mxu0 0
      %3743 = vmatpush.bf16.msra.mxu0 0
      %3744 = vmatpush.bf16.msra.mxu0 %v3732
      %3745 = vmatmul.bf16.gmra.mxu0 %v3684
      %v3746 = vpop.f32.mrf.mxu0
      %v3747 = vadd.f32 0.0, %v3746
      %v3748 = vpop.f32.mrf.mxu0
      %v3749 = vadd.f32 0.0, %v3748
      %3750 = vmatmul.bf16.gmra.mxu0 %v3687
      %v3751 = vpop.f32.mrf.mxu0
      %v3752 = vadd.f32 0.0, %v3751
      %v3753 = vpop.f32.mrf.mxu0
      %v3754 = vadd.f32 0.0, %v3753
      %3755 = vmatmul.bf16.gmra.mxu0 %v3690
      %v3756 = vpop.f32.mrf.mxu0
      %v3757 = vadd.f32 0.0, %v3756
      %v3758 = vpop.f32.mrf.mxu0
      %v3759 = vadd.f32 0.0, %v3758
      %3760 = vmatmul.bf16.gmra.mxu0 %v3693
      %v3761 = vpop.f32.mrf.mxu0
      %v3762 = vadd.f32 0.0, %v3761
      %v3763 = vpop.f32.mrf.mxu0
      %v3764 = vadd.f32 0.0, %v3763
      %3765 = vmatmul.bf16.gmra.mxu0 %v3696
      %v3766 = vpop.f32.mrf.mxu0
      %v3767 = vadd.f32 0.0, %v3766
      %v3768 = vpop.f32.mrf.mxu0
      %v3769 = vadd.f32 0.0, %v3768
      %3770 = vmatmul.bf16.gmra.mxu0 %v3699
      %v3771 = vpop.f32.mrf.mxu0
      %v3772 = vadd.f32 0.0, %v3771
      %v3773 = vpop.f32.mrf.mxu0
      %v3774 = vadd.f32 0.0, %v3773
      %3775 = vmatmul.bf16.gmra.mxu0 %v3702
      %v3776 = vpop.f32.mrf.mxu0
      %v3777 = vadd.f32 0.0, %v3776
      %v3778 = vpop.f32.mrf.mxu0
      %v3779 = vadd.f32 0.0, %v3778
      %3780 = vmatmul.bf16.gmra.mxu0 %v3705
      %v3781 = vpop.f32.mrf.mxu0
      %v3782 = vadd.f32 0.0, %v3781
      %v3783 = vpop.f32.mrf.mxu0
      %v3784 = vadd.f32 0.0, %v3783
      %3785 = vmatmul.bf16.gmra.mxu0 %v3708
      %v3786 = vpop.f32.mrf.mxu0
      %v3787 = vadd.f32 0.0, %v3786
      %v3788 = vpop.f32.mrf.mxu0
      %v3789 = vadd.f32 0.0, %v3788
      %3790 = vmatmul.bf16.gmra.mxu0 %v3711
      %v3791 = vpop.f32.mrf.mxu0
      %v3792 = vadd.f32 0.0, %v3791
      %v3793 = vpop.f32.mrf.mxu0
      %v3794 = vadd.f32 0.0, %v3793
      %3795 = vmatmul.bf16.gmra.mxu0 %v3714
      %v3796 = vpop.f32.mrf.mxu0
      %v3797 = vadd.f32 0.0, %v3796
      %v3798 = vpop.f32.mrf.mxu0
      %v3799 = vadd.f32 0.0, %v3798
      %3800 = vmatmul.bf16.gmra.mxu0 %v3717
      %v3801 = vpop.f32.mrf.mxu0
      %v3802 = vadd.f32 0.0, %v3801
      %v3803 = vpop.f32.mrf.mxu0
      %v3804 = vadd.f32 0.0, %v3803
      %3805 = vmatmul.bf16.gmra.mxu0 %v3720
      %v3806 = vpop.f32.mrf.mxu0
      %v3807 = vadd.f32 0.0, %v3806
      %v3808 = vpop.f32.mrf.mxu0
      %v3809 = vadd.f32 0.0, %v3808
      %3810 = vmatmul.bf16.gmra.mxu0 %v3723
      %v3811 = vpop.f32.mrf.mxu0
      %v3812 = vadd.f32 0.0, %v3811
      %v3813 = vpop.f32.mrf.mxu0
      %v3814 = vadd.f32 0.0, %v3813
      %3815 = vmatmul.bf16.gmra.mxu0 %v3726
      %v3816 = vpop.f32.mrf.mxu0
      %v3817 = vadd.f32 0.0, %v3816
      %v3818 = vpop.f32.mrf.mxu0
      %v3819 = vadd.f32 0.0, %v3818
      %3820 = vmatmul.bf16.gmra.mxu0 %v3729
      %v3821 = vpop.f32.mrf.mxu0
      %v3822 = vadd.f32 0.0, %v3821
      %v3823 = vpop.f32.mrf.mxu0
      %v3824 = vadd.f32 0.0, %v3823
      %3825 = vdwg.mxu0
      %3826 = vmatpush.bf16.msra.mxu0 0
      %3827 = vmatpush.bf16.msra.mxu0 0
      %3828 = vmatpush.bf16.msra.mxu0 0
      %3829 = vmatpush.bf16.msra.mxu0 0
      %3830 = vmatpush.bf16.msra.mxu0 0
      %3831 = vmatpush.bf16.msra.mxu0 0
      %3832 = vmatpush.bf16.msra.mxu0 0
      %3833 = vmatpush.bf16.msra.mxu0 %v3735
      %3834 = vmatmul.bf16.gmra.mxu0 %v3684
      %v3835 = vpop.f32.mrf.mxu0
      %v3836 = vadd.f32 0.0, %v3835
      %v3837 = vpop.f32.mrf.mxu0
      %v3838 = vadd.f32 0.0, %v3837
      %3839 = vmatmul.bf16.gmra.mxu0 %v3687
      %v3840 = vpop.f32.mrf.mxu0
      %v3841 = vadd.f32 0.0, %v3840
      %v3842 = vpop.f32.mrf.mxu0
      %v3843 = vadd.f32 0.0, %v3842
      %3844 = vmatmul.bf16.gmra.mxu0 %v3690
      %v3845 = vpop.f32.mrf.mxu0
      %v3846 = vadd.f32 0.0, %v3845
      %v3847 = vpop.f32.mrf.mxu0
      %v3848 = vadd.f32 0.0, %v3847
      %3849 = vmatmul.bf16.gmra.mxu0 %v3693
      %v3850 = vpop.f32.mrf.mxu0
      %v3851 = vadd.f32 0.0, %v3850
      %v3852 = vpop.f32.mrf.mxu0
      %v3853 = vadd.f32 0.0, %v3852
      %3854 = vmatmul.bf16.gmra.mxu0 %v3696
      %v3855 = vpop.f32.mrf.mxu0
      %v3856 = vadd.f32 0.0, %v3855
      %v3857 = vpop.f32.mrf.mxu0
      %v3858 = vadd.f32 0.0, %v3857
      %3859 = vmatmul.bf16.gmra.mxu0 %v3699
      %v3860 = vpop.f32.mrf.mxu0
      %v3861 = vadd.f32 0.0, %v3860
      %v3862 = vpop.f32.mrf.mxu0
      %v3863 = vadd.f32 0.0, %v3862
      %3864 = vmatmul.bf16.gmra.mxu0 %v3702
      %v3865 = vpop.f32.mrf.mxu0
      %v3866 = vadd.f32 0.0, %v3865
      %v3867 = vpop.f32.mrf.mxu0
      %v3868 = vadd.f32 0.0, %v3867
      %3869 = vmatmul.bf16.gmra.mxu0 %v3705
      %v3870 = vpop.f32.mrf.mxu0
      %v3871 = vadd.f32 0.0, %v3870
      %v3872 = vpop.f32.mrf.mxu0
      %v3873 = vadd.f32 0.0, %v3872
      %3874 = vmatmul.bf16.gmra.mxu0 %v3708
      %v3875 = vpop.f32.mrf.mxu0
      %v3876 = vadd.f32 0.0, %v3875
      %v3877 = vpop.f32.mrf.mxu0
      %v3878 = vadd.f32 0.0, %v3877
      %3879 = vmatmul.bf16.gmra.mxu0 %v3711
      %v3880 = vpop.f32.mrf.mxu0
      %v3881 = vadd.f32 0.0, %v3880
      %v3882 = vpop.f32.mrf.mxu0
      %v3883 = vadd.f32 0.0, %v3882
      %3884 = vmatmul.bf16.gmra.mxu0 %v3714
      %v3885 = vpop.f32.mrf.mxu0
      %v3886 = vadd.f32 0.0, %v3885
      %v3887 = vpop.f32.mrf.mxu0
      %v3888 = vadd.f32 0.0, %v3887
      %3889 = vmatmul.bf16.gmra.mxu0 %v3717
      %v3890 = vpop.f32.mrf.mxu0
      %v3891 = vadd.f32 0.0, %v3890
      %v3892 = vpop.f32.mrf.mxu0
      %v3893 = vadd.f32 0.0, %v3892
      %3894 = vmatmul.bf16.gmra.mxu0 %v3720
      %v3895 = vpop.f32.mrf.mxu0
      %v3896 = vadd.f32 0.0, %v3895
      %v3897 = vpop.f32.mrf.mxu0
      %v3898 = vadd.f32 0.0, %v3897
      %3899 = vmatmul.bf16.gmra.mxu0 %v3723
      %v3900 = vpop.f32.mrf.mxu0
      %v3901 = vadd.f32 0.0, %v3900
      %v3902 = vpop.f32.mrf.mxu0
      %v3903 = vadd.f32 0.0, %v3902
      %3904 = vmatmul.bf16.gmra.mxu0 %v3726
      %v3905 = vpop.f32.mrf.mxu0
      %v3906 = vadd.f32 0.0, %v3905
      %v3907 = vpop.f32.mrf.mxu0
      %v3908 = vadd.f32 0.0, %v3907
      %3909 = vmatmul.bf16.gmra.mxu0 %v3729
      %v3910 = vpop.f32.mrf.mxu0
      %v3911 = vadd.f32 0.0, %v3910
      %v3912 = vpop.f32.mrf.mxu0
      %v3913 = vadd.f32 0.0, %v3912
      %3914 = vdwg.mxu0
      %v3915 = vmax.f32 %v3747, %v3836
      %3916 = vmax.xlane.f32.xlu0 %v3915
      %v3917 = vpop.xlane.xlu0 %3916
      %v3918 = vmax.f32 %v3749, %v3838
      %3919 = vmax.xlane.f32.xlu0 %v3918
      %v3920 = vpop.xlane.xlu0 %3919
      %v3921 = vmax.f32 %v3752, %v3841
      %3922 = vmax.xlane.f32.xlu0 %v3921
      %v3923 = vpop.xlane.xlu0 %3922
      %v3924 = vmax.f32 %v3754, %v3843
      %3925 = vmax.xlane.f32.xlu0 %v3924
      %v3926 = vpop.xlane.xlu0 %3925
      %v3927 = vmax.f32 %v3757, %v3846
      %3928 = vmax.xlane.f32.xlu0 %v3927
      %v3929 = vpop.xlane.xlu0 %3928
      %v3930 = vmax.f32 %v3759, %v3848
      %3931 = vmax.xlane.f32.xlu0 %v3930
      %v3932 = vpop.xlane.xlu0 %3931
      %v3933 = vmax.f32 %v3762, %v3851
      %3934 = vmax.xlane.f32.xlu0 %v3933
      %v3935 = vpop.xlane.xlu0 %3934
      %v3936 = vmax.f32 %v3764, %v3853
      %3937 = vmax.xlane.f32.xlu0 %v3936
      %v3938 = vpop.xlane.xlu0 %3937
      %v3939 = vmax.f32 %v3767, %v3856
      %3940 = vmax.xlane.f32.xlu0 %v3939
      %v3941 = vpop.xlane.xlu0 %3940
      %v3942 = vmax.f32 %v3769, %v3858
      %3943 = vmax.xlane.f32.xlu0 %v3942
      %v3944 = vpop.xlane.xlu0 %3943
      %v3945 = vmax.f32 %v3772, %v3861
      %3946 = vmax.xlane.f32.xlu0 %v3945
      %v3947 = vpop.xlane.xlu0 %3946
      %v3948 = vmax.f32 %v3774, %v3863
      %3949 = vmax.xlane.f32.xlu0 %v3948
      %v3950 = vpop.xlane.xlu0 %3949
      %v3951 = vmax.f32 %v3777, %v3866
      %3952 = vmax.xlane.f32.xlu0 %v3951
      %v3953 = vpop.xlane.xlu0 %3952
      %v3954 = vmax.f32 %v3779, %v3868
      %3955 = vmax.xlane.f32.xlu0 %v3954
      %v3956 = vpop.xlane.xlu0 %3955
      %v3957 = vmax.f32 %v3782, %v3871
      %3958 = vmax.xlane.f32.xlu0 %v3957
      %v3959 = vpop.xlane.xlu0 %3958
      %v3960 = vmax.f32 %v3784, %v3873
      %3961 = vmax.xlane.f32.xlu0 %v3960
      %v3962 = vpop.xlane.xlu0 %3961
      %v3963 = vmax.f32 %v3787, %v3876
      %3964 = vmax.xlane.f32.xlu0 %v3963
      %v3965 = vpop.xlane.xlu0 %3964
      %v3966 = vmax.f32 %v3789, %v3878
      %3967 = vmax.xlane.f32.xlu0 %v3966
      %v3968 = vpop.xlane.xlu0 %3967
      %v3969 = vmax.f32 %v3792, %v3881
      %3970 = vmax.xlane.f32.xlu0 %v3969
      %v3971 = vpop.xlane.xlu0 %3970
      %v3972 = vmax.f32 %v3794, %v3883
      %3973 = vmax.xlane.f32.xlu0 %v3972
      %v3974 = vpop.xlane.xlu0 %3973
      %v3975 = vmax.f32 %v3797, %v3886
      %3976 = vmax.xlane.f32.xlu0 %v3975
      %v3977 = vpop.xlane.xlu0 %3976
      %v3978 = vmax.f32 %v3799, %v3888
      %3979 = vmax.xlane.f32.xlu0 %v3978
      %v3980 = vpop.xlane.xlu0 %3979
      %v3981 = vmax.f32 %v3802, %v3891
      %3982 = vmax.xlane.f32.xlu0 %v3981
      %v3983 = vpop.xlane.xlu0 %3982
      %v3984 = vmax.f32 %v3804, %v3893
      %3985 = vmax.xlane.f32.xlu0 %v3984
      %v3986 = vpop.xlane.xlu0 %3985
      %v3987 = vmax.f32 %v3807, %v3896
      %3988 = vmax.xlane.f32.xlu0 %v3987
      %v3989 = vpop.xlane.xlu0 %3988
      %v3990 = vmax.f32 %v3809, %v3898
      %3991 = vmax.xlane.f32.xlu0 %v3990
      %v3992 = vpop.xlane.xlu0 %3991
      %v3993 = vmax.f32 %v3812, %v3901
      %3994 = vmax.xlane.f32.xlu0 %v3993
      %v3995 = vpop.xlane.xlu0 %3994
      %v3996 = vmax.f32 %v3814, %v3903
      %3997 = vmax.xlane.f32.xlu0 %v3996
      %v3998 = vpop.xlane.xlu0 %3997
      %v3999 = vmax.f32 %v3817, %v3906
      %4000 = vmax.xlane.f32.xlu0 %v3999
      %v4001 = vpop.xlane.xlu0 %4000
      %v4002 = vmax.f32 %v3819, %v3908
      %4003 = vmax.xlane.f32.xlu0 %v4002
      %v4004 = vpop.xlane.xlu0 %4003
      %v4005 = vmax.f32 %v3822, %v3911
      %4006 = vmax.xlane.f32.xlu0 %v4005
      %v4007 = vpop.xlane.xlu0 %4006
      %v4008 = vmax.f32 %v3824, %v3913
      %4009 = vmax.xlane.f32.xlu0 %v4008
      %v4010 = vpop.xlane.xlu0 %4009
      %v4011 = vsub.f32 %v3747, %v3917
      %v4012 = vsub.f32 %v3836, %v3917
      %v4013 = vsub.f32 %v3749, %v3920
      %v4014 = vsub.f32 %v3838, %v3920
      %v4015 = vsub.f32 %v3752, %v3923
      %v4016 = vsub.f32 %v3841, %v3923
      %v4017 = vsub.f32 %v3754, %v3926
      %v4018 = vsub.f32 %v3843, %v3926
      %v4019 = vsub.f32 %v3757, %v3929
      %v4020 = vsub.f32 %v3846, %v3929
      %v4021 = vsub.f32 %v3759, %v3932
      %v4022 = vsub.f32 %v3848, %v3932
      %v4023 = vsub.f32 %v3762, %v3935
      %v4024 = vsub.f32 %v3851, %v3935
      %v4025 = vsub.f32 %v3764, %v3938
      %v4026 = vsub.f32 %v3853, %v3938
      %v4027 = vsub.f32 %v3767, %v3941
      %v4028 = vsub.f32 %v3856, %v3941
      %v4029 = vsub.f32 %v3769, %v3944
      %v4030 = vsub.f32 %v3858, %v3944
      %v4031 = vsub.f32 %v3772, %v3947
      %v4032 = vsub.f32 %v3861, %v3947
      %v4033 = vsub.f32 %v3774, %v3950
      %v4034 = vsub.f32 %v3863, %v3950
      %v4035 = vsub.f32 %v3777, %v3953
      %v4036 = vsub.f32 %v3866, %v3953
      %v4037 = vsub.f32 %v3779, %v3956
      %v4038 = vsub.f32 %v3868, %v3956
      %v4039 = vsub.f32 %v3782, %v3959
      %v4040 = vsub.f32 %v3871, %v3959
      %v4041 = vsub.f32 %v3784, %v3962
      %v4042 = vsub.f32 %v3873, %v3962
      %v4043 = vsub.f32 %v3787, %v3965
      %v4044 = vsub.f32 %v3876, %v3965
      %v4045 = vsub.f32 %v3789, %v3968
      %v4046 = vsub.f32 %v3878, %v3968
      %v4047 = vsub.f32 %v3792, %v3971
      %v4048 = vsub.f32 %v3881, %v3971
      %v4049 = vsub.f32 %v3794, %v3974
      %v4050 = vsub.f32 %v3883, %v3974
      %v4051 = vsub.f32 %v3797, %v3977
      %v4052 = vsub.f32 %v3886, %v3977
      %v4053 = vsub.f32 %v3799, %v3980
      %v4054 = vsub.f32 %v3888, %v3980
      %v4055 = vsub.f32 %v3802, %v3983
      %v4056 = vsub.f32 %v3891, %v3983
      %v4057 = vsub.f32 %v3804, %v3986
      %v4058 = vsub.f32 %v3893, %v3986
      %v4059 = vsub.f32 %v3807, %v3989
      %v4060 = vsub.f32 %v3896, %v3989
      %v4061 = vsub.f32 %v3809, %v3992
      %v4062 = vsub.f32 %v3898, %v3992
      %v4063 = vsub.f32 %v3812, %v3995
      %v4064 = vsub.f32 %v3901, %v3995
      %v4065 = vsub.f32 %v3814, %v3998
      %v4066 = vsub.f32 %v3903, %v3998
      %v4067 = vsub.f32 %v3817, %v4001
      %v4068 = vsub.f32 %v3906, %v4001
      %v4069 = vsub.f32 %v3819, %v4004
      %v4070 = vsub.f32 %v3908, %v4004
      %v4071 = vsub.f32 %v3822, %v4007
      %v4072 = vsub.f32 %v3911, %v4007
      %v4073 = vsub.f32 %v3824, %v4010
      %v4074 = vsub.f32 %v3913, %v4010
      %v4075 = vmul.f32 %v4011, 1.442695
      %v4076 = vpow.pop %v4075
      %v4077 = vmul.f32 %v4012, 1.442695
      %v4078 = vpow.pop %v4077
      %v4079 = vmul.f32 %v4013, 1.442695
      %v4080 = vpow.pop %v4079
      %v4081 = vmul.f32 %v4014, 1.442695
      %v4082 = vpow.pop %v4081
      %v4083 = vmul.f32 %v4015, 1.442695
      %v4084 = vpow.pop %v4083
      %v4085 = vmul.f32 %v4016, 1.442695
      %v4086 = vpow.pop %v4085
      %v4087 = vmul.f32 %v4017, 1.442695
      %v4088 = vpow.pop %v4087
      %v4089 = vmul.f32 %v4018, 1.442695
      %v4090 = vpow.pop %v4089
      %v4091 = vmul.f32 %v4019, 1.442695
      %v4092 = vpow.pop %v4091
      %v4093 = vmul.f32 %v4020, 1.442695
      %v4094 = vpow.pop %v4093
      %v4095 = vmul.f32 %v4021, 1.442695
      %v4096 = vpow.pop %v4095
      %v4097 = vmul.f32 %v4022, 1.442695
      %v4098 = vpow.pop %v4097
      %v4099 = vmul.f32 %v4023, 1.442695
      %v4100 = vpow.pop %v4099
      %v4101 = vmul.f32 %v4024, 1.442695
      %v4102 = vpow.pop %v4101
      %v4103 = vmul.f32 %v4025, 1.442695
      %v4104 = vpow.pop %v4103
      %v4105 = vmul.f32 %v4026, 1.442695
      %v4106 = vpow.pop %v4105
      %v4107 = vmul.f32 %v4027, 1.442695
      %v4108 = vpow.pop %v4107
      %v4109 = vmul.f32 %v4028, 1.442695
      %v4110 = vpow.pop %v4109
      %v4111 = vmul.f32 %v4029, 1.442695
      %v4112 = vpow.pop %v4111
      %v4113 = vmul.f32 %v4030, 1.442695
      %v4114 = vpow.pop %v4113
      %v4115 = vmul.f32 %v4031, 1.442695
      %v4116 = vpow.pop %v4115
      %v4117 = vmul.f32 %v4032, 1.442695
      %v4118 = vpow.pop %v4117
      %v4119 = vmul.f32 %v4033, 1.442695
      %v4120 = vpow.pop %v4119
      %v4121 = vmul.f32 %v4034, 1.442695
      %v4122 = vpow.pop %v4121
      %v4123 = vmul.f32 %v4035, 1.442695
      %v4124 = vpow.pop %v4123
      %v4125 = vmul.f32 %v4036, 1.442695
      %v4126 = vpow.pop %v4125
      %v4127 = vmul.f32 %v4037, 1.442695
      %v4128 = vpow.pop %v4127
      %v4129 = vmul.f32 %v4038, 1.442695
      %v4130 = vpow.pop %v4129
      %v4131 = vmul.f32 %v4039, 1.442695
      %v4132 = vpow.pop %v4131
      %v4133 = vmul.f32 %v4040, 1.442695
      %v4134 = vpow.pop %v4133
      %v4135 = vmul.f32 %v4041, 1.442695
      %v4136 = vpow.pop %v4135
      %v4137 = vmul.f32 %v4042, 1.442695
      %v4138 = vpow.pop %v4137
      %v4139 = vmul.f32 %v4043, 1.442695
      %v4140 = vpow.pop %v4139
      %v4141 = vmul.f32 %v4044, 1.442695
      %v4142 = vpow.pop %v4141
      %v4143 = vmul.f32 %v4045, 1.442695
      %v4144 = vpow.pop %v4143
      %v4145 = vmul.f32 %v4046, 1.442695
      %v4146 = vpow.pop %v4145
      %v4147 = vmul.f32 %v4047, 1.442695
      %v4148 = vpow.pop %v4147
      %v4149 = vmul.f32 %v4048, 1.442695
      %v4150 = vpow.pop %v4149
      %v4151 = vmul.f32 %v4049, 1.442695
      %v4152 = vpow.pop %v4151
      %v4153 = vmul.f32 %v4050, 1.442695
      %v4154 = vpow.pop %v4153
      %v4155 = vmul.f32 %v4051, 1.442695
      %v4156 = vpow.pop %v4155
      %v4157 = vmul.f32 %v4052, 1.442695
      %v4158 = vpow.pop %v4157
      %v4159 = vmul.f32 %v4053, 1.442695
      %v4160 = vpow.pop %v4159
      %v4161 = vmul.f32 %v4054, 1.442695
      %v4162 = vpow.pop %v4161
      %v4163 = vmul.f32 %v4055, 1.442695
      %v4164 = vpow.pop %v4163
      %v4165 = vmul.f32 %v4056, 1.442695
      %v4166 = vpow.pop %v4165
      %v4167 = vmul.f32 %v4057, 1.442695
      %v4168 = vpow.pop %v4167
      %v4169 = vmul.f32 %v4058, 1.442695
      %v4170 = vpow.pop %v4169
      %v4171 = vmul.f32 %v4059, 1.442695
      %v4172 = vpow.pop %v4171
      %v4173 = vmul.f32 %v4060, 1.442695
      %v4174 = vpow.pop %v4173
      %v4175 = vmul.f32 %v4061, 1.442695
      %v4176 = vpow.pop %v4175
      %v4177 = vmul.f32 %v4062, 1.442695
      %v4178 = vpow.pop %v4177
      %v4179 = vmul.f32 %v4063, 1.442695
      %v4180 = vpow.pop %v4179
      %v4181 = vmul.f32 %v4064, 1.442695
      %v4182 = vpow.pop %v4181
      %v4183 = vmul.f32 %v4065, 1.442695
      %v4184 = vpow.pop %v4183
      %v4185 = vmul.f32 %v4066, 1.442695
      %v4186 = vpow.pop %v4185
      %v4187 = vmul.f32 %v4067, 1.442695
      %v4188 = vpow.pop %v4187
      %v4189 = vmul.f32 %v4068, 1.442695
      %v4190 = vpow.pop %v4189
      %v4191 = vmul.f32 %v4069, 1.442695
      %v4192 = vpow.pop %v4191
      %v4193 = vmul.f32 %v4070, 1.442695
      %v4194 = vpow.pop %v4193
      %v4195 = vmul.f32 %v4071, 1.442695
      %v4196 = vpow.pop %v4195
      %v4197 = vmul.f32 %v4072, 1.442695
      %v4198 = vpow.pop %v4197
      %v4199 = vmul.f32 %v4073, 1.442695
      %v4200 = vpow.pop %v4199
      %v4201 = vmul.f32 %v4074, 1.442695
      %v4202 = vpow.pop %v4201
      %v4203 = vadd.f32 %v4076, %v4078
      %4204 = vadd.xlane.f32.xlu0 %v4203
      %v4205 = vpop.xlane.xlu0 %4204
      %v4206 = vadd.f32 %v4080, %v4082
      %4207 = vadd.xlane.f32.xlu0 %v4206
      %v4208 = vpop.xlane.xlu0 %4207
      %v4209 = vadd.f32 %v4084, %v4086
      %4210 = vadd.xlane.f32.xlu0 %v4209
      %v4211 = vpop.xlane.xlu0 %4210
      %v4212 = vadd.f32 %v4088, %v4090
      %4213 = vadd.xlane.f32.xlu0 %v4212
      %v4214 = vpop.xlane.xlu0 %4213
      %v4215 = vadd.f32 %v4092, %v4094
      %4216 = vadd.xlane.f32.xlu0 %v4215
      %v4217 = vpop.xlane.xlu0 %4216
      %v4218 = vadd.f32 %v4096, %v4098
      %4219 = vadd.xlane.f32.xlu0 %v4218
      %v4220 = vpop.xlane.xlu0 %4219
      %v4221 = vadd.f32 %v4100, %v4102
      %4222 = vadd.xlane.f32.xlu0 %v4221
      %v4223 = vpop.xlane.xlu0 %4222
      %v4224 = vadd.f32 %v4104, %v4106
      %4225 = vadd.xlane.f32.xlu0 %v4224
      %v4226 = vpop.xlane.xlu0 %4225
      %v4227 = vadd.f32 %v4108, %v4110
      %4228 = vadd.xlane.f32.xlu0 %v4227
      %v4229 = vpop.xlane.xlu0 %4228
      %v4230 = vadd.f32 %v4112, %v4114
      %4231 = vadd.xlane.f32.xlu0 %v4230
      %v4232 = vpop.xlane.xlu0 %4231
      %v4233 = vadd.f32 %v4116, %v4118
      %4234 = vadd.xlane.f32.xlu0 %v4233
      %v4235 = vpop.xlane.xlu0 %4234
      %v4236 = vadd.f32 %v4120, %v4122
      %4237 = vadd.xlane.f32.xlu0 %v4236
      %v4238 = vpop.xlane.xlu0 %4237
      %v4239 = vadd.f32 %v4124, %v4126
      %4240 = vadd.xlane.f32.xlu0 %v4239
      %v4241 = vpop.xlane.xlu0 %4240
      %v4242 = vadd.f32 %v4128, %v4130
      %4243 = vadd.xlane.f32.xlu0 %v4242
      %v4244 = vpop.xlane.xlu0 %4243
      %v4245 = vadd.f32 %v4132, %v4134
      %4246 = vadd.xlane.f32.xlu0 %v4245
      %v4247 = vpop.xlane.xlu0 %4246
      %v4248 = vadd.f32 %v4136, %v4138
      %4249 = vadd.xlane.f32.xlu0 %v4248
      %v4250 = vpop.xlane.xlu0 %4249
      %v4251 = vadd.f32 %v4140, %v4142
      %4252 = vadd.xlane.f32.xlu0 %v4251
      %v4253 = vpop.xlane.xlu0 %4252
      %v4254 = vadd.f32 %v4144, %v4146
      %4255 = vadd.xlane.f32.xlu0 %v4254
      %v4256 = vpop.xlane.xlu0 %4255
      %v4257 = vadd.f32 %v4148, %v4150
      %4258 = vadd.xlane.f32.xlu0 %v4257
      %v4259 = vpop.xlane.xlu0 %4258
      %v4260 = vadd.f32 %v4152, %v4154
      %4261 = vadd.xlane.f32.xlu0 %v4260
      %v4262 = vpop.xlane.xlu0 %4261
      %v4263 = vadd.f32 %v4156, %v4158
      %4264 = vadd.xlane.f32.xlu0 %v4263
      %v4265 = vpop.xlane.xlu0 %4264
      %v4266 = vadd.f32 %v4160, %v4162
      %4267 = vadd.xlane.f32.xlu0 %v4266
      %v4268 = vpop.xlane.xlu0 %4267
      %v4269 = vadd.f32 %v4164, %v4166
      %4270 = vadd.xlane.f32.xlu0 %v4269
      %v4271 = vpop.xlane.xlu0 %4270
      %v4272 = vadd.f32 %v4168, %v4170
      %4273 = vadd.xlane.f32.xlu0 %v4272
      %v4274 = vpop.xlane.xlu0 %4273
      %v4275 = vadd.f32 %v4172, %v4174
      %4276 = vadd.xlane.f32.xlu0 %v4275
      %v4277 = vpop.xlane.xlu0 %4276
      %v4278 = vadd.f32 %v4176, %v4178
      %4279 = vadd.xlane.f32.xlu0 %v4278
      %v4280 = vpop.xlane.xlu0 %4279
      %v4281 = vadd.f32 %v4180, %v4182
      %4282 = vadd.xlane.f32.xlu0 %v4281
      %v4283 = vpop.xlane.xlu0 %4282
      %v4284 = vadd.f32 %v4184, %v4186
      %4285 = vadd.xlane.f32.xlu0 %v4284
      %v4286 = vpop.xlane.xlu0 %4285
      %v4287 = vadd.f32 %v4188, %v4190
      %4288 = vadd.xlane.f32.xlu0 %v4287
      %v4289 = vpop.xlane.xlu0 %4288
      %v4290 = vadd.f32 %v4192, %v4194
      %4291 = vadd.xlane.f32.xlu0 %v4290
      %v4292 = vpop.xlane.xlu0 %4291
      %v4293 = vadd.f32 %v4196, %v4198
      %4294 = vadd.xlane.f32.xlu0 %v4293
      %v4295 = vpop.xlane.xlu0 %4294
      %v4296 = vadd.f32 %v4200, %v4202
      %4297 = vadd.xlane.f32.xlu0 %v4296
      %v4298 = vpop.xlane.xlu0 %4297
      %v4299 = vrcp.pop %v4205
      %v4300 = vrcp.pop %v4208
      %v4301 = vrcp.pop %v4211
      %v4302 = vrcp.pop %v4214
      %v4303 = vrcp.pop %v4217
      %v4304 = vrcp.pop %v4220
      %v4305 = vrcp.pop %v4223
      %v4306 = vrcp.pop %v4226
      %v4307 = vrcp.pop %v4229
      %v4308 = vrcp.pop %v4232
      %v4309 = vrcp.pop %v4235
      %v4310 = vrcp.pop %v4238
      %v4311 = vrcp.pop %v4241
      %v4312 = vrcp.pop %v4244
      %v4313 = vrcp.pop %v4247
      %v4314 = vrcp.pop %v4250
      %v4315 = vrcp.pop %v4253
      %v4316 = vrcp.pop %v4256
      %v4317 = vrcp.pop %v4259
      %v4318 = vrcp.pop %v4262
      %v4319 = vrcp.pop %v4265
      %v4320 = vrcp.pop %v4268
      %v4321 = vrcp.pop %v4271
      %v4322 = vrcp.pop %v4274
      %v4323 = vrcp.pop %v4277
      %v4324 = vrcp.pop %v4280
      %v4325 = vrcp.pop %v4283
      %v4326 = vrcp.pop %v4286
      %v4327 = vrcp.pop %v4289
      %v4328 = vrcp.pop %v4292
      %v4329 = vrcp.pop %v4295
      %v4330 = vrcp.pop %v4298
      %v4331 = vmul.f32 %v4076, %v4299
      %v4332 = vmul.f32 %v4078, %v4299
      %v4333 = vmul.f32 %v4080, %v4300
      %v4334 = vmul.f32 %v4082, %v4300
      %v4335 = vmul.f32 %v4084, %v4301
      %v4336 = vmul.f32 %v4086, %v4301
      %v4337 = vmul.f32 %v4088, %v4302
      %v4338 = vmul.f32 %v4090, %v4302
      %v4339 = vmul.f32 %v4092, %v4303
      %v4340 = vmul.f32 %v4094, %v4303
      %v4341 = vmul.f32 %v4096, %v4304
      %v4342 = vmul.f32 %v4098, %v4304
      %v4343 = vmul.f32 %v4100, %v4305
      %v4344 = vmul.f32 %v4102, %v4305
      %v4345 = vmul.f32 %v4104, %v4306
      %v4346 = vmul.f32 %v4106, %v4306
      %v4347 = vmul.f32 %v4108, %v4307
      %v4348 = vmul.f32 %v4110, %v4307
      %v4349 = vmul.f32 %v4112, %v4308
      %v4350 = vmul.f32 %v4114, %v4308
      %v4351 = vmul.f32 %v4116, %v4309
      %v4352 = vmul.f32 %v4118, %v4309
      %v4353 = vmul.f32 %v4120, %v4310
      %v4354 = vmul.f32 %v4122, %v4310
      %v4355 = vmul.f32 %v4124, %v4311
      %v4356 = vmul.f32 %v4126, %v4311
      %v4357 = vmul.f32 %v4128, %v4312
      %v4358 = vmul.f32 %v4130, %v4312
      %v4359 = vmul.f32 %v4132, %v4313
      %v4360 = vmul.f32 %v4134, %v4313
      %v4361 = vmul.f32 %v4136, %v4314
      %v4362 = vmul.f32 %v4138, %v4314
      %v4363 = vmul.f32 %v4140, %v4315
      %v4364 = vmul.f32 %v4142, %v4315
      %v4365 = vmul.f32 %v4144, %v4316
      %v4366 = vmul.f32 %v4146, %v4316
      %v4367 = vmul.f32 %v4148, %v4317
      %v4368 = vmul.f32 %v4150, %v4317
      %v4369 = vmul.f32 %v4152, %v4318
      %v4370 = vmul.f32 %v4154, %v4318
      %v4371 = vmul.f32 %v4156, %v4319
      %v4372 = vmul.f32 %v4158, %v4319
      %v4373 = vmul.f32 %v4160, %v4320
      %v4374 = vmul.f32 %v4162, %v4320
      %v4375 = vmul.f32 %v4164, %v4321
      %v4376 = vmul.f32 %v4166, %v4321
      %v4377 = vmul.f32 %v4168, %v4322
      %v4378 = vmul.f32 %v4170, %v4322
      %v4379 = vmul.f32 %v4172, %v4323
      %v4380 = vmul.f32 %v4174, %v4323
      %v4381 = vmul.f32 %v4176, %v4324
      %v4382 = vmul.f32 %v4178, %v4324
      %v4383 = vmul.f32 %v4180, %v4325
      %v4384 = vmul.f32 %v4182, %v4325
      %v4385 = vmul.f32 %v4184, %v4326
      %v4386 = vmul.f32 %v4186, %v4326
      %v4387 = vmul.f32 %v4188, %v4327
      %v4388 = vmul.f32 %v4190, %v4327
      %v4389 = vmul.f32 %v4192, %v4328
      %v4390 = vmul.f32 %v4194, %v4328
      %v4391 = vmul.f32 %v4196, %v4329
      %v4392 = vmul.f32 %v4198, %v4329
      %v4393 = vmul.f32 %v4200, %v4330
      %v4394 = vmul.f32 %v4202, %v4330
      %v4395 = vpack.c.bf16 %v3592, %v3592
      %v4396 = vpack.c.bf16 %v3631, %v3631
      %v4397 = vpack.c.bf16 %v4333, %v4331
      %v4398 = vpack.c.bf16 %v4334, %v4332
      %v4399 = vpack.c.bf16 %v4337, %v4335
      %v4400 = vpack.c.bf16 %v4338, %v4336
      %v4401 = vpack.c.bf16 %v4341, %v4339
      %v4402 = vpack.c.bf16 %v4342, %v4340
      %v4403 = vpack.c.bf16 %v4345, %v4343
      %v4404 = vpack.c.bf16 %v4346, %v4344
      %v4405 = vpack.c.bf16 %v4349, %v4347
      %v4406 = vpack.c.bf16 %v4350, %v4348
      %v4407 = vpack.c.bf16 %v4353, %v4351
      %v4408 = vpack.c.bf16 %v4354, %v4352
      %v4409 = vpack.c.bf16 %v4357, %v4355
      %v4410 = vpack.c.bf16 %v4358, %v4356
      %v4411 = vpack.c.bf16 %v4361, %v4359
      %v4412 = vpack.c.bf16 %v4362, %v4360
      %v4413 = vpack.c.bf16 %v4365, %v4363
      %v4414 = vpack.c.bf16 %v4366, %v4364
      %v4415 = vpack.c.bf16 %v4369, %v4367
      %v4416 = vpack.c.bf16 %v4370, %v4368
      %v4417 = vpack.c.bf16 %v4373, %v4371
      %v4418 = vpack.c.bf16 %v4374, %v4372
      %v4419 = vpack.c.bf16 %v4377, %v4375
      %v4420 = vpack.c.bf16 %v4378, %v4376
      %v4421 = vpack.c.bf16 %v4381, %v4379
      %v4422 = vpack.c.bf16 %v4382, %v4380
      %v4423 = vpack.c.bf16 %v4385, %v4383
      %v4424 = vpack.c.bf16 %v4386, %v4384
      %v4425 = vpack.c.bf16 %v4389, %v4387
      %v4426 = vpack.c.bf16 %v4390, %v4388
      %v4427 = vpack.c.bf16 %v4393, %v4391
      %v4428 = vpack.c.bf16 %v4394, %v4392
      %4429 = vmatpush.bf16.xpose.msra.mxu0 %v4411
      %4430 = vmatpush.bf16.xpose.msra.mxu0 %v4409
      %4431 = vmatpush.bf16.xpose.msra.mxu0 %v4407
      %4432 = vmatpush.bf16.xpose.msra.mxu0 %v4405
      %4433 = vmatpush.bf16.xpose.msra.mxu0 %v4403
      %4434 = vmatpush.bf16.xpose.msra.mxu0 %v4401
      %4435 = vmatpush.bf16.xpose.msra.mxu0 %v4399
      %4436 = vmatpush.bf16.xpose.msra.mxu0 %v4397
      %4437 = vmatmul.bf16.gmra.mxu0 %v4395
      %v4438 = vpop.f32.mrf.mxu0
      %v4439 = vadd.f32 0.0, %v4438
      %v4440 = vpop.f32.mrf.mxu0
      %4441 = vdwg.mxu0
      %4442 = vmatpush.bf16.xpose.msra.mxu0 %v4412
      %4443 = vmatpush.bf16.xpose.msra.mxu0 %v4410
      %4444 = vmatpush.bf16.xpose.msra.mxu0 %v4408
      %4445 = vmatpush.bf16.xpose.msra.mxu0 %v4406
      %4446 = vmatpush.bf16.xpose.msra.mxu0 %v4404
      %4447 = vmatpush.bf16.xpose.msra.mxu0 %v4402
      %4448 = vmatpush.bf16.xpose.msra.mxu0 %v4400
      %4449 = vmatpush.bf16.xpose.msra.mxu0 %v4398
      %4450 = vmatmul.bf16.gmra.mxu0 %v4396
      %v4451 = vpop.f32.mrf.mxu0
      %v4452 = vadd.f32 %v4439, %v4451
      %v4453 = vpop.f32.mrf.mxu0
      %4454 = vdwg.mxu0
      %4455 = vmatpush.bf16.xpose.msra.mxu0 %v4427
      %4456 = vmatpush.bf16.xpose.msra.mxu0 %v4425
      %4457 = vmatpush.bf16.xpose.msra.mxu0 %v4423
      %4458 = vmatpush.bf16.xpose.msra.mxu0 %v4421
      %4459 = vmatpush.bf16.xpose.msra.mxu0 %v4419
      %4460 = vmatpush.bf16.xpose.msra.mxu0 %v4417
      %4461 = vmatpush.bf16.xpose.msra.mxu0 %v4415
      %4462 = vmatpush.bf16.xpose.msra.mxu0 %v4413
      %4463 = vmatmul.bf16.gmra.mxu0 %v4395
      %v4464 = vpop.f32.mrf.mxu0
      %v4465 = vadd.f32 0.0, %v4464
      %v4466 = vpop.f32.mrf.mxu0
      %4467 = vdwg.mxu0
      %4468 = vmatpush.bf16.xpose.msra.mxu0 %v4428
      %4469 = vmatpush.bf16.xpose.msra.mxu0 %v4426
      %4470 = vmatpush.bf16.xpose.msra.mxu0 %v4424
      %4471 = vmatpush.bf16.xpose.msra.mxu0 %v4422
      %4472 = vmatpush.bf16.xpose.msra.mxu0 %v4420
      %4473 = vmatpush.bf16.xpose.msra.mxu0 %v4418
      %4474 = vmatpush.bf16.xpose.msra.mxu0 %v4416
      %4475 = vmatpush.bf16.xpose.msra.mxu0 %v4414
      %4476 = vmatmul.bf16.gmra.mxu0 %v4396
      %v4477 = vpop.f32.mrf.mxu0
      %v4478 = vadd.f32 %v4465, %v4477
      %v4479 = vpop.f32.mrf.mxu0
      %4480 = vdwg.mxu0
      %v4481 = vpack.c.bf16 %v3594, %v3594
      %v4482 = vpack.c.bf16 %v3633, %v3633
      %v4483 = vpack.c.bf16 %v3597, %v3597
      %v4484 = vpack.c.bf16 %v3636, %v3636
      %4485 = vxpose.binary.xlu0.c.b16.start [1/16] %v4482, %v4481, 128
      %4486 = vxpose.binary.xlu0.c.b16.cont [2/16] 0, 0, 128
      %4487 = vxpose.binary.xlu0.c.b16.cont [3/16] 0, 0, 128
      %4488 = vxpose.binary.xlu0.c.b16.cont [4/16] 0, 0, 128
      %4489 = vxpose.binary.xlu0.c.b16.cont [5/16] 0, 0, 128
      %4490 = vxpose.binary.xlu0.c.b16.cont [6/16] 0, 0, 128
      %4491 = vxpose.binary.xlu0.c.b16.cont [7/16] 0, 0, 128
      %4492 = vxpose.binary.xlu0.c.b16.end [8/16] 0, 0, 128
      %v4493 = vpop.trf.xlu0
      %v4494 = vpop.trf.xlu0
      %v4495 = vpop.trf.xlu0
      %v4496 = vpop.trf.xlu0
      %v4497 = vpop.trf.xlu0
      %v4498 = vpop.trf.xlu0
      %v4499 = vpop.trf.xlu0
      %v4500 = vpop.trf.xlu0
      %v4501 = vpop.trf.xlu0
      %v4502 = vpop.trf.xlu0
      %v4503 = vpop.trf.xlu0
      %v4504 = vpop.trf.xlu0
      %v4505 = vpop.trf.xlu0
      %v4506 = vpop.trf.xlu0
      %v4507 = vpop.trf.xlu0
      %v4508 = vpop.trf.xlu0
      %v4510 = vsel %vm731, %v4493, 0
      %v4513 = vsel %vm731, %v4495, 0
      %v4516 = vsel %vm731, %v4497, 0
      %v4519 = vsel %vm731, %v4499, 0
      %v4522 = vsel %vm731, %v4501, 0
      %v4525 = vsel %vm731, %v4503, 0
      %v4528 = vsel %vm731, %v4505, 0
      %v4531 = vsel %vm731, %v4507, 0
      %v4534 = vsel %vm731, %v4494, 0
      %v4537 = vsel %vm731, %v4496, 0
      %v4540 = vsel %vm731, %v4498, 0
      %v4543 = vsel %vm731, %v4500, 0
      %v4546 = vsel %vm731, %v4502, 0
      %v4549 = vsel %vm731, %v4504, 0
      %v4552 = vsel %vm731, %v4506, 0
      %v4555 = vsel %vm731, %v4508, 0
      %v4558 = vsel %vm922, %v4483, 0
      %v4561 = vsel %vm922, %v4484, 0
      %4563 = vmatpush.bf16.msra.mxu0 0
      %4564 = vmatpush.bf16.msra.mxu0 0
      %4565 = vmatpush.bf16.msra.mxu0 0
      %4566 = vmatpush.bf16.msra.mxu0 0
      %4567 = vmatpush.bf16.msra.mxu0 0
      %4568 = vmatpush.bf16.msra.mxu0 0
      %4569 = vmatpush.bf16.msra.mxu0 0
      %4570 = vmatpush.bf16.msra.mxu0 %v4558
      %4571 = vmatmul.bf16.gmra.mxu0 %v4510
      %v4572 = vpop.f32.mrf.mxu0
      %v4573 = vadd.f32 0.0, %v4572
      %v4574 = vpop.f32.mrf.mxu0
      %v4575 = vadd.f32 0.0, %v4574
      %4576 = vmatmul.bf16.gmra.mxu0 %v4513
      %v4577 = vpop.f32.mrf.mxu0
      %v4578 = vadd.f32 0.0, %v4577
      %v4579 = vpop.f32.mrf.mxu0
      %v4580 = vadd.f32 0.0, %v4579
      %4581 = vmatmul.bf16.gmra.mxu0 %v4516
      %v4582 = vpop.f32.mrf.mxu0
      %v4583 = vadd.f32 0.0, %v4582
      %v4584 = vpop.f32.mrf.mxu0
      %v4585 = vadd.f32 0.0, %v4584
      %4586 = vmatmul.bf16.gmra.mxu0 %v4519
      %v4587 = vpop.f32.mrf.mxu0
      %v4588 = vadd.f32 0.0, %v4587
      %v4589 = vpop.f32.mrf.mxu0
      %v4590 = vadd.f32 0.0, %v4589
      %4591 = vmatmul.bf16.gmra.mxu0 %v4522
      %v4592 = vpop.f32.mrf.mxu0
      %v4593 = vadd.f32 0.0, %v4592
      %v4594 = vpop.f32.mrf.mxu0
      %v4595 = vadd.f32 0.0, %v4594
      %4596 = vmatmul.bf16.gmra.mxu0 %v4525
      %v4597 = vpop.f32.mrf.mxu0
      %v4598 = vadd.f32 0.0, %v4597
      %v4599 = vpop.f32.mrf.mxu0
      %v4600 = vadd.f32 0.0, %v4599
      %4601 = vmatmul.bf16.gmra.mxu0 %v4528
      %v4602 = vpop.f32.mrf.mxu0
      %v4603 = vadd.f32 0.0, %v4602
      %v4604 = vpop.f32.mrf.mxu0
      %v4605 = vadd.f32 0.0, %v4604
      %4606 = vmatmul.bf16.gmra.mxu0 %v4531
      %v4607 = vpop.f32.mrf.mxu0
      %v4608 = vadd.f32 0.0, %v4607
      %v4609 = vpop.f32.mrf.mxu0
      %v4610 = vadd.f32 0.0, %v4609
      %4611 = vmatmul.bf16.gmra.mxu0 %v4534
      %v4612 = vpop.f32.mrf.mxu0
      %v4613 = vadd.f32 0.0, %v4612
      %v4614 = vpop.f32.mrf.mxu0
      %v4615 = vadd.f32 0.0, %v4614
      %4616 = vmatmul.bf16.gmra.mxu0 %v4537
      %v4617 = vpop.f32.mrf.mxu0
      %v4618 = vadd.f32 0.0, %v4617
      %v4619 = vpop.f32.mrf.mxu0
      %v4620 = vadd.f32 0.0, %v4619
      %4621 = vmatmul.bf16.gmra.mxu0 %v4540
      %v4622 = vpop.f32.mrf.mxu0
      %v4623 = vadd.f32 0.0, %v4622
      %v4624 = vpop.f32.mrf.mxu0
      %v4625 = vadd.f32 0.0, %v4624
      %4626 = vmatmul.bf16.gmra.mxu0 %v4543
      %v4627 = vpop.f32.mrf.mxu0
      %v4628 = vadd.f32 0.0, %v4627
      %v4629 = vpop.f32.mrf.mxu0
      %v4630 = vadd.f32 0.0, %v4629
      %4631 = vmatmul.bf16.gmra.mxu0 %v4546
      %v4632 = vpop.f32.mrf.mxu0
      %v4633 = vadd.f32 0.0, %v4632
      %v4634 = vpop.f32.mrf.mxu0
      %v4635 = vadd.f32 0.0, %v4634
      %4636 = vmatmul.bf16.gmra.mxu0 %v4549
      %v4637 = vpop.f32.mrf.mxu0
      %v4638 = vadd.f32 0.0, %v4637
      %v4639 = vpop.f32.mrf.mxu0
      %v4640 = vadd.f32 0.0, %v4639
      %4641 = vmatmul.bf16.gmra.mxu0 %v4552
      %v4642 = vpop.f32.mrf.mxu0
      %v4643 = vadd.f32 0.0, %v4642
      %v4644 = vpop.f32.mrf.mxu0
      %v4645 = vadd.f32 0.0, %v4644
      %4646 = vmatmul.bf16.gmra.mxu0 %v4555
      %v4647 = vpop.f32.mrf.mxu0
      %v4648 = vadd.f32 0.0, %v4647
      %v4649 = vpop.f32.mrf.mxu0
      %v4650 = vadd.f32 0.0, %v4649
      %4651 = vdwg.mxu0
      %4652 = vmatpush.bf16.msra.mxu0 0
      %4653 = vmatpush.bf16.msra.mxu0 0
      %4654 = vmatpush.bf16.msra.mxu0 0
      %4655 = vmatpush.bf16.msra.mxu0 0
      %4656 = vmatpush.bf16.msra.mxu0 0
      %4657 = vmatpush.bf16.msra.mxu0 0
      %4658 = vmatpush.bf16.msra.mxu0 0
      %4659 = vmatpush.bf16.msra.mxu0 %v4561
      %4660 = vmatmul.bf16.gmra.mxu0 %v4510
      %v4661 = vpop.f32.mrf.mxu0
      %v4662 = vadd.f32 0.0, %v4661
      %v4663 = vpop.f32.mrf.mxu0
      %v4664 = vadd.f32 0.0, %v4663
      %4665 = vmatmul.bf16.gmra.mxu0 %v4513
      %v4666 = vpop.f32.mrf.mxu0
      %v4667 = vadd.f32 0.0, %v4666
      %v4668 = vpop.f32.mrf.mxu0
      %v4669 = vadd.f32 0.0, %v4668
      %4670 = vmatmul.bf16.gmra.mxu0 %v4516
      %v4671 = vpop.f32.mrf.mxu0
      %v4672 = vadd.f32 0.0, %v4671
      %v4673 = vpop.f32.mrf.mxu0
      %v4674 = vadd.f32 0.0, %v4673
      %4675 = vmatmul.bf16.gmra.mxu0 %v4519
      %v4676 = vpop.f32.mrf.mxu0
      %v4677 = vadd.f32 0.0, %v4676
      %v4678 = vpop.f32.mrf.mxu0
      %v4679 = vadd.f32 0.0, %v4678
      %4680 = vmatmul.bf16.gmra.mxu0 %v4522
      %v4681 = vpop.f32.mrf.mxu0
      %v4682 = vadd.f32 0.0, %v4681
      %v4683 = vpop.f32.mrf.mxu0
      %v4684 = vadd.f32 0.0, %v4683
      %4685 = vmatmul.bf16.gmra.mxu0 %v4525
      %v4686 = vpop.f32.mrf.mxu0
      %v4687 = vadd.f32 0.0, %v4686
      %v4688 = vpop.f32.mrf.mxu0
      %v4689 = vadd.f32 0.0, %v4688
      %4690 = vmatmul.bf16.gmra.mxu0 %v4528
      %v4691 = vpop.f32.mrf.mxu0
      %v4692 = vadd.f32 0.0, %v4691
      %v4693 = vpop.f32.mrf.mxu0
      %v4694 = vadd.f32 0.0, %v4693
      %4695 = vmatmul.bf16.gmra.mxu0 %v4531
      %v4696 = vpop.f32.mrf.mxu0
      %v4697 = vadd.f32 0.0, %v4696
      %v4698 = vpop.f32.mrf.mxu0
      %v4699 = vadd.f32 0.0, %v4698
      %4700 = vmatmul.bf16.gmra.mxu0 %v4534
      %v4701 = vpop.f32.mrf.mxu0
      %v4702 = vadd.f32 0.0, %v4701
      %v4703 = vpop.f32.mrf.mxu0
      %v4704 = vadd.f32 0.0, %v4703
      %4705 = vmatmul.bf16.gmra.mxu0 %v4537
      %v4706 = vpop.f32.mrf.mxu0
      %v4707 = vadd.f32 0.0, %v4706
      %v4708 = vpop.f32.mrf.mxu0
      %v4709 = vadd.f32 0.0, %v4708
      %4710 = vmatmul.bf16.gmra.mxu0 %v4540
      %v4711 = vpop.f32.mrf.mxu0
      %v4712 = vadd.f32 0.0, %v4711
      %v4713 = vpop.f32.mrf.mxu0
      %v4714 = vadd.f32 0.0, %v4713
      %4715 = vmatmul.bf16.gmra.mxu0 %v4543
      %v4716 = vpop.f32.mrf.mxu0
      %v4717 = vadd.f32 0.0, %v4716
      %v4718 = vpop.f32.mrf.mxu0
      %v4719 = vadd.f32 0.0, %v4718
      %4720 = vmatmul.bf16.gmra.mxu0 %v4546
      %v4721 = vpop.f32.mrf.mxu0
      %v4722 = vadd.f32 0.0, %v4721
      %v4723 = vpop.f32.mrf.mxu0
      %v4724 = vadd.f32 0.0, %v4723
      %4725 = vmatmul.bf16.gmra.mxu0 %v4549
      %v4726 = vpop.f32.mrf.mxu0
      %v4727 = vadd.f32 0.0, %v4726
      %v4728 = vpop.f32.mrf.mxu0
      %v4729 = vadd.f32 0.0, %v4728
      %4730 = vmatmul.bf16.gmra.mxu0 %v4552
      %v4731 = vpop.f32.mrf.mxu0
      %v4732 = vadd.f32 0.0, %v4731
      %v4733 = vpop.f32.mrf.mxu0
      %v4734 = vadd.f32 0.0, %v4733
      %4735 = vmatmul.bf16.gmra.mxu0 %v4555
      %v4736 = vpop.f32.mrf.mxu0
      %v4737 = vadd.f32 0.0, %v4736
      %v4738 = vpop.f32.mrf.mxu0
      %v4739 = vadd.f32 0.0, %v4738
      %4740 = vdwg.mxu0
      %v4741 = vmax.f32 %v4573, %v4662
      %4742 = vmax.xlane.f32.xlu0 %v4741
      %v4743 = vpop.xlane.xlu0 %4742
      %v4744 = vmax.f32 %v4575, %v4664
      %4745 = vmax.xlane.f32.xlu0 %v4744
      %v4746 = vpop.xlane.xlu0 %4745
      %v4747 = vmax.f32 %v4578, %v4667
      %4748 = vmax.xlane.f32.xlu0 %v4747
      %v4749 = vpop.xlane.xlu0 %4748
      %v4750 = vmax.f32 %v4580, %v4669
      %4751 = vmax.xlane.f32.xlu0 %v4750
      %v4752 = vpop.xlane.xlu0 %4751
      %v4753 = vmax.f32 %v4583, %v4672
      %4754 = vmax.xlane.f32.xlu0 %v4753
      %v4755 = vpop.xlane.xlu0 %4754
      %v4756 = vmax.f32 %v4585, %v4674
      %4757 = vmax.xlane.f32.xlu0 %v4756
      %v4758 = vpop.xlane.xlu0 %4757
      %v4759 = vmax.f32 %v4588, %v4677
      %4760 = vmax.xlane.f32.xlu0 %v4759
      %v4761 = vpop.xlane.xlu0 %4760
      %v4762 = vmax.f32 %v4590, %v4679
      %4763 = vmax.xlane.f32.xlu0 %v4762
      %v4764 = vpop.xlane.xlu0 %4763
      %v4765 = vmax.f32 %v4593, %v4682
      %4766 = vmax.xlane.f32.xlu0 %v4765
      %v4767 = vpop.xlane.xlu0 %4766
      %v4768 = vmax.f32 %v4595, %v4684
      %4769 = vmax.xlane.f32.xlu0 %v4768
      %v4770 = vpop.xlane.xlu0 %4769
      %v4771 = vmax.f32 %v4598, %v4687
      %4772 = vmax.xlane.f32.xlu0 %v4771
      %v4773 = vpop.xlane.xlu0 %4772
      %v4774 = vmax.f32 %v4600, %v4689
      %4775 = vmax.xlane.f32.xlu0 %v4774
      %v4776 = vpop.xlane.xlu0 %4775
      %v4777 = vmax.f32 %v4603, %v4692
      %4778 = vmax.xlane.f32.xlu0 %v4777
      %v4779 = vpop.xlane.xlu0 %4778
      %v4780 = vmax.f32 %v4605, %v4694
      %4781 = vmax.xlane.f32.xlu0 %v4780
      %v4782 = vpop.xlane.xlu0 %4781
      %v4783 = vmax.f32 %v4608, %v4697
      %4784 = vmax.xlane.f32.xlu0 %v4783
      %v4785 = vpop.xlane.xlu0 %4784
      %v4786 = vmax.f32 %v4610, %v4699
      %4787 = vmax.xlane.f32.xlu0 %v4786
      %v4788 = vpop.xlane.xlu0 %4787
      %v4789 = vmax.f32 %v4613, %v4702
      %4790 = vmax.xlane.f32.xlu0 %v4789
      %v4791 = vpop.xlane.xlu0 %4790
      %v4792 = vmax.f32 %v4615, %v4704
      %4793 = vmax.xlane.f32.xlu0 %v4792
      %v4794 = vpop.xlane.xlu0 %4793
      %v4795 = vmax.f32 %v4618, %v4707
      %4796 = vmax.xlane.f32.xlu0 %v4795
      %v4797 = vpop.xlane.xlu0 %4796
      %v4798 = vmax.f32 %v4620, %v4709
      %4799 = vmax.xlane.f32.xlu0 %v4798
      %v4800 = vpop.xlane.xlu0 %4799
      %v4801 = vmax.f32 %v4623, %v4712
      %4802 = vmax.xlane.f32.xlu0 %v4801
      %v4803 = vpop.xlane.xlu0 %4802
      %v4804 = vmax.f32 %v4625, %v4714
      %4805 = vmax.xlane.f32.xlu0 %v4804
      %v4806 = vpop.xlane.xlu0 %4805
      %v4807 = vmax.f32 %v4628, %v4717
      %4808 = vmax.xlane.f32.xlu0 %v4807
      %v4809 = vpop.xlane.xlu0 %4808
      %v4810 = vmax.f32 %v4630, %v4719
      %4811 = vmax.xlane.f32.xlu0 %v4810
      %v4812 = vpop.xlane.xlu0 %4811
      %v4813 = vmax.f32 %v4633, %v4722
      %4814 = vmax.xlane.f32.xlu0 %v4813
      %v4815 = vpop.xlane.xlu0 %4814
      %v4816 = vmax.f32 %v4635, %v4724
      %4817 = vmax.xlane.f32.xlu0 %v4816
      %v4818 = vpop.xlane.xlu0 %4817
      %v4819 = vmax.f32 %v4638, %v4727
      %4820 = vmax.xlane.f32.xlu0 %v4819
      %v4821 = vpop.xlane.xlu0 %4820
      %v4822 = vmax.f32 %v4640, %v4729
      %4823 = vmax.xlane.f32.xlu0 %v4822
      %v4824 = vpop.xlane.xlu0 %4823
      %v4825 = vmax.f32 %v4643, %v4732
      %4826 = vmax.xlane.f32.xlu0 %v4825
      %v4827 = vpop.xlane.xlu0 %4826
      %v4828 = vmax.f32 %v4645, %v4734
      %4829 = vmax.xlane.f32.xlu0 %v4828
      %v4830 = vpop.xlane.xlu0 %4829
      %v4831 = vmax.f32 %v4648, %v4737
      %4832 = vmax.xlane.f32.xlu0 %v4831
      %v4833 = vpop.xlane.xlu0 %4832
      %v4834 = vmax.f32 %v4650, %v4739
      %4835 = vmax.xlane.f32.xlu0 %v4834
      %v4836 = vpop.xlane.xlu0 %4835
      %v4837 = vsub.f32 %v4573, %v4743
      %v4838 = vsub.f32 %v4662, %v4743
      %v4839 = vsub.f32 %v4575, %v4746
      %v4840 = vsub.f32 %v4664, %v4746
      %v4841 = vsub.f32 %v4578, %v4749
      %v4842 = vsub.f32 %v4667, %v4749
      %v4843 = vsub.f32 %v4580, %v4752
      %v4844 = vsub.f32 %v4669, %v4752
      %v4845 = vsub.f32 %v4583, %v4755
      %v4846 = vsub.f32 %v4672, %v4755
      %v4847 = vsub.f32 %v4585, %v4758
      %v4848 = vsub.f32 %v4674, %v4758
      %v4849 = vsub.f32 %v4588, %v4761
      %v4850 = vsub.f32 %v4677, %v4761
      %v4851 = vsub.f32 %v4590, %v4764
      %v4852 = vsub.f32 %v4679, %v4764
      %v4853 = vsub.f32 %v4593, %v4767
      %v4854 = vsub.f32 %v4682, %v4767
      %v4855 = vsub.f32 %v4595, %v4770
      %v4856 = vsub.f32 %v4684, %v4770
      %v4857 = vsub.f32 %v4598, %v4773
      %v4858 = vsub.f32 %v4687, %v4773
      %v4859 = vsub.f32 %v4600, %v4776
      %v4860 = vsub.f32 %v4689, %v4776
      %v4861 = vsub.f32 %v4603, %v4779
      %v4862 = vsub.f32 %v4692, %v4779
      %v4863 = vsub.f32 %v4605, %v4782
      %v4864 = vsub.f32 %v4694, %v4782
      %v4865 = vsub.f32 %v4608, %v4785
      %v4866 = vsub.f32 %v4697, %v4785
      %v4867 = vsub.f32 %v4610, %v4788
      %v4868 = vsub.f32 %v4699, %v4788
      %v4869 = vsub.f32 %v4613, %v4791
      %v4870 = vsub.f32 %v4702, %v4791
      %v4871 = vsub.f32 %v4615, %v4794
      %v4872 = vsub.f32 %v4704, %v4794
      %v4873 = vsub.f32 %v4618, %v4797
      %v4874 = vsub.f32 %v4707, %v4797
      %v4875 = vsub.f32 %v4620, %v4800
      %v4876 = vsub.f32 %v4709, %v4800
      %v4877 = vsub.f32 %v4623, %v4803
      %v4878 = vsub.f32 %v4712, %v4803
      %v4879 = vsub.f32 %v4625, %v4806
      %v4880 = vsub.f32 %v4714, %v4806
      %v4881 = vsub.f32 %v4628, %v4809
      %v4882 = vsub.f32 %v4717, %v4809
      %v4883 = vsub.f32 %v4630, %v4812
      %v4884 = vsub.f32 %v4719, %v4812
      %v4885 = vsub.f32 %v4633, %v4815
      %v4886 = vsub.f32 %v4722, %v4815
      %v4887 = vsub.f32 %v4635, %v4818
      %v4888 = vsub.f32 %v4724, %v4818
      %v4889 = vsub.f32 %v4638, %v4821
      %v4890 = vsub.f32 %v4727, %v4821
      %v4891 = vsub.f32 %v4640, %v4824
      %v4892 = vsub.f32 %v4729, %v4824
      %v4893 = vsub.f32 %v4643, %v4827
      %v4894 = vsub.f32 %v4732, %v4827
      %v4895 = vsub.f32 %v4645, %v4830
      %v4896 = vsub.f32 %v4734, %v4830
      %v4897 = vsub.f32 %v4648, %v4833
      %v4898 = vsub.f32 %v4737, %v4833
      %v4899 = vsub.f32 %v4650, %v4836
      %v4900 = vsub.f32 %v4739, %v4836
      %v4901 = vmul.f32 %v4837, 1.442695
      %v4902 = vpow.pop %v4901
      %v4903 = vmul.f32 %v4838, 1.442695
      %v4904 = vpow.pop %v4903
      %v4905 = vmul.f32 %v4839, 1.442695
      %v4906 = vpow.pop %v4905
      %v4907 = vmul.f32 %v4840, 1.442695
      %v4908 = vpow.pop %v4907
      %v4909 = vmul.f32 %v4841, 1.442695
      %v4910 = vpow.pop %v4909
      %v4911 = vmul.f32 %v4842, 1.442695
      %v4912 = vpow.pop %v4911
      %v4913 = vmul.f32 %v4843, 1.442695
      %v4914 = vpow.pop %v4913
      %v4915 = vmul.f32 %v4844, 1.442695
      %v4916 = vpow.pop %v4915
      %v4917 = vmul.f32 %v4845, 1.442695
      %v4918 = vpow.pop %v4917
      %v4919 = vmul.f32 %v4846, 1.442695
      %v4920 = vpow.pop %v4919
      %v4921 = vmul.f32 %v4847, 1.442695
      %v4922 = vpow.pop %v4921
      %v4923 = vmul.f32 %v4848, 1.442695
      %v4924 = vpow.pop %v4923
      %v4925 = vmul.f32 %v4849, 1.442695
      %v4926 = vpow.pop %v4925
      %v4927 = vmul.f32 %v4850, 1.442695
      %v4928 = vpow.pop %v4927
      %v4929 = vmul.f32 %v4851, 1.442695
      %v4930 = vpow.pop %v4929
      %v4931 = vmul.f32 %v4852, 1.442695
      %v4932 = vpow.pop %v4931
      %v4933 = vmul.f32 %v4853, 1.442695
      %v4934 = vpow.pop %v4933
      %v4935 = vmul.f32 %v4854, 1.442695
      %v4936 = vpow.pop %v4935
      %v4937 = vmul.f32 %v4855, 1.442695
      %v4938 = vpow.pop %v4937
      %v4939 = vmul.f32 %v4856, 1.442695
      %v4940 = vpow.pop %v4939
      %v4941 = vmul.f32 %v4857, 1.442695
      %v4942 = vpow.pop %v4941
      %v4943 = vmul.f32 %v4858, 1.442695
      %v4944 = vpow.pop %v4943
      %v4945 = vmul.f32 %v4859, 1.442695
      %v4946 = vpow.pop %v4945
      %v4947 = vmul.f32 %v4860, 1.442695
      %v4948 = vpow.pop %v4947
      %v4949 = vmul.f32 %v4861, 1.442695
      %v4950 = vpow.pop %v4949
      %v4951 = vmul.f32 %v4862, 1.442695
      %v4952 = vpow.pop %v4951
      %v4953 = vmul.f32 %v4863, 1.442695
      %v4954 = vpow.pop %v4953
      %v4955 = vmul.f32 %v4864, 1.442695
      %v4956 = vpow.pop %v4955
      %v4957 = vmul.f32 %v4865, 1.442695
      %v4958 = vpow.pop %v4957
      %v4959 = vmul.f32 %v4866, 1.442695
      %v4960 = vpow.pop %v4959
      %v4961 = vmul.f32 %v4867, 1.442695
      %v4962 = vpow.pop %v4961
      %v4963 = vmul.f32 %v4868, 1.442695
      %v4964 = vpow.pop %v4963
      %v4965 = vmul.f32 %v4869, 1.442695
      %v4966 = vpow.pop %v4965
      %v4967 = vmul.f32 %v4870, 1.442695
      %v4968 = vpow.pop %v4967
      %v4969 = vmul.f32 %v4871, 1.442695
      %v4970 = vpow.pop %v4969
      %v4971 = vmul.f32 %v4872, 1.442695
      %v4972 = vpow.pop %v4971
      %v4973 = vmul.f32 %v4873, 1.442695
      %v4974 = vpow.pop %v4973
      %v4975 = vmul.f32 %v4874, 1.442695
      %v4976 = vpow.pop %v4975
      %v4977 = vmul.f32 %v4875, 1.442695
      %v4978 = vpow.pop %v4977
      %v4979 = vmul.f32 %v4876, 1.442695
      %v4980 = vpow.pop %v4979
      %v4981 = vmul.f32 %v4877, 1.442695
      %v4982 = vpow.pop %v4981
      %v4983 = vmul.f32 %v4878, 1.442695
      %v4984 = vpow.pop %v4983
      %v4985 = vmul.f32 %v4879, 1.442695
      %v4986 = vpow.pop %v4985
      %v4987 = vmul.f32 %v4880, 1.442695
      %v4988 = vpow.pop %v4987
      %v4989 = vmul.f32 %v4881, 1.442695
      %v4990 = vpow.pop %v4989
      %v4991 = vmul.f32 %v4882, 1.442695
      %v4992 = vpow.pop %v4991
      %v4993 = vmul.f32 %v4883, 1.442695
      %v4994 = vpow.pop %v4993
      %v4995 = vmul.f32 %v4884, 1.442695
      %v4996 = vpow.pop %v4995
      %v4997 = vmul.f32 %v4885, 1.442695
      %v4998 = vpow.pop %v4997
      %v4999 = vmul.f32 %v4886, 1.442695
      %v5000 = vpow.pop %v4999
      %v5001 = vmul.f32 %v4887, 1.442695
      %v5002 = vpow.pop %v5001
      %v5003 = vmul.f32 %v4888, 1.442695
      %v5004 = vpow.pop %v5003
      %v5005 = vmul.f32 %v4889, 1.442695
      %v5006 = vpow.pop %v5005
      %v5007 = vmul.f32 %v4890, 1.442695
      %v5008 = vpow.pop %v5007
      %v5009 = vmul.f32 %v4891, 1.442695
      %v5010 = vpow.pop %v5009
      %v5011 = vmul.f32 %v4892, 1.442695
      %v5012 = vpow.pop %v5011
      %v5013 = vmul.f32 %v4893, 1.442695
      %v5014 = vpow.pop %v5013
      %v5015 = vmul.f32 %v4894, 1.442695
      %v5016 = vpow.pop %v5015
      %v5017 = vmul.f32 %v4895, 1.442695
      %v5018 = vpow.pop %v5017
      %v5019 = vmul.f32 %v4896, 1.442695
      %v5020 = vpow.pop %v5019
      %v5021 = vmul.f32 %v4897, 1.442695
      %v5022 = vpow.pop %v5021
      %v5023 = vmul.f32 %v4898, 1.442695
      %v5024 = vpow.pop %v5023
      %v5025 = vmul.f32 %v4899, 1.442695
      %v5026 = vpow.pop %v5025
      %v5027 = vmul.f32 %v4900, 1.442695
      %v5028 = vpow.pop %v5027
      %v5029 = vadd.f32 %v4902, %v4904
      %5030 = vadd.xlane.f32.xlu0 %v5029
      %v5031 = vpop.xlane.xlu0 %5030
      %v5032 = vadd.f32 %v4906, %v4908
      %5033 = vadd.xlane.f32.xlu0 %v5032
      %v5034 = vpop.xlane.xlu0 %5033
      %v5035 = vadd.f32 %v4910, %v4912
      %5036 = vadd.xlane.f32.xlu0 %v5035
      %v5037 = vpop.xlane.xlu0 %5036
      %v5038 = vadd.f32 %v4914, %v4916
      %5039 = vadd.xlane.f32.xlu0 %v5038
      %v5040 = vpop.xlane.xlu0 %5039
      %v5041 = vadd.f32 %v4918, %v4920
      %5042 = vadd.xlane.f32.xlu0 %v5041
      %v5043 = vpop.xlane.xlu0 %5042
      %v5044 = vadd.f32 %v4922, %v4924
      %5045 = vadd.xlane.f32.xlu0 %v5044
      %v5046 = vpop.xlane.xlu0 %5045
      %v5047 = vadd.f32 %v4926, %v4928
      %5048 = vadd.xlane.f32.xlu0 %v5047
      %v5049 = vpop.xlane.xlu0 %5048
      %v5050 = vadd.f32 %v4930, %v4932
      %5051 = vadd.xlane.f32.xlu0 %v5050
      %v5052 = vpop.xlane.xlu0 %5051
      %v5053 = vadd.f32 %v4934, %v4936
      %5054 = vadd.xlane.f32.xlu0 %v5053
      %v5055 = vpop.xlane.xlu0 %5054
      %v5056 = vadd.f32 %v4938, %v4940
      %5057 = vadd.xlane.f32.xlu0 %v5056
      %v5058 = vpop.xlane.xlu0 %5057
      %v5059 = vadd.f32 %v4942, %v4944
      %5060 = vadd.xlane.f32.xlu0 %v5059
      %v5061 = vpop.xlane.xlu0 %5060
      %v5062 = vadd.f32 %v4946, %v4948
      %5063 = vadd.xlane.f32.xlu0 %v5062
      %v5064 = vpop.xlane.xlu0 %5063
      %v5065 = vadd.f32 %v4950, %v4952
      %5066 = vadd.xlane.f32.xlu0 %v5065
      %v5067 = vpop.xlane.xlu0 %5066
      %v5068 = vadd.f32 %v4954, %v4956
      %5069 = vadd.xlane.f32.xlu0 %v5068
      %v5070 = vpop.xlane.xlu0 %5069
      %v5071 = vadd.f32 %v4958, %v4960
      %5072 = vadd.xlane.f32.xlu0 %v5071
      %v5073 = vpop.xlane.xlu0 %5072
      %v5074 = vadd.f32 %v4962, %v4964
      %5075 = vadd.xlane.f32.xlu0 %v5074
      %v5076 = vpop.xlane.xlu0 %5075
      %v5077 = vadd.f32 %v4966, %v4968
      %5078 = vadd.xlane.f32.xlu0 %v5077
      %v5079 = vpop.xlane.xlu0 %5078
      %v5080 = vadd.f32 %v4970, %v4972
      %5081 = vadd.xlane.f32.xlu0 %v5080
      %v5082 = vpop.xlane.xlu0 %5081
      %v5083 = vadd.f32 %v4974, %v4976
      %5084 = vadd.xlane.f32.xlu0 %v5083
      %v5085 = vpop.xlane.xlu0 %5084
      %v5086 = vadd.f32 %v4978, %v4980
      %5087 = vadd.xlane.f32.xlu0 %v5086
      %v5088 = vpop.xlane.xlu0 %5087
      %v5089 = vadd.f32 %v4982, %v4984
      %5090 = vadd.xlane.f32.xlu0 %v5089
      %v5091 = vpop.xlane.xlu0 %5090
      %v5092 = vadd.f32 %v4986, %v4988
      %5093 = vadd.xlane.f32.xlu0 %v5092
      %v5094 = vpop.xlane.xlu0 %5093
      %v5095 = vadd.f32 %v4990, %v4992
      %5096 = vadd.xlane.f32.xlu0 %v5095
      %v5097 = vpop.xlane.xlu0 %5096
      %v5098 = vadd.f32 %v4994, %v4996
      %5099 = vadd.xlane.f32.xlu0 %v5098
      %v5100 = vpop.xlane.xlu0 %5099
      %v5101 = vadd.f32 %v4998, %v5000
      %5102 = vadd.xlane.f32.xlu0 %v5101
      %v5103 = vpop.xlane.xlu0 %5102
      %v5104 = vadd.f32 %v5002, %v5004
      %5105 = vadd.xlane.f32.xlu0 %v5104
      %v5106 = vpop.xlane.xlu0 %5105
      %v5107 = vadd.f32 %v5006, %v5008
      %5108 = vadd.xlane.f32.xlu0 %v5107
      %v5109 = vpop.xlane.xlu0 %5108
      %v5110 = vadd.f32 %v5010, %v5012
      %5111 = vadd.xlane.f32.xlu0 %v5110
      %v5112 = vpop.xlane.xlu0 %5111
      %v5113 = vadd.f32 %v5014, %v5016
      %5114 = vadd.xlane.f32.xlu0 %v5113
      %v5115 = vpop.xlane.xlu0 %5114
      %v5116 = vadd.f32 %v5018, %v5020
      %5117 = vadd.xlane.f32.xlu0 %v5116
      %v5118 = vpop.xlane.xlu0 %5117
      %v5119 = vadd.f32 %v5022, %v5024
      %5120 = vadd.xlane.f32.xlu0 %v5119
      %v5121 = vpop.xlane.xlu0 %5120
      %v5122 = vadd.f32 %v5026, %v5028
      %5123 = vadd.xlane.f32.xlu0 %v5122
      %v5124 = vpop.xlane.xlu0 %5123
      %v5125 = vrcp.pop %v5031
      %v5126 = vrcp.pop %v5034
      %v5127 = vrcp.pop %v5037
      %v5128 = vrcp.pop %v5040
      %v5129 = vrcp.pop %v5043
      %v5130 = vrcp.pop %v5046
      %v5131 = vrcp.pop %v5049
      %v5132 = vrcp.pop %v5052
      %v5133 = vrcp.pop %v5055
      %v5134 = vrcp.pop %v5058
      %v5135 = vrcp.pop %v5061
      %v5136 = vrcp.pop %v5064
      %v5137 = vrcp.pop %v5067
      %v5138 = vrcp.pop %v5070
      %v5139 = vrcp.pop %v5073
      %v5140 = vrcp.pop %v5076
      %v5141 = vrcp.pop %v5079
      %v5142 = vrcp.pop %v5082
      %v5143 = vrcp.pop %v5085
      %v5144 = vrcp.pop %v5088
      %v5145 = vrcp.pop %v5091
      %v5146 = vrcp.pop %v5094
      %v5147 = vrcp.pop %v5097
      %v5148 = vrcp.pop %v5100
      %v5149 = vrcp.pop %v5103
      %v5150 = vrcp.pop %v5106
      %v5151 = vrcp.pop %v5109
      %v5152 = vrcp.pop %v5112
      %v5153 = vrcp.pop %v5115
      %v5154 = vrcp.pop %v5118
      %v5155 = vrcp.pop %v5121
      %v5156 = vrcp.pop %v5124
      %v5157 = vmul.f32 %v4902, %v5125
      %v5158 = vmul.f32 %v4904, %v5125
      %v5159 = vmul.f32 %v4906, %v5126
      %v5160 = vmul.f32 %v4908, %v5126
      %v5161 = vmul.f32 %v4910, %v5127
      %v5162 = vmul.f32 %v4912, %v5127
      %v5163 = vmul.f32 %v4914, %v5128
      %v5164 = vmul.f32 %v4916, %v5128
      %v5165 = vmul.f32 %v4918, %v5129
      %v5166 = vmul.f32 %v4920, %v5129
      %v5167 = vmul.f32 %v4922, %v5130
      %v5168 = vmul.f32 %v4924, %v5130
      %v5169 = vmul.f32 %v4926, %v5131
      %v5170 = vmul.f32 %v4928, %v5131
      %v5171 = vmul.f32 %v4930, %v5132
      %v5172 = vmul.f32 %v4932, %v5132
      %v5173 = vmul.f32 %v4934, %v5133
      %v5174 = vmul.f32 %v4936, %v5133
      %v5175 = vmul.f32 %v4938, %v5134
      %v5176 = vmul.f32 %v4940, %v5134
      %v5177 = vmul.f32 %v4942, %v5135
      %v5178 = vmul.f32 %v4944, %v5135
      %v5179 = vmul.f32 %v4946, %v5136
      %v5180 = vmul.f32 %v4948, %v5136
      %v5181 = vmul.f32 %v4950, %v5137
      %v5182 = vmul.f32 %v4952, %v5137
      %v5183 = vmul.f32 %v4954, %v5138
      %v5184 = vmul.f32 %v4956, %v5138
      %v5185 = vmul.f32 %v4958, %v5139
      %v5186 = vmul.f32 %v4960, %v5139
      %v5187 = vmul.f32 %v4962, %v5140
      %v5188 = vmul.f32 %v4964, %v5140
      %v5189 = vmul.f32 %v4966, %v5141
      %v5190 = vmul.f32 %v4968, %v5141
      %v5191 = vmul.f32 %v4970, %v5142
      %v5192 = vmul.f32 %v4972, %v5142
      %v5193 = vmul.f32 %v4974, %v5143
      %v5194 = vmul.f32 %v4976, %v5143
      %v5195 = vmul.f32 %v4978, %v5144
      %v5196 = vmul.f32 %v4980, %v5144
      %v5197 = vmul.f32 %v4982, %v5145
      %v5198 = vmul.f32 %v4984, %v5145
      %v5199 = vmul.f32 %v4986, %v5146
      %v5200 = vmul.f32 %v4988, %v5146
      %v5201 = vmul.f32 %v4990, %v5147
      %v5202 = vmul.f32 %v4992, %v5147
      %v5203 = vmul.f32 %v4994, %v5148
      %v5204 = vmul.f32 %v4996, %v5148
      %v5205 = vmul.f32 %v4998, %v5149
      %v5206 = vmul.f32 %v5000, %v5149
      %v5207 = vmul.f32 %v5002, %v5150
      %v5208 = vmul.f32 %v5004, %v5150
      %v5209 = vmul.f32 %v5006, %v5151
      %v5210 = vmul.f32 %v5008, %v5151
      %v5211 = vmul.f32 %v5010, %v5152
      %v5212 = vmul.f32 %v5012, %v5152
      %v5213 = vmul.f32 %v5014, %v5153
      %v5214 = vmul.f32 %v5016, %v5153
      %v5215 = vmul.f32 %v5018, %v5154
      %v5216 = vmul.f32 %v5020, %v5154
      %v5217 = vmul.f32 %v5022, %v5155
      %v5218 = vmul.f32 %v5024, %v5155
      %v5219 = vmul.f32 %v5026, %v5156
      %v5220 = vmul.f32 %v5028, %v5156
      %v5221 = vpack.c.bf16 %v3599, %v3599
      %v5222 = vpack.c.bf16 %v3638, %v3638
      %v5223 = vpack.c.bf16 %v5159, %v5157
      %v5224 = vpack.c.bf16 %v5160, %v5158
      %v5225 = vpack.c.bf16 %v5163, %v5161
      %v5226 = vpack.c.bf16 %v5164, %v5162
      %v5227 = vpack.c.bf16 %v5167, %v5165
      %v5228 = vpack.c.bf16 %v5168, %v5166
      %v5229 = vpack.c.bf16 %v5171, %v5169
      %v5230 = vpack.c.bf16 %v5172, %v5170
      %v5231 = vpack.c.bf16 %v5175, %v5173
      %v5232 = vpack.c.bf16 %v5176, %v5174
      %v5233 = vpack.c.bf16 %v5179, %v5177
      %v5234 = vpack.c.bf16 %v5180, %v5178
      %v5235 = vpack.c.bf16 %v5183, %v5181
      %v5236 = vpack.c.bf16 %v5184, %v5182
      %v5237 = vpack.c.bf16 %v5187, %v5185
      %v5238 = vpack.c.bf16 %v5188, %v5186
      %v5239 = vpack.c.bf16 %v5191, %v5189
      %v5240 = vpack.c.bf16 %v5192, %v5190
      %v5241 = vpack.c.bf16 %v5195, %v5193
      %v5242 = vpack.c.bf16 %v5196, %v5194
      %v5243 = vpack.c.bf16 %v5199, %v5197
      %v5244 = vpack.c.bf16 %v5200, %v5198
      %v5245 = vpack.c.bf16 %v5203, %v5201
      %v5246 = vpack.c.bf16 %v5204, %v5202
      %v5247 = vpack.c.bf16 %v5207, %v5205
      %v5248 = vpack.c.bf16 %v5208, %v5206
      %v5249 = vpack.c.bf16 %v5211, %v5209
      %v5250 = vpack.c.bf16 %v5212, %v5210
      %v5251 = vpack.c.bf16 %v5215, %v5213
      %v5252 = vpack.c.bf16 %v5216, %v5214
      %v5253 = vpack.c.bf16 %v5219, %v5217
      %v5254 = vpack.c.bf16 %v5220, %v5218
      %5255 = vmatpush.bf16.xpose.msra.mxu0 %v5237
      %5256 = vmatpush.bf16.xpose.msra.mxu0 %v5235
      %5257 = vmatpush.bf16.xpose.msra.mxu0 %v5233
      %5258 = vmatpush.bf16.xpose.msra.mxu0 %v5231
      %5259 = vmatpush.bf16.xpose.msra.mxu0 %v5229
      %5260 = vmatpush.bf16.xpose.msra.mxu0 %v5227
      %5261 = vmatpush.bf16.xpose.msra.mxu0 %v5225
      %5262 = vmatpush.bf16.xpose.msra.mxu0 %v5223
      %5263 = vmatmul.bf16.gmra.mxu0 %v5221
      %v5264 = vpop.f32.mrf.mxu0
      %v5265 = vadd.f32 0.0, %v5264
      %v5266 = vpop.f32.mrf.mxu0
      %5267 = vdwg.mxu0
      %5268 = vmatpush.bf16.xpose.msra.mxu0 %v5238
      %5269 = vmatpush.bf16.xpose.msra.mxu0 %v5236
      %5270 = vmatpush.bf16.xpose.msra.mxu0 %v5234
      %5271 = vmatpush.bf16.xpose.msra.mxu0 %v5232
      %5272 = vmatpush.bf16.xpose.msra.mxu0 %v5230
      %5273 = vmatpush.bf16.xpose.msra.mxu0 %v5228
      %5274 = vmatpush.bf16.xpose.msra.mxu0 %v5226
      %5275 = vmatpush.bf16.xpose.msra.mxu0 %v5224
      %5276 = vmatmul.bf16.gmra.mxu0 %v5222
      %v5277 = vpop.f32.mrf.mxu0
      %v5278 = vadd.f32 %v5265, %v5277
      %v5279 = vpop.f32.mrf.mxu0
      %5280 = vdwg.mxu0
      %5281 = vmatpush.bf16.xpose.msra.mxu0 %v5253
      %5282 = vmatpush.bf16.xpose.msra.mxu0 %v5251
      %5283 = vmatpush.bf16.xpose.msra.mxu0 %v5249
      %5284 = vmatpush.bf16.xpose.msra.mxu0 %v5247
      %5285 = vmatpush.bf16.xpose.msra.mxu0 %v5245
      %5286 = vmatpush.bf16.xpose.msra.mxu0 %v5243
      %5287 = vmatpush.bf16.xpose.msra.mxu0 %v5241
      %5288 = vmatpush.bf16.xpose.msra.mxu0 %v5239
      %5289 = vmatmul.bf16.gmra.mxu0 %v5221
      %v5290 = vpop.f32.mrf.mxu0
      %v5291 = vadd.f32 0.0, %v5290
      %v5292 = vpop.f32.mrf.mxu0
      %5293 = vdwg.mxu0
      %5294 = vmatpush.bf16.xpose.msra.mxu0 %v5254
      %5295 = vmatpush.bf16.xpose.msra.mxu0 %v5252
      %5296 = vmatpush.bf16.xpose.msra.mxu0 %v5250
      %5297 = vmatpush.bf16.xpose.msra.mxu0 %v5248
      %5298 = vmatpush.bf16.xpose.msra.mxu0 %v5246
      %5299 = vmatpush.bf16.xpose.msra.mxu0 %v5244
      %5300 = vmatpush.bf16.xpose.msra.mxu0 %v5242
      %5301 = vmatpush.bf16.xpose.msra.mxu0 %v5240
      %5302 = vmatmul.bf16.gmra.mxu0 %v5222
      %v5303 = vpop.f32.mrf.mxu0
      %v5304 = vadd.f32 %v5291, %v5303
      %v5305 = vpop.f32.mrf.mxu0
      %5306 = vdwg.mxu0
      %v5307 = vpack.c.bf16 %v3602, %v3602
      %v5308 = vpack.c.bf16 %v3641, %v3641
      %v5309 = vpack.c.bf16 %v3604, %v3604
      %v5310 = vpack.c.bf16 %v3643, %v3643
      %5311 = vxpose.binary.xlu0.c.b16.start [1/16] %v5308, %v5307, 128
      %5312 = vxpose.binary.xlu0.c.b16.cont [2/16] 0, 0, 128
      %5313 = vxpose.binary.xlu0.c.b16.cont [3/16] 0, 0, 128
      %5314 = vxpose.binary.xlu0.c.b16.cont [4/16] 0, 0, 128
      %5315 = vxpose.binary.xlu0.c.b16.cont [5/16] 0, 0, 128
      %5316 = vxpose.binary.xlu0.c.b16.cont [6/16] 0, 0, 128
      %5317 = vxpose.binary.xlu0.c.b16.cont [7/16] 0, 0, 128
      %5318 = vxpose.binary.xlu0.c.b16.end [8/16] 0, 0, 128
      %v5319 = vpop.trf.xlu0
      %v5320 = vpop.trf.xlu0
      %v5321 = vpop.trf.xlu0
      %v5322 = vpop.trf.xlu0
      %v5323 = vpop.trf.xlu0
      %v5324 = vpop.trf.xlu0
      %v5325 = vpop.trf.xlu0
      %v5326 = vpop.trf.xlu0
      %v5327 = vpop.trf.xlu0
      %v5328 = vpop.trf.xlu0
      %v5329 = vpop.trf.xlu0
      %v5330 = vpop.trf.xlu0
      %v5331 = vpop.trf.xlu0
      %v5332 = vpop.trf.xlu0
      %v5333 = vpop.trf.xlu0
      %v5334 = vpop.trf.xlu0
      %v5336 = vsel %vm731, %v5319, 0
      %v5339 = vsel %vm731, %v5321, 0
      %v5342 = vsel %vm731, %v5323, 0
      %v5345 = vsel %vm731, %v5325, 0
      %v5348 = vsel %vm731, %v5327, 0
      %v5351 = vsel %vm731, %v5329, 0
      %v5354 = vsel %vm731, %v5331, 0
      %v5357 = vsel %vm731, %v5333, 0
      %v5360 = vsel %vm731, %v5320, 0
      %v5363 = vsel %vm731, %v5322, 0
      %v5366 = vsel %vm731, %v5324, 0
      %v5369 = vsel %vm731, %v5326, 0
      %v5372 = vsel %vm731, %v5328, 0
      %v5375 = vsel %vm731, %v5330, 0
      %v5378 = vsel %vm731, %v5332, 0
      %v5381 = vsel %vm731, %v5334, 0
      %v5384 = vsel %vm922, %v5309, 0
      %v5387 = vsel %vm922, %v5310, 0
      %5389 = vmatpush.bf16.msra.mxu0 0
      %5390 = vmatpush.bf16.msra.mxu0 0
      %5391 = vmatpush.bf16.msra.mxu0 0
      %5392 = vmatpush.bf16.msra.mxu0 0
      %5393 = vmatpush.bf16.msra.mxu0 0
      %5394 = vmatpush.bf16.msra.mxu0 0
      %5395 = vmatpush.bf16.msra.mxu0 0
      %5396 = vmatpush.bf16.msra.mxu0 %v5384
      %5397 = vmatmul.bf16.gmra.mxu0 %v5336
      %v5398 = vpop.f32.mrf.mxu0
      %v5399 = vadd.f32 0.0, %v5398
      %v5400 = vpop.f32.mrf.mxu0
      %v5401 = vadd.f32 0.0, %v5400
      %5402 = vmatmul.bf16.gmra.mxu0 %v5339
      %v5403 = vpop.f32.mrf.mxu0
      %v5404 = vadd.f32 0.0, %v5403
      %v5405 = vpop.f32.mrf.mxu0
      %v5406 = vadd.f32 0.0, %v5405
      %5407 = vmatmul.bf16.gmra.mxu0 %v5342
      %v5408 = vpop.f32.mrf.mxu0
      %v5409 = vadd.f32 0.0, %v5408
      %v5410 = vpop.f32.mrf.mxu0
      %v5411 = vadd.f32 0.0, %v5410
      %5412 = vmatmul.bf16.gmra.mxu0 %v5345
      %v5413 = vpop.f32.mrf.mxu0
      %v5414 = vadd.f32 0.0, %v5413
      %v5415 = vpop.f32.mrf.mxu0
      %v5416 = vadd.f32 0.0, %v5415
      %5417 = vmatmul.bf16.gmra.mxu0 %v5348
      %v5418 = vpop.f32.mrf.mxu0
      %v5419 = vadd.f32 0.0, %v5418
      %v5420 = vpop.f32.mrf.mxu0
      %v5421 = vadd.f32 0.0, %v5420
      %5422 = vmatmul.bf16.gmra.mxu0 %v5351
      %v5423 = vpop.f32.mrf.mxu0
      %v5424 = vadd.f32 0.0, %v5423
      %v5425 = vpop.f32.mrf.mxu0
      %v5426 = vadd.f32 0.0, %v5425
      %5427 = vmatmul.bf16.gmra.mxu0 %v5354
      %v5428 = vpop.f32.mrf.mxu0
      %v5429 = vadd.f32 0.0, %v5428
      %v5430 = vpop.f32.mrf.mxu0
      %v5431 = vadd.f32 0.0, %v5430
      %5432 = vmatmul.bf16.gmra.mxu0 %v5357
      %v5433 = vpop.f32.mrf.mxu0
      %v5434 = vadd.f32 0.0, %v5433
      %v5435 = vpop.f32.mrf.mxu0
      %v5436 = vadd.f32 0.0, %v5435
      %5437 = vmatmul.bf16.gmra.mxu0 %v5360
      %v5438 = vpop.f32.mrf.mxu0
      %v5439 = vadd.f32 0.0, %v5438
      %v5440 = vpop.f32.mrf.mxu0
      %v5441 = vadd.f32 0.0, %v5440
      %5442 = vmatmul.bf16.gmra.mxu0 %v5363
      %v5443 = vpop.f32.mrf.mxu0
      %v5444 = vadd.f32 0.0, %v5443
      %v5445 = vpop.f32.mrf.mxu0
      %v5446 = vadd.f32 0.0, %v5445
      %5447 = vmatmul.bf16.gmra.mxu0 %v5366
      %v5448 = vpop.f32.mrf.mxu0
      %v5449 = vadd.f32 0.0, %v5448
      %v5450 = vpop.f32.mrf.mxu0
      %v5451 = vadd.f32 0.0, %v5450
      %5452 = vmatmul.bf16.gmra.mxu0 %v5369
      %v5453 = vpop.f32.mrf.mxu0
      %v5454 = vadd.f32 0.0, %v5453
      %v5455 = vpop.f32.mrf.mxu0
      %v5456 = vadd.f32 0.0, %v5455
      %5457 = vmatmul.bf16.gmra.mxu0 %v5372
      %v5458 = vpop.f32.mrf.mxu0
      %v5459 = vadd.f32 0.0, %v5458
      %v5460 = vpop.f32.mrf.mxu0
      %v5461 = vadd.f32 0.0, %v5460
      %5462 = vmatmul.bf16.gmra.mxu0 %v5375
      %v5463 = vpop.f32.mrf.mxu0
      %v5464 = vadd.f32 0.0, %v5463
      %v5465 = vpop.f32.mrf.mxu0
      %v5466 = vadd.f32 0.0, %v5465
      %5467 = vmatmul.bf16.gmra.mxu0 %v5378
      %v5468 = vpop.f32.mrf.mxu0
      %v5469 = vadd.f32 0.0, %v5468
      %v5470 = vpop.f32.mrf.mxu0
      %v5471 = vadd.f32 0.0, %v5470
      %5472 = vmatmul.bf16.gmra.mxu0 %v5381
      %v5473 = vpop.f32.mrf.mxu0
      %v5474 = vadd.f32 0.0, %v5473
      %v5475 = vpop.f32.mrf.mxu0
      %v5476 = vadd.f32 0.0, %v5475
      %5477 = vdwg.mxu0
      %5478 = vmatpush.bf16.msra.mxu0 0
      %5479 = vmatpush.bf16.msra.mxu0 0
      %5480 = vmatpush.bf16.msra.mxu0 0
      %5481 = vmatpush.bf16.msra.mxu0 0
      %5482 = vmatpush.bf16.msra.mxu0 0
      %5483 = vmatpush.bf16.msra.mxu0 0
      %5484 = vmatpush.bf16.msra.mxu0 0
      %5485 = vmatpush.bf16.msra.mxu0 %v5387
      %5486 = vmatmul.bf16.gmra.mxu0 %v5336
      %v5487 = vpop.f32.mrf.mxu0
      %v5488 = vadd.f32 0.0, %v5487
      %v5489 = vpop.f32.mrf.mxu0
      %v5490 = vadd.f32 0.0, %v5489
      %5491 = vmatmul.bf16.gmra.mxu0 %v5339
      %v5492 = vpop.f32.mrf.mxu0
      %v5493 = vadd.f32 0.0, %v5492
      %v5494 = vpop.f32.mrf.mxu0
      %v5495 = vadd.f32 0.0, %v5494
      %5496 = vmatmul.bf16.gmra.mxu0 %v5342
      %v5497 = vpop.f32.mrf.mxu0
      %v5498 = vadd.f32 0.0, %v5497
      %v5499 = vpop.f32.mrf.mxu0
      %v5500 = vadd.f32 0.0, %v5499
      %5501 = vmatmul.bf16.gmra.mxu0 %v5345
      %v5502 = vpop.f32.mrf.mxu0
      %v5503 = vadd.f32 0.0, %v5502
      %v5504 = vpop.f32.mrf.mxu0
      %v5505 = vadd.f32 0.0, %v5504
      %5506 = vmatmul.bf16.gmra.mxu0 %v5348
      %v5507 = vpop.f32.mrf.mxu0
      %v5508 = vadd.f32 0.0, %v5507
      %v5509 = vpop.f32.mrf.mxu0
      %v5510 = vadd.f32 0.0, %v5509
      %5511 = vmatmul.bf16.gmra.mxu0 %v5351
      %v5512 = vpop.f32.mrf.mxu0
      %v5513 = vadd.f32 0.0, %v5512
      %v5514 = vpop.f32.mrf.mxu0
      %v5515 = vadd.f32 0.0, %v5514
      %5516 = vmatmul.bf16.gmra.mxu0 %v5354
      %v5517 = vpop.f32.mrf.mxu0
      %v5518 = vadd.f32 0.0, %v5517
      %v5519 = vpop.f32.mrf.mxu0
      %v5520 = vadd.f32 0.0, %v5519
      %5521 = vmatmul.bf16.gmra.mxu0 %v5357
      %v5522 = vpop.f32.mrf.mxu0
      %v5523 = vadd.f32 0.0, %v5522
      %v5524 = vpop.f32.mrf.mxu0
      %v5525 = vadd.f32 0.0, %v5524
      %5526 = vmatmul.bf16.gmra.mxu0 %v5360
      %v5527 = vpop.f32.mrf.mxu0
      %v5528 = vadd.f32 0.0, %v5527
      %v5529 = vpop.f32.mrf.mxu0
      %v5530 = vadd.f32 0.0, %v5529
      %5531 = vmatmul.bf16.gmra.mxu0 %v5363
      %v5532 = vpop.f32.mrf.mxu0
      %v5533 = vadd.f32 0.0, %v5532
      %v5534 = vpop.f32.mrf.mxu0
      %v5535 = vadd.f32 0.0, %v5534
      %5536 = vmatmul.bf16.gmra.mxu0 %v5366
      %v5537 = vpop.f32.mrf.mxu0
      %v5538 = vadd.f32 0.0, %v5537
      %v5539 = vpop.f32.mrf.mxu0
      %v5540 = vadd.f32 0.0, %v5539
      %5541 = vmatmul.bf16.gmra.mxu0 %v5369
      %v5542 = vpop.f32.mrf.mxu0
      %v5543 = vadd.f32 0.0, %v5542
      %v5544 = vpop.f32.mrf.mxu0
      %v5545 = vadd.f32 0.0, %v5544
      %5546 = vmatmul.bf16.gmra.mxu0 %v5372
      %v5547 = vpop.f32.mrf.mxu0
      %v5548 = vadd.f32 0.0, %v5547
      %v5549 = vpop.f32.mrf.mxu0
      %v5550 = vadd.f32 0.0, %v5549
      %5551 = vmatmul.bf16.gmra.mxu0 %v5375
      %v5552 = vpop.f32.mrf.mxu0
      %v5553 = vadd.f32 0.0, %v5552
      %v5554 = vpop.f32.mrf.mxu0
      %v5555 = vadd.f32 0.0, %v5554
      %5556 = vmatmul.bf16.gmra.mxu0 %v5378
      %v5557 = vpop.f32.mrf.mxu0
      %v5558 = vadd.f32 0.0, %v5557
      %v5559 = vpop.f32.mrf.mxu0
      %v5560 = vadd.f32 0.0, %v5559
      %5561 = vmatmul.bf16.gmra.mxu0 %v5381
      %v5562 = vpop.f32.mrf.mxu0
      %v5563 = vadd.f32 0.0, %v5562
      %v5564 = vpop.f32.mrf.mxu0
      %v5565 = vadd.f32 0.0, %v5564
      %5566 = vdwg.mxu0
      %v5567 = vmax.f32 %v5399, %v5488
      %5568 = vmax.xlane.f32.xlu0 %v5567
      %v5569 = vpop.xlane.xlu0 %5568
      %v5570 = vmax.f32 %v5401, %v5490
      %5571 = vmax.xlane.f32.xlu0 %v5570
      %v5572 = vpop.xlane.xlu0 %5571
      %v5573 = vmax.f32 %v5404, %v5493
      %5574 = vmax.xlane.f32.xlu0 %v5573
      %v5575 = vpop.xlane.xlu0 %5574
      %v5576 = vmax.f32 %v5406, %v5495
      %5577 = vmax.xlane.f32.xlu0 %v5576
      %v5578 = vpop.xlane.xlu0 %5577
      %v5579 = vmax.f32 %v5409, %v5498
      %5580 = vmax.xlane.f32.xlu0 %v5579
      %v5581 = vpop.xlane.xlu0 %5580
      %v5582 = vmax.f32 %v5411, %v5500
      %5583 = vmax.xlane.f32.xlu0 %v5582
      %v5584 = vpop.xlane.xlu0 %5583
      %v5585 = vmax.f32 %v5414, %v5503
      %5586 = vmax.xlane.f32.xlu0 %v5585
      %v5587 = vpop.xlane.xlu0 %5586
      %v5588 = vmax.f32 %v5416, %v5505
      %5589 = vmax.xlane.f32.xlu0 %v5588
      %v5590 = vpop.xlane.xlu0 %5589
      %v5591 = vmax.f32 %v5419, %v5508
      %5592 = vmax.xlane.f32.xlu0 %v5591
      %v5593 = vpop.xlane.xlu0 %5592
      %v5594 = vmax.f32 %v5421, %v5510
      %5595 = vmax.xlane.f32.xlu0 %v5594
      %v5596 = vpop.xlane.xlu0 %5595
      %v5597 = vmax.f32 %v5424, %v5513
      %5598 = vmax.xlane.f32.xlu0 %v5597
      %v5599 = vpop.xlane.xlu0 %5598
      %v5600 = vmax.f32 %v5426, %v5515
      %5601 = vmax.xlane.f32.xlu0 %v5600
      %v5602 = vpop.xlane.xlu0 %5601
      %v5603 = vmax.f32 %v5429, %v5518
      %5604 = vmax.xlane.f32.xlu0 %v5603
      %v5605 = vpop.xlane.xlu0 %5604
      %v5606 = vmax.f32 %v5431, %v5520
      %5607 = vmax.xlane.f32.xlu0 %v5606
      %v5608 = vpop.xlane.xlu0 %5607
      %v5609 = vmax.f32 %v5434, %v5523
      %5610 = vmax.xlane.f32.xlu0 %v5609
      %v5611 = vpop.xlane.xlu0 %5610
      %v5612 = vmax.f32 %v5436, %v5525
      %5613 = vmax.xlane.f32.xlu0 %v5612
      %v5614 = vpop.xlane.xlu0 %5613
      %v5615 = vmax.f32 %v5439, %v5528
      %5616 = vmax.xlane.f32.xlu0 %v5615
      %v5617 = vpop.xlane.xlu0 %5616
      %v5618 = vmax.f32 %v5441, %v5530
      %5619 = vmax.xlane.f32.xlu0 %v5618
      %v5620 = vpop.xlane.xlu0 %5619
      %v5621 = vmax.f32 %v5444, %v5533
      %5622 = vmax.xlane.f32.xlu0 %v5621
      %v5623 = vpop.xlane.xlu0 %5622
      %v5624 = vmax.f32 %v5446, %v5535
      %5625 = vmax.xlane.f32.xlu0 %v5624
      %v5626 = vpop.xlane.xlu0 %5625
      %v5627 = vmax.f32 %v5449, %v5538
      %5628 = vmax.xlane.f32.xlu0 %v5627
      %v5629 = vpop.xlane.xlu0 %5628
      %v5630 = vmax.f32 %v5451, %v5540
      %5631 = vmax.xlane.f32.xlu0 %v5630
      %v5632 = vpop.xlane.xlu0 %5631
      %v5633 = vmax.f32 %v5454, %v5543
      %5634 = vmax.xlane.f32.xlu0 %v5633
      %v5635 = vpop.xlane.xlu0 %5634
      %v5636 = vmax.f32 %v5456, %v5545
      %5637 = vmax.xlane.f32.xlu0 %v5636
      %v5638 = vpop.xlane.xlu0 %5637
      %v5639 = vmax.f32 %v5459, %v5548
      %5640 = vmax.xlane.f32.xlu0 %v5639
      %v5641 = vpop.xlane.xlu0 %5640
      %v5642 = vmax.f32 %v5461, %v5550
      %5643 = vmax.xlane.f32.xlu0 %v5642
      %v5644 = vpop.xlane.xlu0 %5643
      %v5645 = vmax.f32 %v5464, %v5553
      %5646 = vmax.xlane.f32.xlu0 %v5645
      %v5647 = vpop.xlane.xlu0 %5646
      %v5648 = vmax.f32 %v5466, %v5555
      %5649 = vmax.xlane.f32.xlu0 %v5648
      %v5650 = vpop.xlane.xlu0 %5649
      %v5651 = vmax.f32 %v5469, %v5558
      %5652 = vmax.xlane.f32.xlu0 %v5651
      %v5653 = vpop.xlane.xlu0 %5652
      %v5654 = vmax.f32 %v5471, %v5560
      %5655 = vmax.xlane.f32.xlu0 %v5654
      %v5656 = vpop.xlane.xlu0 %5655
      %v5657 = vmax.f32 %v5474, %v5563
      %5658 = vmax.xlane.f32.xlu0 %v5657
      %v5659 = vpop.xlane.xlu0 %5658
      %v5660 = vmax.f32 %v5476, %v5565
      %5661 = vmax.xlane.f32.xlu0 %v5660
      %v5662 = vpop.xlane.xlu0 %5661
      %v5663 = vsub.f32 %v5399, %v5569
      %v5664 = vsub.f32 %v5488, %v5569
      %v5665 = vsub.f32 %v5401, %v5572
      %v5666 = vsub.f32 %v5490, %v5572
      %v5667 = vsub.f32 %v5404, %v5575
      %v5668 = vsub.f32 %v5493, %v5575
      %v5669 = vsub.f32 %v5406, %v5578
      %v5670 = vsub.f32 %v5495, %v5578
      %v5671 = vsub.f32 %v5409, %v5581
      %v5672 = vsub.f32 %v5498, %v5581
      %v5673 = vsub.f32 %v5411, %v5584
      %v5674 = vsub.f32 %v5500, %v5584
      %v5675 = vsub.f32 %v5414, %v5587
      %v5676 = vsub.f32 %v5503, %v5587
      %v5677 = vsub.f32 %v5416, %v5590
      %v5678 = vsub.f32 %v5505, %v5590
      %v5679 = vsub.f32 %v5419, %v5593
      %v5680 = vsub.f32 %v5508, %v5593
      %v5681 = vsub.f32 %v5421, %v5596
      %v5682 = vsub.f32 %v5510, %v5596
      %v5683 = vsub.f32 %v5424, %v5599
      %v5684 = vsub.f32 %v5513, %v5599
      %v5685 = vsub.f32 %v5426, %v5602
      %v5686 = vsub.f32 %v5515, %v5602
      %v5687 = vsub.f32 %v5429, %v5605
      %v5688 = vsub.f32 %v5518, %v5605
      %v5689 = vsub.f32 %v5431, %v5608
      %v5690 = vsub.f32 %v5520, %v5608
      %v5691 = vsub.f32 %v5434, %v5611
      %v5692 = vsub.f32 %v5523, %v5611
      %v5693 = vsub.f32 %v5436, %v5614
      %v5694 = vsub.f32 %v5525, %v5614
      %v5695 = vsub.f32 %v5439, %v5617
      %v5696 = vsub.f32 %v5528, %v5617
      %v5697 = vsub.f32 %v5441, %v5620
      %v5698 = vsub.f32 %v5530, %v5620
      %v5699 = vsub.f32 %v5444, %v5623
      %v5700 = vsub.f32 %v5533, %v5623
      %v5701 = vsub.f32 %v5446, %v5626
      %v5702 = vsub.f32 %v5535, %v5626
      %v5703 = vsub.f32 %v5449, %v5629
      %v5704 = vsub.f32 %v5538, %v5629
      %v5705 = vsub.f32 %v5451, %v5632
      %v5706 = vsub.f32 %v5540, %v5632
      %v5707 = vsub.f32 %v5454, %v5635
      %v5708 = vsub.f32 %v5543, %v5635
      %v5709 = vsub.f32 %v5456, %v5638
      %v5710 = vsub.f32 %v5545, %v5638
      %v5711 = vsub.f32 %v5459, %v5641
      %v5712 = vsub.f32 %v5548, %v5641
      %v5713 = vsub.f32 %v5461, %v5644
      %v5714 = vsub.f32 %v5550, %v5644
      %v5715 = vsub.f32 %v5464, %v5647
      %v5716 = vsub.f32 %v5553, %v5647
      %v5717 = vsub.f32 %v5466, %v5650
      %v5718 = vsub.f32 %v5555, %v5650
      %v5719 = vsub.f32 %v5469, %v5653
      %v5720 = vsub.f32 %v5558, %v5653
      %v5721 = vsub.f32 %v5471, %v5656
      %v5722 = vsub.f32 %v5560, %v5656
      %v5723 = vsub.f32 %v5474, %v5659
      %v5724 = vsub.f32 %v5563, %v5659
      %v5725 = vsub.f32 %v5476, %v5662
      %v5726 = vsub.f32 %v5565, %v5662
      %v5727 = vmul.f32 %v5663, 1.442695
      %v5728 = vpow.pop %v5727
      %v5729 = vmul.f32 %v5664, 1.442695
      %v5730 = vpow.pop %v5729
      %v5731 = vmul.f32 %v5665, 1.442695
      %v5732 = vpow.pop %v5731
      %v5733 = vmul.f32 %v5666, 1.442695
      %v5734 = vpow.pop %v5733
      %v5735 = vmul.f32 %v5667, 1.442695
      %v5736 = vpow.pop %v5735
      %v5737 = vmul.f32 %v5668, 1.442695
      %v5738 = vpow.pop %v5737
      %v5739 = vmul.f32 %v5669, 1.442695
      %v5740 = vpow.pop %v5739
      %v5741 = vmul.f32 %v5670, 1.442695
      %v5742 = vpow.pop %v5741
      %v5743 = vmul.f32 %v5671, 1.442695
      %v5744 = vpow.pop %v5743
      %v5745 = vmul.f32 %v5672, 1.442695
      %v5746 = vpow.pop %v5745
      %v5747 = vmul.f32 %v5673, 1.442695
      %v5748 = vpow.pop %v5747
      %v5749 = vmul.f32 %v5674, 1.442695
      %v5750 = vpow.pop %v5749
      %v5751 = vmul.f32 %v5675, 1.442695
      %v5752 = vpow.pop %v5751
      %v5753 = vmul.f32 %v5676, 1.442695
      %v5754 = vpow.pop %v5753
      %v5755 = vmul.f32 %v5677, 1.442695
      %v5756 = vpow.pop %v5755
      %v5757 = vmul.f32 %v5678, 1.442695
      %v5758 = vpow.pop %v5757
      %v5759 = vmul.f32 %v5679, 1.442695
      %v5760 = vpow.pop %v5759
      %v5761 = vmul.f32 %v5680, 1.442695
      %v5762 = vpow.pop %v5761
      %v5763 = vmul.f32 %v5681, 1.442695
      %v5764 = vpow.pop %v5763
      %v5765 = vmul.f32 %v5682, 1.442695
      %v5766 = vpow.pop %v5765
      %v5767 = vmul.f32 %v5683, 1.442695
      %v5768 = vpow.pop %v5767
      %v5769 = vmul.f32 %v5684, 1.442695
      %v5770 = vpow.pop %v5769
      %v5771 = vmul.f32 %v5685, 1.442695
      %v5772 = vpow.pop %v5771
      %v5773 = vmul.f32 %v5686, 1.442695
      %v5774 = vpow.pop %v5773
      %v5775 = vmul.f32 %v5687, 1.442695
      %v5776 = vpow.pop %v5775
      %v5777 = vmul.f32 %v5688, 1.442695
      %v5778 = vpow.pop %v5777
      %v5779 = vmul.f32 %v5689, 1.442695
      %v5780 = vpow.pop %v5779
      %v5781 = vmul.f32 %v5690, 1.442695
      %v5782 = vpow.pop %v5781
      %v5783 = vmul.f32 %v5691, 1.442695
      %v5784 = vpow.pop %v5783
      %v5785 = vmul.f32 %v5692, 1.442695
      %v5786 = vpow.pop %v5785
      %v5787 = vmul.f32 %v5693, 1.442695
      %v5788 = vpow.pop %v5787
      %v5789 = vmul.f32 %v5694, 1.442695
      %v5790 = vpow.pop %v5789
      %v5791 = vmul.f32 %v5695, 1.442695
      %v5792 = vpow.pop %v5791
      %v5793 = vmul.f32 %v5696, 1.442695
      %v5794 = vpow.pop %v5793
      %v5795 = vmul.f32 %v5697, 1.442695
      %v5796 = vpow.pop %v5795
      %v5797 = vmul.f32 %v5698, 1.442695
      %v5798 = vpow.pop %v5797
      %v5799 = vmul.f32 %v5699, 1.442695
      %v5800 = vpow.pop %v5799
      %v5801 = vmul.f32 %v5700, 1.442695
      %v5802 = vpow.pop %v5801
      %v5803 = vmul.f32 %v5701, 1.442695
      %v5804 = vpow.pop %v5803
      %v5805 = vmul.f32 %v5702, 1.442695
      %v5806 = vpow.pop %v5805
      %v5807 = vmul.f32 %v5703, 1.442695
      %v5808 = vpow.pop %v5807
      %v5809 = vmul.f32 %v5704, 1.442695
      %v5810 = vpow.pop %v5809
      %v5811 = vmul.f32 %v5705, 1.442695
      %v5812 = vpow.pop %v5811
      %v5813 = vmul.f32 %v5706, 1.442695
      %v5814 = vpow.pop %v5813
      %v5815 = vmul.f32 %v5707, 1.442695
      %v5816 = vpow.pop %v5815
      %v5817 = vmul.f32 %v5708, 1.442695
      %v5818 = vpow.pop %v5817
      %v5819 = vmul.f32 %v5709, 1.442695
      %v5820 = vpow.pop %v5819
      %v5821 = vmul.f32 %v5710, 1.442695
      %v5822 = vpow.pop %v5821
      %v5823 = vmul.f32 %v5711, 1.442695
      %v5824 = vpow.pop %v5823
      %v5825 = vmul.f32 %v5712, 1.442695
      %v5826 = vpow.pop %v5825
      %v5827 = vmul.f32 %v5713, 1.442695
      %v5828 = vpow.pop %v5827
      %v5829 = vmul.f32 %v5714, 1.442695
      %v5830 = vpow.pop %v5829
      %v5831 = vmul.f32 %v5715, 1.442695
      %v5832 = vpow.pop %v5831
      %v5833 = vmul.f32 %v5716, 1.442695
      %v5834 = vpow.pop %v5833
      %v5835 = vmul.f32 %v5717, 1.442695
      %v5836 = vpow.pop %v5835
      %v5837 = vmul.f32 %v5718, 1.442695
      %v5838 = vpow.pop %v5837
      %v5839 = vmul.f32 %v5719, 1.442695
      %v5840 = vpow.pop %v5839
      %v5841 = vmul.f32 %v5720, 1.442695
      %v5842 = vpow.pop %v5841
      %v5843 = vmul.f32 %v5721, 1.442695
      %v5844 = vpow.pop %v5843
      %v5845 = vmul.f32 %v5722, 1.442695
      %v5846 = vpow.pop %v5845
      %v5847 = vmul.f32 %v5723, 1.442695
      %v5848 = vpow.pop %v5847
      %v5849 = vmul.f32 %v5724, 1.442695
      %v5850 = vpow.pop %v5849
      %v5851 = vmul.f32 %v5725, 1.442695
      %v5852 = vpow.pop %v5851
      %v5853 = vmul.f32 %v5726, 1.442695
      %v5854 = vpow.pop %v5853
      %v5855 = vadd.f32 %v5728, %v5730
      %5856 = vadd.xlane.f32.xlu0 %v5855
      %v5857 = vpop.xlane.xlu0 %5856
      %v5858 = vadd.f32 %v5732, %v5734
      %5859 = vadd.xlane.f32.xlu0 %v5858
      %v5860 = vpop.xlane.xlu0 %5859
      %v5861 = vadd.f32 %v5736, %v5738
      %5862 = vadd.xlane.f32.xlu0 %v5861
      %v5863 = vpop.xlane.xlu0 %5862
      %v5864 = vadd.f32 %v5740, %v5742
      %5865 = vadd.xlane.f32.xlu0 %v5864
      %v5866 = vpop.xlane.xlu0 %5865
      %v5867 = vadd.f32 %v5744, %v5746
      %5868 = vadd.xlane.f32.xlu0 %v5867
      %v5869 = vpop.xlane.xlu0 %5868
      %v5870 = vadd.f32 %v5748, %v5750
      %5871 = vadd.xlane.f32.xlu0 %v5870
      %v5872 = vpop.xlane.xlu0 %5871
      %v5873 = vadd.f32 %v5752, %v5754
      %5874 = vadd.xlane.f32.xlu0 %v5873
      %v5875 = vpop.xlane.xlu0 %5874
      %v5876 = vadd.f32 %v5756, %v5758
      %5877 = vadd.xlane.f32.xlu0 %v5876
      %v5878 = vpop.xlane.xlu0 %5877
      %v5879 = vadd.f32 %v5760, %v5762
      %5880 = vadd.xlane.f32.xlu0 %v5879
      %v5881 = vpop.xlane.xlu0 %5880
      %v5882 = vadd.f32 %v5764, %v5766
      %5883 = vadd.xlane.f32.xlu0 %v5882
      %v5884 = vpop.xlane.xlu0 %5883
      %v5885 = vadd.f32 %v5768, %v5770
      %5886 = vadd.xlane.f32.xlu0 %v5885
      %v5887 = vpop.xlane.xlu0 %5886
      %v5888 = vadd.f32 %v5772, %v5774
      %5889 = vadd.xlane.f32.xlu0 %v5888
      %v5890 = vpop.xlane.xlu0 %5889
      %v5891 = vadd.f32 %v5776, %v5778
      %5892 = vadd.xlane.f32.xlu0 %v5891
      %v5893 = vpop.xlane.xlu0 %5892
      %v5894 = vadd.f32 %v5780, %v5782
      %5895 = vadd.xlane.f32.xlu0 %v5894
      %v5896 = vpop.xlane.xlu0 %5895
      %v5897 = vadd.f32 %v5784, %v5786
      %5898 = vadd.xlane.f32.xlu0 %v5897
      %v5899 = vpop.xlane.xlu0 %5898
      %v5900 = vadd.f32 %v5788, %v5790
      %5901 = vadd.xlane.f32.xlu0 %v5900
      %v5902 = vpop.xlane.xlu0 %5901
      %v5903 = vadd.f32 %v5792, %v5794
      %5904 = vadd.xlane.f32.xlu0 %v5903
      %v5905 = vpop.xlane.xlu0 %5904
      %v5906 = vadd.f32 %v5796, %v5798
      %5907 = vadd.xlane.f32.xlu0 %v5906
      %v5908 = vpop.xlane.xlu0 %5907
      %v5909 = vadd.f32 %v5800, %v5802
      %5910 = vadd.xlane.f32.xlu0 %v5909
      %v5911 = vpop.xlane.xlu0 %5910
      %v5912 = vadd.f32 %v5804, %v5806
      %5913 = vadd.xlane.f32.xlu0 %v5912
      %v5914 = vpop.xlane.xlu0 %5913
      %v5915 = vadd.f32 %v5808, %v5810
      %5916 = vadd.xlane.f32.xlu0 %v5915
      %v5917 = vpop.xlane.xlu0 %5916
      %v5918 = vadd.f32 %v5812, %v5814
      %5919 = vadd.xlane.f32.xlu0 %v5918
      %v5920 = vpop.xlane.xlu0 %5919
      %v5921 = vadd.f32 %v5816, %v5818
      %5922 = vadd.xlane.f32.xlu0 %v5921
      %v5923 = vpop.xlane.xlu0 %5922
      %v5924 = vadd.f32 %v5820, %v5822
      %5925 = vadd.xlane.f32.xlu0 %v5924
      %v5926 = vpop.xlane.xlu0 %5925
      %v5927 = vadd.f32 %v5824, %v5826
      %5928 = vadd.xlane.f32.xlu0 %v5927
      %v5929 = vpop.xlane.xlu0 %5928
      %v5930 = vadd.f32 %v5828, %v5830
      %5931 = vadd.xlane.f32.xlu0 %v5930
      %v5932 = vpop.xlane.xlu0 %5931
      %v5933 = vadd.f32 %v5832, %v5834
      %5934 = vadd.xlane.f32.xlu0 %v5933
      %v5935 = vpop.xlane.xlu0 %5934
      %v5936 = vadd.f32 %v5836, %v5838
      %5937 = vadd.xlane.f32.xlu0 %v5936
      %v5938 = vpop.xlane.xlu0 %5937
      %v5939 = vadd.f32 %v5840, %v5842
      %5940 = vadd.xlane.f32.xlu0 %v5939
      %v5941 = vpop.xlane.xlu0 %5940
      %v5942 = vadd.f32 %v5844, %v5846
      %5943 = vadd.xlane.f32.xlu0 %v5942
      %v5944 = vpop.xlane.xlu0 %5943
      %v5945 = vadd.f32 %v5848, %v5850
      %5946 = vadd.xlane.f32.xlu0 %v5945
      %v5947 = vpop.xlane.xlu0 %5946
      %v5948 = vadd.f32 %v5852, %v5854
      %5949 = vadd.xlane.f32.xlu0 %v5948
      %v5950 = vpop.xlane.xlu0 %5949
      %v5951 = vrcp.pop %v5857
      %v5952 = vrcp.pop %v5860
      %v5953 = vrcp.pop %v5863
      %v5954 = vrcp.pop %v5866
      %v5955 = vrcp.pop %v5869
      %v5956 = vrcp.pop %v5872
      %v5957 = vrcp.pop %v5875
      %v5958 = vrcp.pop %v5878
      %v5959 = vrcp.pop %v5881
      %v5960 = vrcp.pop %v5884
      %v5961 = vrcp.pop %v5887
      %v5962 = vrcp.pop %v5890
      %v5963 = vrcp.pop %v5893
      %v5964 = vrcp.pop %v5896
      %v5965 = vrcp.pop %v5899
      %v5966 = vrcp.pop %v5902
      %v5967 = vrcp.pop %v5905
      %v5968 = vrcp.pop %v5908
      %v5969 = vrcp.pop %v5911
      %v5970 = vrcp.pop %v5914
      %v5971 = vrcp.pop %v5917
      %v5972 = vrcp.pop %v5920
      %v5973 = vrcp.pop %v5923
      %v5974 = vrcp.pop %v5926
      %v5975 = vrcp.pop %v5929
      %v5976 = vrcp.pop %v5932
      %v5977 = vrcp.pop %v5935
      %v5978 = vrcp.pop %v5938
      %v5979 = vrcp.pop %v5941
      %v5980 = vrcp.pop %v5944
      %v5981 = vrcp.pop %v5947
      %v5982 = vrcp.pop %v5950
      %v5983 = vmul.f32 %v5728, %v5951
      %v5984 = vmul.f32 %v5730, %v5951
      %v5985 = vmul.f32 %v5732, %v5952
      %v5986 = vmul.f32 %v5734, %v5952
      %v5987 = vmul.f32 %v5736, %v5953
      %v5988 = vmul.f32 %v5738, %v5953
      %v5989 = vmul.f32 %v5740, %v5954
      %v5990 = vmul.f32 %v5742, %v5954
      %v5991 = vmul.f32 %v5744, %v5955
      %v5992 = vmul.f32 %v5746, %v5955
      %v5993 = vmul.f32 %v5748, %v5956
      %v5994 = vmul.f32 %v5750, %v5956
      %v5995 = vmul.f32 %v5752, %v5957
      %v5996 = vmul.f32 %v5754, %v5957
      %v5997 = vmul.f32 %v5756, %v5958
      %v5998 = vmul.f32 %v5758, %v5958
      %v5999 = vmul.f32 %v5760, %v5959
      %v6000 = vmul.f32 %v5762, %v5959
      %v6001 = vmul.f32 %v5764, %v5960
      %v6002 = vmul.f32 %v5766, %v5960
      %v6003 = vmul.f32 %v5768, %v5961
      %v6004 = vmul.f32 %v5770, %v5961
      %v6005 = vmul.f32 %v5772, %v5962
      %v6006 = vmul.f32 %v5774, %v5962
      %v6007 = vmul.f32 %v5776, %v5963
      %v6008 = vmul.f32 %v5778, %v5963
      %v6009 = vmul.f32 %v5780, %v5964
      %v6010 = vmul.f32 %v5782, %v5964
      %v6011 = vmul.f32 %v5784, %v5965
      %v6012 = vmul.f32 %v5786, %v5965
      %v6013 = vmul.f32 %v5788, %v5966
      %v6014 = vmul.f32 %v5790, %v5966
      %v6015 = vmul.f32 %v5792, %v5967
      %v6016 = vmul.f32 %v5794, %v5967
      %v6017 = vmul.f32 %v5796, %v5968
      %v6018 = vmul.f32 %v5798, %v5968
      %v6019 = vmul.f32 %v5800, %v5969
      %v6020 = vmul.f32 %v5802, %v5969
      %v6021 = vmul.f32 %v5804, %v5970
      %v6022 = vmul.f32 %v5806, %v5970
      %v6023 = vmul.f32 %v5808, %v5971
      %v6024 = vmul.f32 %v5810, %v5971
      %v6025 = vmul.f32 %v5812, %v5972
      %v6026 = vmul.f32 %v5814, %v5972
      %v6027 = vmul.f32 %v5816, %v5973
      %v6028 = vmul.f32 %v5818, %v5973
      %v6029 = vmul.f32 %v5820, %v5974
      %v6030 = vmul.f32 %v5822, %v5974
      %v6031 = vmul.f32 %v5824, %v5975
      %v6032 = vmul.f32 %v5826, %v5975
      %v6033 = vmul.f32 %v5828, %v5976
      %v6034 = vmul.f32 %v5830, %v5976
      %v6035 = vmul.f32 %v5832, %v5977
      %v6036 = vmul.f32 %v5834, %v5977
      %v6037 = vmul.f32 %v5836, %v5978
      %v6038 = vmul.f32 %v5838, %v5978
      %v6039 = vmul.f32 %v5840, %v5979
      %v6040 = vmul.f32 %v5842, %v5979
      %v6041 = vmul.f32 %v5844, %v5980
      %v6042 = vmul.f32 %v5846, %v5980
      %v6043 = vmul.f32 %v5848, %v5981
      %v6044 = vmul.f32 %v5850, %v5981
      %v6045 = vmul.f32 %v5852, %v5982
      %v6046 = vmul.f32 %v5854, %v5982
      %v6047 = vpack.c.bf16 %v3607, %v3607
      %v6048 = vpack.c.bf16 %v3646, %v3646
      %v6049 = vpack.c.bf16 %v5985, %v5983
      %v6050 = vpack.c.bf16 %v5986, %v5984
      %v6051 = vpack.c.bf16 %v5989, %v5987
      %v6052 = vpack.c.bf16 %v5990, %v5988
      %v6053 = vpack.c.bf16 %v5993, %v5991
      %v6054 = vpack.c.bf16 %v5994, %v5992
      %v6055 = vpack.c.bf16 %v5997, %v5995
      %v6056 = vpack.c.bf16 %v5998, %v5996
      %v6057 = vpack.c.bf16 %v6001, %v5999
      %v6058 = vpack.c.bf16 %v6002, %v6000
      %v6059 = vpack.c.bf16 %v6005, %v6003
      %v6060 = vpack.c.bf16 %v6006, %v6004
      %v6061 = vpack.c.bf16 %v6009, %v6007
      %v6062 = vpack.c.bf16 %v6010, %v6008
      %v6063 = vpack.c.bf16 %v6013, %v6011
      %v6064 = vpack.c.bf16 %v6014, %v6012
      %v6065 = vpack.c.bf16 %v6017, %v6015
      %v6066 = vpack.c.bf16 %v6018, %v6016
      %v6067 = vpack.c.bf16 %v6021, %v6019
      %v6068 = vpack.c.bf16 %v6022, %v6020
      %v6069 = vpack.c.bf16 %v6025, %v6023
      %v6070 = vpack.c.bf16 %v6026, %v6024
      %v6071 = vpack.c.bf16 %v6029, %v6027
      %v6072 = vpack.c.bf16 %v6030, %v6028
      %v6073 = vpack.c.bf16 %v6033, %v6031
      %v6074 = vpack.c.bf16 %v6034, %v6032
      %v6075 = vpack.c.bf16 %v6037, %v6035
      %v6076 = vpack.c.bf16 %v6038, %v6036
      %v6077 = vpack.c.bf16 %v6041, %v6039
      %v6078 = vpack.c.bf16 %v6042, %v6040
      %v6079 = vpack.c.bf16 %v6045, %v6043
      %v6080 = vpack.c.bf16 %v6046, %v6044
      %6081 = vmatpush.bf16.xpose.msra.mxu0 %v6063
      %6082 = vmatpush.bf16.xpose.msra.mxu0 %v6061
      %6083 = vmatpush.bf16.xpose.msra.mxu0 %v6059
      %6084 = vmatpush.bf16.xpose.msra.mxu0 %v6057
      %6085 = vmatpush.bf16.xpose.msra.mxu0 %v6055
      %6086 = vmatpush.bf16.xpose.msra.mxu0 %v6053
      %6087 = vmatpush.bf16.xpose.msra.mxu0 %v6051
      %6088 = vmatpush.bf16.xpose.msra.mxu0 %v6049
      %6089 = vmatmul.bf16.gmra.mxu0 %v6047
      %v6090 = vpop.f32.mrf.mxu0
      %v6091 = vadd.f32 0.0, %v6090
      %v6092 = vpop.f32.mrf.mxu0
      %6093 = vdwg.mxu0
      %6094 = vmatpush.bf16.xpose.msra.mxu0 %v6064
      %6095 = vmatpush.bf16.xpose.msra.mxu0 %v6062
      %6096 = vmatpush.bf16.xpose.msra.mxu0 %v6060
      %6097 = vmatpush.bf16.xpose.msra.mxu0 %v6058
      %6098 = vmatpush.bf16.xpose.msra.mxu0 %v6056
      %6099 = vmatpush.bf16.xpose.msra.mxu0 %v6054
      %6100 = vmatpush.bf16.xpose.msra.mxu0 %v6052
      %6101 = vmatpush.bf16.xpose.msra.mxu0 %v6050
      %6102 = vmatmul.bf16.gmra.mxu0 %v6048
      %v6103 = vpop.f32.mrf.mxu0
      %v6104 = vadd.f32 %v6091, %v6103
      %v6105 = vpop.f32.mrf.mxu0
      %6106 = vdwg.mxu0
      %6107 = vmatpush.bf16.xpose.msra.mxu0 %v6079
      %6108 = vmatpush.bf16.xpose.msra.mxu0 %v6077
      %6109 = vmatpush.bf16.xpose.msra.mxu0 %v6075
      %6110 = vmatpush.bf16.xpose.msra.mxu0 %v6073
      %6111 = vmatpush.bf16.xpose.msra.mxu0 %v6071
      %6112 = vmatpush.bf16.xpose.msra.mxu0 %v6069
      %6113 = vmatpush.bf16.xpose.msra.mxu0 %v6067
      %6114 = vmatpush.bf16.xpose.msra.mxu0 %v6065
      %6115 = vmatmul.bf16.gmra.mxu0 %v6047
      %v6116 = vpop.f32.mrf.mxu0
      %v6117 = vadd.f32 0.0, %v6116
      %v6118 = vpop.f32.mrf.mxu0
      %6119 = vdwg.mxu0
      %6120 = vmatpush.bf16.xpose.msra.mxu0 %v6080
      %6121 = vmatpush.bf16.xpose.msra.mxu0 %v6078
      %6122 = vmatpush.bf16.xpose.msra.mxu0 %v6076
      %6123 = vmatpush.bf16.xpose.msra.mxu0 %v6074
      %6124 = vmatpush.bf16.xpose.msra.mxu0 %v6072
      %6125 = vmatpush.bf16.xpose.msra.mxu0 %v6070
      %6126 = vmatpush.bf16.xpose.msra.mxu0 %v6068
      %6127 = vmatpush.bf16.xpose.msra.mxu0 %v6066
      %6128 = vmatmul.bf16.gmra.mxu0 %v6048
      %v6129 = vpop.f32.mrf.mxu0
      %v6130 = vadd.f32 %v6117, %v6129
      %v6131 = vpop.f32.mrf.mxu0
      %6132 = vdwg.mxu0
      %v6133 = vpack.c.bf16 %v3609, %v3609
      %v6134 = vpack.c.bf16 %v3648, %v3648
      %v6135 = vpack.c.bf16 %v3612, %v3612
      %v6136 = vpack.c.bf16 %v3651, %v3651
      %6137 = vxpose.binary.xlu0.c.b16.start [1/16] %v6134, %v6133, 128
      %6138 = vxpose.binary.xlu0.c.b16.cont [2/16] 0, 0, 128
      %6139 = vxpose.binary.xlu0.c.b16.cont [3/16] 0, 0, 128
      %6140 = vxpose.binary.xlu0.c.b16.cont [4/16] 0, 0, 128
      %6141 = vxpose.binary.xlu0.c.b16.cont [5/16] 0, 0, 128
      %6142 = vxpose.binary.xlu0.c.b16.cont [6/16] 0, 0, 128
      %6143 = vxpose.binary.xlu0.c.b16.cont [7/16] 0, 0, 128
      %6144 = vxpose.binary.xlu0.c.b16.end [8/16] 0, 0, 128
      %v6145 = vpop.trf.xlu0
      %v6146 = vpop.trf.xlu0
      %v6147 = vpop.trf.xlu0
      %v6148 = vpop.trf.xlu0
      %v6149 = vpop.trf.xlu0
      %v6150 = vpop.trf.xlu0
      %v6151 = vpop.trf.xlu0
      %v6152 = vpop.trf.xlu0
      %v6153 = vpop.trf.xlu0
      %v6154 = vpop.trf.xlu0
      %v6155 = vpop.trf.xlu0
      %v6156 = vpop.trf.xlu0
      %v6157 = vpop.trf.xlu0
      %v6158 = vpop.trf.xlu0
      %v6159 = vpop.trf.xlu0
      %v6160 = vpop.trf.xlu0
      %v6162 = vsel %vm731, %v6145, 0
      %v6165 = vsel %vm731, %v6147, 0
      %v6168 = vsel %vm731, %v6149, 0
      %v6171 = vsel %vm731, %v6151, 0
      %v6174 = vsel %vm731, %v6153, 0
      %v6177 = vsel %vm731, %v6155, 0
      %v6180 = vsel %vm731, %v6157, 0
      %v6183 = vsel %vm731, %v6159, 0
      %v6186 = vsel %vm731, %v6146, 0
      %v6189 = vsel %vm731, %v6148, 0
      %v6192 = vsel %vm731, %v6150, 0
      %v6195 = vsel %vm731, %v6152, 0
      %v6198 = vsel %vm731, %v6154, 0
      %v6201 = vsel %vm731, %v6156, 0
      %v6204 = vsel %vm731, %v6158, 0
      %v6207 = vsel %vm731, %v6160, 0
      %v6210 = vsel %vm922, %v6135, 0
      %v6213 = vsel %vm922, %v6136, 0
      %6215 = vmatpush.bf16.msra.mxu0 0
      %6216 = vmatpush.bf16.msra.mxu0 0
      %6217 = vmatpush.bf16.msra.mxu0 0
      %6218 = vmatpush.bf16.msra.mxu0 0
      %6219 = vmatpush.bf16.msra.mxu0 0
      %6220 = vmatpush.bf16.msra.mxu0 0
      %6221 = vmatpush.bf16.msra.mxu0 0
      %6222 = vmatpush.bf16.msra.mxu0 %v6210
      %6223 = vmatmul.bf16.gmra.mxu0 %v6162
      %v6224 = vpop.f32.mrf.mxu0
      %v6225 = vadd.f32 0.0, %v6224
      %v6226 = vpop.f32.mrf.mxu0
      %v6227 = vadd.f32 0.0, %v6226
      %6228 = vmatmul.bf16.gmra.mxu0 %v6165
      %v6229 = vpop.f32.mrf.mxu0
      %v6230 = vadd.f32 0.0, %v6229
      %v6231 = vpop.f32.mrf.mxu0
      %v6232 = vadd.f32 0.0, %v6231
      %6233 = vmatmul.bf16.gmra.mxu0 %v6168
      %v6234 = vpop.f32.mrf.mxu0
      %v6235 = vadd.f32 0.0, %v6234
      %v6236 = vpop.f32.mrf.mxu0
      %v6237 = vadd.f32 0.0, %v6236
      %6238 = vmatmul.bf16.gmra.mxu0 %v6171
      %v6239 = vpop.f32.mrf.mxu0
      %v6240 = vadd.f32 0.0, %v6239
      %v6241 = vpop.f32.mrf.mxu0
      %v6242 = vadd.f32 0.0, %v6241
      %6243 = vmatmul.bf16.gmra.mxu0 %v6174
      %v6244 = vpop.f32.mrf.mxu0
      %v6245 = vadd.f32 0.0, %v6244
      %v6246 = vpop.f32.mrf.mxu0
      %v6247 = vadd.f32 0.0, %v6246
      %6248 = vmatmul.bf16.gmra.mxu0 %v6177
      %v6249 = vpop.f32.mrf.mxu0
      %v6250 = vadd.f32 0.0, %v6249
      %v6251 = vpop.f32.mrf.mxu0
      %v6252 = vadd.f32 0.0, %v6251
      %6253 = vmatmul.bf16.gmra.mxu0 %v6180
      %v6254 = vpop.f32.mrf.mxu0
      %v6255 = vadd.f32 0.0, %v6254
      %v6256 = vpop.f32.mrf.mxu0
      %v6257 = vadd.f32 0.0, %v6256
      %6258 = vmatmul.bf16.gmra.mxu0 %v6183
      %v6259 = vpop.f32.mrf.mxu0
      %v6260 = vadd.f32 0.0, %v6259
      %v6261 = vpop.f32.mrf.mxu0
      %v6262 = vadd.f32 0.0, %v6261
      %6263 = vmatmul.bf16.gmra.mxu0 %v6186
      %v6264 = vpop.f32.mrf.mxu0
      %v6265 = vadd.f32 0.0, %v6264
      %v6266 = vpop.f32.mrf.mxu0
      %v6267 = vadd.f32 0.0, %v6266
      %6268 = vmatmul.bf16.gmra.mxu0 %v6189
      %v6269 = vpop.f32.mrf.mxu0
      %v6270 = vadd.f32 0.0, %v6269
      %v6271 = vpop.f32.mrf.mxu0
      %v6272 = vadd.f32 0.0, %v6271
      %6273 = vmatmul.bf16.gmra.mxu0 %v6192
      %v6274 = vpop.f32.mrf.mxu0
      %v6275 = vadd.f32 0.0, %v6274
      %v6276 = vpop.f32.mrf.mxu0
      %v6277 = vadd.f32 0.0, %v6276
      %6278 = vmatmul.bf16.gmra.mxu0 %v6195
      %v6279 = vpop.f32.mrf.mxu0
      %v6280 = vadd.f32 0.0, %v6279
      %v6281 = vpop.f32.mrf.mxu0
      %v6282 = vadd.f32 0.0, %v6281
      %6283 = vmatmul.bf16.gmra.mxu0 %v6198
      %v6284 = vpop.f32.mrf.mxu0
      %v6285 = vadd.f32 0.0, %v6284
      %v6286 = vpop.f32.mrf.mxu0
      %v6287 = vadd.f32 0.0, %v6286
      %6288 = vmatmul.bf16.gmra.mxu0 %v6201
      %v6289 = vpop.f32.mrf.mxu0
      %v6290 = vadd.f32 0.0, %v6289
      %v6291 = vpop.f32.mrf.mxu0
      %v6292 = vadd.f32 0.0, %v6291
      %6293 = vmatmul.bf16.gmra.mxu0 %v6204
      %v6294 = vpop.f32.mrf.mxu0
      %v6295 = vadd.f32 0.0, %v6294
      %v6296 = vpop.f32.mrf.mxu0
      %v6297 = vadd.f32 0.0, %v6296
      %6298 = vmatmul.bf16.gmra.mxu0 %v6207
      %v6299 = vpop.f32.mrf.mxu0
      %v6300 = vadd.f32 0.0, %v6299
      %v6301 = vpop.f32.mrf.mxu0
      %v6302 = vadd.f32 0.0, %v6301
      %6303 = vdwg.mxu0
      %6304 = vmatpush.bf16.msra.mxu0 0
      %6305 = vmatpush.bf16.msra.mxu0 0
      %6306 = vmatpush.bf16.msra.mxu0 0
      %6307 = vmatpush.bf16.msra.mxu0 0
      %6308 = vmatpush.bf16.msra.mxu0 0
      %6309 = vmatpush.bf16.msra.mxu0 0
      %6310 = vmatpush.bf16.msra.mxu0 0
      %6311 = vmatpush.bf16.msra.mxu0 %v6213
      %6312 = vmatmul.bf16.gmra.mxu0 %v6162
      %v6313 = vpop.f32.mrf.mxu0
      %v6314 = vadd.f32 0.0, %v6313
      %v6315 = vpop.f32.mrf.mxu0
      %v6316 = vadd.f32 0.0, %v6315
      %6317 = vmatmul.bf16.gmra.mxu0 %v6165
      %v6318 = vpop.f32.mrf.mxu0
      %v6319 = vadd.f32 0.0, %v6318
      %v6320 = vpop.f32.mrf.mxu0
      %v6321 = vadd.f32 0.0, %v6320
      %6322 = vmatmul.bf16.gmra.mxu0 %v6168
      %v6323 = vpop.f32.mrf.mxu0
      %v6324 = vadd.f32 0.0, %v6323
      %v6325 = vpop.f32.mrf.mxu0
      %v6326 = vadd.f32 0.0, %v6325
      %6327 = vmatmul.bf16.gmra.mxu0 %v6171
      %v6328 = vpop.f32.mrf.mxu0
      %v6329 = vadd.f32 0.0, %v6328
      %v6330 = vpop.f32.mrf.mxu0
      %v6331 = vadd.f32 0.0, %v6330
      %6332 = vmatmul.bf16.gmra.mxu0 %v6174
      %v6333 = vpop.f32.mrf.mxu0
      %v6334 = vadd.f32 0.0, %v6333
      %v6335 = vpop.f32.mrf.mxu0
      %v6336 = vadd.f32 0.0, %v6335
      %6337 = vmatmul.bf16.gmra.mxu0 %v6177
      %v6338 = vpop.f32.mrf.mxu0
      %v6339 = vadd.f32 0.0, %v6338
      %v6340 = vpop.f32.mrf.mxu0
      %v6341 = vadd.f32 0.0, %v6340
      %6342 = vmatmul.bf16.gmra.mxu0 %v6180
      %v6343 = vpop.f32.mrf.mxu0
      %v6344 = vadd.f32 0.0, %v6343
      %v6345 = vpop.f32.mrf.mxu0
      %v6346 = vadd.f32 0.0, %v6345
      %6347 = vmatmul.bf16.gmra.mxu0 %v6183
      %v6348 = vpop.f32.mrf.mxu0
      %v6349 = vadd.f32 0.0, %v6348
      %v6350 = vpop.f32.mrf.mxu0
      %v6351 = vadd.f32 0.0, %v6350
      %6352 = vmatmul.bf16.gmra.mxu0 %v6186
      %v6353 = vpop.f32.mrf.mxu0
      %v6354 = vadd.f32 0.0, %v6353
      %v6355 = vpop.f32.mrf.mxu0
      %v6356 = vadd.f32 0.0, %v6355
      %6357 = vmatmul.bf16.gmra.mxu0 %v6189
      %v6358 = vpop.f32.mrf.mxu0
      %v6359 = vadd.f32 0.0, %v6358
      %v6360 = vpop.f32.mrf.mxu0
      %v6361 = vadd.f32 0.0, %v6360
      %6362 = vmatmul.bf16.gmra.mxu0 %v6192
      %v6363 = vpop.f32.mrf.mxu0
      %v6364 = vadd.f32 0.0, %v6363
      %v6365 = vpop.f32.mrf.mxu0
      %v6366 = vadd.f32 0.0, %v6365
      %6367 = vmatmul.bf16.gmra.mxu0 %v6195
      %v6368 = vpop.f32.mrf.mxu0
      %v6369 = vadd.f32 0.0, %v6368
      %v6370 = vpop.f32.mrf.mxu0
      %v6371 = vadd.f32 0.0, %v6370
      %6372 = vmatmul.bf16.gmra.mxu0 %v6198
      %v6373 = vpop.f32.mrf.mxu0
      %v6374 = vadd.f32 0.0, %v6373
      %v6375 = vpop.f32.mrf.mxu0
      %v6376 = vadd.f32 0.0, %v6375
      %6377 = vmatmul.bf16.gmra.mxu0 %v6201
      %v6378 = vpop.f32.mrf.mxu0
      %v6379 = vadd.f32 0.0, %v6378
      %v6380 = vpop.f32.mrf.mxu0
      %v6381 = vadd.f32 0.0, %v6380
      %6382 = vmatmul.bf16.gmra.mxu0 %v6204
      %v6383 = vpop.f32.mrf.mxu0
      %v6384 = vadd.f32 0.0, %v6383
      %v6385 = vpop.f32.mrf.mxu0
      %v6386 = vadd.f32 0.0, %v6385
      %6387 = vmatmul.bf16.gmra.mxu0 %v6207
      %v6388 = vpop.f32.mrf.mxu0
      %v6389 = vadd.f32 0.0, %v6388
      %v6390 = vpop.f32.mrf.mxu0
      %v6391 = vadd.f32 0.0, %v6390
      %6392 = vdwg.mxu0
      %v6393 = vmax.f32 %v6225, %v6314
      %6394 = vmax.xlane.f32.xlu0 %v6393
      %v6395 = vpop.xlane.xlu0 %6394
      %v6396 = vmax.f32 %v6227, %v6316
      %6397 = vmax.xlane.f32.xlu0 %v6396
      %v6398 = vpop.xlane.xlu0 %6397
      %v6399 = vmax.f32 %v6230, %v6319
      %6400 = vmax.xlane.f32.xlu0 %v6399
      %v6401 = vpop.xlane.xlu0 %6400
      %v6402 = vmax.f32 %v6232, %v6321
      %6403 = vmax.xlane.f32.xlu0 %v6402
      %v6404 = vpop.xlane.xlu0 %6403
      %v6405 = vmax.f32 %v6235, %v6324
      %6406 = vmax.xlane.f32.xlu0 %v6405
      %v6407 = vpop.xlane.xlu0 %6406
      %v6408 = vmax.f32 %v6237, %v6326
      %6409 = vmax.xlane.f32.xlu0 %v6408
      %v6410 = vpop.xlane.xlu0 %6409
      %v6411 = vmax.f32 %v6240, %v6329
      %6412 = vmax.xlane.f32.xlu0 %v6411
      %v6413 = vpop.xlane.xlu0 %6412
      %v6414 = vmax.f32 %v6242, %v6331
      %6415 = vmax.xlane.f32.xlu0 %v6414
      %v6416 = vpop.xlane.xlu0 %6415
      %v6417 = vmax.f32 %v6245, %v6334
      %6418 = vmax.xlane.f32.xlu0 %v6417
      %v6419 = vpop.xlane.xlu0 %6418
      %v6420 = vmax.f32 %v6247, %v6336
      %6421 = vmax.xlane.f32.xlu0 %v6420
      %v6422 = vpop.xlane.xlu0 %6421
      %v6423 = vmax.f32 %v6250, %v6339
      %6424 = vmax.xlane.f32.xlu0 %v6423
      %v6425 = vpop.xlane.xlu0 %6424
      %v6426 = vmax.f32 %v6252, %v6341
      %6427 = vmax.xlane.f32.xlu0 %v6426
      %v6428 = vpop.xlane.xlu0 %6427
      %v6429 = vmax.f32 %v6255, %v6344
      %6430 = vmax.xlane.f32.xlu0 %v6429
      %v6431 = vpop.xlane.xlu0 %6430
      %v6432 = vmax.f32 %v6257, %v6346
      %6433 = vmax.xlane.f32.xlu0 %v6432
      %v6434 = vpop.xlane.xlu0 %6433
      %v6435 = vmax.f32 %v6260, %v6349
      %6436 = vmax.xlane.f32.xlu0 %v6435
      %v6437 = vpop.xlane.xlu0 %6436
      %v6438 = vmax.f32 %v6262, %v6351
      %6439 = vmax.xlane.f32.xlu0 %v6438
      %v6440 = vpop.xlane.xlu0 %6439
      %v6441 = vmax.f32 %v6265, %v6354
      %6442 = vmax.xlane.f32.xlu0 %v6441
      %v6443 = vpop.xlane.xlu0 %6442
      %v6444 = vmax.f32 %v6267, %v6356
      %6445 = vmax.xlane.f32.xlu0 %v6444
      %v6446 = vpop.xlane.xlu0 %6445
      %v6447 = vmax.f32 %v6270, %v6359
      %6448 = vmax.xlane.f32.xlu0 %v6447
      %v6449 = vpop.xlane.xlu0 %6448
      %v6450 = vmax.f32 %v6272, %v6361
      %6451 = vmax.xlane.f32.xlu0 %v6450
      %v6452 = vpop.xlane.xlu0 %6451
      %v6453 = vmax.f32 %v6275, %v6364
      %6454 = vmax.xlane.f32.xlu0 %v6453
      %v6455 = vpop.xlane.xlu0 %6454
      %v6456 = vmax.f32 %v6277, %v6366
      %6457 = vmax.xlane.f32.xlu0 %v6456
      %v6458 = vpop.xlane.xlu0 %6457
      %v6459 = vmax.f32 %v6280, %v6369
      %6460 = vmax.xlane.f32.xlu0 %v6459
      %v6461 = vpop.xlane.xlu0 %6460
      %v6462 = vmax.f32 %v6282, %v6371
      %6463 = vmax.xlane.f32.xlu0 %v6462
      %v6464 = vpop.xlane.xlu0 %6463
      %v6465 = vmax.f32 %v6285, %v6374
      %6466 = vmax.xlane.f32.xlu0 %v6465
      %v6467 = vpop.xlane.xlu0 %6466
      %v6468 = vmax.f32 %v6287, %v6376
      %6469 = vmax.xlane.f32.xlu0 %v6468
      %v6470 = vpop.xlane.xlu0 %6469
      %v6471 = vmax.f32 %v6290, %v6379
      %6472 = vmax.xlane.f32.xlu0 %v6471
      %v6473 = vpop.xlane.xlu0 %6472
      %v6474 = vmax.f32 %v6292, %v6381
      %6475 = vmax.xlane.f32.xlu0 %v6474
      %v6476 = vpop.xlane.xlu0 %6475
      %v6477 = vmax.f32 %v6295, %v6384
      %6478 = vmax.xlane.f32.xlu0 %v6477
      %v6479 = vpop.xlane.xlu0 %6478
      %v6480 = vmax.f32 %v6297, %v6386
      %6481 = vmax.xlane.f32.xlu0 %v6480
      %v6482 = vpop.xlane.xlu0 %6481
      %v6483 = vmax.f32 %v6300, %v6389
      %6484 = vmax.xlane.f32.xlu0 %v6483
      %v6485 = vpop.xlane.xlu0 %6484
      %v6486 = vmax.f32 %v6302, %v6391
      %6487 = vmax.xlane.f32.xlu0 %v6486
      %v6488 = vpop.xlane.xlu0 %6487
      %v6489 = vsub.f32 %v6225, %v6395
      %v6490 = vsub.f32 %v6314, %v6395
      %v6491 = vsub.f32 %v6227, %v6398
      %v6492 = vsub.f32 %v6316, %v6398
      %v6493 = vsub.f32 %v6230, %v6401
      %v6494 = vsub.f32 %v6319, %v6401
      %v6495 = vsub.f32 %v6232, %v6404
      %v6496 = vsub.f32 %v6321, %v6404
      %v6497 = vsub.f32 %v6235, %v6407
      %v6498 = vsub.f32 %v6324, %v6407
      %v6499 = vsub.f32 %v6237, %v6410
      %v6500 = vsub.f32 %v6326, %v6410
      %v6501 = vsub.f32 %v6240, %v6413
      %v6502 = vsub.f32 %v6329, %v6413
      %v6503 = vsub.f32 %v6242, %v6416
      %v6504 = vsub.f32 %v6331, %v6416
      %v6505 = vsub.f32 %v6245, %v6419
      %v6506 = vsub.f32 %v6334, %v6419
      %v6507 = vsub.f32 %v6247, %v6422
      %v6508 = vsub.f32 %v6336, %v6422
      %v6509 = vsub.f32 %v6250, %v6425
      %v6510 = vsub.f32 %v6339, %v6425
      %v6511 = vsub.f32 %v6252, %v6428
      %v6512 = vsub.f32 %v6341, %v6428
      %v6513 = vsub.f32 %v6255, %v6431
      %v6514 = vsub.f32 %v6344, %v6431
      %v6515 = vsub.f32 %v6257, %v6434
      %v6516 = vsub.f32 %v6346, %v6434
      %v6517 = vsub.f32 %v6260, %v6437
      %v6518 = vsub.f32 %v6349, %v6437
      %v6519 = vsub.f32 %v6262, %v6440
      %v6520 = vsub.f32 %v6351, %v6440
      %v6521 = vsub.f32 %v6265, %v6443
      %v6522 = vsub.f32 %v6354, %v6443
      %v6523 = vsub.f32 %v6267, %v6446
      %v6524 = vsub.f32 %v6356, %v6446
      %v6525 = vsub.f32 %v6270, %v6449
      %v6526 = vsub.f32 %v6359, %v6449
      %v6527 = vsub.f32 %v6272, %v6452
      %v6528 = vsub.f32 %v6361, %v6452
      %v6529 = vsub.f32 %v6275, %v6455
      %v6530 = vsub.f32 %v6364, %v6455
      %v6531 = vsub.f32 %v6277, %v6458
      %v6532 = vsub.f32 %v6366, %v6458
      %v6533 = vsub.f32 %v6280, %v6461
      %v6534 = vsub.f32 %v6369, %v6461
      %v6535 = vsub.f32 %v6282, %v6464
      %v6536 = vsub.f32 %v6371, %v6464
      %v6537 = vsub.f32 %v6285, %v6467
      %v6538 = vsub.f32 %v6374, %v6467
      %v6539 = vsub.f32 %v6287, %v6470
      %v6540 = vsub.f32 %v6376, %v6470
      %v6541 = vsub.f32 %v6290, %v6473
      %v6542 = vsub.f32 %v6379, %v6473
      %v6543 = vsub.f32 %v6292, %v6476
      %v6544 = vsub.f32 %v6381, %v6476
      %v6545 = vsub.f32 %v6295, %v6479
      %v6546 = vsub.f32 %v6384, %v6479
      %v6547 = vsub.f32 %v6297, %v6482
      %v6548 = vsub.f32 %v6386, %v6482
      %v6549 = vsub.f32 %v6300, %v6485
      %v6550 = vsub.f32 %v6389, %v6485
      %v6551 = vsub.f32 %v6302, %v6488
      %v6552 = vsub.f32 %v6391, %v6488
      %v6553 = vmul.f32 %v6489, 1.442695
      %v6554 = vpow.pop %v6553
      %v6555 = vmul.f32 %v6490, 1.442695
      %v6556 = vpow.pop %v6555
      %v6557 = vmul.f32 %v6491, 1.442695
      %v6558 = vpow.pop %v6557
      %v6559 = vmul.f32 %v6492, 1.442695
      %v6560 = vpow.pop %v6559
      %v6561 = vmul.f32 %v6493, 1.442695
      %v6562 = vpow.pop %v6561
      %v6563 = vmul.f32 %v6494, 1.442695
      %v6564 = vpow.pop %v6563
      %v6565 = vmul.f32 %v6495, 1.442695
      %v6566 = vpow.pop %v6565
      %v6567 = vmul.f32 %v6496, 1.442695
      %v6568 = vpow.pop %v6567
      %v6569 = vmul.f32 %v6497, 1.442695
      %v6570 = vpow.pop %v6569
      %v6571 = vmul.f32 %v6498, 1.442695
      %v6572 = vpow.pop %v6571
      %v6573 = vmul.f32 %v6499, 1.442695
      %v6574 = vpow.pop %v6573
      %v6575 = vmul.f32 %v6500, 1.442695
      %v6576 = vpow.pop %v6575
      %v6577 = vmul.f32 %v6501, 1.442695
      %v6578 = vpow.pop %v6577
      %v6579 = vmul.f32 %v6502, 1.442695
      %v6580 = vpow.pop %v6579
      %v6581 = vmul.f32 %v6503, 1.442695
      %v6582 = vpow.pop %v6581
      %v6583 = vmul.f32 %v6504, 1.442695
      %v6584 = vpow.pop %v6583
      %v6585 = vmul.f32 %v6505, 1.442695
      %v6586 = vpow.pop %v6585
      %v6587 = vmul.f32 %v6506, 1.442695
      %v6588 = vpow.pop %v6587
      %v6589 = vmul.f32 %v6507, 1.442695
      %v6590 = vpow.pop %v6589
      %v6591 = vmul.f32 %v6508, 1.442695
      %v6592 = vpow.pop %v6591
      %v6593 = vmul.f32 %v6509, 1.442695
      %v6594 = vpow.pop %v6593
      %v6595 = vmul.f32 %v6510, 1.442695
      %v6596 = vpow.pop %v6595
      %v6597 = vmul.f32 %v6511, 1.442695
      %v6598 = vpow.pop %v6597
      %v6599 = vmul.f32 %v6512, 1.442695
      %v6600 = vpow.pop %v6599
      %v6601 = vmul.f32 %v6513, 1.442695
      %v6602 = vpow.pop %v6601
      %v6603 = vmul.f32 %v6514, 1.442695
      %v6604 = vpow.pop %v6603
      %v6605 = vmul.f32 %v6515, 1.442695
      %v6606 = vpow.pop %v6605
      %v6607 = vmul.f32 %v6516, 1.442695
      %v6608 = vpow.pop %v6607
      %v6609 = vmul.f32 %v6517, 1.442695
      %v6610 = vpow.pop %v6609
      %v6611 = vmul.f32 %v6518, 1.442695
      %v6612 = vpow.pop %v6611
      %v6613 = vmul.f32 %v6519, 1.442695
      %v6614 = vpow.pop %v6613
      %v6615 = vmul.f32 %v6520, 1.442695
      %v6616 = vpow.pop %v6615
      %v6617 = vmul.f32 %v6521, 1.442695
      %v6618 = vpow.pop %v6617
      %v6619 = vmul.f32 %v6522, 1.442695
      %v6620 = vpow.pop %v6619
      %v6621 = vmul.f32 %v6523, 1.442695
      %v6622 = vpow.pop %v6621
      %v6623 = vmul.f32 %v6524, 1.442695
      %v6624 = vpow.pop %v6623
      %v6625 = vmul.f32 %v6525, 1.442695
      %v6626 = vpow.pop %v6625
      %v6627 = vmul.f32 %v6526, 1.442695
      %v6628 = vpow.pop %v6627
      %v6629 = vmul.f32 %v6527, 1.442695
      %v6630 = vpow.pop %v6629
      %v6631 = vmul.f32 %v6528, 1.442695
      %v6632 = vpow.pop %v6631
      %v6633 = vmul.f32 %v6529, 1.442695
      %v6634 = vpow.pop %v6633
      %v6635 = vmul.f32 %v6530, 1.442695
      %v6636 = vpow.pop %v6635
      %v6637 = vmul.f32 %v6531, 1.442695
      %v6638 = vpow.pop %v6637
      %v6639 = vmul.f32 %v6532, 1.442695
      %v6640 = vpow.pop %v6639
      %v6641 = vmul.f32 %v6533, 1.442695
      %v6642 = vpow.pop %v6641
      %v6643 = vmul.f32 %v6534, 1.442695
      %v6644 = vpow.pop %v6643
      %v6645 = vmul.f32 %v6535, 1.442695
      %v6646 = vpow.pop %v6645
      %v6647 = vmul.f32 %v6536, 1.442695
      %v6648 = vpow.pop %v6647
      %v6649 = vmul.f32 %v6537, 1.442695
      %v6650 = vpow.pop %v6649
      %v6651 = vmul.f32 %v6538, 1.442695
      %v6652 = vpow.pop %v6651
      %v6653 = vmul.f32 %v6539, 1.442695
      %v6654 = vpow.pop %v6653
      %v6655 = vmul.f32 %v6540, 1.442695
      %v6656 = vpow.pop %v6655
      %v6657 = vmul.f32 %v6541, 1.442695
      %v6658 = vpow.pop %v6657
      %v6659 = vmul.f32 %v6542, 1.442695
      %v6660 = vpow.pop %v6659
      %v6661 = vmul.f32 %v6543, 1.442695
      %v6662 = vpow.pop %v6661
      %v6663 = vmul.f32 %v6544, 1.442695
      %v6664 = vpow.pop %v6663
      %v6665 = vmul.f32 %v6545, 1.442695
      %v6666 = vpow.pop %v6665
      %v6667 = vmul.f32 %v6546, 1.442695
      %v6668 = vpow.pop %v6667
      %v6669 = vmul.f32 %v6547, 1.442695
      %v6670 = vpow.pop %v6669
      %v6671 = vmul.f32 %v6548, 1.442695
      %v6672 = vpow.pop %v6671
      %v6673 = vmul.f32 %v6549, 1.442695
      %v6674 = vpow.pop %v6673
      %v6675 = vmul.f32 %v6550, 1.442695
      %v6676 = vpow.pop %v6675
      %v6677 = vmul.f32 %v6551, 1.442695
      %v6678 = vpow.pop %v6677
      %v6679 = vmul.f32 %v6552, 1.442695
      %v6680 = vpow.pop %v6679
      %v6681 = vadd.f32 %v6554, %v6556
      %6682 = vadd.xlane.f32.xlu0 %v6681
      %v6683 = vpop.xlane.xlu0 %6682
      %v6684 = vadd.f32 %v6558, %v6560
      %6685 = vadd.xlane.f32.xlu0 %v6684
      %v6686 = vpop.xlane.xlu0 %6685
      %v6687 = vadd.f32 %v6562, %v6564
      %6688 = vadd.xlane.f32.xlu0 %v6687
      %v6689 = vpop.xlane.xlu0 %6688
      %v6690 = vadd.f32 %v6566, %v6568
      %6691 = vadd.xlane.f32.xlu0 %v6690
      %v6692 = vpop.xlane.xlu0 %6691
      %v6693 = vadd.f32 %v6570, %v6572
      %6694 = vadd.xlane.f32.xlu0 %v6693
      %v6695 = vpop.xlane.xlu0 %6694
      %v6696 = vadd.f32 %v6574, %v6576
      %6697 = vadd.xlane.f32.xlu0 %v6696
      %v6698 = vpop.xlane.xlu0 %6697
      %v6699 = vadd.f32 %v6578, %v6580
      %6700 = vadd.xlane.f32.xlu0 %v6699
      %v6701 = vpop.xlane.xlu0 %6700
      %v6702 = vadd.f32 %v6582, %v6584
      %6703 = vadd.xlane.f32.xlu0 %v6702
      %v6704 = vpop.xlane.xlu0 %6703
      %v6705 = vadd.f32 %v6586, %v6588
      %6706 = vadd.xlane.f32.xlu0 %v6705
      %v6707 = vpop.xlane.xlu0 %6706
      %v6708 = vadd.f32 %v6590, %v6592
      %6709 = vadd.xlane.f32.xlu0 %v6708
      %v6710 = vpop.xlane.xlu0 %6709
      %v6711 = vadd.f32 %v6594, %v6596
      %6712 = vadd.xlane.f32.xlu0 %v6711
      %v6713 = vpop.xlane.xlu0 %6712
      %v6714 = vadd.f32 %v6598, %v6600
      %6715 = vadd.xlane.f32.xlu0 %v6714
      %v6716 = vpop.xlane.xlu0 %6715
      %v6717 = vadd.f32 %v6602, %v6604
      %6718 = vadd.xlane.f32.xlu0 %v6717
      %v6719 = vpop.xlane.xlu0 %6718
      %v6720 = vadd.f32 %v6606, %v6608
      %6721 = vadd.xlane.f32.xlu0 %v6720
      %v6722 = vpop.xlane.xlu0 %6721
      %v6723 = vadd.f32 %v6610, %v6612
      %6724 = vadd.xlane.f32.xlu0 %v6723
      %v6725 = vpop.xlane.xlu0 %6724
      %v6726 = vadd.f32 %v6614, %v6616
      %6727 = vadd.xlane.f32.xlu0 %v6726
      %v6728 = vpop.xlane.xlu0 %6727
      %v6729 = vadd.f32 %v6618, %v6620
      %6730 = vadd.xlane.f32.xlu0 %v6729
      %v6731 = vpop.xlane.xlu0 %6730
      %v6732 = vadd.f32 %v6622, %v6624
      %6733 = vadd.xlane.f32.xlu0 %v6732
      %v6734 = vpop.xlane.xlu0 %6733
      %v6735 = vadd.f32 %v6626, %v6628
      %6736 = vadd.xlane.f32.xlu0 %v6735
      %v6737 = vpop.xlane.xlu0 %6736
      %v6738 = vadd.f32 %v6630, %v6632
      %6739 = vadd.xlane.f32.xlu0 %v6738
      %v6740 = vpop.xlane.xlu0 %6739
      %v6741 = vadd.f32 %v6634, %v6636
      %6742 = vadd.xlane.f32.xlu0 %v6741
      %v6743 = vpop.xlane.xlu0 %6742
      %v6744 = vadd.f32 %v6638, %v6640
      %6745 = vadd.xlane.f32.xlu0 %v6744
      %v6746 = vpop.xlane.xlu0 %6745
      %v6747 = vadd.f32 %v6642, %v6644
      %6748 = vadd.xlane.f32.xlu0 %v6747
      %v6749 = vpop.xlane.xlu0 %6748
      %v6750 = vadd.f32 %v6646, %v6648
      %6751 = vadd.xlane.f32.xlu0 %v6750
      %v6752 = vpop.xlane.xlu0 %6751
      %v6753 = vadd.f32 %v6650, %v6652
      %6754 = vadd.xlane.f32.xlu0 %v6753
      %v6755 = vpop.xlane.xlu0 %6754
      %v6756 = vadd.f32 %v6654, %v6656
      %6757 = vadd.xlane.f32.xlu0 %v6756
      %v6758 = vpop.xlane.xlu0 %6757
      %v6759 = vadd.f32 %v6658, %v6660
      %6760 = vadd.xlane.f32.xlu0 %v6759
      %v6761 = vpop.xlane.xlu0 %6760
      %v6762 = vadd.f32 %v6662, %v6664
      %6763 = vadd.xlane.f32.xlu0 %v6762
      %v6764 = vpop.xlane.xlu0 %6763
      %v6765 = vadd.f32 %v6666, %v6668
      %6766 = vadd.xlane.f32.xlu0 %v6765
      %v6767 = vpop.xlane.xlu0 %6766
      %v6768 = vadd.f32 %v6670, %v6672
      %6769 = vadd.xlane.f32.xlu0 %v6768
      %v6770 = vpop.xlane.xlu0 %6769
      %v6771 = vadd.f32 %v6674, %v6676
      %6772 = vadd.xlane.f32.xlu0 %v6771
      %v6773 = vpop.xlane.xlu0 %6772
      %v6774 = vadd.f32 %v6678, %v6680
      %6775 = vadd.xlane.f32.xlu0 %v6774
      %v6776 = vpop.xlane.xlu0 %6775
      %v6777 = vrcp.pop %v6683
      %v6778 = vrcp.pop %v6686
      %v6779 = vrcp.pop %v6689
      %v6780 = vrcp.pop %v6692
      %v6781 = vrcp.pop %v6695
      %v6782 = vrcp.pop %v6698
      %v6783 = vrcp.pop %v6701
      %v6784 = vrcp.pop %v6704
      %v6785 = vrcp.pop %v6707
      %v6786 = vrcp.pop %v6710
      %v6787 = vrcp.pop %v6713
      %v6788 = vrcp.pop %v6716
      %v6789 = vrcp.pop %v6719
      %v6790 = vrcp.pop %v6722
      %v6791 = vrcp.pop %v6725
      %v6792 = vrcp.pop %v6728
      %v6793 = vrcp.pop %v6731
      %v6794 = vrcp.pop %v6734
      %v6795 = vrcp.pop %v6737
      %v6796 = vrcp.pop %v6740
      %v6797 = vrcp.pop %v6743
      %v6798 = vrcp.pop %v6746
      %v6799 = vrcp.pop %v6749
      %v6800 = vrcp.pop %v6752
      %v6801 = vrcp.pop %v6755
      %v6802 = vrcp.pop %v6758
      %v6803 = vrcp.pop %v6761
      %v6804 = vrcp.pop %v6764
      %v6805 = vrcp.pop %v6767
      %v6806 = vrcp.pop %v6770
      %v6807 = vrcp.pop %v6773
      %v6808 = vrcp.pop %v6776
      %v6809 = vmul.f32 %v6554, %v6777
      %v6810 = vmul.f32 %v6556, %v6777
      %v6811 = vmul.f32 %v6558, %v6778
      %v6812 = vmul.f32 %v6560, %v6778
      %v6813 = vmul.f32 %v6562, %v6779
      %v6814 = vmul.f32 %v6564, %v6779
      %v6815 = vmul.f32 %v6566, %v6780
      %v6816 = vmul.f32 %v6568, %v6780
      %v6817 = vmul.f32 %v6570, %v6781
      %v6818 = vmul.f32 %v6572, %v6781
      %v6819 = vmul.f32 %v6574, %v6782
      %v6820 = vmul.f32 %v6576, %v6782
      %v6821 = vmul.f32 %v6578, %v6783
      %v6822 = vmul.f32 %v6580, %v6783
      %v6823 = vmul.f32 %v6582, %v6784
      %v6824 = vmul.f32 %v6584, %v6784
      %v6825 = vmul.f32 %v6586, %v6785
      %v6826 = vmul.f32 %v6588, %v6785
      %v6827 = vmul.f32 %v6590, %v6786
      %v6828 = vmul.f32 %v6592, %v6786
      %v6829 = vmul.f32 %v6594, %v6787
      %v6830 = vmul.f32 %v6596, %v6787
      %v6831 = vmul.f32 %v6598, %v6788
      %v6832 = vmul.f32 %v6600, %v6788
      %v6833 = vmul.f32 %v6602, %v6789
      %v6834 = vmul.f32 %v6604, %v6789
      %v6835 = vmul.f32 %v6606, %v6790
      %v6836 = vmul.f32 %v6608, %v6790
      %v6837 = vmul.f32 %v6610, %v6791
      %v6838 = vmul.f32 %v6612, %v6791
      %v6839 = vmul.f32 %v6614, %v6792
      %v6840 = vmul.f32 %v6616, %v6792
      %v6841 = vmul.f32 %v6618, %v6793
      %v6842 = vmul.f32 %v6620, %v6793
      %v6843 = vmul.f32 %v6622, %v6794
      %v6844 = vmul.f32 %v6624, %v6794
      %v6845 = vmul.f32 %v6626, %v6795
      %v6846 = vmul.f32 %v6628, %v6795
      %v6847 = vmul.f32 %v6630, %v6796
      %v6848 = vmul.f32 %v6632, %v6796
      %v6849 = vmul.f32 %v6634, %v6797
      %v6850 = vmul.f32 %v6636, %v6797
      %v6851 = vmul.f32 %v6638, %v6798
      %v6852 = vmul.f32 %v6640, %v6798
      %v6853 = vmul.f32 %v6642, %v6799
      %v6854 = vmul.f32 %v6644, %v6799
      %v6855 = vmul.f32 %v6646, %v6800
      %v6856 = vmul.f32 %v6648, %v6800
      %v6857 = vmul.f32 %v6650, %v6801
      %v6858 = vmul.f32 %v6652, %v6801
      %v6859 = vmul.f32 %v6654, %v6802
      %v6860 = vmul.f32 %v6656, %v6802
      %v6861 = vmul.f32 %v6658, %v6803
      %v6862 = vmul.f32 %v6660, %v6803
      %v6863 = vmul.f32 %v6662, %v6804
      %v6864 = vmul.f32 %v6664, %v6804
      %v6865 = vmul.f32 %v6666, %v6805
      %v6866 = vmul.f32 %v6668, %v6805
      %v6867 = vmul.f32 %v6670, %v6806
      %v6868 = vmul.f32 %v6672, %v6806
      %v6869 = vmul.f32 %v6674, %v6807
      %v6870 = vmul.f32 %v6676, %v6807
      %v6871 = vmul.f32 %v6678, %v6808
      %v6872 = vmul.f32 %v6680, %v6808
      %v6873 = vpack.c.bf16 %v3614, %v3614
      %v6874 = vpack.c.bf16 %v3653, %v3653
      %v6875 = vpack.c.bf16 %v6811, %v6809
      %v6876 = vpack.c.bf16 %v6812, %v6810
      %v6877 = vpack.c.bf16 %v6815, %v6813
      %v6878 = vpack.c.bf16 %v6816, %v6814
      %v6879 = vpack.c.bf16 %v6819, %v6817
      %v6880 = vpack.c.bf16 %v6820, %v6818
      %v6881 = vpack.c.bf16 %v6823, %v6821
      %v6882 = vpack.c.bf16 %v6824, %v6822
      %v6883 = vpack.c.bf16 %v6827, %v6825
      %v6884 = vpack.c.bf16 %v6828, %v6826
      %v6885 = vpack.c.bf16 %v6831, %v6829
      %v6886 = vpack.c.bf16 %v6832, %v6830
      %v6887 = vpack.c.bf16 %v6835, %v6833
      %v6888 = vpack.c.bf16 %v6836, %v6834
      %v6889 = vpack.c.bf16 %v6839, %v6837
      %v6890 = vpack.c.bf16 %v6840, %v6838
      %v6891 = vpack.c.bf16 %v6843, %v6841
      %v6892 = vpack.c.bf16 %v6844, %v6842
      %v6893 = vpack.c.bf16 %v6847, %v6845
      %v6894 = vpack.c.bf16 %v6848, %v6846
      %v6895 = vpack.c.bf16 %v6851, %v6849
      %v6896 = vpack.c.bf16 %v6852, %v6850
      %v6897 = vpack.c.bf16 %v6855, %v6853
      %v6898 = vpack.c.bf16 %v6856, %v6854
      %v6899 = vpack.c.bf16 %v6859, %v6857
      %v6900 = vpack.c.bf16 %v6860, %v6858
      %v6901 = vpack.c.bf16 %v6863, %v6861
      %v6902 = vpack.c.bf16 %v6864, %v6862
      %v6903 = vpack.c.bf16 %v6867, %v6865
      %v6904 = vpack.c.bf16 %v6868, %v6866
      %v6905 = vpack.c.bf16 %v6871, %v6869
      %v6906 = vpack.c.bf16 %v6872, %v6870
      %6907 = vmatpush.bf16.xpose.msra.mxu0 %v6889
      %6908 = vmatpush.bf16.xpose.msra.mxu0 %v6887
      %6909 = vmatpush.bf16.xpose.msra.mxu0 %v6885
      %6910 = vmatpush.bf16.xpose.msra.mxu0 %v6883
      %6911 = vmatpush.bf16.xpose.msra.mxu0 %v6881
      %6912 = vmatpush.bf16.xpose.msra.mxu0 %v6879
      %6913 = vmatpush.bf16.xpose.msra.mxu0 %v6877
      %6914 = vmatpush.bf16.xpose.msra.mxu0 %v6875
      %6915 = vmatmul.bf16.gmra.mxu0 %v6873
      %v6916 = vpop.f32.mrf.mxu0
      %v6917 = vadd.f32 0.0, %v6916
      %v6918 = vpop.f32.mrf.mxu0
      %6919 = vdwg.mxu0
      %6920 = vmatpush.bf16.xpose.msra.mxu0 %v6890
      %6921 = vmatpush.bf16.xpose.msra.mxu0 %v6888
      %6922 = vmatpush.bf16.xpose.msra.mxu0 %v6886
      %6923 = vmatpush.bf16.xpose.msra.mxu0 %v6884
      %6924 = vmatpush.bf16.xpose.msra.mxu0 %v6882
      %6925 = vmatpush.bf16.xpose.msra.mxu0 %v6880
      %6926 = vmatpush.bf16.xpose.msra.mxu0 %v6878
      %6927 = vmatpush.bf16.xpose.msra.mxu0 %v6876
      %6928 = vmatmul.bf16.gmra.mxu0 %v6874
      %v6929 = vpop.f32.mrf.mxu0
      %v6930 = vadd.f32 %v6917, %v6929
      %v6931 = vpop.f32.mrf.mxu0
      %6932 = vdwg.mxu0
      %6933 = vmatpush.bf16.xpose.msra.mxu0 %v6905
      %6934 = vmatpush.bf16.xpose.msra.mxu0 %v6903
      %6935 = vmatpush.bf16.xpose.msra.mxu0 %v6901
      %6936 = vmatpush.bf16.xpose.msra.mxu0 %v6899
      %6937 = vmatpush.bf16.xpose.msra.mxu0 %v6897
      %6938 = vmatpush.bf16.xpose.msra.mxu0 %v6895
      %6939 = vmatpush.bf16.xpose.msra.mxu0 %v6893
      %6940 = vmatpush.bf16.xpose.msra.mxu0 %v6891
      %6941 = vmatmul.bf16.gmra.mxu0 %v6873
      %v6942 = vpop.f32.mrf.mxu0
      %v6943 = vadd.f32 0.0, %v6942
      %v6944 = vpop.f32.mrf.mxu0
      %6945 = vdwg.mxu0
      %6946 = vmatpush.bf16.xpose.msra.mxu0 %v6906
      %6947 = vmatpush.bf16.xpose.msra.mxu0 %v6904
      %6948 = vmatpush.bf16.xpose.msra.mxu0 %v6902
      %6949 = vmatpush.bf16.xpose.msra.mxu0 %v6900
      %6950 = vmatpush.bf16.xpose.msra.mxu0 %v6898
      %6951 = vmatpush.bf16.xpose.msra.mxu0 %v6896
      %6952 = vmatpush.bf16.xpose.msra.mxu0 %v6894
      %6953 = vmatpush.bf16.xpose.msra.mxu0 %v6892
      %6954 = vmatmul.bf16.gmra.mxu0 %v6874
      %v6955 = vpop.f32.mrf.mxu0
      %v6956 = vadd.f32 %v6943, %v6955
      %v6957 = vpop.f32.mrf.mxu0
      %6958 = vdwg.mxu0
      %v6959 = vld [vmem:[%s20] sm:$0xf]
      %v6960 = vld [vmem:[%s20 + $0x4] sm:$0xf]
      %v6961 = vld [vmem:[%s20 + $0x8] sm:$0xf]
      %v6962 = vld [vmem:[%s20 + $0xc] sm:$0xf]
      %v6963 = vpack.c.bf16 %v5278, %v4452
      %v6964 = vpack.c.bf16 %v5304, %v4478
      %v6965 = vpack.c.bf16 %v6930, %v6104
      %v6966 = vpack.c.bf16 %v6956, %v6130
      %v6967 = vld [vmem:[%s21] sm:$0xff]
      %v6968 = vld [vmem:[%s21 + $0x8] sm:$0xff]
      %v6969 = vld [vmem:[%s21 + $0x10] sm:$0xff]
      %v6970 = vld [vmem:[%s21 + $0x18] sm:$0xff]
      %6972 = vset.pattern.permute.xlu0 0
      %6973 = vperm.xlu0 %6972, %v6967
      %v6974 = vpop.permute.xlu0 %6973
      %6977 = vset.pattern.permute.xlu0 0
      %6978 = vperm.xlu0 %6977, %v6968
      %v6979 = vpop.permute.xlu0 %6978
      %6982 = vset.pattern.permute.xlu0 0
      %6983 = vperm.xlu0 %6982, %v6969
      %v6984 = vpop.permute.xlu0 %6983
      %6987 = vset.pattern.permute.xlu0 0
      %6988 = vperm.xlu0 %6987, %v6970
      %v6989 = vpop.permute.xlu0 %6988
      %v6995 = vunpack.c.l.b16 %v6959
      %v6996 = vunpack.c.l.b16 %v6960
      %v6997 = vunpack.c.l.b16 %v6961
      %v6998 = vunpack.c.l.b16 %v6962
      %v6999 = vpack.c.b16 %v6996, %v6995
      %v7000 = vpack.c.b16 %v6998, %v6997
      %v7002 = vsel %vm1696, %v6999, 0
      %v7005 = vsel %vm1696, %v7000, 0
      %7007 = vmatpush.bf16.msra.mxu0 0
      %7008 = vmatpush.bf16.msra.mxu0 0
      %7009 = vmatpush.bf16.msra.mxu0 0
      %7010 = vmatpush.bf16.msra.mxu0 0
      %7011 = vmatpush.bf16.msra.mxu0 0
      %7012 = vmatpush.bf16.msra.mxu0 0
      %7013 = vmatpush.bf16.msra.mxu0 %v6965
      %7014 = vmatpush.bf16.msra.mxu0 %v6963
      %7015 = vmatmul.bf16.gmra.mxu0 %v7002
      %v7016 = vpop.f32.mrf.mxu0
      %v7017 = vadd.f32 %v6974, %v7016
      %v7018 = vpop.f32.mrf.mxu0
      %v7019 = vadd.f32 %v6979, %v7018
      %7020 = vmatmul.bf16.gmra.mxu0 %v7005
      %v7021 = vpop.f32.mrf.mxu0
      %v7022 = vadd.f32 %v6984, %v7021
      %v7023 = vpop.f32.mrf.mxu0
      %v7024 = vadd.f32 %v6989, %v7023
      %7025 = vdwg.mxu0
      %7026 = vmatpush.bf16.msra.mxu0 0
      %7027 = vmatpush.bf16.msra.mxu0 0
      %7028 = vmatpush.bf16.msra.mxu0 0
      %7029 = vmatpush.bf16.msra.mxu0 0
      %7030 = vmatpush.bf16.msra.mxu0 0
      %7031 = vmatpush.bf16.msra.mxu0 0
      %7032 = vmatpush.bf16.msra.mxu0 %v6966
      %7033 = vmatpush.bf16.msra.mxu0 %v6964
      %7034 = vmatmul.bf16.gmra.mxu0 %v7002
      %v7035 = vpop.f32.mrf.mxu0
      %v7036 = vadd.f32 %v6974, %v7035
      %v7037 = vpop.f32.mrf.mxu0
      %v7038 = vadd.f32 %v6979, %v7037
      %7039 = vmatmul.bf16.gmra.mxu0 %v7005
      %v7040 = vpop.f32.mrf.mxu0
      %v7041 = vadd.f32 %v6984, %v7040
      %v7042 = vpop.f32.mrf.mxu0
      %v7043 = vadd.f32 %v6989, %v7042
      %7044 = vdwg.mxu0
      %v7045 = vadd.f32 %v3183, %v7017
      %v7046 = vadd.f32 %v3184, %v7036
      %v7047 = vadd.f32 %v3185, %v7019
      %v7048 = vadd.f32 %v3186, %v7038
      %v7049 = vadd.f32 %v3187, %v7022
      %v7050 = vadd.f32 %v3188, %v7041
      %v7051 = vadd.f32 %v3189, %v7024
      %v7052 = vadd.f32 %v3190, %v7043
      %v7053 = vmul.f32 %v7045, 0.70710677
      %v7054 = vmul.f32 %v7046, 0.70710677
      %v7055 = vmul.f32 %v7047, 0.70710677
      %v7056 = vmul.f32 %v7048, 0.70710677
      %v7057 = vmul.f32 %v7049, 0.70710677
      %v7058 = vmul.f32 %v7050, 0.70710677
      %v7059 = vmul.f32 %v7051, 0.70710677
      %v7060 = vmul.f32 %v7052, 0.70710677
      %7061 = vst [vmem:[%s723] sm:$0xff] %v7053
      %7062 = vst [vmem:[%s723 + $0x8] sm:$0xff] %v7054
      %7063 = vst [vmem:[%s723 + $0x10] sm:$0xff] %v7055
      %7064 = vst [vmem:[%s723 + $0x18] sm:$0xff] %v7056
      %7065 = vst [vmem:[%s723 + $0x20] sm:$0xff] %v7057
      %7066 = vst [vmem:[%s723 + $0x28] sm:$0xff] %v7058
      %7067 = vst [vmem:[%s723 + $0x30] sm:$0xff] %v7059
      %7068 = vst [vmem:[%s723 + $0x38] sm:$0xff] %v7060
      %p7069 = scmp.lt.s32.totalorder %s33, 1
      %s7070 = scalar_select %p7069, %s33, 1
      %s7071 = smul.addr %s7070, 8
      %s7072 = smul.addr %s7071, 8
      %s7073 = scalar_lea.vmem %s22, %s7072
      // Predicated region
      $region109: #{ncsnpp_unet_forward.1} parent=107 // pred_check
        %p7074 = pneg %p528
      $region110: #{ncsnpp_unet_forward.1} parent=107 // pred_check_branch
        %7076 = sbr.rel (%p7074) target = $region112
      $region111: #{ncsnpp_unet_forward.1} parent=107 // pred_region
        _
      $region112: #{ncsnpp_unet_forward.1} parent=107 // pred_fallthru
        _
    $region108: #{ncsnpp_unet_forward.1} parent=5 // pred_fallthru
      _
    %p7077 = scmp.le.s32.totalorder 2, %s28
    // Predicated region
    $region113: #{ncsnpp_unet_forward.1} parent=5 // pred_check
      %p7078 = pneg %p7077
    $region114: #{ncsnpp_unet_forward.1} parent=5 // pred_check_branch
      %7080 = sbr.rel (%p7078) target = $region116
    $region115: #{ncsnpp_unet_forward.1} parent=5 // pred_region
      %s7081 = ssub.s32 %s28, 2
      // Predicated region
      $region117: #{ncsnpp_unet_forward.1} parent=115 // pred_check
        %p7082 = pneg %p534
      $region118: #{ncsnpp_unet_forward.1} parent=115 // pred_check_branch
        %7084 = sbr.rel (%p7082) target = $region120
      $region119: #{ncsnpp_unet_forward.1} parent=115 // pred_region
        %p7085 = scmp.lt.s32.totalorder %s34, 1
        %s7086 = scalar_select %p7085, %s34, 1
        %s7087 = smul.addr %s7086, 8
        %s7088 = smul.addr %s7087, 8
        %s7089 = scalar_lea.vmem %s22, %s7088
      $region120: #{ncsnpp_unet_forward.1} parent=115 // pred_fallthru
        _
    $region116: #{ncsnpp_unet_forward.1} parent=5 // pred_fallthru
      _
  $region6: #{ncsnpp_unet_forward.1} parent=0 // loop_footer
    %s32 = sadd.s32 1, %s28
  $region7: #{ncsnpp_unet_forward.1} parent=0 // loop_footer_branch
    %27 = sbr.rel target = $region3
  $region8: #{ncsnpp_unet_forward.1} parent=0 // loop_exit
    _

</llo_original>
